<compile_context>
chip_gen: v7x
topology: tpu7x:2x2x1
jax: 0.10.0
libtpu: 0.0.40
codegen_flags: <defaults>
</compile_context>

<pallas_src>
import functools

import jax
import jax.numpy as jnp
from jax import lax
from jax.experimental import pallas as pl
from jax.experimental.pallas import tpu as pltpu

EPS = 1e-5
SLOPE = 0.2

# Above the v5e scoped-VMEM default (16 MiB), below every generation's physical budget
# (v7x: 64 MiB physical / 32 MiB scoped default).  Re-derive for very large W*C.
VMEM_LIMIT_BYTES = 32 * 1024 * 1024


def _row_roll(v, shift):
    """Static roll along the flattened-row (sublane) axis; shift normalised to >= 0."""
    return pltpu.roll(v, shift=shift % v.shape[0], axis=0)


# ---------------------------------------------------------------------------
# Kernel 1: (optional fused BN-affine + LeakyReLU on the input) -> 3x3x3 conv
#           -> bias -> packed per-lane sum / sum-of-squares for the next BN.
# Lane-dense layout (N, D, H, W*C); one grid step = one (batch, depth-tile);
# 9 MXU matmuls of shape (td*H, W*C) x (W*C, W*C).
# ---------------------------------------------------------------------------
def _conv3d_kernel(scale_ref, shift_ref, x_ref, xup_ref, xdn_ref, w_ref, b_ref,
                   o_ref, stat_ref, xin_ref, acc_ref, *,
                   in_act, compute_dtype, slope):
    td, H, WC = x_ref.shape
    rows = td * H
    t = pl.program_id(1)
    n_t = pl.num_programs(1)

    def prep(v, valid=None):
        v = v.astype(jnp.float32)
        if in_act:                       # fused BN1-affine + LeakyReLU of the previous conv
            v = v * scale_ref[...] + shift_ref[...]
            v = jnp.where(v > 0, v, slope * v)
        if valid is not None:            # zero the depth halo at the volume edges
            v = v * valid
        return v

    # ---- Stage the depth-padded tile in VMEM (f32, row pitch = H, no H padding -> no memset).
    xin_ref[1:td + 1] = prep(x_ref[...])
    up_ok = (t > 0).astype(jnp.float32)
    dn_ok = (t < n_t - 1).astype(jnp.float32)
    xin_ref[0:1] = prep(xup_ref[...], up_ok)
    xin_ref[td + 1:td + 2] = prep(xdn_ref[...], dn_ok)

    # ---- 9 matmuls: kw tap + W padding folded into the banded weights, kd realised by sliding
    #      the (aligned) depth window, kh accumulated per-tap into three f32 VMEM accumulators.
    #      No unaligned slice+reshape copy is done here (H % 8 == 0 keeps the merge layout-free).
    for kd in range(3):
        slab = xin_ref[kd:kd + td].reshape(rows, WC).astype(compute_dtype)
        for kh in range(3):
            contrib = jnp.dot(slab, w_ref[kd, kh],
                              preferred_element_type=jnp.float32)
            if kd == 0:
                acc_ref[kh] = contrib            # first tap assigns: no zero-init pass
            else:
                acc_ref[kh] += contrib

    # ---- Realise the kh shift on the accumulators with two XLU rolls + boundary masks:
    #      out[d, h] = A1[d, h] + A0[d, h-1] + A2[d, h+1]  (zero outside 0 <= h < H).
    h_idx = lax.broadcasted_iota(jnp.int32, (rows, 1), 0) % H
    not_first = (h_idx != 0).astype(jnp.float32)
    not_last = (h_idx != H - 1).astype(jnp.float32)

    out = (acc_ref[1]
           + not_first * _row_roll(acc_ref[0], 1)
           + not_last * _row_roll(acc_ref[2], -1)
           + b_ref[...].astype(jnp.float32))

    o_ref[...] = out.reshape(td, H, WC).astype(o_ref.dtype)
    # Packed per-(w, c)-lane partial BatchNorm statistics from the f32 accumulation; the
    # batch / tile / W reduction happens in a few hundred flops of JAX glue outside.
    stat_ref[0:1, :] = jnp.sum(out, axis=0, keepdims=True)
    stat_ref[1:2, :] = jnp.sum(out * out, axis=0, keepdims=True)


def conv3d_fused(x_flat, w_band, b_flat, in_scale, in_shift, *, td, in_act,
                 compute_dtype, store_dtype):
    N, D, H, WC = x_flat.shape
    assert D % td == 0, (D, td)
    n_t = D // td

    kernel = functools.partial(_conv3d_kernel, in_act=in_act,
                               compute_dtype=compute_dtype, slope=SLOPE)
    return pl.pallas_call(
        kernel,
        out_shape=(
            jax.ShapeDtypeStruct((N, D, H, WC), store_dtype),     # conv output (bf16 by default)
            jax.ShapeDtypeStruct((N, n_t, 2, WC), jnp.float32),   # packed [sum; sum_sq] stats
        ),
        grid=(N, n_t),
        in_specs=[
            pl.BlockSpec((1, WC), lambda n, t: (0, 0)),                        # input BN scale
            pl.BlockSpec((1, WC), lambda n, t: (0, 0)),                        # input BN shift
            pl.BlockSpec((None, td, H, WC), lambda n, t: (n, t, 0, 0)),        # depth tile
            pl.BlockSpec((None, 1, H, WC),
                         lambda n, t: (n, jnp.maximum(t * td - 1, 0), 0, 0)),  # halo above
            pl.BlockSpec((None, 1, H, WC),
                         lambda n, t: (n, jnp.minimum(t * td + td, D - 1), 0, 0)),  # halo below
            pl.BlockSpec((3, 3, WC, WC), lambda n, t: (0, 0, 0, 0)),           # banded weights
            pl.BlockSpec((1, WC), lambda n, t: (0, 0)),                        # bias (W-tiled)
        ],
        out_specs=(
            pl.BlockSpec((None, td, H, WC), lambda n, t: (n, t, 0, 0)),
            pl.BlockSpec((None, None, 2, WC), lambda n, t: (n, t, 0, 0)),
        ),
        scratch_shapes=[
            pltpu.VMEM((td + 2, H, WC), jnp.float32),   # depth-padded staging tile
            pltpu.VMEM((3, td * H, WC), jnp.float32),   # per-kh f32 accumulators
        ],
        compiler_params=pltpu.CompilerParams(
            dimension_semantics=("parallel", "parallel"),
            vmem_limit_bytes=VMEM_LIMIT_BYTES),
    )(in_scale, in_shift, x_flat, x_flat, x_flat, w_band, b_flat)


# ---------------------------------------------------------------------------
# Kernel 2: BN2-affine + residual add + LeakyReLU (gridded, lane-dense).
# Output aliases the (dead) y2 buffer.
# ---------------------------------------------------------------------------
def _bn_res_lrelu_kernel(y_ref, r_ref, scale_ref, shift_ref, o_ref, *, slope):
    v = y_ref[...].astype(jnp.float32) * scale_ref[...] + shift_ref[...]
    v = v + r_ref[...].astype(jnp.float32)
    o_ref[...] = jnp.where(v > 0, v, slope * v).astype(o_ref.dtype)


def bn_res_lrelu(y_flat, res_flat, scale_flat, shift_flat, *, td):
    N, D, H, WC = y_flat.shape
    n_t = D // td
    return pl.pallas_call(
        functools.partial(_bn_res_lrelu_kernel, slope=SLOPE),
        out_shape=jax.ShapeDtypeStruct((N, D, H, WC), y_flat.dtype),
        grid=(N, n_t),
        in_specs=[
            pl.BlockSpec((None, td, H, WC), lambda n, t: (n, t, 0, 0)),
            pl.BlockSpec((None, td, H, WC), lambda n, t: (n, t, 0, 0)),
            pl.BlockSpec((1, WC), lambda n, t: (0, 0)),
            pl.BlockSpec((1, WC), lambda n, t: (0, 0)),
        ],
        out_specs=pl.BlockSpec((None, td, H, WC), lambda n, t: (n, t, 0, 0)),
        input_output_aliases={0: 0},          # reuse y2's HBM buffer (dead after this kernel)
        compiler_params=pltpu.CompilerParams(
            dimension_semantics=("parallel", "parallel"),
            vmem_limit_bytes=VMEM_LIMIT_BYTES),
    )(y_flat, res_flat, scale_flat, shift_flat)


# ---------------------------------------------------------------------------
# JAX glue: packed partial sums -> per-channel BN scale/shift (training-mode, biased var).
# NOTE: E[x^2]-E[x]^2 in f32 can cancel for very large volumes; fine at these scales.
# ---------------------------------------------------------------------------
def _bn_affine(stats, gamma, beta, count, W):
    C = gamma.shape[0]
    s = stats[:, :, 0, :].reshape(-1, W, C).sum(axis=(0, 1))
    ss = stats[:, :, 1, :].reshape(-1, W, C).sum(axis=(0, 1))
    mean = s / count
    var = ss / count - mean * mean
    scale = gamma * lax.rsqrt(var + EPS)
    shift = beta - mean * scale
    return (jnp.tile(scale, W).reshape(1, W * C),
            jnp.tile(shift, W).reshape(1, W * C))


# ---------------------------------------------------------------------------
# Parameters + one-time repacking (hoist out of the forward path when stacking blocks).
# ---------------------------------------------------------------------------
def init_params(key, channels):
    k1, k2, k3, k4 = jax.random.split(key, 4)
    bound = (channels * 27) ** -0.5
    w1 = jax.random.uniform(k1, (channels, channels, 3, 3, 3), jnp.float32, -bound, bound)
    b1 = jax.random.uniform(k2, (channels,), jnp.float32, -bound, bound)
    w2 = jax.random.uniform(k3, (channels, channels, 3, 3, 3), jnp.float32, -bound, bound)
    b2 = jax.random.uniform(k4, (channels,), jnp.float32, -bound, bound)
    return {
        "w1": w1, "b1": b1, "w2": w2, "b2": b2,
        "gamma1": jnp.ones((channels,), jnp.float32),
        "beta1": jnp.zeros((channels,), jnp.float32),
        "gamma2": jnp.ones((channels,), jnp.float32),
        "beta2": jnp.zeros((channels,), jnp.float32),
    }


def _band_weights(w, W, compute_dtype):
    """(Cout, Cin, 3, 3, 3) -> (3[kd], 3[kh], W*Cin, W*Cout): folds the kw tap, the W lane
    packing and the W zero padding into a block-banded matmul RHS (for small C*W)."""
    wi = jnp.arange(W)[None, :, None]
    wo = jnp.arange(W)[None, None, :]
    kw = jnp.arange(3)[:, None, None]
    band = (wi == wo + kw - 1).astype(jnp.float32)                  # (3, W, W)
    t6 = jnp.einsum("kab,oidhk->dhaibo", band, w.astype(jnp.float32))
    Cout, Cin = w.shape[0], w.shape[1]
    return t6.reshape(3, 3, W * Cin, W * Cout).astype(compute_dtype)


def prepare_params(params, W, compute_dtype=jnp.bfloat16):
    """One-time weight/bias repacking (do at parameter-load time, not per forward)."""
    C = params["b1"].shape[0]
    return {
        "w1": _band_weights(params["w1"], W, compute_dtype),
        "w2": _band_weights(params["w2"], W, compute_dtype),
        "b1": jnp.tile(params["b1"].astype(jnp.float32), W).reshape(1, W * C),
        "b2": jnp.tile(params["b2"].astype(jnp.float32), W).reshape(1, W * C),
        "gamma1": params["gamma1"], "beta1": params["beta1"],
        "gamma2": params["gamma2"], "beta2": params["beta2"],
    }


def _pick_td(D, H, min_rows=256, max_rows=2048):
    """Smallest divisor of D giving td*H in [min_rows, max_rows]; otherwise the largest
    divisor below max_rows.  min_rows targets MXU-efficient M; cap protects VMEM."""
    divisors = [t for t in range(1, D + 1) if D % t == 0]
    ok = [t for t in divisors if min_rows <= t * H <= max_rows]
    if ok:
        return ok[0]
    under = [t for t in divisors if t * H <= max_rows]
    return under[-1] if under else 1


# ---------------------------------------------------------------------------
# Forward pass.
# ---------------------------------------------------------------------------
@functools.partial(jax.jit, static_argnames=("C", "td", "compute_dtype", "store_dtype"))
def residual_block_3d_packed(x_flat, prep, *, C, td,
                             compute_dtype=jnp.bfloat16, store_dtype=jnp.bfloat16):
    """Forward on the internal lane-dense (N, D, H, W*C) layout (keep this layout across
    stacked blocks).  Returns store_dtype."""
    N, D, H, WC = x_flat.shape
    W = WC // C
    count = N * D * H * W
    ident_scale = jnp.ones((1, WC), jnp.float32)
    ident_shift = jnp.zeros((1, WC), jnp.float32)

    # conv1 (+ bias); BN1 statistics come for free from the f32 accumulators.
    y1, st1 = conv3d_fused(x_flat, prep["w1"], prep["b1"], ident_scale, ident_shift,
                           td=td, in_act=False,
                           compute_dtype=compute_dtype, store_dtype=store_dtype)
    scale1, shift1 = _bn_affine(st1, prep["gamma1"], prep["beta1"], count, W)

    # BN1-affine + LeakyReLU fused into conv2's input transform; conv2 emits BN2 stats.
    y2, st2 = conv3d_fused(y1, prep["w2"], prep["b2"], scale1, shift1,
                           td=td, in_act=True,
                           compute_dtype=compute_dtype, store_dtype=store_dtype)
    scale2, shift2 = _bn_affine(st2, prep["gamma2"], prep["beta2"], count, W)

    # BN2-affine + residual + LeakyReLU; output aliases y2's HBM buffer.
    return bn_res_lrelu(y2, x_flat, scale2, shift2, td=td)


def residual_block_3d(x_ncdhw, params, *, td=None,
                      compute_dtype=jnp.bfloat16, store_dtype=jnp.bfloat16):
    """PyTorch-interface wrapper (NCDHW f32 in / NCDHW f32 out).  When stacking blocks, hoist
    prepare_params and the layout transposes out of the per-block call."""
    N, C, D, H, W = x_ncdhw.shape
    if td is None:
        td = _pick_td(D, H)
    assert D % td == 0, (D, td)
    prep = prepare_params(params, W, compute_dtype)
    x_flat = jnp.transpose(x_ncdhw, (0, 2, 3, 4, 1)).reshape(N, D, H, W * C)
    out = residual_block_3d_packed(x_flat, prep, C=C, td=td,
                                   compute_dtype=compute_dtype,
                                   store_dtype=store_dtype)
    out = out.astype(jnp.float32)
    return jnp.transpose(out.reshape(N, D, H, W, C), (0, 4, 1, 2, 3))


# ---------------------------------------------------------------------------
# Pure-JAX reference (correctness check).
# ---------------------------------------------------------------------------
def _ref_forward(x, p):
    def conv(x, w, b):
        y = lax.conv_general_dilated(
            x, w, (1, 1, 1), ((1, 1), (1, 1), (1, 1)),
            dimension_numbers=("NCDHW", "OIDHW", "NCDHW"))
        return y + b.reshape(1, -1, 1, 1, 1)

    def bn(x, g, b):
        mean = jnp.mean(x, axis=(0, 2, 3, 4), keepdims=True)
        var = jnp.mean(jnp.square(x - mean), axis=(0, 2, 3, 4), keepdims=True)
        return (x - mean) * lax.rsqrt(var + EPS) * g.reshape(1, -1, 1, 1, 1) \
            + b.reshape(1, -1, 1, 1, 1)

    def lrelu(x):
        return jnp.where(x > 0, x, SLOPE * x)

    out = lrelu(bn(conv(x, p["w1"], p["b1"]), p["gamma1"], p["beta1"]))
    out = bn(conv(out, p["w2"], p["b2"]), p["gamma2"], p["beta2"]) + x
    return lrelu(out)


if __name__ == "__main__":
    key = jax.random.PRNGKey(0)
    N, C, D, H, W = 2, 16, 8, 8, 8          # W*C = 128 -> fully lane-dense packed layout
    kx, kp = jax.random.split(key)
    x = jax.random.normal(kx, (N, C, D, H, W), jnp.float32)
    params = init_params(kp, C)

    ref = _ref_forward(x, params)

    # Performance configuration: bf16 MXU operands + bf16 intermediates in HBM,
    # f32 accumulation / BN statistics / final output.
    out_bf16 = jax.block_until_ready(
        residual_block_3d(x, params, compute_dtype=jnp.bfloat16,
                          store_dtype=jnp.bfloat16))
    assert out_bf16.shape == x.shape, (out_bf16.shape, x.shape)
    err_bf16 = float(jnp.max(jnp.abs(out_bf16 - ref)))
    assert err_bf16 < 2e-1, f"bf16 path max abs err {err_bf16}"

    # f32 everywhere: tight numerical check of the kernel structure itself.
    out_f32 = jax.block_until_ready(
        residual_block_3d(x, params, compute_dtype=jnp.float32,
                          store_dtype=jnp.float32))
    err_f32 = float(jnp.max(jnp.abs(out_f32 - ref)))
    assert err_f32 < 2e-3, f"f32 path max abs err {err_f32}"

    print("KERNEL_OK")
</pallas_src>

<mosaic_0001>
module attributes {stable_mosaic.version = 11 : i64} {
  func.func @_conv3d_kernel(%arg0: i32, %arg1: i32, %arg2: memref<1x128xf32, #tpu.memory_space<vmem>>, %arg3: memref<1x128xf32, #tpu.memory_space<vmem>>, %arg4: memref<1x8x8x128xf32, #tpu.memory_space<vmem>>, %arg5: memref<1x1x8x128xf32, #tpu.memory_space<vmem>>, %arg6: memref<1x1x8x128xf32, #tpu.memory_space<vmem>>, %arg7: memref<3x3x128x128xbf16, #tpu.memory_space<vmem>>, %arg8: memref<1x128xf32, #tpu.memory_space<vmem>>, %arg9: memref<1x8x8x128xbf16, #tpu.memory_space<vmem>>, %arg10: memref<1x1x2x128xf32, #tpu.memory_space<vmem>>, %arg11: memref<10x8x128xf32, #tpu.memory_space<vmem>>, %arg12: memref<3x64x128xf32, #tpu.memory_space<vmem>>) attributes {dimension_semantics = [#tpu.dimension_semantics<parallel>, #tpu.dimension_semantics<parallel>], iteration_bounds = array<i64: 2, 1>, scalar_prefetch = 0 : i64, scratch_operands = 2 : i64, tpu.core_type = #tpu.core_type<tc>, window_params = [{pipeline_mode = #tpu.pipeline_mode<synchronous>, transform_indices = @transform_0, window_bounds = array<i64: 1, 128>}, {pipeline_mode = #tpu.pipeline_mode<synchronous>, transform_indices = @transform_1, window_bounds = array<i64: 1, 128>}, {transform_indices = @transform_2, window_bounds = array<i64: 1, 8, 8, 128>}, {transform_indices = @transform_3, window_bounds = array<i64: 1, 1, 8, 128>}, {transform_indices = @transform_4, window_bounds = array<i64: 1, 1, 8, 128>}, {pipeline_mode = #tpu.pipeline_mode<synchronous>, transform_indices = @transform_5, window_bounds = array<i64: 3, 3, 128, 128>}, {pipeline_mode = #tpu.pipeline_mode<synchronous>, transform_indices = @transform_6, window_bounds = array<i64: 1, 128>}, {transform_indices = @transform_7, window_bounds = array<i64: 1, 8, 8, 128>}, {transform_indices = @transform_8, window_bounds = array<i64: 1, 1, 2, 128>}]} {
    %c0 = arith.constant 0 : index
    %c0_0 = arith.constant 0 : index
    %c0_1 = arith.constant 0 : index
    %c0_2 = arith.constant 0 : index
    %0 = vector.load %arg4[%c0, %c0_0, %c0_1, %c0_2] : memref<1x8x8x128xf32, #tpu.memory_space<vmem>>, vector<1x8x8x128xf32>
    %1 = vector.shape_cast %0 : vector<1x8x8x128xf32> to vector<8x8x128xf32>
    %c1 = arith.constant 1 : index
    %c0_3 = arith.constant 0 : index
    %c0_4 = arith.constant 0 : index
    %2 = vector.load %arg11[%c1, %c0_3, %c0_4] : memref<10x8x128xf32, #tpu.memory_space<vmem>>, vector<8x8x128xf32>
    tpu.vector_store %arg11[%c1, %c0_3, %c0_4], %1 {strides = array<i32>} : memref<10x8x128xf32, #tpu.memory_space<vmem>>, vector<8x8x128xf32>,
    %c0_i32 = arith.constant 0 : i32
    %3 = arith.cmpi sgt, %arg1, %c0_i32 : i32
    %4 = arith.extui %3 : i1 to i32
    %5 = arith.sitofp %4 : i32 to f32
    %c0_i32_5 = arith.constant 0 : i32
    %6 = arith.cmpi slt, %arg1, %c0_i32_5 : i32
    %7 = arith.extui %6 : i1 to i32
    %8 = arith.sitofp %7 : i32 to f32
    %c0_6 = arith.constant 0 : index
    %c0_7 = arith.constant 0 : index
    %c0_8 = arith.constant 0 : index
    %c0_9 = arith.constant 0 : index
    %9 = vector.load %arg5[%c0_6, %c0_7, %c0_8, %c0_9] : memref<1x1x8x128xf32, #tpu.memory_space<vmem>>, vector<1x1x8x128xf32>
    %10 = vector.shape_cast %9 : vector<1x1x8x128xf32> to vector<1x8x128xf32>
    %11 = vector.broadcast %5 : f32 to vector<1x8x128xf32>
    %12 = arith.mulf %10, %11 : vector<1x8x128xf32>
    %c0_10 = arith.constant 0 : index
    %c0_11 = arith.constant 0 : index
    %c0_12 = arith.constant 0 : index
    %13 = vector.load %arg11[%c0_10, %c0_11, %c0_12] : memref<10x8x128xf32, #tpu.memory_space<vmem>>, vector<1x8x128xf32>
    tpu.vector_store %arg11[%c0_10, %c0_11, %c0_12], %12 {strides = array<i32>} : memref<10x8x128xf32, #tpu.memory_space<vmem>>, vector<1x8x128xf32>,
    %c0_13 = arith.constant 0 : index
    %c0_14 = arith.constant 0 : index
    %c0_15 = arith.constant 0 : index
    %c0_16 = arith.constant 0 : index
    %14 = vector.load %arg6[%c0_13, %c0_14, %c0_15, %c0_16] : memref<1x1x8x128xf32, #tpu.memory_space<vmem>>, vector<1x1x8x128xf32>
    %15 = vector.shape_cast %14 : vector<1x1x8x128xf32> to vector<1x8x128xf32>
    %16 = vector.broadcast %8 : f32 to vector<1x8x128xf32>
    %17 = arith.mulf %15, %16 : vector<1x8x128xf32>
    %c9 = arith.constant 9 : index
    %c0_17 = arith.constant 0 : index
    %c0_18 = arith.constant 0 : index
    %18 = vector.load %arg11[%c9, %c0_17, %c0_18] : memref<10x8x128xf32, #tpu.memory_space<vmem>>, vector<1x8x128xf32>
    tpu.vector_store %arg11[%c9, %c0_17, %c0_18], %17 {strides = array<i32>} : memref<10x8x128xf32, #tpu.memory_space<vmem>>, vector<1x8x128xf32>,
    %c0_19 = arith.constant 0 : index
    %c0_20 = arith.constant 0 : index
    %c0_21 = arith.constant 0 : index
    %19 = vector.load %arg11[%c0_19, %c0_20, %c0_21] : memref<10x8x128xf32, #tpu.memory_space<vmem>>, vector<8x8x128xf32>
    %20 = vector.shape_cast %19 : vector<8x8x128xf32> to vector<64x128xf32>
    %21 = arith.truncf %20 : vector<64x128xf32> to vector<64x128xbf16>
    %c0_22 = arith.constant 0 : index
    %c0_23 = arith.constant 0 : index
    %c0_24 = arith.constant 0 : index
    %c0_25 = arith.constant 0 : index
    %22 = vector.load %arg7[%c0_22, %c0_23, %c0_24, %c0_25] : memref<3x3x128x128xbf16, #tpu.memory_space<vmem>>, vector<1x1x128x128xbf16>
    %23 = vector.shape_cast %22 : vector<1x1x128x128xbf16> to vector<128x128xbf16>
    %cst = arith.constant dense<0.000000e+00> : vector<64x128xf32>
    %24 = tpu.matmul %21, %23, %cst {dimension_numbers = #tpu.dot_dimension_numbers<[1], [0], [0], [1], [0, 0, 1, 1], [], []>} : vector<64x128xbf16>, vector<128x128xbf16>, vector<64x128xf32> -> vector<64x128xf32>
    %c0_26 = arith.constant 0 : index
    %c0_27 = arith.constant 0 : index
    %c0_28 = arith.constant 0 : index
    %25 = vector.load %arg12[%c0_26, %c0_27, %c0_28] : memref<3x64x128xf32, #tpu.memory_space<vmem>>, vector<1x64x128xf32>
    %26 = vector.shape_cast %25 : vector<1x64x128xf32> to vector<64x128xf32>
    %27 = vector.shape_cast %24 : vector<64x128xf32> to vector<1x64x128xf32>
    tpu.vector_store %arg12[%c0_26, %c0_27, %c0_28], %27 {strides = array<i32>} : memref<3x64x128xf32, #tpu.memory_space<vmem>>, vector<1x64x128xf32>,
    %c0_29 = arith.constant 0 : index
    %c1_30 = arith.constant 1 : index
    %c0_31 = arith.constant 0 : index
    %c0_32 = arith.constant 0 : index
    %28 = vector.load %arg7[%c0_29, %c1_30, %c0_31, %c0_32] : memref<3x3x128x128xbf16, #tpu.memory_space<vmem>>, vector<1x1x128x128xbf16>
    %29 = vector.shape_cast %28 : vector<1x1x128x128xbf16> to vector<128x128xbf16>
    %cst_33 = arith.constant dense<0.000000e+00> : vector<64x128xf32>
    %30 = tpu.matmul %21, %29, %cst_33 {dimension_numbers = #tpu.dot_dimension_numbers<[1], [0], [0], [1], [0, 0, 1, 1], [], []>} : vector<64x128xbf16>, vector<128x128xbf16>, vector<64x128xf32> -> vector<64x128xf32>
    %c1_34 = arith.constant 1 : index
    %c0_35 = arith.constant 0 : index
    %c0_36 = arith.constant 0 : index
    %31 = vector.load %arg12[%c1_34, %c0_35, %c0_36] : memref<3x64x128xf32, #tpu.memory_space<vmem>>, vector<1x64x128xf32>
    %32 = vector.shape_cast %31 : vector<1x64x128xf32> to vector<64x128xf32>
    %33 = vector.shape_cast %30 : vector<64x128xf32> to vector<1x64x128xf32>
    tpu.vector_store %arg12[%c1_34, %c0_35, %c0_36], %33 {strides = array<i32>} : memref<3x64x128xf32, #tpu.memory_space<vmem>>, vector<1x64x128xf32>,
    %c0_37 = arith.constant 0 : index
    %c2 = arith.constant 2 : index
    %c0_38 = arith.constant 0 : index
    %c0_39 = arith.constant 0 : index
    %34 = vector.load %arg7[%c0_37, %c2, %c0_38, %c0_39] : memref<3x3x128x128xbf16, #tpu.memory_space<vmem>>, vector<1x1x128x128xbf16>
    %35 = vector.shape_cast %34 : vector<1x1x128x128xbf16> to vector<128x128xbf16>
    %cst_40 = arith.constant dense<0.000000e+00> : vector<64x128xf32>
    %36 = tpu.matmul %21, %35, %cst_40 {dimension_numbers = #tpu.dot_dimension_numbers<[1], [0], [0], [1], [0, 0, 1, 1], [], []>} : vector<64x128xbf16>, vector<128x128xbf16>, vector<64x128xf32> -> vector<64x128xf32>
    %c2_41 = arith.constant 2 : index
    %c0_42 = arith.constant 0 : index
    %c0_43 = arith.constant 0 : index
    %37 = vector.load %arg12[%c2_41, %c0_42, %c0_43] : memref<3x64x128xf32, #tpu.memory_space<vmem>>, vector<1x64x128xf32>
    %38 = vector.shape_cast %37 : vector<1x64x128xf32> to vector<64x128xf32>
    %39 = vector.shape_cast %36 : vector<64x128xf32> to vector<1x64x128xf32>
    tpu.vector_store %arg12[%c2_41, %c0_42, %c0_43], %39 {strides = array<i32>} : memref<3x64x128xf32, #tpu.memory_space<vmem>>, vector<1x64x128xf32>,
    %c1_44 = arith.constant 1 : index
    %c0_45 = arith.constant 0 : index
    %c0_46 = arith.constant 0 : index
    %40 = vector.load %arg11[%c1_44, %c0_45, %c0_46] : memref<10x8x128xf32, #tpu.memory_space<vmem>>, vector<8x8x128xf32>
    %41 = vector.shape_cast %40 : vector<8x8x128xf32> to vector<64x128xf32>
    %42 = arith.truncf %41 : vector<64x128xf32> to vector<64x128xbf16>
    %c1_47 = arith.constant 1 : index
    %c0_48 = arith.constant 0 : index
    %c0_49 = arith.constant 0 : index
    %c0_50 = arith.constant 0 : index
    %43 = vector.load %arg7[%c1_47, %c0_48, %c0_49, %c0_50] : memref<3x3x128x128xbf16, #tpu.memory_space<vmem>>, vector<1x1x128x128xbf16>
    %44 = vector.shape_cast %43 : vector<1x1x128x128xbf16> to vector<128x128xbf16>
    %cst_51 = arith.constant dense<0.000000e+00> : vector<64x128xf32>
    %45 = tpu.matmul %42, %44, %cst_51 {dimension_numbers = #tpu.dot_dimension_numbers<[1], [0], [0], [1], [0, 0, 1, 1], [], []>} : vector<64x128xbf16>, vector<128x128xbf16>, vector<64x128xf32> -> vector<64x128xf32>
    %c0_52 = arith.constant 0 : index
    %c0_53 = arith.constant 0 : index
    %c0_54 = arith.constant 0 : index
    %46 = vector.load %arg12[%c0_52, %c0_53, %c0_54] : memref<3x64x128xf32, #tpu.memory_space<vmem>>, vector<1x64x128xf32>
    %47 = vector.shape_cast %46 : vector<1x64x128xf32> to vector<64x128xf32>
    %48 = arith.addf %47, %45 : vector<64x128xf32>
    %c0_55 = arith.constant 0 : index
    %c0_56 = arith.constant 0 : index
    %c0_57 = arith.constant 0 : index
    %49 = vector.load %arg12[%c0_55, %c0_56, %c0_57] : memref<3x64x128xf32, #tpu.memory_space<vmem>>, vector<1x64x128xf32>
    %50 = vector.shape_cast %49 : vector<1x64x128xf32> to vector<64x128xf32>
    %51 = vector.shape_cast %48 : vector<64x128xf32> to vector<1x64x128xf32>
    tpu.vector_store %arg12[%c0_55, %c0_56, %c0_57], %51 {strides = array<i32>} : memref<3x64x128xf32, #tpu.memory_space<vmem>>, vector<1x64x128xf32>,
    %c1_58 = arith.constant 1 : index
    %c1_59 = arith.constant 1 : index
    %c0_60 = arith.constant 0 : index
    %c0_61 = arith.constant 0 : index
    %52 = vector.load %arg7[%c1_58, %c1_59, %c0_60, %c0_61] : memref<3x3x128x128xbf16, #tpu.memory_space<vmem>>, vector<1x1x128x128xbf16>
    %53 = vector.shape_cast %52 : vector<1x1x128x128xbf16> to vector<128x128xbf16>
    %cst_62 = arith.constant dense<0.000000e+00> : vector<64x128xf32>
    %54 = tpu.matmul %42, %53, %cst_62 {dimension_numbers = #tpu.dot_dimension_numbers<[1], [0], [0], [1], [0, 0, 1, 1], [], []>} : vector<64x128xbf16>, vector<128x128xbf16>, vector<64x128xf32> -> vector<64x128xf32>
    %c1_63 = arith.constant 1 : index
    %c0_64 = arith.constant 0 : index
    %c0_65 = arith.constant 0 : index
    %55 = vector.load %arg12[%c1_63, %c0_64, %c0_65] : memref<3x64x128xf32, #tpu.memory_space<vmem>>, vector<1x64x128xf32>
    %56 = vector.shape_cast %55 : vector<1x64x128xf32> to vector<64x128xf32>
    %57 = arith.addf %56, %54 : vector<64x128xf32>
    %c1_66 = arith.constant 1 : index
    %c0_67 = arith.constant 0 : index
    %c0_68 = arith.constant 0 : index
    %58 = vector.load %arg12[%c1_66, %c0_67, %c0_68] : memref<3x64x128xf32, #tpu.memory_space<vmem>>, vector<1x64x128xf32>
    %59 = vector.shape_cast %58 : vector<1x64x128xf32> to vector<64x128xf32>
    %60 = vector.shape_cast %57 : vector<64x128xf32> to vector<1x64x128xf32>
    tpu.vector_store %arg12[%c1_66, %c0_67, %c0_68], %60 {strides = array<i32>} : memref<3x64x128xf32, #tpu.memory_space<vmem>>, vector<1x64x128xf32>,
    %c1_69 = arith.constant 1 : index
    %c2_70 = arith.constant 2 : index
    %c0_71 = arith.constant 0 : index
    %c0_72 = arith.constant 0 : index
    %61 = vector.load %arg7[%c1_69, %c2_70, %c0_71, %c0_72] : memref<3x3x128x128xbf16, #tpu.memory_space<vmem>>, vector<1x1x128x128xbf16>
    %62 = vector.shape_cast %61 : vector<1x1x128x128xbf16> to vector<128x128xbf16>
    %cst_73 = arith.constant dense<0.000000e+00> : vector<64x128xf32>
    %63 = tpu.matmul %42, %62, %cst_73 {dimension_numbers = #tpu.dot_dimension_numbers<[1], [0], [0], [1], [0, 0, 1, 1], [], []>} : vector<64x128xbf16>, vector<128x128xbf16>, vector<64x128xf32> -> vector<64x128xf32>
    %c2_74 = arith.constant 2 : index
    %c0_75 = arith.constant 0 : index
    %c0_76 = arith.constant 0 : index
    %64 = vector.load %arg12[%c2_74, %c0_75, %c0_76] : memref<3x64x128xf32, #tpu.memory_space<vmem>>, vector<1x64x128xf32>
    %65 = vector.shape_cast %64 : vector<1x64x128xf32> to vector<64x128xf32>
    %66 = arith.addf %65, %63 : vector<64x128xf32>
    %c2_77 = arith.constant 2 : index
    %c0_78 = arith.constant 0 : index
    %c0_79 = arith.constant 0 : index
    %67 = vector.load %arg12[%c2_77, %c0_78, %c0_79] : memref<3x64x128xf32, #tpu.memory_space<vmem>>, vector<1x64x128xf32>
    %68 = vector.shape_cast %67 : vector<1x64x128xf32> to vector<64x128xf32>
    %69 = vector.shape_cast %66 : vector<64x128xf32> to vector<1x64x128xf32>
    tpu.vector_store %arg12[%c2_77, %c0_78, %c0_79], %69 {strides = array<i32>} : memref<3x64x128xf32, #tpu.memory_space<vmem>>, vector<1x64x128xf32>,
    %c2_80 = arith.constant 2 : index
    %c0_81 = arith.constant 0 : index
    %c0_82 = arith.constant 0 : index
    %70 = vector.load %arg11[%c2_80, %c0_81, %c0_82] : memref<10x8x128xf32, #tpu.memory_space<vmem>>, vector<8x8x128xf32>
    %71 = vector.shape_cast %70 : vector<8x8x128xf32> to vector<64x128xf32>
    %72 = arith.truncf %71 : vector<64x128xf32> to vector<64x128xbf16>
    %c2_83 = arith.constant 2 : index
    %c0_84 = arith.constant 0 : index
    %c0_85 = arith.constant 0 : index
    %c0_86 = arith.constant 0 : index
    %73 = vector.load %arg7[%c2_83, %c0_84, %c0_85, %c0_86] : memref<3x3x128x128xbf16, #tpu.memory_space<vmem>>, vector<1x1x128x128xbf16>
    %74 = vector.shape_cast %73 : vector<1x1x128x128xbf16> to vector<128x128xbf16>
    %cst_87 = arith.constant dense<0.000000e+00> : vector<64x128xf32>
    %75 = tpu.matmul %72, %74, %cst_87 {dimension_numbers = #tpu.dot_dimension_numbers<[1], [0], [0], [1], [0, 0, 1, 1], [], []>} : vector<64x128xbf16>, vector<128x128xbf16>, vector<64x128xf32> -> vector<64x128xf32>
    %c0_88 = arith.constant 0 : index
    %c0_89 = arith.constant 0 : index
    %c0_90 = arith.constant 0 : index
    %76 = vector.load %arg12[%c0_88, %c0_89, %c0_90] : memref<3x64x128xf32, #tpu.memory_space<vmem>>, vector<1x64x128xf32>
    %77 = vector.shape_cast %76 : vector<1x64x128xf32> to vector<64x128xf32>
    %78 = arith.addf %77, %75 : vector<64x128xf32>
    %c0_91 = arith.constant 0 : index
    %c0_92 = arith.constant 0 : index
    %c0_93 = arith.constant 0 : index
    %79 = vector.load %arg12[%c0_91, %c0_92, %c0_93] : memref<3x64x128xf32, #tpu.memory_space<vmem>>, vector<1x64x128xf32>
    %80 = vector.shape_cast %79 : vector<1x64x128xf32> to vector<64x128xf32>
    %81 = vector.shape_cast %78 : vector<64x128xf32> to vector<1x64x128xf32>
    tpu.vector_store %arg12[%c0_91, %c0_92, %c0_93], %81 {strides = array<i32>} : memref<3x64x128xf32, #tpu.memory_space<vmem>>, vector<1x64x128xf32>,
    %c2_94 = arith.constant 2 : index
    %c1_95 = arith.constant 1 : index
    %c0_96 = arith.constant 0 : index
    %c0_97 = arith.constant 0 : index
    %82 = vector.load %arg7[%c2_94, %c1_95, %c0_96, %c0_97] : memref<3x3x128x128xbf16, #tpu.memory_space<vmem>>, vector<1x1x128x128xbf16>
    %83 = vector.shape_cast %82 : vector<1x1x128x128xbf16> to vector<128x128xbf16>
    %cst_98 = arith.constant dense<0.000000e+00> : vector<64x128xf32>
    %84 = tpu.matmul %72, %83, %cst_98 {dimension_numbers = #tpu.dot_dimension_numbers<[1], [0], [0], [1], [0, 0, 1, 1], [], []>} : vector<64x128xbf16>, vector<128x128xbf16>, vector<64x128xf32> -> vector<64x128xf32>
    %c1_99 = arith.constant 1 : index
    %c0_100 = arith.constant 0 : index
    %c0_101 = arith.constant 0 : index
    %85 = vector.load %arg12[%c1_99, %c0_100, %c0_101] : memref<3x64x128xf32, #tpu.memory_space<vmem>>, vector<1x64x128xf32>
    %86 = vector.shape_cast %85 : vector<1x64x128xf32> to vector<64x128xf32>
    %87 = arith.addf %86, %84 : vector<64x128xf32>
    %c1_102 = arith.constant 1 : index
    %c0_103 = arith.constant 0 : index
    %c0_104 = arith.constant 0 : index
    %88 = vector.load %arg12[%c1_102, %c0_103, %c0_104] : memref<3x64x128xf32, #tpu.memory_space<vmem>>, vector<1x64x128xf32>
    %89 = vector.shape_cast %88 : vector<1x64x128xf32> to vector<64x128xf32>
    %90 = vector.shape_cast %87 : vector<64x128xf32> to vector<1x64x128xf32>
    tpu.vector_store %arg12[%c1_102, %c0_103, %c0_104], %90 {strides = array<i32>} : memref<3x64x128xf32, #tpu.memory_space<vmem>>, vector<1x64x128xf32>,
    %c2_105 = arith.constant 2 : index
    %c2_106 = arith.constant 2 : index
    %c0_107 = arith.constant 0 : index
    %c0_108 = arith.constant 0 : index
    %91 = vector.load %arg7[%c2_105, %c2_106, %c0_107, %c0_108] : memref<3x3x128x128xbf16, #tpu.memory_space<vmem>>, vector<1x1x128x128xbf16>
    %92 = vector.shape_cast %91 : vector<1x1x128x128xbf16> to vector<128x128xbf16>
    %cst_109 = arith.constant dense<0.000000e+00> : vector<64x128xf32>
    %93 = tpu.matmul %72, %92, %cst_109 {dimension_numbers = #tpu.dot_dimension_numbers<[1], [0], [0], [1], [0, 0, 1, 1], [], []>} : vector<64x128xbf16>, vector<128x128xbf16>, vector<64x128xf32> -> vector<64x128xf32>
    %c2_110 = arith.constant 2 : index
    %c0_111 = arith.constant 0 : index
    %c0_112 = arith.constant 0 : index
    %94 = vector.load %arg12[%c2_110, %c0_111, %c0_112] : memref<3x64x128xf32, #tpu.memory_space<vmem>>, vector<1x64x128xf32>
    %95 = vector.shape_cast %94 : vector<1x64x128xf32> to vector<64x128xf32>
    %96 = arith.addf %95, %93 : vector<64x128xf32>
    %c2_113 = arith.constant 2 : index
    %c0_114 = arith.constant 0 : index
    %c0_115 = arith.constant 0 : index
    %97 = vector.load %arg12[%c2_113, %c0_114, %c0_115] : memref<3x64x128xf32, #tpu.memory_space<vmem>>, vector<1x64x128xf32>
    %98 = vector.shape_cast %97 : vector<1x64x128xf32> to vector<64x128xf32>
    %99 = vector.shape_cast %96 : vector<64x128xf32> to vector<1x64x128xf32>
    tpu.vector_store %arg12[%c2_113, %c0_114, %c0_115], %99 {strides = array<i32>} : memref<3x64x128xf32, #tpu.memory_space<vmem>>, vector<1x64x128xf32>,
    %100 = tpu.iota {dimensions = array<i32: 0>} : vector<64x1xi32>
    %c8_i32 = arith.constant 8 : i32
    %c0_i32_116 = arith.constant 0 : i32
    %101 = arith.cmpi eq, %c8_i32, %c0_i32_116 : i32
    %c1_i32 = arith.constant 1 : i32
    %102 = arith.select %101, %c1_i32, %c8_i32 : i32
    %103 = vector.broadcast %102 : i32 to vector<64x1xi32>
    %104 = arith.remsi %100, %103 : vector<64x1xi32>
    %c0_i32_117 = arith.constant 0 : i32
    %105 = vector.broadcast %c0_i32_117 : i32 to vector<64x1xi32>
    %106 = arith.cmpi ne, %104, %105 : vector<64x1xi32>
    %c0_i32_118 = arith.constant 0 : i32
    %107 = vector.broadcast %c0_i32_118 : i32 to vector<64x1xi32>
    %108 = arith.cmpi slt, %104, %107 : vector<64x1xi32>
    %c0_i32_119 = arith.constant 0 : i32
    %109 = arith.cmpi slt, %102, %c0_i32_119 : i32
    %110 = vector.broadcast %109 : i1 to vector<64x1xi1>
    %111 = vector.broadcast %110 : vector<64x1xi1> to vector<64x1xi1>
    %112 = arith.xori %108, %111 : vector<64x1xi1>
    %113 = arith.andi %112, %106 : vector<64x1xi1>
    %114 = vector.broadcast %102 : i32 to vector<64x1xi32>
    %115 = arith.addi %104, %114 : vector<64x1xi32>
    %116 = arith.select %113, %115, %104 : vector<64x1xi1>, vector<64x1xi32>
    %c0_i32_120 = arith.constant 0 : i32
    %117 = vector.broadcast %c0_i32_120 : i32 to vector<64x1xi32>
    %118 = arith.cmpi ne, %116, %117 : vector<64x1xi32>
    %119 = arith.extui %118 : vector<64x1xi1> to vector<64x1xi32>
    %120 = arith.sitofp %119 : vector<64x1xi32> to vector<64x1xf32>
    %c7_i32 = arith.constant 7 : i32
    %121 = vector.broadcast %c7_i32 : i32 to vector<64x1xi32>
    %122 = arith.cmpi ne, %116, %121 : vector<64x1xi32>
    %123 = arith.extui %122 : vector<64x1xi1> to vector<64x1xi32>
    %124 = arith.sitofp %123 : vector<64x1xi32> to vector<64x1xf32>
    %c1_121 = arith.constant 1 : index
    %c0_122 = arith.constant 0 : index
    %c0_123 = arith.constant 0 : index
    %125 = vector.load %arg12[%c1_121, %c0_122, %c0_123] : memref<3x64x128xf32, #tpu.memory_space<vmem>>, vector<1x64x128xf32>
    %126 = vector.shape_cast %125 : vector<1x64x128xf32> to vector<64x128xf32>
    %c0_124 = arith.constant 0 : index
    %c0_125 = arith.constant 0 : index
    %c0_126 = arith.constant 0 : index
    %127 = vector.load %arg12[%c0_124, %c0_125, %c0_126] : memref<3x64x128xf32, #tpu.memory_space<vmem>>, vector<1x64x128xf32>
    %128 = vector.shape_cast %127 : vector<1x64x128xf32> to vector<64x128xf32>
    %c1_i32_127 = arith.constant 1 : i32
    %129 = tpu.dynamic_rotate %128 by %c1_i32_127 dim 0 : vector<64x128xf32>, i32 -> vector<64x128xf32>
    %130 = vector.broadcast %120 : vector<64x1xf32> to vector<64x128xf32>
    %131 = arith.mulf %130, %129 : vector<64x128xf32>
    %132 = arith.addf %126, %131 : vector<64x128xf32>
    %c2_128 = arith.constant 2 : index
    %c0_129 = arith.constant 0 : index
    %c0_130 = arith.constant 0 : index
    %133 = vector.load %arg12[%c2_128, %c0_129, %c0_130] : memref<3x64x128xf32, #tpu.memory_space<vmem>>, vector<1x64x128xf32>
    %134 = vector.shape_cast %133 : vector<1x64x128xf32> to vector<64x128xf32>
    %c63_i32 = arith.constant 63 : i32
    %135 = tpu.dynamic_rotate %134 by %c63_i32 dim 0 : vector<64x128xf32>, i32 -> vector<64x128xf32>
    %136 = vector.broadcast %124 : vector<64x1xf32> to vector<64x128xf32>
    %137 = arith.mulf %136, %135 : vector<64x128xf32>
    %138 = arith.addf %132, %137 : vector<64x128xf32>
    %c0_131 = arith.constant 0 : index
    %c0_132 = arith.constant 0 : index
    %139 = vector.load %arg8[%c0_131, %c0_132] : memref<1x128xf32, #tpu.memory_space<vmem>>, vector<1x128xf32>
    %140 = vector.broadcast %139 : vector<1x128xf32> to vector<64x128xf32>
    %141 = arith.addf %138, %140 : vector<64x128xf32>
    %142 = vector.shape_cast %141 : vector<64x128xf32> to vector<8x8x128xf32>
    %143 = arith.truncf %142 : vector<8x8x128xf32> to vector<8x8x128xbf16>
    %c0_133 = arith.constant 0 : index
    %c0_134 = arith.constant 0 : index
    %c0_135 = arith.constant 0 : index
    %c0_136 = arith.constant 0 : index
    %144 = vector.load %arg9[%c0_133, %c0_134, %c0_135, %c0_136] : memref<1x8x8x128xbf16, #tpu.memory_space<vmem>>, vector<1x8x8x128xbf16>
    %145 = vector.shape_cast %144 : vector<1x8x8x128xbf16> to vector<8x8x128xbf16>
    %146 = vector.shape_cast %143 : vector<8x8x128xbf16> to vector<1x8x8x128xbf16>
    tpu.vector_store %arg9[%c0_133, %c0_134, %c0_135, %c0_136], %146 {strides = array<i32>} : memref<1x8x8x128xbf16, #tpu.memory_space<vmem>>, vector<1x8x8x128xbf16>,
    %cst_137 = arith.constant dense<0.000000e+00> : vector<128xf32>
    %147 = vector.multi_reduction <add>, %141, %cst_137 [0] : vector<64x128xf32> to vector<128xf32>
    %148 = vector.shape_cast %147 : vector<128xf32> to vector<1x128xf32>
    %c0_138 = arith.constant 0 : index
    %c0_139 = arith.constant 0 : index
    %c0_140 = arith.constant 0 : index
    %c0_141 = arith.constant 0 : index
    %149 = vector.load %arg10[%c0_138, %c0_139, %c0_140, %c0_141] : memref<1x1x2x128xf32, #tpu.memory_space<vmem>>, vector<1x1x1x128xf32>
    %150 = vector.shape_cast %149 : vector<1x1x1x128xf32> to vector<1x128xf32>
    %151 = vector.shape_cast %148 : vector<1x128xf32> to vector<1x1x1x128xf32>
    tpu.vector_store %arg10[%c0_138, %c0_139, %c0_140, %c0_141], %151 {strides = array<i32>} : memref<1x1x2x128xf32, #tpu.memory_space<vmem>>, vector<1x1x1x128xf32>,
    %152 = arith.mulf %141, %141 : vector<64x128xf32>
    %cst_142 = arith.constant dense<0.000000e+00> : vector<128xf32>
    %153 = vector.multi_reduction <add>, %152, %cst_142 [0] : vector<64x128xf32> to vector<128xf32>
    %154 = vector.shape_cast %153 : vector<128xf32> to vector<1x128xf32>
    %c0_143 = arith.constant 0 : index
    %c0_144 = arith.constant 0 : index
    %c1_145 = arith.constant 1 : index
    %c0_146 = arith.constant 0 : index
    %155 = vector.load %arg10[%c0_143, %c0_144, %c1_145, %c0_146] : memref<1x1x2x128xf32, #tpu.memory_space<vmem>>, vector<1x1x1x128xf32>
    %156 = vector.shape_cast %155 : vector<1x1x1x128xf32> to vector<1x128xf32>
    %157 = vector.shape_cast %154 : vector<1x128xf32> to vector<1x1x1x128xf32>
    tpu.vector_store %arg10[%c0_143, %c0_144, %c1_145, %c0_146], %157 {strides = array<i32>} : memref<1x1x2x128xf32, #tpu.memory_space<vmem>>, vector<1x1x1x128xf32>,
    return
  }
  func.func @transform_0(%arg0: i32, %arg1: i32) -> (i32, i32) {
    %c0_i32 = arith.constant 0 : i32
    %c0_i32_0 = arith.constant 0 : i32
    %c0_i32_1 = arith.constant 0 : i32
    return %c0_i32, %c0_i32_0 : i32, i32
  }
  func.func @transform_1(%arg0: i32, %arg1: i32) -> (i32, i32) {
    %c0_i32 = arith.constant 0 : i32
    %c0_i32_0 = arith.constant 0 : i32
    %c0_i32_1 = arith.constant 0 : i32
    return %c0_i32, %c0_i32_0 : i32, i32
  }
  func.func @transform_2(%arg0: i32, %arg1: i32) -> (i32, i32, i32, i32) {
    %c0_i32 = arith.constant 0 : i32
    %c0_i32_0 = arith.constant 0 : i32
    %c0_i32_1 = arith.constant 0 : i32
    return %arg0, %arg1, %c0_i32, %c0_i32_0 : i32, i32, i32, i32
  }
  func.func @transform_3(%arg0: i32, %arg1: i32) -> (i32, i32, i32, i32) {
    %c8_i32 = arith.constant 8 : i32
    %0 = arith.muli %arg1, %c8_i32 : i32
    %c1_i32 = arith.constant 1 : i32
    %1 = arith.subi %0, %c1_i32 : i32
    %c0_i32 = arith.constant 0 : i32
    %2 = arith.maxsi %1, %c0_i32 : i32
    %c0_i32_0 = arith.constant 0 : i32
    %c0_i32_1 = arith.constant 0 : i32
    %c0_i32_2 = arith.constant 0 : i32
    return %arg0, %2, %c0_i32_0, %c0_i32_1 : i32, i32, i32, i32
  }
  func.func @transform_4(%arg0: i32, %arg1: i32) -> (i32, i32, i32, i32) {
    %c8_i32 = arith.constant 8 : i32
    %0 = arith.muli %arg1, %c8_i32 : i32
    %c8_i32_0 = arith.constant 8 : i32
    %1 = arith.addi %0, %c8_i32_0 : i32
    %c7_i32 = arith.constant 7 : i32
    %2 = arith.minsi %1, %c7_i32 : i32
    %c0_i32 = arith.constant 0 : i32
    %c0_i32_1 = arith.constant 0 : i32
    %c0_i32_2 = arith.constant 0 : i32
    return %arg0, %2, %c0_i32, %c0_i32_1 : i32, i32, i32, i32
  }
  func.func @transform_5(%arg0: i32, %arg1: i32) -> (i32, i32, i32, i32) {
    %c0_i32 = arith.constant 0 : i32
    %c0_i32_0 = arith.constant 0 : i32
    %c0_i32_1 = arith.constant 0 : i32
    %c0_i32_2 = arith.constant 0 : i32
    %c0_i32_3 = arith.constant 0 : i32
    return %c0_i32, %c0_i32_0, %c0_i32_1, %c0_i32_2 : i32, i32, i32, i32
  }
  func.func @transform_6(%arg0: i32, %arg1: i32) -> (i32, i32) {
    %c0_i32 = arith.constant 0 : i32
    %c0_i32_0 = arith.constant 0 : i32
    %c0_i32_1 = arith.constant 0 : i32
    return %c0_i32, %c0_i32_0 : i32, i32
  }
  func.func @transform_7(%arg0: i32, %arg1: i32) -> (i32, i32, i32, i32) {
    %c0_i32 = arith.constant 0 : i32
    %c0_i32_0 = arith.constant 0 : i32
    %c0_i32_1 = arith.constant 0 : i32
    return %arg0, %arg1, %c0_i32, %c0_i32_0 : i32, i32, i32, i32
  }
  func.func @transform_8(%arg0: i32, %arg1: i32) -> (i32, i32, i32, i32) {
    %c0_i32 = arith.constant 0 : i32
    %c0_i32_0 = arith.constant 0 : i32
    %c0_i32_1 = arith.constant 0 : i32
    return %arg0, %arg1, %c0_i32, %c0_i32_0 : i32, i32, i32, i32
  }
}

module attributes {stable_mosaic.version = 11 : i64} {
  func.func @_conv3d_kernel(%arg0: i32, %arg1: i32, %arg2: memref<1x128xf32, #tpu.memory_space<vmem>>, %arg3: memref<1x128xf32, #tpu.memory_space<vmem>>, %arg4: memref<1x8x8x128xbf16, #tpu.memory_space<vmem>>, %arg5: memref<1x1x8x128xbf16, #tpu.memory_space<vmem>>, %arg6: memref<1x1x8x128xbf16, #tpu.memory_space<vmem>>, %arg7: memref<3x3x128x128xbf16, #tpu.memory_space<vmem>>, %arg8: memref<1x128xf32, #tpu.memory_space<vmem>>, %arg9: memref<1x8x8x128xbf16, #tpu.memory_space<vmem>>, %arg10: memref<1x1x2x128xf32, #tpu.memory_space<vmem>>, %arg11: memref<10x8x128xf32, #tpu.memory_space<vmem>>, %arg12: memref<3x64x128xf32, #tpu.memory_space<vmem>>) attributes {dimension_semantics = [#tpu.dimension_semantics<parallel>, #tpu.dimension_semantics<parallel>], iteration_bounds = array<i64: 2, 1>, scalar_prefetch = 0 : i64, scratch_operands = 2 : i64, tpu.core_type = #tpu.core_type<tc>, window_params = [{pipeline_mode = #tpu.pipeline_mode<synchronous>, transform_indices = @transform_0, window_bounds = array<i64: 1, 128>}, {pipeline_mode = #tpu.pipeline_mode<synchronous>, transform_indices = @transform_1, window_bounds = array<i64: 1, 128>}, {transform_indices = @transform_2, window_bounds = array<i64: 1, 8, 8, 128>}, {transform_indices = @transform_3, window_bounds = array<i64: 1, 1, 8, 128>}, {transform_indices = @transform_4, window_bounds = array<i64: 1, 1, 8, 128>}, {pipeline_mode = #tpu.pipeline_mode<synchronous>, transform_indices = @transform_5, window_bounds = array<i64: 3, 3, 128, 128>}, {pipeline_mode = #tpu.pipeline_mode<synchronous>, transform_indices = @transform_6, window_bounds = array<i64: 1, 128>}, {transform_indices = @transform_7, window_bounds = array<i64: 1, 8, 8, 128>}, {transform_indices = @transform_8, window_bounds = array<i64: 1, 1, 2, 128>}]} {
    %c0 = arith.constant 0 : index
    %c0_0 = arith.constant 0 : index
    %c0_1 = arith.constant 0 : index
    %c0_2 = arith.constant 0 : index
    %0 = vector.load %arg4[%c0, %c0_0, %c0_1, %c0_2] : memref<1x8x8x128xbf16, #tpu.memory_space<vmem>>, vector<1x8x8x128xbf16>
    %1 = vector.shape_cast %0 : vector<1x8x8x128xbf16> to vector<8x8x128xbf16>
    %2 = arith.extf %1 : vector<8x8x128xbf16> to vector<8x8x128xf32>
    %c0_3 = arith.constant 0 : index
    %c0_4 = arith.constant 0 : index
    %3 = vector.load %arg2[%c0_3, %c0_4] : memref<1x128xf32, #tpu.memory_space<vmem>>, vector<1x128xf32>
    %4 = vector.shape_cast %3 : vector<1x128xf32> to vector<1x1x128xf32>
    %5 = vector.broadcast %4 : vector<1x1x128xf32> to vector<8x8x128xf32>
    %6 = arith.mulf %2, %5 : vector<8x8x128xf32>
    %c0_5 = arith.constant 0 : index
    %c0_6 = arith.constant 0 : index
    %7 = vector.load %arg3[%c0_5, %c0_6] : memref<1x128xf32, #tpu.memory_space<vmem>>, vector<1x128xf32>
    %8 = vector.shape_cast %7 : vector<1x128xf32> to vector<1x1x128xf32>
    %9 = vector.broadcast %8 : vector<1x1x128xf32> to vector<8x8x128xf32>
    %10 = arith.addf %6, %9 : vector<8x8x128xf32>
    %cst = arith.constant 0.000000e+00 : f32
    %11 = vector.broadcast %cst : f32 to vector<8x8x128xf32>
    %12 = arith.cmpf ogt, %10, %11 : vector<8x8x128xf32>
    %cst_7 = arith.constant 2.000000e-01 : f32
    %13 = vector.broadcast %cst_7 : f32 to vector<8x8x128xf32>
    %14 = arith.mulf %13, %10 : vector<8x8x128xf32>
    %15 = arith.select %12, %10, %14 : vector<8x8x128xi1>, vector<8x8x128xf32>
    %c1 = arith.constant 1 : index
    %c0_8 = arith.constant 0 : index
    %c0_9 = arith.constant 0 : index
    %16 = vector.load %arg11[%c1, %c0_8, %c0_9] : memref<10x8x128xf32, #tpu.memory_space<vmem>>, vector<8x8x128xf32>
    tpu.vector_store %arg11[%c1, %c0_8, %c0_9], %15 {strides = array<i32>} : memref<10x8x128xf32, #tpu.memory_space<vmem>>, vector<8x8x128xf32>,
    %c0_i32 = arith.constant 0 : i32
    %17 = arith.cmpi sgt, %arg1, %c0_i32 : i32
    %18 = arith.extui %17 : i1 to i32
    %19 = arith.sitofp %18 : i32 to f32
    %c0_i32_10 = arith.constant 0 : i32
    %20 = arith.cmpi slt, %arg1, %c0_i32_10 : i32
    %21 = arith.extui %20 : i1 to i32
    %22 = arith.sitofp %21 : i32 to f32
    %c0_11 = arith.constant 0 : index
    %c0_12 = arith.constant 0 : index
    %c0_13 = arith.constant 0 : index
    %c0_14 = arith.constant 0 : index
    %23 = vector.load %arg5[%c0_11, %c0_12, %c0_13, %c0_14] : memref<1x1x8x128xbf16, #tpu.memory_space<vmem>>, vector<1x1x8x128xbf16>
    %24 = vector.shape_cast %23 : vector<1x1x8x128xbf16> to vector<1x8x128xbf16>
    %25 = arith.extf %24 : vector<1x8x128xbf16> to vector<1x8x128xf32>
    %c0_15 = arith.constant 0 : index
    %c0_16 = arith.constant 0 : index
    %26 = vector.load %arg2[%c0_15, %c0_16] : memref<1x128xf32, #tpu.memory_space<vmem>>, vector<1x128xf32>
    %27 = vector.shape_cast %26 : vector<1x128xf32> to vector<1x1x128xf32>
    %28 = vector.broadcast %27 : vector<1x1x128xf32> to vector<1x8x128xf32>
    %29 = arith.mulf %25, %28 : vector<1x8x128xf32>
    %c0_17 = arith.constant 0 : index
    %c0_18 = arith.constant 0 : index
    %30 = vector.load %arg3[%c0_17, %c0_18] : memref<1x128xf32, #tpu.memory_space<vmem>>, vector<1x128xf32>
    %31 = vector.shape_cast %30 : vector<1x128xf32> to vector<1x1x128xf32>
    %32 = vector.broadcast %31 : vector<1x1x128xf32> to vector<1x8x128xf32>
    %33 = arith.addf %29, %32 : vector<1x8x128xf32>
    %cst_19 = arith.constant 0.000000e+00 : f32
    %34 = vector.broadcast %cst_19 : f32 to vector<1x8x128xf32>
    %35 = arith.cmpf ogt, %33, %34 : vector<1x8x128xf32>
    %cst_20 = arith.constant 2.000000e-01 : f32
    %36 = vector.broadcast %cst_20 : f32 to vector<1x8x128xf32>
    %37 = arith.mulf %36, %33 : vector<1x8x128xf32>
    %38 = arith.select %35, %33, %37 : vector<1x8x128xi1>, vector<1x8x128xf32>
    %39 = vector.broadcast %19 : f32 to vector<1x8x128xf32>
    %40 = arith.mulf %38, %39 : vector<1x8x128xf32>
    %c0_21 = arith.constant 0 : index
    %c0_22 = arith.constant 0 : index
    %c0_23 = arith.constant 0 : index
    %41 = vector.load %arg11[%c0_21, %c0_22, %c0_23] : memref<10x8x128xf32, #tpu.memory_space<vmem>>, vector<1x8x128xf32>
    tpu.vector_store %arg11[%c0_21, %c0_22, %c0_23], %40 {strides = array<i32>} : memref<10x8x128xf32, #tpu.memory_space<vmem>>, vector<1x8x128xf32>,
    %c0_24 = arith.constant 0 : index
    %c0_25 = arith.constant 0 : index
    %c0_26 = arith.constant 0 : index
    %c0_27 = arith.constant 0 : index
    %42 = vector.load %arg6[%c0_24, %c0_25, %c0_26, %c0_27] : memref<1x1x8x128xbf16, #tpu.memory_space<vmem>>, vector<1x1x8x128xbf16>
    %43 = vector.shape_cast %42 : vector<1x1x8x128xbf16> to vector<1x8x128xbf16>
    %44 = arith.extf %43 : vector<1x8x128xbf16> to vector<1x8x128xf32>
    %c0_28 = arith.constant 0 : index
    %c0_29 = arith.constant 0 : index
    %45 = vector.load %arg2[%c0_28, %c0_29] : memref<1x128xf32, #tpu.memory_space<vmem>>, vector<1x128xf32>
    %46 = vector.shape_cast %45 : vector<1x128xf32> to vector<1x1x128xf32>
    %47 = vector.broadcast %46 : vector<1x1x128xf32> to vector<1x8x128xf32>
    %48 = arith.mulf %44, %47 : vector<1x8x128xf32>
    %c0_30 = arith.constant 0 : index
    %c0_31 = arith.constant 0 : index
    %49 = vector.load %arg3[%c0_30, %c0_31] : memref<1x128xf32, #tpu.memory_space<vmem>>, vector<1x128xf32>
    %50 = vector.shape_cast %49 : vector<1x128xf32> to vector<1x1x128xf32>
    %51 = vector.broadcast %50 : vector<1x1x128xf32> to vector<1x8x128xf32>
    %52 = arith.addf %48, %51 : vector<1x8x128xf32>
    %cst_32 = arith.constant 0.000000e+00 : f32
    %53 = vector.broadcast %cst_32 : f32 to vector<1x8x128xf32>
    %54 = arith.cmpf ogt, %52, %53 : vector<1x8x128xf32>
    %cst_33 = arith.constant 2.000000e-01 : f32
    %55 = vector.broadcast %cst_33 : f32 to vector<1x8x128xf32>
    %56 = arith.mulf %55, %52 : vector<1x8x128xf32>
    %57 = arith.select %54, %52, %56 : vector<1x8x128xi1>, vector<1x8x128xf32>
    %58 = vector.broadcast %22 : f32 to vector<1x8x128xf32>
    %59 = arith.mulf %57, %58 : vector<1x8x128xf32>
    %c9 = arith.constant 9 : index
    %c0_34 = arith.constant 0 : index
    %c0_35 = arith.constant 0 : index
    %60 = vector.load %arg11[%c9, %c0_34, %c0_35] : memref<10x8x128xf32, #tpu.memory_space<vmem>>, vector<1x8x128xf32>
    tpu.vector_store %arg11[%c9, %c0_34, %c0_35], %59 {strides = array<i32>} : memref<10x8x128xf32, #tpu.memory_space<vmem>>, vector<1x8x128xf32>,
    %c0_36 = arith.constant 0 : index
    %c0_37 = arith.constant 0 : index
    %c0_38 = arith.constant 0 : index
    %61 = vector.load %arg11[%c0_36, %c0_37, %c0_38] : memref<10x8x128xf32, #tpu.memory_space<vmem>>, vector<8x8x128xf32>
    %62 = vector.shape_cast %61 : vector<8x8x128xf32> to vector<64x128xf32>
    %63 = arith.truncf %62 : vector<64x128xf32> to vector<64x128xbf16>
    %c0_39 = arith.constant 0 : index
    %c0_40 = arith.constant 0 : index
    %c0_41 = arith.constant 0 : index
    %c0_42 = arith.constant 0 : index
    %64 = vector.load %arg7[%c0_39, %c0_40, %c0_41, %c0_42] : memref<3x3x128x128xbf16, #tpu.memory_space<vmem>>, vector<1x1x128x128xbf16>
    %65 = vector.shape_cast %64 : vector<1x1x128x128xbf16> to vector<128x128xbf16>
    %cst_43 = arith.constant dense<0.000000e+00> : vector<64x128xf32>
    %66 = tpu.matmul %63, %65, %cst_43 {dimension_numbers = #tpu.dot_dimension_numbers<[1], [0], [0], [1], [0, 0, 1, 1], [], []>} : vector<64x128xbf16>, vector<128x128xbf16>, vector<64x128xf32> -> vector<64x128xf32>
    %c0_44 = arith.constant 0 : index
    %c0_45 = arith.constant 0 : index
    %c0_46 = arith.constant 0 : index
    %67 = vector.load %arg12[%c0_44, %c0_45, %c0_46] : memref<3x64x128xf32, #tpu.memory_space<vmem>>, vector<1x64x128xf32>
    %68 = vector.shape_cast %67 : vector<1x64x128xf32> to vector<64x128xf32>
    %69 = vector.shape_cast %66 : vector<64x128xf32> to vector<1x64x128xf32>
    tpu.vector_store %arg12[%c0_44, %c0_45, %c0_46], %69 {strides = array<i32>} : memref<3x64x128xf32, #tpu.memory_space<vmem>>, vector<1x64x128xf32>,
    %c0_47 = arith.constant 0 : index
    %c1_48 = arith.constant 1 : index
    %c0_49 = arith.constant 0 : index
    %c0_50 = arith.constant 0 : index
    %70 = vector.load %arg7[%c0_47, %c1_48, %c0_49, %c0_50] : memref<3x3x128x128xbf16, #tpu.memory_space<vmem>>, vector<1x1x128x128xbf16>
    %71 = vector.shape_cast %70 : vector<1x1x128x128xbf16> to vector<128x128xbf16>
    %cst_51 = arith.constant dense<0.000000e+00> : vector<64x128xf32>
    %72 = tpu.matmul %63, %71, %cst_51 {dimension_numbers = #tpu.dot_dimension_numbers<[1], [0], [0], [1], [0, 0, 1, 1], [], []>} : vector<64x128xbf16>, vector<128x128xbf16>, vector<64x128xf32> -> vector<64x128xf32>
    %c1_52 = arith.constant 1 : index
    %c0_53 = arith.constant 0 : index
    %c0_54 = arith.constant 0 : index
    %73 = vector.load %arg12[%c1_52, %c0_53, %c0_54] : memref<3x64x128xf32, #tpu.memory_space<vmem>>, vector<1x64x128xf32>
    %74 = vector.shape_cast %73 : vector<1x64x128xf32> to vector<64x128xf32>
    %75 = vector.shape_cast %72 : vector<64x128xf32> to vector<1x64x128xf32>
    tpu.vector_store %arg12[%c1_52, %c0_53, %c0_54], %75 {strides = array<i32>} : memref<3x64x128xf32, #tpu.memory_space<vmem>>, vector<1x64x128xf32>,
    %c0_55 = arith.constant 0 : index
    %c2 = arith.constant 2 : index
    %c0_56 = arith.constant 0 : index
    %c0_57 = arith.constant 0 : index
    %76 = vector.load %arg7[%c0_55, %c2, %c0_56, %c0_57] : memref<3x3x128x128xbf16, #tpu.memory_space<vmem>>, vector<1x1x128x128xbf16>
    %77 = vector.shape_cast %76 : vector<1x1x128x128xbf16> to vector<128x128xbf16>
    %cst_58 = arith.constant dense<0.000000e+00> : vector<64x128xf32>
    %78 = tpu.matmul %63, %77, %cst_58 {dimension_numbers = #tpu.dot_dimension_numbers<[1], [0], [0], [1], [0, 0, 1, 1], [], []>} : vector<64x128xbf16>, vector<128x128xbf16>, vector<64x128xf32> -> vector<64x128xf32>
    %c2_59 = arith.constant 2 : index
    %c0_60 = arith.constant 0 : index
    %c0_61 = arith.constant 0 : index
    %79 = vector.load %arg12[%c2_59, %c0_60, %c0_61] : memref<3x64x128xf32, #tpu.memory_space<vmem>>, vector<1x64x128xf32>
    %80 = vector.shape_cast %79 : vector<1x64x128xf32> to vector<64x128xf32>
    %81 = vector.shape_cast %78 : vector<64x128xf32> to vector<1x64x128xf32>
    tpu.vector_store %arg12[%c2_59, %c0_60, %c0_61], %81 {strides = array<i32>} : memref<3x64x128xf32, #tpu.memory_space<vmem>>, vector<1x64x128xf32>,
    %c1_62 = arith.constant 1 : index
    %c0_63 = arith.constant 0 : index
    %c0_64 = arith.constant 0 : index
    %82 = vector.load %arg11[%c1_62, %c0_63, %c0_64] : memref<10x8x128xf32, #tpu.memory_space<vmem>>, vector<8x8x128xf32>
    %83 = vector.shape_cast %82 : vector<8x8x128xf32> to vector<64x128xf32>
    %84 = arith.truncf %83 : vector<64x128xf32> to vector<64x128xbf16>
    %c1_65 = arith.constant 1 : index
    %c0_66 = arith.constant 0 : index
    %c0_67 = arith.constant 0 : index
    %c0_68 = arith.constant 0 : index
    %85 = vector.load %arg7[%c1_65, %c0_66, %c0_67, %c0_68] : memref<3x3x128x128xbf16, #tpu.memory_space<vmem>>, vector<1x1x128x128xbf16>
    %86 = vector.shape_cast %85 : vector<1x1x128x128xbf16> to vector<128x128xbf16>
    %cst_69 = arith.constant dense<0.000000e+00> : vector<64x128xf32>
    %87 = tpu.matmul %84, %86, %cst_69 {dimension_numbers = #tpu.dot_dimension_numbers<[1], [0], [0], [1], [0, 0, 1, 1], [], []>} : vector<64x128xbf16>, vector<128x128xbf16>, vector<64x128xf32> -> vector<64x128xf32>
    %c0_70 = arith.constant 0 : index
    %c0_71 = arith.constant 0 : index
    %c0_72 = arith.constant 0 : index
    %88 = vector.load %arg12[%c0_70, %c0_71, %c0_72] : memref<3x64x128xf32, #tpu.memory_space<vmem>>, vector<1x64x128xf32>
    %89 = vector.shape_cast %88 : vector<1x64x128xf32> to vector<64x128xf32>
    %90 = arith.addf %89, %87 : vector<64x128xf32>
    %c0_73 = arith.constant 0 : index
    %c0_74 = arith.constant 0 : index
    %c0_75 = arith.constant 0 : index
    %91 = vector.load %arg12[%c0_73, %c0_74, %c0_75] : memref<3x64x128xf32, #tpu.memory_space<vmem>>, vector<1x64x128xf32>
    %92 = vector.shape_cast %91 : vector<1x64x128xf32> to vector<64x128xf32>
    %93 = vector.shape_cast %90 : vector<64x128xf32> to vector<1x64x128xf32>
    tpu.vector_store %arg12[%c0_73, %c0_74, %c0_75], %93 {strides = array<i32>} : memref<3x64x128xf32, #tpu.memory_space<vmem>>, vector<1x64x128xf32>,
    %c1_76 = arith.constant 1 : index
    %c1_77 = arith.constant 1 : index
    %c0_78 = arith.constant 0 : index
    %c0_79 = arith.constant 0 : index
    %94 = vector.load %arg7[%c1_76, %c1_77, %c0_78, %c0_79] : memref<3x3x128x128xbf16, #tpu.memory_space<vmem>>, vector<1x1x128x128xbf16>
    %95 = vector.shape_cast %94 : vector<1x1x128x128xbf16> to vector<128x128xbf16>
    %cst_80 = arith.constant dense<0.000000e+00> : vector<64x128xf32>
    %96 = tpu.matmul %84, %95, %cst_80 {dimension_numbers = #tpu.dot_dimension_numbers<[1], [0], [0], [1], [0, 0, 1, 1], [], []>} : vector<64x128xbf16>, vector<128x128xbf16>, vector<64x128xf32> -> vector<64x128xf32>
    %c1_81 = arith.constant 1 : index
    %c0_82 = arith.constant 0 : index
    %c0_83 = arith.constant 0 : index
    %97 = vector.load %arg12[%c1_81, %c0_82, %c0_83] : memref<3x64x128xf32, #tpu.memory_space<vmem>>, vector<1x64x128xf32>
    %98 = vector.shape_cast %97 : vector<1x64x128xf32> to vector<64x128xf32>
    %99 = arith.addf %98, %96 : vector<64x128xf32>
    %c1_84 = arith.constant 1 : index
    %c0_85 = arith.constant 0 : index
    %c0_86 = arith.constant 0 : index
    %100 = vector.load %arg12[%c1_84, %c0_85, %c0_86] : memref<3x64x128xf32, #tpu.memory_space<vmem>>, vector<1x64x128xf32>
    %101 = vector.shape_cast %100 : vector<1x64x128xf32> to vector<64x128xf32>
    %102 = vector.shape_cast %99 : vector<64x128xf32> to vector<1x64x128xf32>
    tpu.vector_store %arg12[%c1_84, %c0_85, %c0_86], %102 {strides = array<i32>} : memref<3x64x128xf32, #tpu.memory_space<vmem>>, vector<1x64x128xf32>,
    %c1_87 = arith.constant 1 : index
    %c2_88 = arith.constant 2 : index
    %c0_89 = arith.constant 0 : index
    %c0_90 = arith.constant 0 : index
    %103 = vector.load %arg7[%c1_87, %c2_88, %c0_89, %c0_90] : memref<3x3x128x128xbf16, #tpu.memory_space<vmem>>, vector<1x1x128x128xbf16>
    %104 = vector.shape_cast %103 : vector<1x1x128x128xbf16> to vector<128x128xbf16>
    %cst_91 = arith.constant dense<0.000000e+00> : vector<64x128xf32>
    %105 = tpu.matmul %84, %104, %cst_91 {dimension_numbers = #tpu.dot_dimension_numbers<[1], [0], [0], [1], [0, 0, 1, 1], [], []>} : vector<64x128xbf16>, vector<128x128xbf16>, vector<64x128xf32> -> vector<64x128xf32>
    %c2_92 = arith.constant 2 : index
    %c0_93 = arith.constant 0 : index
    %c0_94 = arith.constant 0 : index
    %106 = vector.load %arg12[%c2_92, %c0_93, %c0_94] : memref<3x64x128xf32, #tpu.memory_space<vmem>>, vector<1x64x128xf32>
    %107 = vector.shape_cast %106 : vector<1x64x128xf32> to vector<64x128xf32>
    %108 = arith.addf %107, %105 : vector<64x128xf32>
    %c2_95 = arith.constant 2 : index
    %c0_96 = arith.constant 0 : index
    %c0_97 = arith.constant 0 : index
    %109 = vector.load %arg12[%c2_95, %c0_96, %c0_97] : memref<3x64x128xf32, #tpu.memory_space<vmem>>, vector<1x64x128xf32>
    %110 = vector.shape_cast %109 : vector<1x64x128xf32> to vector<64x128xf32>
    %111 = vector.shape_cast %108 : vector<64x128xf32> to vector<1x64x128xf32>
    tpu.vector_store %arg12[%c2_95, %c0_96, %c0_97], %111 {strides = array<i32>} : memref<3x64x128xf32, #tpu.memory_space<vmem>>, vector<1x64x128xf32>,
    %c2_98 = arith.constant 2 : index
    %c0_99 = arith.constant 0 : index
    %c0_100 = arith.constant 0 : index
    %112 = vector.load %arg11[%c2_98, %c0_99, %c0_100] : memref<10x8x128xf32, #tpu.memory_space<vmem>>, vector<8x8x128xf32>
    %113 = vector.shape_cast %112 : vector<8x8x128xf32> to vector<64x128xf32>
    %114 = arith.truncf %113 : vector<64x128xf32> to vector<64x128xbf16>
    %c2_101 = arith.constant 2 : index
    %c0_102 = arith.constant 0 : index
    %c0_103 = arith.constant 0 : index
    %c0_104 = arith.constant 0 : index
    %115 = vector.load %arg7[%c2_101, %c0_102, %c0_103, %c0_104] : memref<3x3x128x128xbf16, #tpu.memory_space<vmem>>, vector<1x1x128x128xbf16>
    %116 = vector.shape_cast %115 : vector<1x1x128x128xbf16> to vector<128x128xbf16>
    %cst_105 = arith.constant dense<0.000000e+00> : vector<64x128xf32>
    %117 = tpu.matmul %114, %116, %cst_105 {dimension_numbers = #tpu.dot_dimension_numbers<[1], [0], [0], [1], [0, 0, 1, 1], [], []>} : vector<64x128xbf16>, vector<128x128xbf16>, vector<64x128xf32> -> vector<64x128xf32>
    %c0_106 = arith.constant 0 : index
    %c0_107 = arith.constant 0 : index
    %c0_108 = arith.constant 0 : index
    %118 = vector.load %arg12[%c0_106, %c0_107, %c0_108] : memref<3x64x128xf32, #tpu.memory_space<vmem>>, vector<1x64x128xf32>
    %119 = vector.shape_cast %118 : vector<1x64x128xf32> to vector<64x128xf32>
    %120 = arith.addf %119, %117 : vector<64x128xf32>
    %c0_109 = arith.constant 0 : index
    %c0_110 = arith.constant 0 : index
    %c0_111 = arith.constant 0 : index
    %121 = vector.load %arg12[%c0_109, %c0_110, %c0_111] : memref<3x64x128xf32, #tpu.memory_space<vmem>>, vector<1x64x128xf32>
    %122 = vector.shape_cast %121 : vector<1x64x128xf32> to vector<64x128xf32>
    %123 = vector.shape_cast %120 : vector<64x128xf32> to vector<1x64x128xf32>
    tpu.vector_store %arg12[%c0_109, %c0_110, %c0_111], %123 {strides = array<i32>} : memref<3x64x128xf32, #tpu.memory_space<vmem>>, vector<1x64x128xf32>,
    %c2_112 = arith.constant 2 : index
    %c1_113 = arith.constant 1 : index
    %c0_114 = arith.constant 0 : index
    %c0_115 = arith.constant 0 : index
    %124 = vector.load %arg7[%c2_112, %c1_113, %c0_114, %c0_115] : memref<3x3x128x128xbf16, #tpu.memory_space<vmem>>, vector<1x1x128x128xbf16>
    %125 = vector.shape_cast %124 : vector<1x1x128x128xbf16> to vector<128x128xbf16>
    %cst_116 = arith.constant dense<0.000000e+00> : vector<64x128xf32>
    %126 = tpu.matmul %114, %125, %cst_116 {dimension_numbers = #tpu.dot_dimension_numbers<[1], [0], [0], [1], [0, 0, 1, 1], [], []>} : vector<64x128xbf16>, vector<128x128xbf16>, vector<64x128xf32> -> vector<64x128xf32>
    %c1_117 = arith.constant 1 : index
    %c0_118 = arith.constant 0 : index
    %c0_119 = arith.constant 0 : index
    %127 = vector.load %arg12[%c1_117, %c0_118, %c0_119] : memref<3x64x128xf32, #tpu.memory_space<vmem>>, vector<1x64x128xf32>
    %128 = vector.shape_cast %127 : vector<1x64x128xf32> to vector<64x128xf32>
    %129 = arith.addf %128, %126 : vector<64x128xf32>
    %c1_120 = arith.constant 1 : index
    %c0_121 = arith.constant 0 : index
    %c0_122 = arith.constant 0 : index
    %130 = vector.load %arg12[%c1_120, %c0_121, %c0_122] : memref<3x64x128xf32, #tpu.memory_space<vmem>>, vector<1x64x128xf32>
    %131 = vector.shape_cast %130 : vector<1x64x128xf32> to vector<64x128xf32>
    %132 = vector.shape_cast %129 : vector<64x128xf32> to vector<1x64x128xf32>
    tpu.vector_store %arg12[%c1_120, %c0_121, %c0_122], %132 {strides = array<i32>} : memref<3x64x128xf32, #tpu.memory_space<vmem>>, vector<1x64x128xf32>,
    %c2_123 = arith.constant 2 : index
    %c2_124 = arith.constant 2 : index
    %c0_125 = arith.constant 0 : index
    %c0_126 = arith.constant 0 : index
    %133 = vector.load %arg7[%c2_123, %c2_124, %c0_125, %c0_126] : memref<3x3x128x128xbf16, #tpu.memory_space<vmem>>, vector<1x1x128x128xbf16>
    %134 = vector.shape_cast %133 : vector<1x1x128x128xbf16> to vector<128x128xbf16>
    %cst_127 = arith.constant dense<0.000000e+00> : vector<64x128xf32>
    %135 = tpu.matmul %114, %134, %cst_127 {dimension_numbers = #tpu.dot_dimension_numbers<[1], [0], [0], [1], [0, 0, 1, 1], [], []>} : vector<64x128xbf16>, vector<128x128xbf16>, vector<64x128xf32> -> vector<64x128xf32>
    %c2_128 = arith.constant 2 : index
    %c0_129 = arith.constant 0 : index
    %c0_130 = arith.constant 0 : index
    %136 = vector.load %arg12[%c2_128, %c0_129, %c0_130] : memref<3x64x128xf32, #tpu.memory_space<vmem>>, vector<1x64x128xf32>
    %137 = vector.shape_cast %136 : vector<1x64x128xf32> to vector<64x128xf32>
    %138 = arith.addf %137, %135 : vector<64x128xf32>
    %c2_131 = arith.constant 2 : index
    %c0_132 = arith.constant 0 : index
    %c0_133 = arith.constant 0 : index
    %139 = vector.load %arg12[%c2_131, %c0_132, %c0_133] : memref<3x64x128xf32, #tpu.memory_space<vmem>>, vector<1x64x128xf32>
    %140 = vector.shape_cast %139 : vector<1x64x128xf32> to vector<64x128xf32>
    %141 = vector.shape_cast %138 : vector<64x128xf32> to vector<1x64x128xf32>
    tpu.vector_store %arg12[%c2_131, %c0_132, %c0_133], %141 {strides = array<i32>} : memref<3x64x128xf32, #tpu.memory_space<vmem>>, vector<1x64x128xf32>,
    %142 = tpu.iota {dimensions = array<i32: 0>} : vector<64x1xi32>
    %c8_i32 = arith.constant 8 : i32
    %c0_i32_134 = arith.constant 0 : i32
    %143 = arith.cmpi eq, %c8_i32, %c0_i32_134 : i32
    %c1_i32 = arith.constant 1 : i32
    %144 = arith.select %143, %c1_i32, %c8_i32 : i32
    %145 = vector.broadcast %144 : i32 to vector<64x1xi32>
    %146 = arith.remsi %142, %145 : vector<64x1xi32>
    %c0_i32_135 = arith.constant 0 : i32
    %147 = vector.broadcast %c0_i32_135 : i32 to vector<64x1xi32>
    %148 = arith.cmpi ne, %146, %147 : vector<64x1xi32>
    %c0_i32_136 = arith.constant 0 : i32
    %149 = vector.broadcast %c0_i32_136 : i32 to vector<64x1xi32>
    %150 = arith.cmpi slt, %146, %149 : vector<64x1xi32>
    %c0_i32_137 = arith.constant 0 : i32
    %151 = arith.cmpi slt, %144, %c0_i32_137 : i32
    %152 = vector.broadcast %151 : i1 to vector<64x1xi1>
    %153 = vector.broadcast %152 : vector<64x1xi1> to vector<64x1xi1>
    %154 = arith.xori %150, %153 : vector<64x1xi1>
    %155 = arith.andi %154, %148 : vector<64x1xi1>
    %156 = vector.broadcast %144 : i32 to vector<64x1xi32>
    %157 = arith.addi %146, %156 : vector<64x1xi32>
    %158 = arith.select %155, %157, %146 : vector<64x1xi1>, vector<64x1xi32>
    %c0_i32_138 = arith.constant 0 : i32
    %159 = vector.broadcast %c0_i32_138 : i32 to vector<64x1xi32>
    %160 = arith.cmpi ne, %158, %159 : vector<64x1xi32>
    %161 = arith.extui %160 : vector<64x1xi1> to vector<64x1xi32>
    %162 = arith.sitofp %161 : vector<64x1xi32> to vector<64x1xf32>
    %c7_i32 = arith.constant 7 : i32
    %163 = vector.broadcast %c7_i32 : i32 to vector<64x1xi32>
    %164 = arith.cmpi ne, %158, %163 : vector<64x1xi32>
    %165 = arith.extui %164 : vector<64x1xi1> to vector<64x1xi32>
    %166 = arith.sitofp %165 : vector<64x1xi32> to vector<64x1xf32>
    %c1_139 = arith.constant 1 : index
    %c0_140 = arith.constant 0 : index
    %c0_141 = arith.constant 0 : index
    %167 = vector.load %arg12[%c1_139, %c0_140, %c0_141] : memref<3x64x128xf32, #tpu.memory_space<vmem>>, vector<1x64x128xf32>
    %168 = vector.shape_cast %167 : vector<1x64x128xf32> to vector<64x128xf32>
    %c0_142 = arith.constant 0 : index
    %c0_143 = arith.constant 0 : index
    %c0_144 = arith.constant 0 : index
    %169 = vector.load %arg12[%c0_142, %c0_143, %c0_144] : memref<3x64x128xf32, #tpu.memory_space<vmem>>, vector<1x64x128xf32>
    %170 = vector.shape_cast %169 : vector<1x64x128xf32> to vector<64x128xf32>
    %c1_i32_145 = arith.constant 1 : i32
    %171 = tpu.dynamic_rotate %170 by %c1_i32_145 dim 0 : vector<64x128xf32>, i32 -> vector<64x128xf32>
    %172 = vector.broadcast %162 : vector<64x1xf32> to vector<64x128xf32>
    %173 = arith.mulf %172, %171 : vector<64x128xf32>
    %174 = arith.addf %168, %173 : vector<64x128xf32>
    %c2_146 = arith.constant 2 : index
    %c0_147 = arith.constant 0 : index
    %c0_148 = arith.constant 0 : index
    %175 = vector.load %arg12[%c2_146, %c0_147, %c0_148] : memref<3x64x128xf32, #tpu.memory_space<vmem>>, vector<1x64x128xf32>
    %176 = vector.shape_cast %175 : vector<1x64x128xf32> to vector<64x128xf32>
    %c63_i32 = arith.constant 63 : i32
    %177 = tpu.dynamic_rotate %176 by %c63_i32 dim 0 : vector<64x128xf32>, i32 -> vector<64x128xf32>
    %178 = vector.broadcast %166 : vector<64x1xf32> to vector<64x128xf32>
    %179 = arith.mulf %178, %177 : vector<64x128xf32>
    %180 = arith.addf %174, %179 : vector<64x128xf32>
    %c0_149 = arith.constant 0 : index
    %c0_150 = arith.constant 0 : index
    %181 = vector.load %arg8[%c0_149, %c0_150] : memref<1x128xf32, #tpu.memory_space<vmem>>, vector<1x128xf32>
    %182 = vector.broadcast %181 : vector<1x128xf32> to vector<64x128xf32>
    %183 = arith.addf %180, %182 : vector<64x128xf32>
    %184 = vector.shape_cast %183 : vector<64x128xf32> to vector<8x8x128xf32>
    %185 = arith.truncf %184 : vector<8x8x128xf32> to vector<8x8x128xbf16>
    %c0_151 = arith.constant 0 : index
    %c0_152 = arith.constant 0 : index
    %c0_153 = arith.constant 0 : index
    %c0_154 = arith.constant 0 : index
    %186 = vector.load %arg9[%c0_151, %c0_152, %c0_153, %c0_154] : memref<1x8x8x128xbf16, #tpu.memory_space<vmem>>, vector<1x8x8x128xbf16>
    %187 = vector.shape_cast %186 : vector<1x8x8x128xbf16> to vector<8x8x128xbf16>
    %188 = vector.shape_cast %185 : vector<8x8x128xbf16> to vector<1x8x8x128xbf16>
    tpu.vector_store %arg9[%c0_151, %c0_152, %c0_153, %c0_154], %188 {strides = array<i32>} : memref<1x8x8x128xbf16, #tpu.memory_space<vmem>>, vector<1x8x8x128xbf16>,
    %cst_155 = arith.constant dense<0.000000e+00> : vector<128xf32>
    %189 = vector.multi_reduction <add>, %183, %cst_155 [0] : vector<64x128xf32> to vector<128xf32>
    %190 = vector.shape_cast %189 : vector<128xf32> to vector<1x128xf32>
    %c0_156 = arith.constant 0 : index
    %c0_157 = arith.constant 0 : index
    %c0_158 = arith.constant 0 : index
    %c0_159 = arith.constant 0 : index
    %191 = vector.load %arg10[%c0_156, %c0_157, %c0_158, %c0_159] : memref<1x1x2x128xf32, #tpu.memory_space<vmem>>, vector<1x1x1x128xf32>
    %192 = vector.shape_cast %191 : vector<1x1x1x128xf32> to vector<1x128xf32>
    %193 = vector.shape_cast %190 : vector<1x128xf32> to vector<1x1x1x128xf32>
    tpu.vector_store %arg10[%c0_156, %c0_157, %c0_158, %c0_159], %193 {strides = array<i32>} : memref<1x1x2x128xf32, #tpu.memory_space<vmem>>, vector<1x1x1x128xf32>,
    %194 = arith.mulf %183, %183 : vector<64x128xf32>
    %cst_160 = arith.constant dense<0.000000e+00> : vector<128xf32>
    %195 = vector.multi_reduction <add>, %194, %cst_160 [0] : vector<64x128xf32> to vector<128xf32>
    %196 = vector.shape_cast %195 : vector<128xf32> to vector<1x128xf32>
    %c0_161 = arith.constant 0 : index
    %c0_162 = arith.constant 0 : index
    %c1_163 = arith.constant 1 : index
    %c0_164 = arith.constant 0 : index
    %197 = vector.load %arg10[%c0_161, %c0_162, %c1_163, %c0_164] : memref<1x1x2x128xf32, #tpu.memory_space<vmem>>, vector<1x1x1x128xf32>
    %198 = vector.shape_cast %197 : vector<1x1x1x128xf32> to vector<1x128xf32>
    %199 = vector.shape_cast %196 : vector<1x128xf32> to vector<1x1x1x128xf32>
    tpu.vector_store %arg10[%c0_161, %c0_162, %c1_163, %c0_164], %199 {strides = array<i32>} : memref<1x1x2x128xf32, #tpu.memory_space<vmem>>, vector<1x1x1x128xf32>,
    return
  }
  func.func @transform_0(%arg0: i32, %arg1: i32) -> (i32, i32) {
    %c0_i32 = arith.constant 0 : i32
    %c0_i32_0 = arith.constant 0 : i32
    %c0_i32_1 = arith.constant 0 : i32
    return %c0_i32, %c0_i32_0 : i32, i32
  }
  func.func @transform_1(%arg0: i32, %arg1: i32) -> (i32, i32) {
    %c0_i32 = arith.constant 0 : i32
    %c0_i32_0 = arith.constant 0 : i32
    %c0_i32_1 = arith.constant 0 : i32
    return %c0_i32, %c0_i32_0 : i32, i32
  }
  func.func @transform_2(%arg0: i32, %arg1: i32) -> (i32, i32, i32, i32) {
    %c0_i32 = arith.constant 0 : i32
    %c0_i32_0 = arith.constant 0 : i32
    %c0_i32_1 = arith.constant 0 : i32
    return %arg0, %arg1, %c0_i32, %c0_i32_0 : i32, i32, i32, i32
  }
  func.func @transform_3(%arg0: i32, %arg1: i32) -> (i32, i32, i32, i32) {
    %c8_i32 = arith.constant 8 : i32
    %0 = arith.muli %arg1, %c8_i32 : i32
    %c1_i32 = arith.constant 1 : i32
    %1 = arith.subi %0, %c1_i32 : i32
    %c0_i32 = arith.constant 0 : i32
    %2 = arith.maxsi %1, %c0_i32 : i32
    %c0_i32_0 = arith.constant 0 : i32
    %c0_i32_1 = arith.constant 0 : i32
    %c0_i32_2 = arith.constant 0 : i32
    return %arg0, %2, %c0_i32_0, %c0_i32_1 : i32, i32, i32, i32
  }
  func.func @transform_4(%arg0: i32, %arg1: i32) -> (i32, i32, i32, i32) {
    %c8_i32 = arith.constant 8 : i32
    %0 = arith.muli %arg1, %c8_i32 : i32
    %c8_i32_0 = arith.constant 8 : i32
    %1 = arith.addi %0, %c8_i32_0 : i32
    %c7_i32 = arith.constant 7 : i32
    %2 = arith.minsi %1, %c7_i32 : i32
    %c0_i32 = arith.constant 0 : i32
    %c0_i32_1 = arith.constant 0 : i32
    %c0_i32_2 = arith.constant 0 : i32
    return %arg0, %2, %c0_i32, %c0_i32_1 : i32, i32, i32, i32
  }
  func.func @transform_5(%arg0: i32, %arg1: i32) -> (i32, i32, i32, i32) {
    %c0_i32 = arith.constant 0 : i32
    %c0_i32_0 = arith.constant 0 : i32
    %c0_i32_1 = arith.constant 0 : i32
    %c0_i32_2 = arith.constant 0 : i32
    %c0_i32_3 = arith.constant 0 : i32
    return %c0_i32, %c0_i32_0, %c0_i32_1, %c0_i32_2 : i32, i32, i32, i32
  }
  func.func @transform_6(%arg0: i32, %arg1: i32) -> (i32, i32) {
    %c0_i32 = arith.constant 0 : i32
    %c0_i32_0 = arith.constant 0 : i32
    %c0_i32_1 = arith.constant 0 : i32
    return %c0_i32, %c0_i32_0 : i32, i32
  }
  func.func @transform_7(%arg0: i32, %arg1: i32) -> (i32, i32, i32, i32) {
    %c0_i32 = arith.constant 0 : i32
    %c0_i32_0 = arith.constant 0 : i32
    %c0_i32_1 = arith.constant 0 : i32
    return %arg0, %arg1, %c0_i32, %c0_i32_0 : i32, i32, i32, i32
  }
  func.func @transform_8(%arg0: i32, %arg1: i32) -> (i32, i32, i32, i32) {
    %c0_i32 = arith.constant 0 : i32
    %c0_i32_0 = arith.constant 0 : i32
    %c0_i32_1 = arith.constant 0 : i32
    return %arg0, %arg1, %c0_i32, %c0_i32_0 : i32, i32, i32, i32
  }
}

module attributes {stable_mosaic.version = 11 : i64} {
  func.func @_bn_res_lrelu_kernel(%arg0: i32, %arg1: i32, %arg2: memref<1x8x8x128xbf16, #tpu.memory_space<vmem>>, %arg3: memref<1x8x8x128xf32, #tpu.memory_space<vmem>>, %arg4: memref<1x128xf32, #tpu.memory_space<vmem>>, %arg5: memref<1x128xf32, #tpu.memory_space<vmem>>, %arg6: memref<1x8x8x128xbf16, #tpu.memory_space<vmem>>) attributes {dimension_semantics = [#tpu.dimension_semantics<parallel>, #tpu.dimension_semantics<parallel>], iteration_bounds = array<i64: 2, 1>, scalar_prefetch = 0 : i64, scratch_operands = 0 : i64, tpu.core_type = #tpu.core_type<tc>, window_params = [{transform_indices = @transform_0, window_bounds = array<i64: 1, 8, 8, 128>}, {transform_indices = @transform_1, window_bounds = array<i64: 1, 8, 8, 128>}, {pipeline_mode = #tpu.pipeline_mode<synchronous>, transform_indices = @transform_2, window_bounds = array<i64: 1, 128>}, {pipeline_mode = #tpu.pipeline_mode<synchronous>, transform_indices = @transform_3, window_bounds = array<i64: 1, 128>}, {transform_indices = @transform_4, window_bounds = array<i64: 1, 8, 8, 128>}]} {
    %c0 = arith.constant 0 : index
    %c0_0 = arith.constant 0 : index
    %c0_1 = arith.constant 0 : index
    %c0_2 = arith.constant 0 : index
    %0 = vector.load %arg2[%c0, %c0_0, %c0_1, %c0_2] : memref<1x8x8x128xbf16, #tpu.memory_space<vmem>>, vector<1x8x8x128xbf16>
    %1 = vector.shape_cast %0 : vector<1x8x8x128xbf16> to vector<8x8x128xbf16>
    %2 = arith.extf %1 : vector<8x8x128xbf16> to vector<8x8x128xf32>
    %c0_3 = arith.constant 0 : index
    %c0_4 = arith.constant 0 : index
    %3 = vector.load %arg4[%c0_3, %c0_4] : memref<1x128xf32, #tpu.memory_space<vmem>>, vector<1x128xf32>
    %4 = vector.shape_cast %3 : vector<1x128xf32> to vector<1x1x128xf32>
    %5 = vector.broadcast %4 : vector<1x1x128xf32> to vector<8x8x128xf32>
    %6 = arith.mulf %2, %5 : vector<8x8x128xf32>
    %c0_5 = arith.constant 0 : index
    %c0_6 = arith.constant 0 : index
    %7 = vector.load %arg5[%c0_5, %c0_6] : memref<1x128xf32, #tpu.memory_space<vmem>>, vector<1x128xf32>
    %8 = vector.shape_cast %7 : vector<1x128xf32> to vector<1x1x128xf32>
    %9 = vector.broadcast %8 : vector<1x1x128xf32> to vector<8x8x128xf32>
    %10 = arith.addf %6, %9 : vector<8x8x128xf32>
    %c0_7 = arith.constant 0 : index
    %c0_8 = arith.constant 0 : index
    %c0_9 = arith.constant 0 : index
    %c0_10 = arith.constant 0 : index
    %11 = vector.load %arg3[%c0_7, %c0_8, %c0_9, %c0_10] : memref<1x8x8x128xf32, #tpu.memory_space<vmem>>, vector<1x8x8x128xf32>
    %12 = vector.shape_cast %11 : vector<1x8x8x128xf32> to vector<8x8x128xf32>
    %13 = arith.addf %10, %12 : vector<8x8x128xf32>
    %cst = arith.constant 0.000000e+00 : f32
    %14 = vector.broadcast %cst : f32 to vector<8x8x128xf32>
    %15 = arith.cmpf ogt, %13, %14 : vector<8x8x128xf32>
    %cst_11 = arith.constant 2.000000e-01 : f32
    %16 = vector.broadcast %cst_11 : f32 to vector<8x8x128xf32>
    %17 = arith.mulf %16, %13 : vector<8x8x128xf32>
    %18 = arith.select %15, %13, %17 : vector<8x8x128xi1>, vector<8x8x128xf32>
    %19 = arith.truncf %18 : vector<8x8x128xf32> to vector<8x8x128xbf16>
    %c0_12 = arith.constant 0 : index
    %c0_13 = arith.constant 0 : index
    %c0_14 = arith.constant 0 : index
    %c0_15 = arith.constant 0 : index
    %20 = vector.load %arg6[%c0_12, %c0_13, %c0_14, %c0_15] : memref<1x8x8x128xbf16, #tpu.memory_space<vmem>>, vector<1x8x8x128xbf16>
    %21 = vector.shape_cast %20 : vector<1x8x8x128xbf16> to vector<8x8x128xbf16>
    %22 = vector.shape_cast %19 : vector<8x8x128xbf16> to vector<1x8x8x128xbf16>
    tpu.vector_store %arg6[%c0_12, %c0_13, %c0_14, %c0_15], %22 {strides = array<i32>} : memref<1x8x8x128xbf16, #tpu.memory_space<vmem>>, vector<1x8x8x128xbf16>,
    return
  }
  func.func @transform_0(%arg0: i32, %arg1: i32) -> (i32, i32, i32, i32) {
    %c0_i32 = arith.constant 0 : i32
    %c0_i32_0 = arith.constant 0 : i32
    %c0_i32_1 = arith.constant 0 : i32
    return %arg0, %arg1, %c0_i32, %c0_i32_0 : i32, i32, i32, i32
  }
  func.func @transform_1(%arg0: i32, %arg1: i32) -> (i32, i32, i32, i32) {
    %c0_i32 = arith.constant 0 : i32
    %c0_i32_0 = arith.constant 0 : i32
    %c0_i32_1 = arith.constant 0 : i32
    return %arg0, %arg1, %c0_i32, %c0_i32_0 : i32, i32, i32, i32
  }
  func.func @transform_2(%arg0: i32, %arg1: i32) -> (i32, i32) {
    %c0_i32 = arith.constant 0 : i32
    %c0_i32_0 = arith.constant 0 : i32
    %c0_i32_1 = arith.constant 0 : i32
    return %c0_i32, %c0_i32_0 : i32, i32
  }
  func.func @transform_3(%arg0: i32, %arg1: i32) -> (i32, i32) {
    %c0_i32 = arith.constant 0 : i32
    %c0_i32_0 = arith.constant 0 : i32
    %c0_i32_1 = arith.constant 0 : i32
    return %c0_i32, %c0_i32_0 : i32, i32
  }
  func.func @transform_4(%arg0: i32, %arg1: i32) -> (i32, i32, i32, i32) {
    %c0_i32 = arith.constant 0 : i32
    %c0_i32_0 = arith.constant 0 : i32
    %c0_i32_1 = arith.constant 0 : i32
    return %arg0, %arg1, %c0_i32, %c0_i32_0 : i32, i32, i32, i32
  }
}

</mosaic_0001>

<llo_original>
// kernel: tile.28
$region0: #{tile.28}
  #allocation0 [shape = 's32[1]{0}', space=sflag, size = 0x4, scoped, tag = 'scoped memory for tile.28']
  %s0 = inlined_call_operand.vmem [shape: f32[16], index: 0, kind: input, shape index: {}]
  %s1 = inlined_call_operand.vmem [shape: f32[8,16], index: 1, kind: output, shape index: {}]
  // Predicated region
  $region2: #{tile.28} parent=0 // pred_check
    _
  $region3: #{tile.28} parent=0 // pred_check_branch
    %3 = sbr.rel (0) target = $region5
  $region4: #{tile.28} parent=0 // pred_region
    _
  $region5: #{tile.28} parent=0 // pred_fallthru
    _
  %v4 = vld [vmem:[%s0] ss:$0 sm:$0xff]
  %5 = vst [vmem:[%s1] sm:$0xff] %v4

// kernel: tile.29
$region0: #{tile.29}
  %s0 = inlined_call_operand.vmem [shape: f32[8,16], index: 0, kind: input, shape index: {}]
  %s1 = inlined_call_operand.vmem [shape: f32[1,128], index: 1, kind: output, shape index: {}]
  $region1: #{tile.29} parent=0
    #allocation0 [shape = 'u8[4096]{0}', space=vmem, size = 0x1000, scoped, tag = 'scoped mem for output reshape']
    %v2 = vld [vmem:[%s0] sm:$0x1]
    %vm3 = vcmask 130048
    %4 = vst.msk [vmem:[#allocation0] sm:$0x1] %vm3, %v2
    %s5 = scalar_lea.vmem %s0, 7
    %v6 = vld [vmem:[%s5] sm:$0x1]
    %7 = vrot.lane.b32.xlu0 %v6, 112
    %v8 = vpop.permute.xlu0 %7
    %vm9 = vcmask 1048448
    %10 = vst.msk [vmem:[#allocation0] sm:$0x1] %vm9, %v8
    %s11 = scalar_lea.vmem %s0, 6
    %v12 = vld [vmem:[%s11] sm:$0x1]
    %13 = vrot.lane.b32.xlu0 %v12, 96
    %v14 = vpop.permute.xlu0 %13
    %vm15 = vcmask 917248
    %16 = vst.msk [vmem:[#allocation0] sm:$0x1] %vm15, %v14
    %s17 = scalar_lea.vmem %s0, 5
    %v18 = vld [vmem:[%s17] sm:$0x1]
    %19 = vrot.lane.b32.xlu0 %v18, 80
    %v20 = vpop.permute.xlu0 %19
    %vm21 = vcmask 786048
    %22 = vst.msk [vmem:[#allocation0] sm:$0x1] %vm21, %v20
    %s23 = scalar_lea.vmem %s0, 4
    %v24 = vld [vmem:[%s23] sm:$0x1]
    %25 = vrot.lane.b32.xlu0 %v24, 64
    %v26 = vpop.permute.xlu0 %25
    %vm27 = vcmask 654848
    %28 = vst.msk [vmem:[#allocation0] sm:$0x1] %vm27, %v26
    %s29 = scalar_lea.vmem %s0, 3
    %v30 = vld [vmem:[%s29] sm:$0x1]
    %31 = vrot.lane.b32.xlu0 %v30, 48
    %v32 = vpop.permute.xlu0 %31
    %vm33 = vcmask 523648
    %34 = vst.msk [vmem:[#allocation0] sm:$0x1] %vm33, %v32
    %s35 = scalar_lea.vmem %s0, 2
    %v36 = vld [vmem:[%s35] sm:$0x1]
    %37 = vrot.lane.b32.xlu0 %v36, 32
    %v38 = vpop.permute.xlu0 %37
    %vm39 = vcmask 392448
    %40 = vst.msk [vmem:[#allocation0] sm:$0x1] %vm39, %v38
    %s41 = scalar_lea.vmem %s0, 1
    %v42 = vld [vmem:[%s41] sm:$0x1]
    %43 = vrot.lane.b32.xlu0 %v42, 16
    %v44 = vpop.permute.xlu0 %43
    %vm45 = vcmask 261248
    %46 = vst.msk [vmem:[#allocation0] sm:$0x1] %vm45, %v44
    %s48 = sshllo.u32 0, 1
    %v50 = vld [vmem:[#allocation0] sm:%s48]
    %s51 = sshllo.u32 0, 1
    %52 = vst [vmem:[%s1] sm:%s51] %v50

// kernel: residual_block_3d_packed.5
$region0: #{residual_block_3d_packed.5}
  #allocation0 [shape = 'u32[]', space=smem, size = 0x4, offset = 0x4, fixed_abs, tag = 'smem constant byte address 0x4 - core index']
  #allocation1 [shape = 'u32[144,128]{1,0:T(1,128)}', space=vmem, size = 0x12000, scoped, tag = 'internal scratch']
  %s0 = inlined_call_operand.hbm [shape: bf16[2,8,8,128], index: 0, kind: input, shape index: {}, may-alias: {0,4}]
  %s1 = inlined_call_operand.vmem [shape: f32[2,8,8,128], index: 1, kind: input, shape index: {}]
  %s2 = inlined_call_operand.vmem [shape: f32[1,128], index: 2, kind: input, shape index: {}]
  %s3 = inlined_call_operand.vmem [shape: f32[1,128], index: 3, kind: input, shape index: {}]
  %s4 = inlined_call_operand.hbm [shape: bf16[2,8,8,128], index: 4, kind: output, shape index: {}, may-alias: {0,4}]
  %s5 = sld [smem:[#allocation0]]
  $region53: #{residual_block_3d_packed.5} parent=0
    _
  %s7 = ssub.s32 1, %s5
  %s8 = scalar_select 0, %s7, %s5
  $region1: #{residual_block_3d_packed.5} parent=0
    #allocation2 [shape = 'u8[32768]{0}', space=vmem, size = 0x8000, scoped, tag = 'input window, operand 0']
    #allocation3 [shape = 's32[2]{0}', space=sflag, size = 0x8, scoped, tag = 'scoped memory for residual_block_3d_packed.5']
    #allocation4 [shape = 's32[2]{0}', space=sflag, size = 0x8, scoped, tag = 'scoped memory for residual_block_3d_packed.5']
    #allocation5 [shape = 'u8[32768]{0}', space=vmem, size = 0x8000, scoped, tag = 'output window, operand 0']
    %9 = vsyncpa [#allocation3], 0
    %s10 = scalar_lea.sflag [#allocation3], 1
    %11 = vsyncpa %s10, 0
    %12 = vsyncpa [#allocation4], 0
    %s13 = scalar_lea.sflag [#allocation4], 1
    %14 = vsyncpa %s13, 0
    loop: start=0, step=1, limit=4
    $region2: #{residual_block_3d_packed.5} parent=1 // loop_pre_header
      _
    $region3: #{residual_block_3d_packed.5} parent=1 // loop_header
      %s16 = sphi 0, %s20
      %p17 = scmp.ge.s32.totalorder %s16, 4
      %s23 = sphi 0, %s35
      %s24 = sphi 0, %s31
      %s25 = sphi 0, %s23
      %s26 = sphi 0, %s24
      %s27 = sphi 0, %s25
      %s28 = sphi 0, %s26
      %s40 = sphi 0, %s42
      %s43 = sphi 0, %s40
      %s44 = sphi 0, %s43
      %s60 = sphi 0, %s44
      %s68 = sphi 0, %s70
      %s71 = sphi 0, %s68
      %s72 = sphi 0, %s71
      %s88 = sphi 0, %s72
      %s92 = sphi 0, %s92
      %s94 = sphi 0, %s92
      %s95 = sphi 0, %s94
      %s109 = sphi 0, %s95
      %s113 = sphi 0, %s113
      %s115 = sphi 0, %s113
      %s116 = sphi 0, %s115
      %s130 = sphi 0, %s116
      %s138 = sphi 0, %s140
      %s141 = sphi 0, %s138
      %s142 = sphi 0, %s141
      %s158 = sphi 0, %s142
    $region4: #{residual_block_3d_packed.5} parent=1 // loop_header_branch
      %19 = sbr.rel (%p17) target = $region8
    $region5: #{residual_block_3d_packed.5} parent=1 // loop_body
      %s21 = ssub.s32 %s16, 1
      %s22 = ssub.s32 %s16, 2
      %s29 = sadd.s32 1, %s24
      %p30 = scmp.ge.s32.totalorder %s29, 1
      %s31 = scalar_select %p30, 0, %s29
      %s32 = sadd.s32 1, %s23
      %s33 = scalar_select %p30, %s32, %s23
      %p34 = scmp.ge.s32.totalorder %s33, 2
      %s35 = scalar_select %p34, 0, %s33
      %s36 = ssub.s32 %s23, %s35
      %s37 = ssub.s32 %s24, %s31
      %s38 = sor.u32 %s36, %s37
      %p39 = scmp.eq.s32.totalorder %s38, 0
      %s41 = sadd.s32 %s40, 1
      %s42 = scalar_select %p39, %s40, %s41
      %p45 = pneg %p39
      %p46 = scmp.eq.s32.totalorder %s16, 1
      %p47 = por %p45, %p46
      %p48 = scmp.ne.s32.totalorder %s40, %s43
      %p49 = scmp.eq.s32.totalorder %s16, 0
      %p50 = por %p48, %p49
      %p51 = scmp.ne.s32.totalorder %s40, %s43
      %p52 = scmp.eq.s32.totalorder %s21, 1
      %p53 = por %p51, %p52
      %p54 = scmp.ne.s32.totalorder %s43, %s44
      %p55 = scmp.eq.s32.totalorder %s21, 0
      %p56 = por %p54, %p55
      %p57 = scmp.ne.s32.totalorder %s43, %s44
      %p58 = scmp.eq.s32.totalorder %s22, 1
      %p59 = por %p57, %p58
      %p61 = scmp.ne.s32.totalorder %s44, %s60
      %p62 = scmp.eq.s32.totalorder %s22, 0
      %p63 = por %p61, %p62
      %s64 = ssub.s32 %s23, %s35
      %s65 = ssub.s32 %s24, %s31
      %s66 = sor.u32 %s64, %s65
      %p67 = scmp.eq.s32.totalorder %s66, 0
      %s69 = sadd.s32 %s68, 1
      %s70 = scalar_select %p67, %s68, %s69
      %p73 = pneg %p67
      %p74 = scmp.eq.s32.totalorder %s16, 1
      %p75 = por %p73, %p74
      %p76 = scmp.ne.s32.totalorder %s68, %s71
      %p77 = scmp.eq.s32.totalorder %s16, 0
      %p78 = por %p76, %p77
      %p79 = scmp.ne.s32.totalorder %s68, %s71
      %p80 = scmp.eq.s32.totalorder %s21, 1
      %p81 = por %p79, %p80
      %p82 = scmp.ne.s32.totalorder %s71, %s72
      %p83 = scmp.eq.s32.totalorder %s21, 0
      %p84 = por %p82, %p83
      %p85 = scmp.ne.s32.totalorder %s71, %s72
      %p86 = scmp.eq.s32.totalorder %s22, 1
      %p87 = por %p85, %p86
      %p89 = scmp.ne.s32.totalorder %s72, %s88
      %p90 = scmp.eq.s32.totalorder %s22, 0
      %p91 = por %p89, %p90
      %s93 = sadd.s32 %s92, 1
      %p96 = scmp.eq.s32.totalorder %s16, 1
      %p97 = scmp.ne.s32.totalorder %s92, %s94
      %p98 = scmp.eq.s32.totalorder %s16, 0
      %p99 = por %p97, %p98
      %p100 = scmp.ne.s32.totalorder %s92, %s94
      %p101 = scmp.eq.s32.totalorder %s21, 1
      %p102 = por %p100, %p101
      %p103 = scmp.ne.s32.totalorder %s94, %s95
      %p104 = scmp.eq.s32.totalorder %s21, 0
      %p105 = por %p103, %p104
      %p106 = scmp.ne.s32.totalorder %s94, %s95
      %p107 = scmp.eq.s32.totalorder %s22, 1
      %p108 = por %p106, %p107
      %p110 = scmp.ne.s32.totalorder %s95, %s109
      %p111 = scmp.eq.s32.totalorder %s22, 0
      %p112 = por %p110, %p111
      %s114 = sadd.s32 %s113, 1
      %p117 = scmp.eq.s32.totalorder %s16, 1
      %p118 = scmp.ne.s32.totalorder %s113, %s115
      %p119 = scmp.eq.s32.totalorder %s16, 0
      %p120 = por %p118, %p119
      %p121 = scmp.ne.s32.totalorder %s113, %s115
      %p122 = scmp.eq.s32.totalorder %s21, 1
      %p123 = por %p121, %p122
      %p124 = scmp.ne.s32.totalorder %s115, %s116
      %p125 = scmp.eq.s32.totalorder %s21, 0
      %p126 = por %p124, %p125
      %p127 = scmp.ne.s32.totalorder %s115, %s116
      %p128 = scmp.eq.s32.totalorder %s22, 1
      %p129 = por %p127, %p128
      %p131 = scmp.ne.s32.totalorder %s116, %s130
      %p132 = scmp.eq.s32.totalorder %s22, 0
      %p133 = por %p131, %p132
      %s134 = ssub.s32 %s23, %s35
      %s135 = ssub.s32 %s24, %s31
      %s136 = sor.u32 %s134, %s135
      %p137 = scmp.eq.s32.totalorder %s136, 0
      %s139 = sadd.s32 %s138, 1
      %s140 = scalar_select %p137, %s138, %s139
      %p143 = pneg %p137
      %p144 = scmp.eq.s32.totalorder %s16, 1
      %p145 = por %p143, %p144
      %p146 = scmp.ne.s32.totalorder %s138, %s141
      %p147 = scmp.eq.s32.totalorder %s16, 0
      %p148 = por %p146, %p147
      %p149 = scmp.ne.s32.totalorder %s138, %s141
      %p150 = scmp.eq.s32.totalorder %s21, 1
      %p151 = por %p149, %p150
      %p152 = scmp.ne.s32.totalorder %s141, %s142
      %p153 = scmp.eq.s32.totalorder %s21, 0
      %p154 = por %p152, %p153
      %p155 = scmp.ne.s32.totalorder %s141, %s142
      %p156 = scmp.eq.s32.totalorder %s22, 1
      %p157 = por %p155, %p156
      %p159 = scmp.ne.s32.totalorder %s142, %s158
      %p160 = scmp.eq.s32.totalorder %s22, 0
      %p161 = por %p159, %p160
      %p162 = scmp.le.s32.totalorder 1, %s16
      %p163 = scmp.lt.s32.totalorder %s16, 3
      %p164 = pnand %p162, %p163
      %p165 = pneg %p164
      // Predicated region
      $region9: #{residual_block_3d_packed.5} parent=5 // pred_check
        _
      $region10: #{residual_block_3d_packed.5} parent=5 // pred_check_branch
        %167 = sbr.rel (%p164) target = $region12
      $region11: #{residual_block_3d_packed.5} parent=5 // pred_region
        %s168 = ssub.s32 %s16, 1
        // Predicated region
        $region13: #{residual_block_3d_packed.5} parent=11 // pred_check
          %p169 = pneg %p105
        $region14: #{residual_block_3d_packed.5} parent=11 // pred_check_branch
          %171 = sbr.rel (%p169) target = $region16
        $region15: #{residual_block_3d_packed.5} parent=11 // pred_region
          _
        $region16: #{residual_block_3d_packed.5} parent=11 // pred_fallthru
          _
        // Predicated region
        $region17: #{residual_block_3d_packed.5} parent=11 // pred_check
          %p172 = pneg %p126
        $region18: #{residual_block_3d_packed.5} parent=11 // pred_check_branch
          %174 = sbr.rel (%p172) target = $region20
        $region19: #{residual_block_3d_packed.5} parent=11 // pred_region
          _
        $region20: #{residual_block_3d_packed.5} parent=11 // pred_fallthru
          _
      $region12: #{residual_block_3d_packed.5} parent=5 // pred_fallthru
        _
      %p175 = scmp.lt.s32.totalorder %s16, 2
      // Predicated region
      $region21: #{residual_block_3d_packed.5} parent=5 // pred_check
        %p176 = pneg %p175
      $region22: #{residual_block_3d_packed.5} parent=5 // pred_check_branch
        %178 = sbr.rel (%p176) target = $region24
      $region23: #{residual_block_3d_packed.5} parent=5 // pred_region
        // Predicated region
        $region25: #{residual_block_3d_packed.5} parent=23 // pred_check
          %p179 = pneg %p50
        $region26: #{residual_block_3d_packed.5} parent=23 // pred_check_branch
          %181 = sbr.rel (%p179) target = $region28
        $region27: #{residual_block_3d_packed.5} parent=23 // pred_region
          %s182 = sand.u32 %s40, 1
          %s183 = scalar_lea.sflag [#allocation3], %s182
          %s184 = sand.u32 %s40, 1
          %s185 = smul.addr %s184, 32
          %s186 = scalar_lea.vmem [#allocation2], %s185
          %s187 = smul.u32 8, %s24
          %s189 = ssub.s32 512, 512
          %190 = vsyncadd %s183, %s189
          %s191 = smul.addr %s23, 8
          %s192 = sadd.s32 %s187, %s191
          %s193 = smul.addr %s192, 64
          %s194 = scalar_lea.hbm %s0, %s193
          %s195 = sshll.u32 %s186, 4
          %s196 = int_to_ptr.vmem [resolvable:$true] %s195
          %201 = dma.hbm_to_vmem [thread:$0]  %s194, 512, %s196, %s183, 64, 64, 4
        $region28: #{residual_block_3d_packed.5} parent=23 // pred_fallthru
          _
        // Predicated region
        $region29: #{residual_block_3d_packed.5} parent=23 // pred_check
          %p202 = pneg %p78
        $region30: #{residual_block_3d_packed.5} parent=23 // pred_check_branch
          %204 = sbr.rel (%p202) target = $region32
        $region31: #{residual_block_3d_packed.5} parent=23 // pred_region
          %s205 = smul.u32 8, %s24
          %p206 = scmp.lt.s32.totalorder %s23, 1
          %s207 = scalar_select %p206, %s23, 1
          %p208 = scmp.lt.s32.totalorder %s205, 7
          %s209 = scalar_select %p208, %s205, 7
          %s210 = smul.addr %s207, 8
          %s211 = sadd.s32 %s209, %s210
          %s212 = smul.addr %s211, 8
          %s213 = scalar_lea.vmem %s1, %s212
          %s214 = smul.u32 8, %s24
        $region32: #{residual_block_3d_packed.5} parent=23 // pred_fallthru
          _
      $region24: #{residual_block_3d_packed.5} parent=5 // pred_fallthru
        _
      %p215 = scmp.le.s32.totalorder 1, %s16
      %p216 = scmp.lt.s32.totalorder %s16, 3
      %p217 = pnand %p215, %p216
      %p218 = pneg %p217
      // Predicated region
      $region33: #{residual_block_3d_packed.5} parent=5 // pred_check
        _
      $region34: #{residual_block_3d_packed.5} parent=5 // pred_check_branch
        %220 = sbr.rel (%p217) target = $region36
      $region35: #{residual_block_3d_packed.5} parent=5 // pred_region
        %s221 = ssub.s32 %s16, 1
        %s222 = sand.u32 %s43, 1
        %s223 = scalar_lea.sflag [#allocation3], %s222
        %s224 = sand.u32 %s43, 1
        %s225 = smul.addr %s224, 32
        %s226 = scalar_lea.vmem [#allocation2], %s225
        // Predicated region
        $region37: #{residual_block_3d_packed.5} parent=35 // pred_check
          %p227 = pneg %p56
        $region38: #{residual_block_3d_packed.5} parent=35 // pred_check_branch
          %229 = sbr.rel (%p227) target = $region40
        $region39: #{residual_block_3d_packed.5} parent=35 // pred_region
          %230 = dma.done %s223, 512
        $region40: #{residual_block_3d_packed.5} parent=35 // pred_fallthru
          _
        %s231 = sand.u32 %s43, 1
        %s232 = scalar_lea.sflag [#allocation3], %s231
        %s233 = sand.u32 %s43, 1
        %s234 = smul.addr %s233, 32
        %s235 = scalar_lea.vmem [#allocation2], %s234
        %p236 = pneg %p56
        %p237 = pneg %p53
        %s238 = smul.u32 8, %s26
        %p239 = scmp.lt.s32.totalorder %s25, 1
        %s240 = scalar_select %p239, %s25, 1
        %p241 = scmp.lt.s32.totalorder %s238, 7
        %s242 = scalar_select %p241, %s238, 7
        %s243 = smul.addr %s240, 8
        %s244 = sadd.s32 %s242, %s243
        %s245 = smul.addr %s244, 8
        %s246 = scalar_lea.vmem %s1, %s245
        %p247 = pneg %p84
        %p248 = pneg %p81
        %p249 = pneg %p105
        %p250 = pneg %p102
        %p251 = pneg %p126
        %p252 = pneg %p123
        %p253 = pneg %p154
        %p254 = pneg %p151
        %s255 = sand.u32 %s141, 1
        %s256 = scalar_lea.sflag [#allocation4], %s255
        %s257 = sand.u32 %s141, 1
        %s258 = smul.addr %s257, 32
        %s259 = scalar_lea.vmem [#allocation5], %s258
        %s260 = smul.u32 8, %s26
        %s261 = smul.u32 8, %s26
        %p262 = scmp.lt.s32.totalorder %s25, 1
        %s263 = scalar_select %p262, %s25, 1
        %p264 = scmp.lt.s32.totalorder %s261, 7
        %s265 = scalar_select %p264, %s261, 7
        %s266 = smul.addr %s263, 8
        %s267 = sadd.s32 %s265, %s266
        %s268 = smul.addr %s267, 8
        %s269 = scalar_lea.vmem %s1, %s268
        %s270 = smul.u32 8, %s26
        %s271 = smul.u32 8, %s26
        %v272 = vld [vmem:[%s226] sm:$0xf]
        %v273 = vld [vmem:[%s226 + $0x4] sm:$0xf]
        %v274 = vld [vmem:[%s226 + $0x8] sm:$0xf]
        %v275 = vld [vmem:[%s226 + $0xc] sm:$0xf]
        %v276 = vld [vmem:[%s226 + $0x10] sm:$0xf]
        %v277 = vld [vmem:[%s226 + $0x14] sm:$0xf]
        %v278 = vld [vmem:[%s226 + $0x18] sm:$0xf]
        %v279 = vld [vmem:[%s226 + $0x1c] sm:$0xf]
        %v280 = vunpack.c.l.bf16 %v272
        %v281 = vunpack.c.l.bf16 %v273
        %v282 = vunpack.c.l.bf16 %v274
        %v283 = vunpack.c.l.bf16 %v275
        %v284 = vunpack.c.l.bf16 %v276
        %v285 = vunpack.c.l.bf16 %v277
        %v286 = vunpack.c.l.bf16 %v278
        %v287 = vunpack.c.l.bf16 %v279
        %v288 = vld [vmem:[%s2] sm:$0x1]
        %v290 = vlaneseq
        %v291 = vshrl.u32 %v290, 7
        %v292 = vsub.s32 0, %v291
        %v293 = vrot.slane %v288, %v292
        %v295 = vmul.f32 %v280, %v293
        %v296 = vmul.f32 %v281, %v293
        %v297 = vmul.f32 %v282, %v293
        %v298 = vmul.f32 %v283, %v293
        %v299 = vmul.f32 %v284, %v293
        %v300 = vmul.f32 %v285, %v293
        %v301 = vmul.f32 %v286, %v293
        %v302 = vmul.f32 %v287, %v293
        %v303 = vld [vmem:[%s3] sm:$0x1]
        %v305 = vlaneseq
        %v306 = vshrl.u32 %v305, 7
        %v307 = vsub.s32 0, %v306
        %v308 = vrot.slane %v303, %v307
        %v310 = vadd.f32 %v295, %v308
        %v311 = vadd.f32 %v296, %v308
        %v312 = vadd.f32 %v297, %v308
        %v313 = vadd.f32 %v298, %v308
        %v314 = vadd.f32 %v299, %v308
        %v315 = vadd.f32 %v300, %v308
        %v316 = vadd.f32 %v301, %v308
        %v317 = vadd.f32 %v302, %v308
        %v318 = vld [vmem:[%s269] sm:$0xff]
        %v319 = vld [vmem:[%s269 + $0x8] sm:$0xff]
        %v320 = vld [vmem:[%s269 + $0x10] sm:$0xff]
        %v321 = vld [vmem:[%s269 + $0x18] sm:$0xff]
        %v322 = vld [vmem:[%s269 + $0x20] sm:$0xff]
        %v323 = vld [vmem:[%s269 + $0x28] sm:$0xff]
        %v324 = vld [vmem:[%s269 + $0x30] sm:$0xff]
        %v325 = vld [vmem:[%s269 + $0x38] sm:$0xff]
        %v326 = vadd.f32 %v310, %v318
        %v327 = vadd.f32 %v311, %v319
        %v328 = vadd.f32 %v312, %v320
        %v329 = vadd.f32 %v313, %v321
        %v330 = vadd.f32 %v314, %v322
        %v331 = vadd.f32 %v315, %v323
        %v332 = vadd.f32 %v316, %v324
        %v333 = vadd.f32 %v317, %v325
        %vm334 = vcmp.gt.f32.partialorder %v326, 0.0
        %vm335 = vcmp.gt.f32.partialorder %v327, 0.0
        %vm336 = vcmp.gt.f32.partialorder %v328, 0.0
        %vm337 = vcmp.gt.f32.partialorder %v329, 0.0
        %vm338 = vcmp.gt.f32.partialorder %v330, 0.0
        %vm339 = vcmp.gt.f32.partialorder %v331, 0.0
        %vm340 = vcmp.gt.f32.partialorder %v332, 0.0
        %vm341 = vcmp.gt.f32.partialorder %v333, 0.0
        %v342 = vmul.f32 %v326, 0.2
        %v343 = vmul.f32 %v327, 0.2
        %v344 = vmul.f32 %v328, 0.2
        %v345 = vmul.f32 %v329, 0.2
        %v346 = vmul.f32 %v330, 0.2
        %v347 = vmul.f32 %v331, 0.2
        %v348 = vmul.f32 %v332, 0.2
        %v349 = vmul.f32 %v333, 0.2
        %v350 = vsel %vm334, %v326, %v342
        %v351 = vsel %vm335, %v327, %v343
        %v352 = vsel %vm336, %v328, %v344
        %v353 = vsel %vm337, %v329, %v345
        %v354 = vsel %vm338, %v330, %v346
        %v355 = vsel %vm339, %v331, %v347
        %v356 = vsel %vm340, %v332, %v348
        %v357 = vsel %vm341, %v333, %v349
        %v358 = vpack.c.bf16 %v350, %v350
        %v359 = vpack.c.bf16 %v351, %v351
        %v360 = vpack.c.bf16 %v352, %v352
        %v361 = vpack.c.bf16 %v353, %v353
        %v362 = vpack.c.bf16 %v354, %v354
        %v363 = vpack.c.bf16 %v355, %v355
        %v364 = vpack.c.bf16 %v356, %v356
        %v365 = vpack.c.bf16 %v357, %v357
        %366 = vst [vmem:[%s259] sm:$0xf] %v358
        %367 = vst [vmem:[%s259 + $0x4] sm:$0xf] %v359
        %368 = vst [vmem:[%s259 + $0x8] sm:$0xf] %v360
        %369 = vst [vmem:[%s259 + $0xc] sm:$0xf] %v361
        %370 = vst [vmem:[%s259 + $0x10] sm:$0xf] %v362
        %371 = vst [vmem:[%s259 + $0x14] sm:$0xf] %v363
        %372 = vst [vmem:[%s259 + $0x18] sm:$0xf] %v364
        %373 = vst [vmem:[%s259 + $0x1c] sm:$0xf] %v365
        %s374 = sand.u32 %s141, 1
        %s375 = scalar_lea.sflag [#allocation4], %s374
        %s376 = sand.u32 %s141, 1
        %s377 = smul.addr %s376, 32
        %s378 = scalar_lea.vmem [#allocation5], %s377
        // Predicated region
        $region41: #{residual_block_3d_packed.5} parent=35 // pred_check
          %p379 = pneg %p151
        $region42: #{residual_block_3d_packed.5} parent=35 // pred_check_branch
          %381 = sbr.rel (%p379) target = $region44
        $region43: #{residual_block_3d_packed.5} parent=35 // pred_region
          %s382 = smul.u32 8, %s26
          %s384 = ssub.s32 512, 512
          %385 = vsyncadd %s375, %s384
          %s386 = smul.addr %s25, 8
          %s387 = sadd.s32 %s382, %s386
          %s388 = smul.addr %s387, 64
          %s389 = scalar_lea.hbm %s4, %s388
          %s390 = sshll.u32 %s378, 4
          %s391 = int_to_ptr.vmem [resolvable:$true] %s390
          %396 = dma.vmem_to_hbm [thread:$0]  %s391, 512, %s389, %s375, 64, 64, 4
        $region44: #{residual_block_3d_packed.5} parent=35 // pred_fallthru
          _
      $region36: #{residual_block_3d_packed.5} parent=5 // pred_fallthru
        _
      %p397 = scmp.le.s32.totalorder 2, %s16
      // Predicated region
      $region45: #{residual_block_3d_packed.5} parent=5 // pred_check
        %p398 = pneg %p397
      $region46: #{residual_block_3d_packed.5} parent=5 // pred_check_branch
        %400 = sbr.rel (%p398) target = $region48
      $region47: #{residual_block_3d_packed.5} parent=5 // pred_region
        %s401 = ssub.s32 %s16, 2
        // Predicated region
        $region49: #{residual_block_3d_packed.5} parent=47 // pred_check
          %p402 = pneg %p157
        $region50: #{residual_block_3d_packed.5} parent=47 // pred_check_branch
          %404 = sbr.rel (%p402) target = $region52
        $region51: #{residual_block_3d_packed.5} parent=47 // pred_region
          %s405 = sand.u32 %s142, 1
          %s406 = scalar_lea.sflag [#allocation4], %s405
          %s407 = sand.u32 %s142, 1
          %s408 = smul.addr %s407, 32
          %s409 = scalar_lea.vmem [#allocation5], %s408
          %410 = dma.done %s406, 512
        $region52: #{residual_block_3d_packed.5} parent=47 // pred_fallthru
          _
      $region48: #{residual_block_3d_packed.5} parent=5 // pred_fallthru
        _
    $region6: #{residual_block_3d_packed.5} parent=1 // loop_footer
      %s20 = sadd.s32 1, %s16
    $region7: #{residual_block_3d_packed.5} parent=1 // loop_footer_branch
      %15 = sbr.rel target = $region3
    $region8: #{residual_block_3d_packed.5} parent=1 // loop_exit
      _
    %411 = vsyncpa [#allocation3], 1
    %s412 = scalar_lea.sflag [#allocation3], 1
    %413 = vsyncpa %s412, 1
    %414 = vsyncpa [#allocation4], 1
    %s415 = scalar_lea.sflag [#allocation4], 1
    %416 = vsyncpa %s415, 1

// kernel: residual_block_3d_packed.4
$region0: #{residual_block_3d_packed.4}
  #allocation0 [shape = 'u32[]', space=smem, size = 0x4, offset = 0x4, fixed_abs, tag = 'smem constant byte address 0x4 - core index']
  #allocation1 [shape = 'u32[144,128]{1,0:T(1,128)}', space=vmem, size = 0x12000, scoped, tag = 'internal scratch']
  #allocation2 [shape = 'f32[10,8,128]{2,1,0:T(8,128)}', space=vmem, size = 0xa000, scoped, tag = 'scratch operand']
  #allocation3 [shape = 'f32[3,64,128]{2,1,0:T(8,128)}', space=vmem, size = 0x18000, scoped, tag = 'scratch operand']
  %s0 = inlined_call_operand.vmem [shape: f32[1,128], index: 0, kind: input, shape index: {}]
  %s1 = inlined_call_operand.vmem [shape: f32[1,128], index: 1, kind: input, shape index: {}]
  %s2 = inlined_call_operand.vmem [shape: bf16[2,8,8,128], index: 2, kind: input, shape index: {}, may-alias: {2,3,4}]
  %s3 = inlined_call_operand.vmem [shape: bf16[2,8,8,128], index: 3, kind: input, shape index: {}, may-alias: {2,3,4}]
  %s4 = inlined_call_operand.vmem [shape: bf16[2,8,8,128], index: 4, kind: input, shape index: {}, may-alias: {2,3,4}]
  %s5 = inlined_call_operand.vmem [shape: bf16[3,3,128,128], index: 5, kind: input, shape index: {}]
  %s6 = inlined_call_operand.vmem [shape: f32[1,128], index: 6, kind: input, shape index: {}]
  %s7 = inlined_call_operand.hbm [shape: bf16[2,8,8,128], index: 7, kind: output, shape index: {0}]
  %s8 = inlined_call_operand.vmem [shape: f32[2,1,2,128], index: 8, kind: output, shape index: {1}]
  %9 = xla_tuple %s7, %s8
  %s10 = sld [smem:[#allocation0]]
  $region69: #{residual_block_3d_packed.4} parent=0
    _
  %s12 = ssub.s32 1, %s10
  %s13 = scalar_select 0, %s12, %s10
  $region1: #{residual_block_3d_packed.4} parent=0
    #allocation4 [shape = 'u8[32768]{0}', space=vmem, size = 0x8000, scoped, tag = 'output window, operand 0']
    #allocation5 [shape = 's32[2]{0}', space=sflag, size = 0x8, scoped, tag = 'scoped memory for residual_block_3d_packed.4']
    %14 = vsyncpa [#allocation5], 0
    %s15 = scalar_lea.sflag [#allocation5], 1
    %16 = vsyncpa %s15, 0
    loop: start=0, step=1, limit=4
    $region2: #{residual_block_3d_packed.4} parent=1 // loop_pre_header
      _
    $region3: #{residual_block_3d_packed.4} parent=1 // loop_header
      %s18 = sphi 0, %s22
      %p19 = scmp.ge.s32.totalorder %s18, 4
      %s25 = sphi 0, %s37
      %s26 = sphi 0, %s33
      %s27 = sphi 0, %s25
      %s28 = sphi 0, %s26
      %s29 = sphi 0, %s27
      %s30 = sphi 0, %s28
      %s38 = sphi 0, %s38
      %s40 = sphi 0, %s38
      %s41 = sphi 0, %s40
      %s55 = sphi 0, %s41
      %s59 = sphi 0, %s59
      %s61 = sphi 0, %s59
      %s62 = sphi 0, %s61
      %s76 = sphi 0, %s62
      %s84 = sphi 0, %s86
      %s87 = sphi 0, %s84
      %s88 = sphi 0, %s87
      %s104 = sphi 0, %s88
      %s120 = sphi 0, %s122
      %s123 = sphi 0, %s120
      %s124 = sphi 0, %s123
      %s140 = sphi 0, %s124
      %s156 = sphi 0, %s158
      %s159 = sphi 0, %s156
      %s160 = sphi 0, %s159
      %s176 = sphi 0, %s160
      %s180 = sphi 0, %s180
      %s182 = sphi 0, %s180
      %s183 = sphi 0, %s182
      %s197 = sphi 0, %s183
      %s201 = sphi 0, %s201
      %s203 = sphi 0, %s201
      %s204 = sphi 0, %s203
      %s218 = sphi 0, %s204
      %s226 = sphi 0, %s228
      %s229 = sphi 0, %s226
      %s230 = sphi 0, %s229
      %s246 = sphi 0, %s230
      %s254 = sphi 0, %s256
      %s257 = sphi 0, %s254
      %s258 = sphi 0, %s257
      %s274 = sphi 0, %s258
    $region4: #{residual_block_3d_packed.4} parent=1 // loop_header_branch
      %21 = sbr.rel (%p19) target = $region8
    $region5: #{residual_block_3d_packed.4} parent=1 // loop_body
      %s23 = ssub.s32 %s18, 1
      %s24 = ssub.s32 %s18, 2
      %s31 = sadd.s32 1, %s26
      %p32 = scmp.ge.s32.totalorder %s31, 1
      %s33 = scalar_select %p32, 0, %s31
      %s34 = sadd.s32 1, %s25
      %s35 = scalar_select %p32, %s34, %s25
      %p36 = scmp.ge.s32.totalorder %s35, 2
      %s37 = scalar_select %p36, 0, %s35
      %s39 = sadd.s32 %s38, 1
      %p42 = scmp.eq.s32.totalorder %s18, 1
      %p43 = scmp.ne.s32.totalorder %s38, %s40
      %p44 = scmp.eq.s32.totalorder %s18, 0
      %p45 = por %p43, %p44
      %p46 = scmp.ne.s32.totalorder %s38, %s40
      %p47 = scmp.eq.s32.totalorder %s23, 1
      %p48 = por %p46, %p47
      %p49 = scmp.ne.s32.totalorder %s40, %s41
      %p50 = scmp.eq.s32.totalorder %s23, 0
      %p51 = por %p49, %p50
      %p52 = scmp.ne.s32.totalorder %s40, %s41
      %p53 = scmp.eq.s32.totalorder %s24, 1
      %p54 = por %p52, %p53
      %p56 = scmp.ne.s32.totalorder %s41, %s55
      %p57 = scmp.eq.s32.totalorder %s24, 0
      %p58 = por %p56, %p57
      %s60 = sadd.s32 %s59, 1
      %p63 = scmp.eq.s32.totalorder %s18, 1
      %p64 = scmp.ne.s32.totalorder %s59, %s61
      %p65 = scmp.eq.s32.totalorder %s18, 0
      %p66 = por %p64, %p65
      %p67 = scmp.ne.s32.totalorder %s59, %s61
      %p68 = scmp.eq.s32.totalorder %s23, 1
      %p69 = por %p67, %p68
      %p70 = scmp.ne.s32.totalorder %s61, %s62
      %p71 = scmp.eq.s32.totalorder %s23, 0
      %p72 = por %p70, %p71
      %p73 = scmp.ne.s32.totalorder %s61, %s62
      %p74 = scmp.eq.s32.totalorder %s24, 1
      %p75 = por %p73, %p74
      %p77 = scmp.ne.s32.totalorder %s62, %s76
      %p78 = scmp.eq.s32.totalorder %s24, 0
      %p79 = por %p77, %p78
      %s80 = ssub.s32 %s25, %s37
      %s81 = ssub.s32 %s26, %s33
      %s82 = sor.u32 %s80, %s81
      %p83 = scmp.eq.s32.totalorder %s82, 0
      %s85 = sadd.s32 %s84, 1
      %s86 = scalar_select %p83, %s84, %s85
      %p89 = pneg %p83
      %p90 = scmp.eq.s32.totalorder %s18, 1
      %p91 = por %p89, %p90
      %p92 = scmp.ne.s32.totalorder %s84, %s87
      %p93 = scmp.eq.s32.totalorder %s18, 0
      %p94 = por %p92, %p93
      %p95 = scmp.ne.s32.totalorder %s84, %s87
      %p96 = scmp.eq.s32.totalorder %s23, 1
      %p97 = por %p95, %p96
      %p98 = scmp.ne.s32.totalorder %s87, %s88
      %p99 = scmp.eq.s32.totalorder %s23, 0
      %p100 = por %p98, %p99
      %p101 = scmp.ne.s32.totalorder %s87, %s88
      %p102 = scmp.eq.s32.totalorder %s24, 1
      %p103 = por %p101, %p102
      %p105 = scmp.ne.s32.totalorder %s88, %s104
      %p106 = scmp.eq.s32.totalorder %s24, 0
      %p107 = por %p105, %p106
      %s108 = smul.u32 %s26, 8
      %s109 = ssub.s32 %s108, 1
      %p110 = scmp.gt.s32.totalorder %s109, 0
      %s111 = scalar_select %p110, %s109, 0
      %s112 = smul.u32 %s33, 8
      %s113 = ssub.s32 %s112, 1
      %p114 = scmp.gt.s32.totalorder %s113, 0
      %s115 = scalar_select %p114, %s113, 0
      %s116 = ssub.s32 %s25, %s37
      %s117 = ssub.s32 %s111, %s115
      %s118 = sor.u32 %s116, %s117
      %p119 = scmp.eq.s32.totalorder %s118, 0
      %s121 = sadd.s32 %s120, 1
      %s122 = scalar_select %p119, %s120, %s121
      %p125 = pneg %p119
      %p126 = scmp.eq.s32.totalorder %s18, 1
      %p127 = por %p125, %p126
      %p128 = scmp.ne.s32.totalorder %s120, %s123
      %p129 = scmp.eq.s32.totalorder %s18, 0
      %p130 = por %p128, %p129
      %p131 = scmp.ne.s32.totalorder %s120, %s123
      %p132 = scmp.eq.s32.totalorder %s23, 1
      %p133 = por %p131, %p132
      %p134 = scmp.ne.s32.totalorder %s123, %s124
      %p135 = scmp.eq.s32.totalorder %s23, 0
      %p136 = por %p134, %p135
      %p137 = scmp.ne.s32.totalorder %s123, %s124
      %p138 = scmp.eq.s32.totalorder %s24, 1
      %p139 = por %p137, %p138
      %p141 = scmp.ne.s32.totalorder %s124, %s140
      %p142 = scmp.eq.s32.totalorder %s24, 0
      %p143 = por %p141, %p142
      %s144 = smul.u32 %s26, 8
      %s145 = sadd.s32 %s144, 8
      %p146 = scmp.lt.s32.totalorder %s145, 7
      %s147 = scalar_select %p146, %s145, 7
      %s148 = smul.u32 %s33, 8
      %s149 = sadd.s32 %s148, 8
      %p150 = scmp.lt.s32.totalorder %s149, 7
      %s151 = scalar_select %p150, %s149, 7
      %s152 = ssub.s32 %s25, %s37
      %s153 = ssub.s32 %s147, %s151
      %s154 = sor.u32 %s152, %s153
      %p155 = scmp.eq.s32.totalorder %s154, 0
      %s157 = sadd.s32 %s156, 1
      %s158 = scalar_select %p155, %s156, %s157
      %p161 = pneg %p155
      %p162 = scmp.eq.s32.totalorder %s18, 1
      %p163 = por %p161, %p162
      %p164 = scmp.ne.s32.totalorder %s156, %s159
      %p165 = scmp.eq.s32.totalorder %s18, 0
      %p166 = por %p164, %p165
      %p167 = scmp.ne.s32.totalorder %s156, %s159
      %p168 = scmp.eq.s32.totalorder %s23, 1
      %p169 = por %p167, %p168
      %p170 = scmp.ne.s32.totalorder %s159, %s160
      %p171 = scmp.eq.s32.totalorder %s23, 0
      %p172 = por %p170, %p171
      %p173 = scmp.ne.s32.totalorder %s159, %s160
      %p174 = scmp.eq.s32.totalorder %s24, 1
      %p175 = por %p173, %p174
      %p177 = scmp.ne.s32.totalorder %s160, %s176
      %p178 = scmp.eq.s32.totalorder %s24, 0
      %p179 = por %p177, %p178
      %s181 = sadd.s32 %s180, 1
      %p184 = scmp.eq.s32.totalorder %s18, 1
      %p185 = scmp.ne.s32.totalorder %s180, %s182
      %p186 = scmp.eq.s32.totalorder %s18, 0
      %p187 = por %p185, %p186
      %p188 = scmp.ne.s32.totalorder %s180, %s182
      %p189 = scmp.eq.s32.totalorder %s23, 1
      %p190 = por %p188, %p189
      %p191 = scmp.ne.s32.totalorder %s182, %s183
      %p192 = scmp.eq.s32.totalorder %s23, 0
      %p193 = por %p191, %p192
      %p194 = scmp.ne.s32.totalorder %s182, %s183
      %p195 = scmp.eq.s32.totalorder %s24, 1
      %p196 = por %p194, %p195
      %p198 = scmp.ne.s32.totalorder %s183, %s197
      %p199 = scmp.eq.s32.totalorder %s24, 0
      %p200 = por %p198, %p199
      %s202 = sadd.s32 %s201, 1
      %p205 = scmp.eq.s32.totalorder %s18, 1
      %p206 = scmp.ne.s32.totalorder %s201, %s203
      %p207 = scmp.eq.s32.totalorder %s18, 0
      %p208 = por %p206, %p207
      %p209 = scmp.ne.s32.totalorder %s201, %s203
      %p210 = scmp.eq.s32.totalorder %s23, 1
      %p211 = por %p209, %p210
      %p212 = scmp.ne.s32.totalorder %s203, %s204
      %p213 = scmp.eq.s32.totalorder %s23, 0
      %p214 = por %p212, %p213
      %p215 = scmp.ne.s32.totalorder %s203, %s204
      %p216 = scmp.eq.s32.totalorder %s24, 1
      %p217 = por %p215, %p216
      %p219 = scmp.ne.s32.totalorder %s204, %s218
      %p220 = scmp.eq.s32.totalorder %s24, 0
      %p221 = por %p219, %p220
      %s222 = ssub.s32 %s25, %s37
      %s223 = ssub.s32 %s26, %s33
      %s224 = sor.u32 %s222, %s223
      %p225 = scmp.eq.s32.totalorder %s224, 0
      %s227 = sadd.s32 %s226, 1
      %s228 = scalar_select %p225, %s226, %s227
      %p231 = pneg %p225
      %p232 = scmp.eq.s32.totalorder %s18, 1
      %p233 = por %p231, %p232
      %p234 = scmp.ne.s32.totalorder %s226, %s229
      %p235 = scmp.eq.s32.totalorder %s18, 0
      %p236 = por %p234, %p235
      %p237 = scmp.ne.s32.totalorder %s226, %s229
      %p238 = scmp.eq.s32.totalorder %s23, 1
      %p239 = por %p237, %p238
      %p240 = scmp.ne.s32.totalorder %s229, %s230
      %p241 = scmp.eq.s32.totalorder %s23, 0
      %p242 = por %p240, %p241
      %p243 = scmp.ne.s32.totalorder %s229, %s230
      %p244 = scmp.eq.s32.totalorder %s24, 1
      %p245 = por %p243, %p244
      %p247 = scmp.ne.s32.totalorder %s230, %s246
      %p248 = scmp.eq.s32.totalorder %s24, 0
      %p249 = por %p247, %p248
      %s250 = ssub.s32 %s25, %s37
      %s251 = ssub.s32 %s26, %s33
      %s252 = sor.u32 %s250, %s251
      %p253 = scmp.eq.s32.totalorder %s252, 0
      %s255 = sadd.s32 %s254, 1
      %s256 = scalar_select %p253, %s254, %s255
      %p259 = pneg %p253
      %p260 = scmp.eq.s32.totalorder %s18, 1
      %p261 = por %p259, %p260
      %p262 = scmp.ne.s32.totalorder %s254, %s257
      %p263 = scmp.eq.s32.totalorder %s18, 0
      %p264 = por %p262, %p263
      %p265 = scmp.ne.s32.totalorder %s254, %s257
      %p266 = scmp.eq.s32.totalorder %s23, 1
      %p267 = por %p265, %p266
      %p268 = scmp.ne.s32.totalorder %s257, %s258
      %p269 = scmp.eq.s32.totalorder %s23, 0
      %p270 = por %p268, %p269
      %p271 = scmp.ne.s32.totalorder %s257, %s258
      %p272 = scmp.eq.s32.totalorder %s24, 1
      %p273 = por %p271, %p272
      %p275 = scmp.ne.s32.totalorder %s258, %s274
      %p276 = scmp.eq.s32.totalorder %s24, 0
      %p277 = por %p275, %p276
      %p278 = scmp.le.s32.totalorder 1, %s18
      %p279 = scmp.lt.s32.totalorder %s18, 3
      %p280 = pnand %p278, %p279
      %p281 = pneg %p280
      // Predicated region
      $region9: #{residual_block_3d_packed.4} parent=5 // pred_check
        _
      $region10: #{residual_block_3d_packed.4} parent=5 // pred_check_branch
        %283 = sbr.rel (%p280) target = $region12
      $region11: #{residual_block_3d_packed.4} parent=5 // pred_region
        %s284 = ssub.s32 %s18, 1
        // Predicated region
        $region13: #{residual_block_3d_packed.4} parent=11 // pred_check
          %p285 = pneg %p51
        $region14: #{residual_block_3d_packed.4} parent=11 // pred_check_branch
          %287 = sbr.rel (%p285) target = $region16
        $region15: #{residual_block_3d_packed.4} parent=11 // pred_region
          _
        $region16: #{residual_block_3d_packed.4} parent=11 // pred_fallthru
          _
        // Predicated region
        $region17: #{residual_block_3d_packed.4} parent=11 // pred_check
          %p288 = pneg %p72
        $region18: #{residual_block_3d_packed.4} parent=11 // pred_check_branch
          %290 = sbr.rel (%p288) target = $region20
        $region19: #{residual_block_3d_packed.4} parent=11 // pred_region
          _
        $region20: #{residual_block_3d_packed.4} parent=11 // pred_fallthru
          _
        // Predicated region
        $region21: #{residual_block_3d_packed.4} parent=11 // pred_check
          %p291 = pneg %p193
        $region22: #{residual_block_3d_packed.4} parent=11 // pred_check_branch
          %293 = sbr.rel (%p291) target = $region24
        $region23: #{residual_block_3d_packed.4} parent=11 // pred_region
          _
        $region24: #{residual_block_3d_packed.4} parent=11 // pred_fallthru
          _
        // Predicated region
        $region25: #{residual_block_3d_packed.4} parent=11 // pred_check
          %p294 = pneg %p214
        $region26: #{residual_block_3d_packed.4} parent=11 // pred_check_branch
          %296 = sbr.rel (%p294) target = $region28
        $region27: #{residual_block_3d_packed.4} parent=11 // pred_region
          _
        $region28: #{residual_block_3d_packed.4} parent=11 // pred_fallthru
          _
      $region12: #{residual_block_3d_packed.4} parent=5 // pred_fallthru
        _
      %p297 = scmp.lt.s32.totalorder %s18, 2
      // Predicated region
      $region29: #{residual_block_3d_packed.4} parent=5 // pred_check
        %p298 = pneg %p297
      $region30: #{residual_block_3d_packed.4} parent=5 // pred_check_branch
        %300 = sbr.rel (%p298) target = $region32
      $region31: #{residual_block_3d_packed.4} parent=5 // pred_region
        // Predicated region
        $region33: #{residual_block_3d_packed.4} parent=31 // pred_check
          %p301 = pneg %p94
        $region34: #{residual_block_3d_packed.4} parent=31 // pred_check_branch
          %303 = sbr.rel (%p301) target = $region36
        $region35: #{residual_block_3d_packed.4} parent=31 // pred_region
          %s304 = smul.u32 8, %s26
          %p305 = scmp.lt.s32.totalorder %s25, 1
          %s306 = scalar_select %p305, %s25, 1
          %p307 = scmp.lt.s32.totalorder %s304, 7
          %s308 = scalar_select %p307, %s304, 7
          %s309 = smul.addr %s306, 8
          %s310 = sadd.s32 %s308, %s309
          %s311 = smul.addr %s310, 4
          %s312 = scalar_lea.vmem %s2, %s311
          %s313 = smul.u32 8, %s26
        $region36: #{residual_block_3d_packed.4} parent=31 // pred_fallthru
          _
        // Predicated region
        $region37: #{residual_block_3d_packed.4} parent=31 // pred_check
          %p314 = pneg %p130
        $region38: #{residual_block_3d_packed.4} parent=31 // pred_check_branch
          %316 = sbr.rel (%p314) target = $region40
        $region39: #{residual_block_3d_packed.4} parent=31 // pred_region
          %s317 = smul.u32 %s26, 8
          %s318 = ssub.s32 %s317, 1
          %p319 = scmp.gt.s32.totalorder %s318, 0
          %s320 = scalar_select %p319, %s318, 0
          %p321 = scmp.lt.s32.totalorder %s25, 1
          %s322 = scalar_select %p321, %s25, 1
          %p323 = scmp.lt.s32.totalorder %s320, 7
          %s324 = scalar_select %p323, %s320, 7
          %s325 = smul.addr %s322, 8
          %s326 = sadd.s32 %s324, %s325
          %s327 = smul.addr %s326, 4
          %s328 = scalar_lea.vmem %s3, %s327
          %s329 = smul.u32 %s26, 8
          %s330 = ssub.s32 %s329, 1
          %p331 = scmp.gt.s32.totalorder %s330, 0
          %s332 = scalar_select %p331, %s330, 0
        $region40: #{residual_block_3d_packed.4} parent=31 // pred_fallthru
          _
        // Predicated region
        $region41: #{residual_block_3d_packed.4} parent=31 // pred_check
          %p333 = pneg %p166
        $region42: #{residual_block_3d_packed.4} parent=31 // pred_check_branch
          %335 = sbr.rel (%p333) target = $region44
        $region43: #{residual_block_3d_packed.4} parent=31 // pred_region
          %s336 = smul.u32 %s26, 8
          %s337 = sadd.s32 %s336, 8
          %p338 = scmp.lt.s32.totalorder %s337, 7
          %s339 = scalar_select %p338, %s337, 7
          %p340 = scmp.lt.s32.totalorder %s25, 1
          %s341 = scalar_select %p340, %s25, 1
          %p342 = scmp.lt.s32.totalorder %s339, 7
          %s343 = scalar_select %p342, %s339, 7
          %s344 = smul.addr %s341, 8
          %s345 = sadd.s32 %s343, %s344
          %s346 = smul.addr %s345, 4
          %s347 = scalar_lea.vmem %s4, %s346
          %s348 = smul.u32 %s26, 8
          %s349 = sadd.s32 %s348, 8
          %p350 = scmp.lt.s32.totalorder %s349, 7
          %s351 = scalar_select %p350, %s349, 7
        $region44: #{residual_block_3d_packed.4} parent=31 // pred_fallthru
          _
      $region32: #{residual_block_3d_packed.4} parent=5 // pred_fallthru
        _
      %p352 = scmp.le.s32.totalorder 1, %s18
      %p353 = scmp.lt.s32.totalorder %s18, 3
      %p354 = pnand %p352, %p353
      %p355 = pneg %p354
      // Predicated region
      $region45: #{residual_block_3d_packed.4} parent=5 // pred_check
        _
      $region46: #{residual_block_3d_packed.4} parent=5 // pred_check_branch
        %357 = sbr.rel (%p354) target = $region48
      $region47: #{residual_block_3d_packed.4} parent=5 // pred_region
        %s358 = ssub.s32 %s18, 1
        %p359 = pneg %p51
        %p360 = pneg %p48
        %p361 = pneg %p72
        %p362 = pneg %p69
        %s363 = smul.u32 8, %s28
        %p364 = scmp.lt.s32.totalorder %s27, 1
        %s365 = scalar_select %p364, %s27, 1
        %p366 = scmp.lt.s32.totalorder %s363, 7
        %s367 = scalar_select %p366, %s363, 7
        %s368 = smul.addr %s365, 8
        %s369 = sadd.s32 %s367, %s368
        %s370 = smul.addr %s369, 4
        %s371 = scalar_lea.vmem %s2, %s370
        %p372 = pneg %p100
        %p373 = pneg %p97
        %s374 = smul.u32 %s28, 8
        %s375 = ssub.s32 %s374, 1
        %p376 = scmp.gt.s32.totalorder %s375, 0
        %s377 = scalar_select %p376, %s375, 0
        %p378 = scmp.lt.s32.totalorder %s27, 1
        %s379 = scalar_select %p378, %s27, 1
        %p380 = scmp.lt.s32.totalorder %s377, 7
        %s381 = scalar_select %p380, %s377, 7
        %s382 = smul.addr %s379, 8
        %s383 = sadd.s32 %s381, %s382
        %s384 = smul.addr %s383, 4
        %s385 = scalar_lea.vmem %s3, %s384
        %p386 = pneg %p136
        %p387 = pneg %p133
        %s388 = smul.u32 %s28, 8
        %s389 = sadd.s32 %s388, 8
        %p390 = scmp.lt.s32.totalorder %s389, 7
        %s391 = scalar_select %p390, %s389, 7
        %p392 = scmp.lt.s32.totalorder %s27, 1
        %s393 = scalar_select %p392, %s27, 1
        %p394 = scmp.lt.s32.totalorder %s391, 7
        %s395 = scalar_select %p394, %s391, 7
        %s396 = smul.addr %s393, 8
        %s397 = sadd.s32 %s395, %s396
        %s398 = smul.addr %s397, 4
        %s399 = scalar_lea.vmem %s4, %s398
        %p400 = pneg %p172
        %p401 = pneg %p169
        %p402 = pneg %p193
        %p403 = pneg %p190
        %p404 = pneg %p214
        %p405 = pneg %p211
        %p406 = pneg %p242
        %p407 = pneg %p239
        %s408 = sand.u32 %s229, 1
        %s409 = scalar_lea.sflag [#allocation5], %s408
        %s410 = sand.u32 %s229, 1
        %s411 = smul.addr %s410, 32
        %s412 = scalar_lea.vmem [#allocation4], %s411
        %p413 = pneg %p270
        %p414 = pneg %p267
        %p415 = scmp.lt.s32.totalorder %s27, 1
        %s416 = scalar_select %p415, %s27, 1
        %p417 = scmp.lt.s32.totalorder %s28, 0
        %s418 = scalar_select %p417, %s28, 0
        %s419 = sadd.s32 %s418, %s416
        %s420 = smul.addr %s419, 2
        %s421 = scalar_lea.vmem %s8, %s420
        %s422 = smul.u32 8, %s28
        %p423 = scmp.lt.s32.totalorder %s27, 1
        %s424 = scalar_select %p423, %s27, 1
        %p425 = scmp.lt.s32.totalorder %s422, 7
        %s426 = scalar_select %p425, %s422, 7
        %s427 = smul.addr %s424, 8
        %s428 = sadd.s32 %s426, %s427
        %s429 = smul.addr %s428, 4
        %s430 = scalar_lea.vmem %s2, %s429
        %s431 = smul.u32 8, %s28
        %s432 = smul.u32 %s28, 8
        %s433 = ssub.s32 %s432, 1
        %p434 = scmp.gt.s32.totalorder %s433, 0
        %s435 = scalar_select %p434, %s433, 0
        %p436 = scmp.lt.s32.totalorder %s27, 1
        %s437 = scalar_select %p436, %s27, 1
        %p438 = scmp.lt.s32.totalorder %s435, 7
        %s439 = scalar_select %p438, %s435, 7
        %s440 = smul.addr %s437, 8
        %s441 = sadd.s32 %s439, %s440
        %s442 = smul.addr %s441, 4
        %s443 = scalar_lea.vmem %s3, %s442
        %s444 = smul.u32 %s28, 8
        %s445 = ssub.s32 %s444, 1
        %p446 = scmp.gt.s32.totalorder %s445, 0
        %s447 = scalar_select %p446, %s445, 0
        %s448 = smul.u32 %s28, 8
        %s449 = sadd.s32 %s448, 8
        %p450 = scmp.lt.s32.totalorder %s449, 7
        %s451 = scalar_select %p450, %s449, 7
        %p452 = scmp.lt.s32.totalorder %s27, 1
        %s453 = scalar_select %p452, %s27, 1
        %p454 = scmp.lt.s32.totalorder %s451, 7
        %s455 = scalar_select %p454, %s451, 7
        %s456 = smul.addr %s453, 8
        %s457 = sadd.s32 %s455, %s456
        %s458 = smul.addr %s457, 4
        %s459 = scalar_lea.vmem %s4, %s458
        %s460 = smul.u32 %s28, 8
        %s461 = sadd.s32 %s460, 8
        %p462 = scmp.lt.s32.totalorder %s461, 7
        %s463 = scalar_select %p462, %s461, 7
        %s464 = smul.u32 8, %s28
        %p465 = scmp.lt.s32.totalorder %s27, 1
        %s466 = scalar_select %p465, %s27, 1
        %p467 = scmp.lt.s32.totalorder %s28, 0
        %s468 = scalar_select %p467, %s28, 0
        %s469 = sadd.s32 %s468, %s466
        %s470 = smul.addr %s469, 2
        %s471 = scalar_lea.vmem %s8, %s470
        %v473 = vld [vmem:[%s430] sm:$0xf]
        %v474 = vld [vmem:[%s430 + $0x4] sm:$0xf]
        %v475 = vld [vmem:[%s430 + $0x8] sm:$0xf]
        %v476 = vld [vmem:[%s430 + $0xc] sm:$0xf]
        %v477 = vld [vmem:[%s430 + $0x10] sm:$0xf]
        %v478 = vld [vmem:[%s430 + $0x14] sm:$0xf]
        %v479 = vld [vmem:[%s430 + $0x18] sm:$0xf]
        %v480 = vld [vmem:[%s430 + $0x1c] sm:$0xf]
        %v481 = vunpack.c.l.bf16 %v473
        %v482 = vunpack.c.l.bf16 %v474
        %v483 = vunpack.c.l.bf16 %v475
        %v484 = vunpack.c.l.bf16 %v476
        %v485 = vunpack.c.l.bf16 %v477
        %v486 = vunpack.c.l.bf16 %v478
        %v487 = vunpack.c.l.bf16 %v479
        %v488 = vunpack.c.l.bf16 %v480
        %v489 = vld [vmem:[%s0] sm:$0x1]
        %v491 = vlaneseq
        %v492 = vshrl.u32 %v491, 7
        %v493 = vsub.s32 0, %v492
        %v494 = vrot.slane %v489, %v493
        %v496 = vmul.f32 %v481, %v494
        %v497 = vmul.f32 %v482, %v494
        %v498 = vmul.f32 %v483, %v494
        %v499 = vmul.f32 %v484, %v494
        %v500 = vmul.f32 %v485, %v494
        %v501 = vmul.f32 %v486, %v494
        %v502 = vmul.f32 %v487, %v494
        %v503 = vmul.f32 %v488, %v494
        %v504 = vld [vmem:[%s1] sm:$0x1]
        %v506 = vlaneseq
        %v507 = vshrl.u32 %v506, 7
        %v508 = vsub.s32 0, %v507
        %v509 = vrot.slane %v504, %v508
        %v511 = vadd.f32 %v496, %v509
        %v512 = vadd.f32 %v497, %v509
        %v513 = vadd.f32 %v498, %v509
        %v514 = vadd.f32 %v499, %v509
        %v515 = vadd.f32 %v500, %v509
        %v516 = vadd.f32 %v501, %v509
        %v517 = vadd.f32 %v502, %v509
        %v518 = vadd.f32 %v503, %v509
        %vm519 = vcmp.gt.f32.partialorder %v511, 0.0
        %vm520 = vcmp.gt.f32.partialorder %v512, 0.0
        %vm521 = vcmp.gt.f32.partialorder %v513, 0.0
        %vm522 = vcmp.gt.f32.partialorder %v514, 0.0
        %vm523 = vcmp.gt.f32.partialorder %v515, 0.0
        %vm524 = vcmp.gt.f32.partialorder %v516, 0.0
        %vm525 = vcmp.gt.f32.partialorder %v517, 0.0
        %vm526 = vcmp.gt.f32.partialorder %v518, 0.0
        %v527 = vmul.f32 %v511, 0.2
        %v528 = vmul.f32 %v512, 0.2
        %v529 = vmul.f32 %v513, 0.2
        %v530 = vmul.f32 %v514, 0.2
        %v531 = vmul.f32 %v515, 0.2
        %v532 = vmul.f32 %v516, 0.2
        %v533 = vmul.f32 %v517, 0.2
        %v534 = vmul.f32 %v518, 0.2
        %v535 = vsel %vm519, %v511, %v527
        %v536 = vsel %vm520, %v512, %v528
        %v537 = vsel %vm521, %v513, %v529
        %v538 = vsel %vm522, %v514, %v530
        %v539 = vsel %vm523, %v515, %v531
        %v540 = vsel %vm524, %v516, %v532
        %v541 = vsel %vm525, %v517, %v533
        %v542 = vsel %vm526, %v518, %v534
        %s543 = scalar_lea.vmem [#allocation2], 8
        %544 = vst [vmem:[%s543] sm:$0xff] %v535
        %545 = vst [vmem:[%s543 + $0x8] sm:$0xff] %v536
        %546 = vst [vmem:[%s543 + $0x10] sm:$0xff] %v537
        %547 = vst [vmem:[%s543 + $0x18] sm:$0xff] %v538
        %548 = vst [vmem:[%s543 + $0x20] sm:$0xff] %v539
        %549 = vst [vmem:[%s543 + $0x28] sm:$0xff] %v540
        %550 = vst [vmem:[%s543 + $0x30] sm:$0xff] %v541
        %551 = vst [vmem:[%s543 + $0x38] sm:$0xff] %v542
        %p552 = scmp.gt.s32.totalorder %s28, 0
        %s553 = scalar_select %p552, 1, 0
        %s554 = scvt.s32.f32 %s553
        %p555 = scmp.lt.s32.totalorder %s28, 0
        %s556 = scalar_select %p555, 1, 0
        %s557 = scvt.s32.f32 %s556
        %v558 = vld [vmem:[%s443] sm:$0xf]
        %v559 = vunpack.c.l.bf16 %v558
        %v560 = vld [vmem:[%s0] sm:$0x1]
        %v562 = vlaneseq
        %v563 = vshrl.u32 %v562, 7
        %v564 = vsub.s32 0, %v563
        %v565 = vrot.slane %v560, %v564
        %v567 = vmul.f32 %v559, %v565
        %v568 = vld [vmem:[%s1] sm:$0x1]
        %v570 = vlaneseq
        %v571 = vshrl.u32 %v570, 7
        %v572 = vsub.s32 0, %v571
        %v573 = vrot.slane %v568, %v572
        %v575 = vadd.f32 %v567, %v573
        %vm576 = vcmp.gt.f32.partialorder %v575, 0.0
        %v577 = vmul.f32 %v575, 0.2
        %v578 = vsel %vm576, %v575, %v577
        %v579 = vstv %s554
        %v580 = vmul.f32 %v578, %v579
        %581 = vst [vmem:[#allocation2] sm:$0xff] %v580
        %v582 = vld [vmem:[%s459] sm:$0xf]
        %v583 = vunpack.c.l.bf16 %v582
        %v584 = vld [vmem:[%s0] sm:$0x1]
        %v586 = vlaneseq
        %v587 = vshrl.u32 %v586, 7
        %v588 = vsub.s32 0, %v587
        %v589 = vrot.slane %v584, %v588
        %v591 = vmul.f32 %v583, %v589
        %v592 = vld [vmem:[%s1] sm:$0x1]
        %v594 = vlaneseq
        %v595 = vshrl.u32 %v594, 7
        %v596 = vsub.s32 0, %v595
        %v597 = vrot.slane %v592, %v596
        %v599 = vadd.f32 %v591, %v597
        %vm600 = vcmp.gt.f32.partialorder %v599, 0.0
        %v601 = vmul.f32 %v599, 0.2
        %v602 = vsel %vm600, %v599, %v601
        %v603 = vstv %s557
        %v604 = vmul.f32 %v602, %v603
        %s605 = scalar_lea.vmem [#allocation2], 72
        %606 = vst [vmem:[%s605] sm:$0xff] %v604
        %v607 = vld [vmem:[#allocation2] sm:$0xff]
        %v608 = vld [vmem:[#allocation2 + $0x8] sm:$0xff]
        %v609 = vld [vmem:[#allocation2 + $0x10] sm:$0xff]
        %v610 = vld [vmem:[#allocation2 + $0x18] sm:$0xff]
        %v611 = vld [vmem:[#allocation2 + $0x20] sm:$0xff]
        %v612 = vld [vmem:[#allocation2 + $0x28] sm:$0xff]
        %v613 = vld [vmem:[#allocation2 + $0x30] sm:$0xff]
        %v614 = vld [vmem:[#allocation2 + $0x38] sm:$0xff]
        %v615 = vpack.c.bf16 %v608, %v607
        %v616 = vpack.c.bf16 %v610, %v609
        %v617 = vpack.c.bf16 %v612, %v611
        %v618 = vpack.c.bf16 %v614, %v613
        %v619 = vld [vmem:[%s5] sm:$0xf]
        %v620 = vld [vmem:[%s5 + $0x4] sm:$0xf]
        %v621 = vld [vmem:[%s5 + $0x8] sm:$0xf]
        %v622 = vld [vmem:[%s5 + $0xc] sm:$0xf]
        %v623 = vld [vmem:[%s5 + $0x10] sm:$0xf]
        %v624 = vld [vmem:[%s5 + $0x14] sm:$0xf]
        %v625 = vld [vmem:[%s5 + $0x18] sm:$0xf]
        %v626 = vld [vmem:[%s5 + $0x1c] sm:$0xf]
        %v627 = vld [vmem:[%s5 + $0x20] sm:$0xf]
        %v628 = vld [vmem:[%s5 + $0x24] sm:$0xf]
        %v629 = vld [vmem:[%s5 + $0x28] sm:$0xf]
        %v630 = vld [vmem:[%s5 + $0x2c] sm:$0xf]
        %v631 = vld [vmem:[%s5 + $0x30] sm:$0xf]
        %v632 = vld [vmem:[%s5 + $0x34] sm:$0xf]
        %v633 = vld [vmem:[%s5 + $0x38] sm:$0xf]
        %v634 = vld [vmem:[%s5 + $0x3c] sm:$0xf]
        %v651 = vunpack.c.l.b16 %v619
        %v652 = vunpack.c.l.b16 %v620
        %v653 = vunpack.c.l.b16 %v621
        %v654 = vunpack.c.l.b16 %v622
        %v655 = vunpack.c.l.b16 %v623
        %v656 = vunpack.c.l.b16 %v624
        %v657 = vunpack.c.l.b16 %v625
        %v658 = vunpack.c.l.b16 %v626
        %v659 = vunpack.c.l.b16 %v627
        %v660 = vunpack.c.l.b16 %v628
        %v661 = vunpack.c.l.b16 %v629
        %v662 = vunpack.c.l.b16 %v630
        %v663 = vunpack.c.l.b16 %v631
        %v664 = vunpack.c.l.b16 %v632
        %v665 = vunpack.c.l.b16 %v633
        %v666 = vunpack.c.l.b16 %v634
        %v667 = vpack.c.b16 %v652, %v651
        %v668 = vpack.c.b16 %v654, %v653
        %v669 = vpack.c.b16 %v656, %v655
        %v670 = vpack.c.b16 %v658, %v657
        %v671 = vpack.c.b16 %v660, %v659
        %v672 = vpack.c.b16 %v662, %v661
        %v673 = vpack.c.b16 %v664, %v663
        %v674 = vpack.c.b16 %v666, %v665
        %683 = vmatprep.subr.bf16.mxu0 0
        %684 = vmatpush1.bf16.msra.mxu0 %v667
        %685 = vmatprep.subr.bf16.mxu0 0
        %686 = vmatpush1.bf16.msra.mxu0 %v668
        %687 = vmatprep.subr.bf16.mxu0 0
        %688 = vmatpush1.bf16.msra.mxu0 %v669
        %689 = vmatprep.subr.bf16.mxu0 0
        %690 = vmatpush1.bf16.msra.mxu0 %v670
        %691 = vmatprep.subr.bf16.mxu0 0
        %692 = vmatpush1.bf16.msra.mxu0 %v671
        %693 = vmatprep.subr.bf16.mxu0 0
        %694 = vmatpush1.bf16.msra.mxu0 %v672
        %695 = vmatprep.subr.bf16.mxu0 0
        %696 = vmatpush1.bf16.msra.mxu0 %v673
        %697 = vmatprep.subr.bf16.mxu0 0
        %698 = vmatpush1.bf16.msra.mxu0 %v674
        %699 = vmatprep.subr.bf16.mxu0 0
        %700 = vmatpush1.bf16.msra.mxu0 0
        %701 = vmatprep.subr.bf16.mxu0 0
        %702 = vmatpush1.bf16.msra.mxu0 0
        %703 = vmatprep.subr.bf16.mxu0 0
        %704 = vmatpush1.bf16.msra.mxu0 0
        %705 = vmatprep.subr.bf16.mxu0 0
        %706 = vmatpush1.bf16.msra.mxu0 0
        %707 = vmatprep.subr.bf16.mxu0 0
        %708 = vmatpush1.bf16.msra.mxu0 0
        %709 = vmatprep.subr.bf16.mxu0 0
        %710 = vmatpush1.bf16.msra.mxu0 0
        %711 = vmatprep.subr.bf16.mxu0 0
        %712 = vmatpush1.bf16.msra.mxu0 0
        %713 = vmatprep.subr.bf16.mxu0 0
        %714 = vmatpush1.bf16.msra.mxu0 0
        %715 = vmatprep.mubr.bf16.mxu0 0
        %716 = vmatmul.mubr.bf16.gmra.mrb[0].mxu0 %v615
        %v717 = vpop.f32.mrb[0].mxu0
        %v718 = vadd.f32 0.0, %v717
        %v719 = vpop.f32.mrb[0].mxu0
        %v720 = vpop.f32.mrb[0].mxu0
        %v721 = vadd.f32 0.0, %v720
        %v722 = vpop.f32.mrb[0].mxu0
        %723 = vmatprep.mubr.bf16.mxu0 0
        %724 = vmatmul.mubr.bf16.gmra.mrb[0].mxu0 %v616
        %v725 = vpop.f32.mrb[0].mxu0
        %v726 = vadd.f32 0.0, %v725
        %v727 = vpop.f32.mrb[0].mxu0
        %v728 = vpop.f32.mrb[0].mxu0
        %v729 = vadd.f32 0.0, %v728
        %v730 = vpop.f32.mrb[0].mxu0
        %731 = vmatprep.mubr.bf16.mxu0 0
        %732 = vmatmul.mubr.bf16.gmra.mrb[0].mxu0 %v617
        %v733 = vpop.f32.mrb[0].mxu0
        %v734 = vadd.f32 0.0, %v733
        %v735 = vpop.f32.mrb[0].mxu0
        %v736 = vpop.f32.mrb[0].mxu0
        %v737 = vadd.f32 0.0, %v736
        %v738 = vpop.f32.mrb[0].mxu0
        %739 = vmatprep.mubr.bf16.mxu0 0
        %740 = vmatmul.mubr.bf16.gmra.mrb[0].mxu0 %v618
        %v741 = vpop.f32.mrb[0].mxu0
        %v742 = vadd.f32 0.0, %v741
        %v743 = vpop.f32.mrb[0].mxu0
        %v744 = vpop.f32.mrb[0].mxu0
        %v745 = vadd.f32 0.0, %v744
        %v746 = vpop.f32.mrb[0].mxu0
        %747 = vdwg.mxu0
        %748 = vst [vmem:[#allocation3] sm:$0xff] %v718
        %749 = vst [vmem:[#allocation3 + $0x8] sm:$0xff] %v721
        %750 = vst [vmem:[#allocation3 + $0x10] sm:$0xff] %v726
        %751 = vst [vmem:[#allocation3 + $0x18] sm:$0xff] %v729
        %752 = vst [vmem:[#allocation3 + $0x20] sm:$0xff] %v734
        %753 = vst [vmem:[#allocation3 + $0x28] sm:$0xff] %v737
        %754 = vst [vmem:[#allocation3 + $0x30] sm:$0xff] %v742
        %755 = vst [vmem:[#allocation3 + $0x38] sm:$0xff] %v745
        %s756 = scalar_lea.vmem %s5, 64
        %v757 = vld [vmem:[%s756] sm:$0xf]
        %v758 = vld [vmem:[%s756 + $0x4] sm:$0xf]
        %v759 = vld [vmem:[%s756 + $0x8] sm:$0xf]
        %v760 = vld [vmem:[%s756 + $0xc] sm:$0xf]
        %v761 = vld [vmem:[%s756 + $0x10] sm:$0xf]
        %v762 = vld [vmem:[%s756 + $0x14] sm:$0xf]
        %v763 = vld [vmem:[%s756 + $0x18] sm:$0xf]
        %v764 = vld [vmem:[%s756 + $0x1c] sm:$0xf]
        %v765 = vld [vmem:[%s756 + $0x20] sm:$0xf]
        %v766 = vld [vmem:[%s756 + $0x24] sm:$0xf]
        %v767 = vld [vmem:[%s756 + $0x28] sm:$0xf]
        %v768 = vld [vmem:[%s756 + $0x2c] sm:$0xf]
        %v769 = vld [vmem:[%s756 + $0x30] sm:$0xf]
        %v770 = vld [vmem:[%s756 + $0x34] sm:$0xf]
        %v771 = vld [vmem:[%s756 + $0x38] sm:$0xf]
        %v772 = vld [vmem:[%s756 + $0x3c] sm:$0xf]
        %v789 = vunpack.c.l.b16 %v757
        %v790 = vunpack.c.l.b16 %v758
        %v791 = vunpack.c.l.b16 %v759
        %v792 = vunpack.c.l.b16 %v760
        %v793 = vunpack.c.l.b16 %v761
        %v794 = vunpack.c.l.b16 %v762
        %v795 = vunpack.c.l.b16 %v763
        %v796 = vunpack.c.l.b16 %v764
        %v797 = vunpack.c.l.b16 %v765
        %v798 = vunpack.c.l.b16 %v766
        %v799 = vunpack.c.l.b16 %v767
        %v800 = vunpack.c.l.b16 %v768
        %v801 = vunpack.c.l.b16 %v769
        %v802 = vunpack.c.l.b16 %v770
        %v803 = vunpack.c.l.b16 %v771
        %v804 = vunpack.c.l.b16 %v772
        %v805 = vpack.c.b16 %v790, %v789
        %v806 = vpack.c.b16 %v792, %v791
        %v807 = vpack.c.b16 %v794, %v793
        %v808 = vpack.c.b16 %v796, %v795
        %v809 = vpack.c.b16 %v798, %v797
        %v810 = vpack.c.b16 %v800, %v799
        %v811 = vpack.c.b16 %v802, %v801
        %v812 = vpack.c.b16 %v804, %v803
        %821 = vmatprep.subr.bf16.mxu0 0
        %822 = vmatpush1.bf16.msra.mxu0 %v805
        %823 = vmatprep.subr.bf16.mxu0 0
        %824 = vmatpush1.bf16.msra.mxu0 %v806
        %825 = vmatprep.subr.bf16.mxu0 0
        %826 = vmatpush1.bf16.msra.mxu0 %v807
        %827 = vmatprep.subr.bf16.mxu0 0
        %828 = vmatpush1.bf16.msra.mxu0 %v808
        %829 = vmatprep.subr.bf16.mxu0 0
        %830 = vmatpush1.bf16.msra.mxu0 %v809
        %831 = vmatprep.subr.bf16.mxu0 0
        %832 = vmatpush1.bf16.msra.mxu0 %v810
        %833 = vmatprep.subr.bf16.mxu0 0
        %834 = vmatpush1.bf16.msra.mxu0 %v811
        %835 = vmatprep.subr.bf16.mxu0 0
        %836 = vmatpush1.bf16.msra.mxu0 %v812
        %837 = vmatprep.subr.bf16.mxu0 0
        %838 = vmatpush1.bf16.msra.mxu0 0
        %839 = vmatprep.subr.bf16.mxu0 0
        %840 = vmatpush1.bf16.msra.mxu0 0
        %841 = vmatprep.subr.bf16.mxu0 0
        %842 = vmatpush1.bf16.msra.mxu0 0
        %843 = vmatprep.subr.bf16.mxu0 0
        %844 = vmatpush1.bf16.msra.mxu0 0
        %845 = vmatprep.subr.bf16.mxu0 0
        %846 = vmatpush1.bf16.msra.mxu0 0
        %847 = vmatprep.subr.bf16.mxu0 0
        %848 = vmatpush1.bf16.msra.mxu0 0
        %849 = vmatprep.subr.bf16.mxu0 0
        %850 = vmatpush1.bf16.msra.mxu0 0
        %851 = vmatprep.subr.bf16.mxu0 0
        %852 = vmatpush1.bf16.msra.mxu0 0
        %853 = vmatprep.mubr.bf16.mxu0 0
        %854 = vmatmul.mubr.bf16.gmra.mrb[0].mxu0 %v615
        %v855 = vpop.f32.mrb[0].mxu0
        %v856 = vadd.f32 0.0, %v855
        %v857 = vpop.f32.mrb[0].mxu0
        %v858 = vpop.f32.mrb[0].mxu0
        %v859 = vadd.f32 0.0, %v858
        %v860 = vpop.f32.mrb[0].mxu0
        %861 = vmatprep.mubr.bf16.mxu0 0
        %862 = vmatmul.mubr.bf16.gmra.mrb[0].mxu0 %v616
        %v863 = vpop.f32.mrb[0].mxu0
        %v864 = vadd.f32 0.0, %v863
        %v865 = vpop.f32.mrb[0].mxu0
        %v866 = vpop.f32.mrb[0].mxu0
        %v867 = vadd.f32 0.0, %v866
        %v868 = vpop.f32.mrb[0].mxu0
        %869 = vmatprep.mubr.bf16.mxu0 0
        %870 = vmatmul.mubr.bf16.gmra.mrb[0].mxu0 %v617
        %v871 = vpop.f32.mrb[0].mxu0
        %v872 = vadd.f32 0.0, %v871
        %v873 = vpop.f32.mrb[0].mxu0
        %v874 = vpop.f32.mrb[0].mxu0
        %v875 = vadd.f32 0.0, %v874
        %v876 = vpop.f32.mrb[0].mxu0
        %877 = vmatprep.mubr.bf16.mxu0 0
        %878 = vmatmul.mubr.bf16.gmra.mrb[0].mxu0 %v618
        %v879 = vpop.f32.mrb[0].mxu0
        %v880 = vadd.f32 0.0, %v879
        %v881 = vpop.f32.mrb[0].mxu0
        %v882 = vpop.f32.mrb[0].mxu0
        %v883 = vadd.f32 0.0, %v882
        %v884 = vpop.f32.mrb[0].mxu0
        %885 = vdwg.mxu0
        %s886 = scalar_lea.vmem [#allocation3], 64
        %887 = vst [vmem:[%s886] sm:$0xff] %v856
        %888 = vst [vmem:[%s886 + $0x8] sm:$0xff] %v859
        %889 = vst [vmem:[%s886 + $0x10] sm:$0xff] %v864
        %890 = vst [vmem:[%s886 + $0x18] sm:$0xff] %v867
        %891 = vst [vmem:[%s886 + $0x20] sm:$0xff] %v872
        %892 = vst [vmem:[%s886 + $0x28] sm:$0xff] %v875
        %893 = vst [vmem:[%s886 + $0x30] sm:$0xff] %v880
        %894 = vst [vmem:[%s886 + $0x38] sm:$0xff] %v883
        %s895 = scalar_lea.vmem %s5, 128
        %v896 = vld [vmem:[%s895] sm:$0xf]
        %v897 = vld [vmem:[%s895 + $0x4] sm:$0xf]
        %v898 = vld [vmem:[%s895 + $0x8] sm:$0xf]
        %v899 = vld [vmem:[%s895 + $0xc] sm:$0xf]
        %v900 = vld [vmem:[%s895 + $0x10] sm:$0xf]
        %v901 = vld [vmem:[%s895 + $0x14] sm:$0xf]
        %v902 = vld [vmem:[%s895 + $0x18] sm:$0xf]
        %v903 = vld [vmem:[%s895 + $0x1c] sm:$0xf]
        %v904 = vld [vmem:[%s895 + $0x20] sm:$0xf]
        %v905 = vld [vmem:[%s895 + $0x24] sm:$0xf]
        %v906 = vld [vmem:[%s895 + $0x28] sm:$0xf]
        %v907 = vld [vmem:[%s895 + $0x2c] sm:$0xf]
        %v908 = vld [vmem:[%s895 + $0x30] sm:$0xf]
        %v909 = vld [vmem:[%s895 + $0x34] sm:$0xf]
        %v910 = vld [vmem:[%s895 + $0x38] sm:$0xf]
        %v911 = vld [vmem:[%s895 + $0x3c] sm:$0xf]
        %v928 = vunpack.c.l.b16 %v896
        %v929 = vunpack.c.l.b16 %v897
        %v930 = vunpack.c.l.b16 %v898
        %v931 = vunpack.c.l.b16 %v899
        %v932 = vunpack.c.l.b16 %v900
        %v933 = vunpack.c.l.b16 %v901
        %v934 = vunpack.c.l.b16 %v902
        %v935 = vunpack.c.l.b16 %v903
        %v936 = vunpack.c.l.b16 %v904
        %v937 = vunpack.c.l.b16 %v905
        %v938 = vunpack.c.l.b16 %v906
        %v939 = vunpack.c.l.b16 %v907
        %v940 = vunpack.c.l.b16 %v908
        %v941 = vunpack.c.l.b16 %v909
        %v942 = vunpack.c.l.b16 %v910
        %v943 = vunpack.c.l.b16 %v911
        %v944 = vpack.c.b16 %v929, %v928
        %v945 = vpack.c.b16 %v931, %v930
        %v946 = vpack.c.b16 %v933, %v932
        %v947 = vpack.c.b16 %v935, %v934
        %v948 = vpack.c.b16 %v937, %v936
        %v949 = vpack.c.b16 %v939, %v938
        %v950 = vpack.c.b16 %v941, %v940
        %v951 = vpack.c.b16 %v943, %v942
        %960 = vmatprep.subr.bf16.mxu0 0
        %961 = vmatpush1.bf16.msra.mxu0 %v944
        %962 = vmatprep.subr.bf16.mxu0 0
        %963 = vmatpush1.bf16.msra.mxu0 %v945
        %964 = vmatprep.subr.bf16.mxu0 0
        %965 = vmatpush1.bf16.msra.mxu0 %v946
        %966 = vmatprep.subr.bf16.mxu0 0
        %967 = vmatpush1.bf16.msra.mxu0 %v947
        %968 = vmatprep.subr.bf16.mxu0 0
        %969 = vmatpush1.bf16.msra.mxu0 %v948
        %970 = vmatprep.subr.bf16.mxu0 0
        %971 = vmatpush1.bf16.msra.mxu0 %v949
        %972 = vmatprep.subr.bf16.mxu0 0
        %973 = vmatpush1.bf16.msra.mxu0 %v950
        %974 = vmatprep.subr.bf16.mxu0 0
        %975 = vmatpush1.bf16.msra.mxu0 %v951
        %976 = vmatprep.subr.bf16.mxu0 0
        %977 = vmatpush1.bf16.msra.mxu0 0
        %978 = vmatprep.subr.bf16.mxu0 0
        %979 = vmatpush1.bf16.msra.mxu0 0
        %980 = vmatprep.subr.bf16.mxu0 0
        %981 = vmatpush1.bf16.msra.mxu0 0
        %982 = vmatprep.subr.bf16.mxu0 0
        %983 = vmatpush1.bf16.msra.mxu0 0
        %984 = vmatprep.subr.bf16.mxu0 0
        %985 = vmatpush1.bf16.msra.mxu0 0
        %986 = vmatprep.subr.bf16.mxu0 0
        %987 = vmatpush1.bf16.msra.mxu0 0
        %988 = vmatprep.subr.bf16.mxu0 0
        %989 = vmatpush1.bf16.msra.mxu0 0
        %990 = vmatprep.subr.bf16.mxu0 0
        %991 = vmatpush1.bf16.msra.mxu0 0
        %992 = vmatprep.mubr.bf16.mxu0 0
        %993 = vmatmul.mubr.bf16.gmra.mrb[0].mxu0 %v615
        %v994 = vpop.f32.mrb[0].mxu0
        %v995 = vadd.f32 0.0, %v994
        %v996 = vpop.f32.mrb[0].mxu0
        %v997 = vpop.f32.mrb[0].mxu0
        %v998 = vadd.f32 0.0, %v997
        %v999 = vpop.f32.mrb[0].mxu0
        %1000 = vmatprep.mubr.bf16.mxu0 0
        %1001 = vmatmul.mubr.bf16.gmra.mrb[0].mxu0 %v616
        %v1002 = vpop.f32.mrb[0].mxu0
        %v1003 = vadd.f32 0.0, %v1002
        %v1004 = vpop.f32.mrb[0].mxu0
        %v1005 = vpop.f32.mrb[0].mxu0
        %v1006 = vadd.f32 0.0, %v1005
        %v1007 = vpop.f32.mrb[0].mxu0
        %1008 = vmatprep.mubr.bf16.mxu0 0
        %1009 = vmatmul.mubr.bf16.gmra.mrb[0].mxu0 %v617
        %v1010 = vpop.f32.mrb[0].mxu0
        %v1011 = vadd.f32 0.0, %v1010
        %v1012 = vpop.f32.mrb[0].mxu0
        %v1013 = vpop.f32.mrb[0].mxu0
        %v1014 = vadd.f32 0.0, %v1013
        %v1015 = vpop.f32.mrb[0].mxu0
        %1016 = vmatprep.mubr.bf16.mxu0 0
        %1017 = vmatmul.mubr.bf16.gmra.mrb[0].mxu0 %v618
        %v1018 = vpop.f32.mrb[0].mxu0
        %v1019 = vadd.f32 0.0, %v1018
        %v1020 = vpop.f32.mrb[0].mxu0
        %v1021 = vpop.f32.mrb[0].mxu0
        %v1022 = vadd.f32 0.0, %v1021
        %v1023 = vpop.f32.mrb[0].mxu0
        %1024 = vdwg.mxu0
        %s1025 = scalar_lea.vmem [#allocation3], 128
        %1026 = vst [vmem:[%s1025] sm:$0xff] %v995
        %1027 = vst [vmem:[%s1025 + $0x8] sm:$0xff] %v998
        %1028 = vst [vmem:[%s1025 + $0x10] sm:$0xff] %v1003
        %1029 = vst [vmem:[%s1025 + $0x18] sm:$0xff] %v1006
        %1030 = vst [vmem:[%s1025 + $0x20] sm:$0xff] %v1011
        %1031 = vst [vmem:[%s1025 + $0x28] sm:$0xff] %v1014
        %1032 = vst [vmem:[%s1025 + $0x30] sm:$0xff] %v1019
        %1033 = vst [vmem:[%s1025 + $0x38] sm:$0xff] %v1022
        %v1034 = vld [vmem:[%s543] sm:$0xff]
        %v1035 = vld [vmem:[%s543 + $0x8] sm:$0xff]
        %v1036 = vld [vmem:[%s543 + $0x10] sm:$0xff]
        %v1037 = vld [vmem:[%s543 + $0x18] sm:$0xff]
        %v1038 = vld [vmem:[%s543 + $0x20] sm:$0xff]
        %v1039 = vld [vmem:[%s543 + $0x28] sm:$0xff]
        %v1040 = vld [vmem:[%s543 + $0x30] sm:$0xff]
        %v1041 = vld [vmem:[%s543 + $0x38] sm:$0xff]
        %v1042 = vpack.c.bf16 %v1035, %v1034
        %v1043 = vpack.c.bf16 %v1037, %v1036
        %v1044 = vpack.c.bf16 %v1039, %v1038
        %v1045 = vpack.c.bf16 %v1041, %v1040
        %s1046 = scalar_lea.vmem %s5, 192
        %v1047 = vld [vmem:[%s1046] sm:$0xf]
        %v1048 = vld [vmem:[%s1046 + $0x4] sm:$0xf]
        %v1049 = vld [vmem:[%s1046 + $0x8] sm:$0xf]
        %v1050 = vld [vmem:[%s1046 + $0xc] sm:$0xf]
        %v1051 = vld [vmem:[%s1046 + $0x10] sm:$0xf]
        %v1052 = vld [vmem:[%s1046 + $0x14] sm:$0xf]
        %v1053 = vld [vmem:[%s1046 + $0x18] sm:$0xf]
        %v1054 = vld [vmem:[%s1046 + $0x1c] sm:$0xf]
        %v1055 = vld [vmem:[%s1046 + $0x20] sm:$0xf]
        %v1056 = vld [vmem:[%s1046 + $0x24] sm:$0xf]
        %v1057 = vld [vmem:[%s1046 + $0x28] sm:$0xf]
        %v1058 = vld [vmem:[%s1046 + $0x2c] sm:$0xf]
        %v1059 = vld [vmem:[%s1046 + $0x30] sm:$0xf]
        %v1060 = vld [vmem:[%s1046 + $0x34] sm:$0xf]
        %v1061 = vld [vmem:[%s1046 + $0x38] sm:$0xf]
        %v1062 = vld [vmem:[%s1046 + $0x3c] sm:$0xf]
        %v1079 = vunpack.c.l.b16 %v1047
        %v1080 = vunpack.c.l.b16 %v1048
        %v1081 = vunpack.c.l.b16 %v1049
        %v1082 = vunpack.c.l.b16 %v1050
        %v1083 = vunpack.c.l.b16 %v1051
        %v1084 = vunpack.c.l.b16 %v1052
        %v1085 = vunpack.c.l.b16 %v1053
        %v1086 = vunpack.c.l.b16 %v1054
        %v1087 = vunpack.c.l.b16 %v1055
        %v1088 = vunpack.c.l.b16 %v1056
        %v1089 = vunpack.c.l.b16 %v1057
        %v1090 = vunpack.c.l.b16 %v1058
        %v1091 = vunpack.c.l.b16 %v1059
        %v1092 = vunpack.c.l.b16 %v1060
        %v1093 = vunpack.c.l.b16 %v1061
        %v1094 = vunpack.c.l.b16 %v1062
        %v1095 = vpack.c.b16 %v1080, %v1079
        %v1096 = vpack.c.b16 %v1082, %v1081
        %v1097 = vpack.c.b16 %v1084, %v1083
        %v1098 = vpack.c.b16 %v1086, %v1085
        %v1099 = vpack.c.b16 %v1088, %v1087
        %v1100 = vpack.c.b16 %v1090, %v1089
        %v1101 = vpack.c.b16 %v1092, %v1091
        %v1102 = vpack.c.b16 %v1094, %v1093
        %1111 = vmatprep.subr.bf16.mxu0 0
        %1112 = vmatpush1.bf16.msra.mxu0 %v1095
        %1113 = vmatprep.subr.bf16.mxu0 0
        %1114 = vmatpush1.bf16.msra.mxu0 %v1096
        %1115 = vmatprep.subr.bf16.mxu0 0
        %1116 = vmatpush1.bf16.msra.mxu0 %v1097
        %1117 = vmatprep.subr.bf16.mxu0 0
        %1118 = vmatpush1.bf16.msra.mxu0 %v1098
        %1119 = vmatprep.subr.bf16.mxu0 0
        %1120 = vmatpush1.bf16.msra.mxu0 %v1099
        %1121 = vmatprep.subr.bf16.mxu0 0
        %1122 = vmatpush1.bf16.msra.mxu0 %v1100
        %1123 = vmatprep.subr.bf16.mxu0 0
        %1124 = vmatpush1.bf16.msra.mxu0 %v1101
        %1125 = vmatprep.subr.bf16.mxu0 0
        %1126 = vmatpush1.bf16.msra.mxu0 %v1102
        %1127 = vmatprep.subr.bf16.mxu0 0
        %1128 = vmatpush1.bf16.msra.mxu0 0
        %1129 = vmatprep.subr.bf16.mxu0 0
        %1130 = vmatpush1.bf16.msra.mxu0 0
        %1131 = vmatprep.subr.bf16.mxu0 0
        %1132 = vmatpush1.bf16.msra.mxu0 0
        %1133 = vmatprep.subr.bf16.mxu0 0
        %1134 = vmatpush1.bf16.msra.mxu0 0
        %1135 = vmatprep.subr.bf16.mxu0 0
        %1136 = vmatpush1.bf16.msra.mxu0 0
        %1137 = vmatprep.subr.bf16.mxu0 0
        %1138 = vmatpush1.bf16.msra.mxu0 0
        %1139 = vmatprep.subr.bf16.mxu0 0
        %1140 = vmatpush1.bf16.msra.mxu0 0
        %1141 = vmatprep.subr.bf16.mxu0 0
        %1142 = vmatpush1.bf16.msra.mxu0 0
        %1143 = vmatprep.mubr.bf16.mxu0 0
        %1144 = vmatmul.mubr.bf16.gmra.mrb[0].mxu0 %v1042
        %v1145 = vpop.f32.mrb[0].mxu0
        %v1146 = vadd.f32 0.0, %v1145
        %v1147 = vpop.f32.mrb[0].mxu0
        %v1148 = vpop.f32.mrb[0].mxu0
        %v1149 = vadd.f32 0.0, %v1148
        %v1150 = vpop.f32.mrb[0].mxu0
        %1151 = vmatprep.mubr.bf16.mxu0 0
        %1152 = vmatmul.mubr.bf16.gmra.mrb[0].mxu0 %v1043
        %v1153 = vpop.f32.mrb[0].mxu0
        %v1154 = vadd.f32 0.0, %v1153
        %v1155 = vpop.f32.mrb[0].mxu0
        %v1156 = vpop.f32.mrb[0].mxu0
        %v1157 = vadd.f32 0.0, %v1156
        %v1158 = vpop.f32.mrb[0].mxu0
        %1159 = vmatprep.mubr.bf16.mxu0 0
        %1160 = vmatmul.mubr.bf16.gmra.mrb[0].mxu0 %v1044
        %v1161 = vpop.f32.mrb[0].mxu0
        %v1162 = vadd.f32 0.0, %v1161
        %v1163 = vpop.f32.mrb[0].mxu0
        %v1164 = vpop.f32.mrb[0].mxu0
        %v1165 = vadd.f32 0.0, %v1164
        %v1166 = vpop.f32.mrb[0].mxu0
        %1167 = vmatprep.mubr.bf16.mxu0 0
        %1168 = vmatmul.mubr.bf16.gmra.mrb[0].mxu0 %v1045
        %v1169 = vpop.f32.mrb[0].mxu0
        %v1170 = vadd.f32 0.0, %v1169
        %v1171 = vpop.f32.mrb[0].mxu0
        %v1172 = vpop.f32.mrb[0].mxu0
        %v1173 = vadd.f32 0.0, %v1172
        %v1174 = vpop.f32.mrb[0].mxu0
        %1175 = vdwg.mxu0
        %v1176 = vld [vmem:[#allocation3] sm:$0xff]
        %v1177 = vld [vmem:[#allocation3 + $0x8] sm:$0xff]
        %v1178 = vld [vmem:[#allocation3 + $0x10] sm:$0xff]
        %v1179 = vld [vmem:[#allocation3 + $0x18] sm:$0xff]
        %v1180 = vld [vmem:[#allocation3 + $0x20] sm:$0xff]
        %v1181 = vld [vmem:[#allocation3 + $0x28] sm:$0xff]
        %v1182 = vld [vmem:[#allocation3 + $0x30] sm:$0xff]
        %v1183 = vld [vmem:[#allocation3 + $0x38] sm:$0xff]
        %v1184 = vadd.f32 %v1176, %v1146
        %v1185 = vadd.f32 %v1177, %v1149
        %v1186 = vadd.f32 %v1178, %v1154
        %v1187 = vadd.f32 %v1179, %v1157
        %v1188 = vadd.f32 %v1180, %v1162
        %v1189 = vadd.f32 %v1181, %v1165
        %v1190 = vadd.f32 %v1182, %v1170
        %v1191 = vadd.f32 %v1183, %v1173
        %1192 = vst [vmem:[#allocation3] sm:$0xff] %v1184
        %1193 = vst [vmem:[#allocation3 + $0x8] sm:$0xff] %v1185
        %1194 = vst [vmem:[#allocation3 + $0x10] sm:$0xff] %v1186
        %1195 = vst [vmem:[#allocation3 + $0x18] sm:$0xff] %v1187
        %1196 = vst [vmem:[#allocation3 + $0x20] sm:$0xff] %v1188
        %1197 = vst [vmem:[#allocation3 + $0x28] sm:$0xff] %v1189
        %1198 = vst [vmem:[#allocation3 + $0x30] sm:$0xff] %v1190
        %1199 = vst [vmem:[#allocation3 + $0x38] sm:$0xff] %v1191
        %s1200 = scalar_lea.vmem %s5, 256
        %v1201 = vld [vmem:[%s1200] sm:$0xf]
        %v1202 = vld [vmem:[%s1200 + $0x4] sm:$0xf]
        %v1203 = vld [vmem:[%s1200 + $0x8] sm:$0xf]
        %v1204 = vld [vmem:[%s1200 + $0xc] sm:$0xf]
        %v1205 = vld [vmem:[%s1200 + $0x10] sm:$0xf]
        %v1206 = vld [vmem:[%s1200 + $0x14] sm:$0xf]
        %v1207 = vld [vmem:[%s1200 + $0x18] sm:$0xf]
        %v1208 = vld [vmem:[%s1200 + $0x1c] sm:$0xf]
        %v1209 = vld [vmem:[%s1200 + $0x20] sm:$0xf]
        %v1210 = vld [vmem:[%s1200 + $0x24] sm:$0xf]
        %v1211 = vld [vmem:[%s1200 + $0x28] sm:$0xf]
        %v1212 = vld [vmem:[%s1200 + $0x2c] sm:$0xf]
        %v1213 = vld [vmem:[%s1200 + $0x30] sm:$0xf]
        %v1214 = vld [vmem:[%s1200 + $0x34] sm:$0xf]
        %v1215 = vld [vmem:[%s1200 + $0x38] sm:$0xf]
        %v1216 = vld [vmem:[%s1200 + $0x3c] sm:$0xf]
        %v1233 = vunpack.c.l.b16 %v1201
        %v1234 = vunpack.c.l.b16 %v1202
        %v1235 = vunpack.c.l.b16 %v1203
        %v1236 = vunpack.c.l.b16 %v1204
        %v1237 = vunpack.c.l.b16 %v1205
        %v1238 = vunpack.c.l.b16 %v1206
        %v1239 = vunpack.c.l.b16 %v1207
        %v1240 = vunpack.c.l.b16 %v1208
        %v1241 = vunpack.c.l.b16 %v1209
        %v1242 = vunpack.c.l.b16 %v1210
        %v1243 = vunpack.c.l.b16 %v1211
        %v1244 = vunpack.c.l.b16 %v1212
        %v1245 = vunpack.c.l.b16 %v1213
        %v1246 = vunpack.c.l.b16 %v1214
        %v1247 = vunpack.c.l.b16 %v1215
        %v1248 = vunpack.c.l.b16 %v1216
        %v1249 = vpack.c.b16 %v1234, %v1233
        %v1250 = vpack.c.b16 %v1236, %v1235
        %v1251 = vpack.c.b16 %v1238, %v1237
        %v1252 = vpack.c.b16 %v1240, %v1239
        %v1253 = vpack.c.b16 %v1242, %v1241
        %v1254 = vpack.c.b16 %v1244, %v1243
        %v1255 = vpack.c.b16 %v1246, %v1245
        %v1256 = vpack.c.b16 %v1248, %v1247
        %1265 = vmatprep.subr.bf16.mxu0 0
        %1266 = vmatpush1.bf16.msra.mxu0 %v1249
        %1267 = vmatprep.subr.bf16.mxu0 0
        %1268 = vmatpush1.bf16.msra.mxu0 %v1250
        %1269 = vmatprep.subr.bf16.mxu0 0
        %1270 = vmatpush1.bf16.msra.mxu0 %v1251
        %1271 = vmatprep.subr.bf16.mxu0 0
        %1272 = vmatpush1.bf16.msra.mxu0 %v1252
        %1273 = vmatprep.subr.bf16.mxu0 0
        %1274 = vmatpush1.bf16.msra.mxu0 %v1253
        %1275 = vmatprep.subr.bf16.mxu0 0
        %1276 = vmatpush1.bf16.msra.mxu0 %v1254
        %1277 = vmatprep.subr.bf16.mxu0 0
        %1278 = vmatpush1.bf16.msra.mxu0 %v1255
        %1279 = vmatprep.subr.bf16.mxu0 0
        %1280 = vmatpush1.bf16.msra.mxu0 %v1256
        %1281 = vmatprep.subr.bf16.mxu0 0
        %1282 = vmatpush1.bf16.msra.mxu0 0
        %1283 = vmatprep.subr.bf16.mxu0 0
        %1284 = vmatpush1.bf16.msra.mxu0 0
        %1285 = vmatprep.subr.bf16.mxu0 0
        %1286 = vmatpush1.bf16.msra.mxu0 0
        %1287 = vmatprep.subr.bf16.mxu0 0
        %1288 = vmatpush1.bf16.msra.mxu0 0
        %1289 = vmatprep.subr.bf16.mxu0 0
        %1290 = vmatpush1.bf16.msra.mxu0 0
        %1291 = vmatprep.subr.bf16.mxu0 0
        %1292 = vmatpush1.bf16.msra.mxu0 0
        %1293 = vmatprep.subr.bf16.mxu0 0
        %1294 = vmatpush1.bf16.msra.mxu0 0
        %1295 = vmatprep.subr.bf16.mxu0 0
        %1296 = vmatpush1.bf16.msra.mxu0 0
        %1297 = vmatprep.mubr.bf16.mxu0 0
        %1298 = vmatmul.mubr.bf16.gmra.mrb[0].mxu0 %v1042
        %v1299 = vpop.f32.mrb[0].mxu0
        %v1300 = vadd.f32 0.0, %v1299
        %v1301 = vpop.f32.mrb[0].mxu0
        %v1302 = vpop.f32.mrb[0].mxu0
        %v1303 = vadd.f32 0.0, %v1302
        %v1304 = vpop.f32.mrb[0].mxu0
        %1305 = vmatprep.mubr.bf16.mxu0 0
        %1306 = vmatmul.mubr.bf16.gmra.mrb[0].mxu0 %v1043
        %v1307 = vpop.f32.mrb[0].mxu0
        %v1308 = vadd.f32 0.0, %v1307
        %v1309 = vpop.f32.mrb[0].mxu0
        %v1310 = vpop.f32.mrb[0].mxu0
        %v1311 = vadd.f32 0.0, %v1310
        %v1312 = vpop.f32.mrb[0].mxu0
        %1313 = vmatprep.mubr.bf16.mxu0 0
        %1314 = vmatmul.mubr.bf16.gmra.mrb[0].mxu0 %v1044
        %v1315 = vpop.f32.mrb[0].mxu0
        %v1316 = vadd.f32 0.0, %v1315
        %v1317 = vpop.f32.mrb[0].mxu0
        %v1318 = vpop.f32.mrb[0].mxu0
        %v1319 = vadd.f32 0.0, %v1318
        %v1320 = vpop.f32.mrb[0].mxu0
        %1321 = vmatprep.mubr.bf16.mxu0 0
        %1322 = vmatmul.mubr.bf16.gmra.mrb[0].mxu0 %v1045
        %v1323 = vpop.f32.mrb[0].mxu0
        %v1324 = vadd.f32 0.0, %v1323
        %v1325 = vpop.f32.mrb[0].mxu0
        %v1326 = vpop.f32.mrb[0].mxu0
        %v1327 = vadd.f32 0.0, %v1326
        %v1328 = vpop.f32.mrb[0].mxu0
        %1329 = vdwg.mxu0
        %v1330 = vld [vmem:[%s886] sm:$0xff]
        %v1331 = vld [vmem:[%s886 + $0x8] sm:$0xff]
        %v1332 = vld [vmem:[%s886 + $0x10] sm:$0xff]
        %v1333 = vld [vmem:[%s886 + $0x18] sm:$0xff]
        %v1334 = vld [vmem:[%s886 + $0x20] sm:$0xff]
        %v1335 = vld [vmem:[%s886 + $0x28] sm:$0xff]
        %v1336 = vld [vmem:[%s886 + $0x30] sm:$0xff]
        %v1337 = vld [vmem:[%s886 + $0x38] sm:$0xff]
        %v1338 = vadd.f32 %v1330, %v1300
        %v1339 = vadd.f32 %v1331, %v1303
        %v1340 = vadd.f32 %v1332, %v1308
        %v1341 = vadd.f32 %v1333, %v1311
        %v1342 = vadd.f32 %v1334, %v1316
        %v1343 = vadd.f32 %v1335, %v1319
        %v1344 = vadd.f32 %v1336, %v1324
        %v1345 = vadd.f32 %v1337, %v1327
        %1346 = vst [vmem:[%s886] sm:$0xff] %v1338
        %1347 = vst [vmem:[%s886 + $0x8] sm:$0xff] %v1339
        %1348 = vst [vmem:[%s886 + $0x10] sm:$0xff] %v1340
        %1349 = vst [vmem:[%s886 + $0x18] sm:$0xff] %v1341
        %1350 = vst [vmem:[%s886 + $0x20] sm:$0xff] %v1342
        %1351 = vst [vmem:[%s886 + $0x28] sm:$0xff] %v1343
        %1352 = vst [vmem:[%s886 + $0x30] sm:$0xff] %v1344
        %1353 = vst [vmem:[%s886 + $0x38] sm:$0xff] %v1345
        %s1354 = scalar_lea.vmem %s5, 320
        %v1355 = vld [vmem:[%s1354] sm:$0xf]
        %v1356 = vld [vmem:[%s1354 + $0x4] sm:$0xf]
        %v1357 = vld [vmem:[%s1354 + $0x8] sm:$0xf]
        %v1358 = vld [vmem:[%s1354 + $0xc] sm:$0xf]
        %v1359 = vld [vmem:[%s1354 + $0x10] sm:$0xf]
        %v1360 = vld [vmem:[%s1354 + $0x14] sm:$0xf]
        %v1361 = vld [vmem:[%s1354 + $0x18] sm:$0xf]
        %v1362 = vld [vmem:[%s1354 + $0x1c] sm:$0xf]
        %v1363 = vld [vmem:[%s1354 + $0x20] sm:$0xf]
        %v1364 = vld [vmem:[%s1354 + $0x24] sm:$0xf]
        %v1365 = vld [vmem:[%s1354 + $0x28] sm:$0xf]
        %v1366 = vld [vmem:[%s1354 + $0x2c] sm:$0xf]
        %v1367 = vld [vmem:[%s1354 + $0x30] sm:$0xf]
        %v1368 = vld [vmem:[%s1354 + $0x34] sm:$0xf]
        %v1369 = vld [vmem:[%s1354 + $0x38] sm:$0xf]
        %v1370 = vld [vmem:[%s1354 + $0x3c] sm:$0xf]
        %v1387 = vunpack.c.l.b16 %v1355
        %v1388 = vunpack.c.l.b16 %v1356
        %v1389 = vunpack.c.l.b16 %v1357
        %v1390 = vunpack.c.l.b16 %v1358
        %v1391 = vunpack.c.l.b16 %v1359
        %v1392 = vunpack.c.l.b16 %v1360
        %v1393 = vunpack.c.l.b16 %v1361
        %v1394 = vunpack.c.l.b16 %v1362
        %v1395 = vunpack.c.l.b16 %v1363
        %v1396 = vunpack.c.l.b16 %v1364
        %v1397 = vunpack.c.l.b16 %v1365
        %v1398 = vunpack.c.l.b16 %v1366
        %v1399 = vunpack.c.l.b16 %v1367
        %v1400 = vunpack.c.l.b16 %v1368
        %v1401 = vunpack.c.l.b16 %v1369
        %v1402 = vunpack.c.l.b16 %v1370
        %v1403 = vpack.c.b16 %v1388, %v1387
        %v1404 = vpack.c.b16 %v1390, %v1389
        %v1405 = vpack.c.b16 %v1392, %v1391
        %v1406 = vpack.c.b16 %v1394, %v1393
        %v1407 = vpack.c.b16 %v1396, %v1395
        %v1408 = vpack.c.b16 %v1398, %v1397
        %v1409 = vpack.c.b16 %v1400, %v1399
        %v1410 = vpack.c.b16 %v1402, %v1401
        %1419 = vmatprep.subr.bf16.mxu0 0
        %1420 = vmatpush1.bf16.msra.mxu0 %v1403
        %1421 = vmatprep.subr.bf16.mxu0 0
        %1422 = vmatpush1.bf16.msra.mxu0 %v1404
        %1423 = vmatprep.subr.bf16.mxu0 0
        %1424 = vmatpush1.bf16.msra.mxu0 %v1405
        %1425 = vmatprep.subr.bf16.mxu0 0
        %1426 = vmatpush1.bf16.msra.mxu0 %v1406
        %1427 = vmatprep.subr.bf16.mxu0 0
        %1428 = vmatpush1.bf16.msra.mxu0 %v1407
        %1429 = vmatprep.subr.bf16.mxu0 0
        %1430 = vmatpush1.bf16.msra.mxu0 %v1408
        %1431 = vmatprep.subr.bf16.mxu0 0
        %1432 = vmatpush1.bf16.msra.mxu0 %v1409
        %1433 = vmatprep.subr.bf16.mxu0 0
        %1434 = vmatpush1.bf16.msra.mxu0 %v1410
        %1435 = vmatprep.subr.bf16.mxu0 0
        %1436 = vmatpush1.bf16.msra.mxu0 0
        %1437 = vmatprep.subr.bf16.mxu0 0
        %1438 = vmatpush1.bf16.msra.mxu0 0
        %1439 = vmatprep.subr.bf16.mxu0 0
        %1440 = vmatpush1.bf16.msra.mxu0 0
        %1441 = vmatprep.subr.bf16.mxu0 0
        %1442 = vmatpush1.bf16.msra.mxu0 0
        %1443 = vmatprep.subr.bf16.mxu0 0
        %1444 = vmatpush1.bf16.msra.mxu0 0
        %1445 = vmatprep.subr.bf16.mxu0 0
        %1446 = vmatpush1.bf16.msra.mxu0 0
        %1447 = vmatprep.subr.bf16.mxu0 0
        %1448 = vmatpush1.bf16.msra.mxu0 0
        %1449 = vmatprep.subr.bf16.mxu0 0
        %1450 = vmatpush1.bf16.msra.mxu0 0
        %1451 = vmatprep.mubr.bf16.mxu0 0
        %1452 = vmatmul.mubr.bf16.gmra.mrb[0].mxu0 %v1042
        %v1453 = vpop.f32.mrb[0].mxu0
        %v1454 = vadd.f32 0.0, %v1453
        %v1455 = vpop.f32.mrb[0].mxu0
        %v1456 = vpop.f32.mrb[0].mxu0
        %v1457 = vadd.f32 0.0, %v1456
        %v1458 = vpop.f32.mrb[0].mxu0
        %1459 = vmatprep.mubr.bf16.mxu0 0
        %1460 = vmatmul.mubr.bf16.gmra.mrb[0].mxu0 %v1043
        %v1461 = vpop.f32.mrb[0].mxu0
        %v1462 = vadd.f32 0.0, %v1461
        %v1463 = vpop.f32.mrb[0].mxu0
        %v1464 = vpop.f32.mrb[0].mxu0
        %v1465 = vadd.f32 0.0, %v1464
        %v1466 = vpop.f32.mrb[0].mxu0
        %1467 = vmatprep.mubr.bf16.mxu0 0
        %1468 = vmatmul.mubr.bf16.gmra.mrb[0].mxu0 %v1044
        %v1469 = vpop.f32.mrb[0].mxu0
        %v1470 = vadd.f32 0.0, %v1469
        %v1471 = vpop.f32.mrb[0].mxu0
        %v1472 = vpop.f32.mrb[0].mxu0
        %v1473 = vadd.f32 0.0, %v1472
        %v1474 = vpop.f32.mrb[0].mxu0
        %1475 = vmatprep.mubr.bf16.mxu0 0
        %1476 = vmatmul.mubr.bf16.gmra.mrb[0].mxu0 %v1045
        %v1477 = vpop.f32.mrb[0].mxu0
        %v1478 = vadd.f32 0.0, %v1477
        %v1479 = vpop.f32.mrb[0].mxu0
        %v1480 = vpop.f32.mrb[0].mxu0
        %v1481 = vadd.f32 0.0, %v1480
        %v1482 = vpop.f32.mrb[0].mxu0
        %1483 = vdwg.mxu0
        %v1484 = vld [vmem:[%s1025] sm:$0xff]
        %v1485 = vld [vmem:[%s1025 + $0x8] sm:$0xff]
        %v1486 = vld [vmem:[%s1025 + $0x10] sm:$0xff]
        %v1487 = vld [vmem:[%s1025 + $0x18] sm:$0xff]
        %v1488 = vld [vmem:[%s1025 + $0x20] sm:$0xff]
        %v1489 = vld [vmem:[%s1025 + $0x28] sm:$0xff]
        %v1490 = vld [vmem:[%s1025 + $0x30] sm:$0xff]
        %v1491 = vld [vmem:[%s1025 + $0x38] sm:$0xff]
        %v1492 = vadd.f32 %v1484, %v1454
        %v1493 = vadd.f32 %v1485, %v1457
        %v1494 = vadd.f32 %v1486, %v1462
        %v1495 = vadd.f32 %v1487, %v1465
        %v1496 = vadd.f32 %v1488, %v1470
        %v1497 = vadd.f32 %v1489, %v1473
        %v1498 = vadd.f32 %v1490, %v1478
        %v1499 = vadd.f32 %v1491, %v1481
        %1500 = vst [vmem:[%s1025] sm:$0xff] %v1492
        %1501 = vst [vmem:[%s1025 + $0x8] sm:$0xff] %v1493
        %1502 = vst [vmem:[%s1025 + $0x10] sm:$0xff] %v1494
        %1503 = vst [vmem:[%s1025 + $0x18] sm:$0xff] %v1495
        %1504 = vst [vmem:[%s1025 + $0x20] sm:$0xff] %v1496
        %1505 = vst [vmem:[%s1025 + $0x28] sm:$0xff] %v1497
        %1506 = vst [vmem:[%s1025 + $0x30] sm:$0xff] %v1498
        %1507 = vst [vmem:[%s1025 + $0x38] sm:$0xff] %v1499
        %s1508 = scalar_lea.vmem [#allocation2], 16
        %v1509 = vld [vmem:[%s1508] sm:$0xff]
        %v1510 = vld [vmem:[%s1508 + $0x8] sm:$0xff]
        %v1511 = vld [vmem:[%s1508 + $0x10] sm:$0xff]
        %v1512 = vld [vmem:[%s1508 + $0x18] sm:$0xff]
        %v1513 = vld [vmem:[%s1508 + $0x20] sm:$0xff]
        %v1514 = vld [vmem:[%s1508 + $0x28] sm:$0xff]
        %v1515 = vld [vmem:[%s1508 + $0x30] sm:$0xff]
        %v1516 = vld [vmem:[%s1508 + $0x38] sm:$0xff]
        %v1517 = vpack.c.bf16 %v1510, %v1509
        %v1518 = vpack.c.bf16 %v1512, %v1511
        %v1519 = vpack.c.bf16 %v1514, %v1513
        %v1520 = vpack.c.bf16 %v1516, %v1515
        %s1521 = scalar_lea.vmem %s5, 384
        %v1522 = vld [vmem:[%s1521] sm:$0xf]
        %v1523 = vld [vmem:[%s1521 + $0x4] sm:$0xf]
        %v1524 = vld [vmem:[%s1521 + $0x8] sm:$0xf]
        %v1525 = vld [vmem:[%s1521 + $0xc] sm:$0xf]
        %v1526 = vld [vmem:[%s1521 + $0x10] sm:$0xf]
        %v1527 = vld [vmem:[%s1521 + $0x14] sm:$0xf]
        %v1528 = vld [vmem:[%s1521 + $0x18] sm:$0xf]
        %v1529 = vld [vmem:[%s1521 + $0x1c] sm:$0xf]
        %v1530 = vld [vmem:[%s1521 + $0x20] sm:$0xf]
        %v1531 = vld [vmem:[%s1521 + $0x24] sm:$0xf]
        %v1532 = vld [vmem:[%s1521 + $0x28] sm:$0xf]
        %v1533 = vld [vmem:[%s1521 + $0x2c] sm:$0xf]
        %v1534 = vld [vmem:[%s1521 + $0x30] sm:$0xf]
        %v1535 = vld [vmem:[%s1521 + $0x34] sm:$0xf]
        %v1536 = vld [vmem:[%s1521 + $0x38] sm:$0xf]
        %v1537 = vld [vmem:[%s1521 + $0x3c] sm:$0xf]
        %v1554 = vunpack.c.l.b16 %v1522
        %v1555 = vunpack.c.l.b16 %v1523
        %v1556 = vunpack.c.l.b16 %v1524
        %v1557 = vunpack.c.l.b16 %v1525
        %v1558 = vunpack.c.l.b16 %v1526
        %v1559 = vunpack.c.l.b16 %v1527
        %v1560 = vunpack.c.l.b16 %v1528
        %v1561 = vunpack.c.l.b16 %v1529
        %v1562 = vunpack.c.l.b16 %v1530
        %v1563 = vunpack.c.l.b16 %v1531
        %v1564 = vunpack.c.l.b16 %v1532
        %v1565 = vunpack.c.l.b16 %v1533
        %v1566 = vunpack.c.l.b16 %v1534
        %v1567 = vunpack.c.l.b16 %v1535
        %v1568 = vunpack.c.l.b16 %v1536
        %v1569 = vunpack.c.l.b16 %v1537
        %v1570 = vpack.c.b16 %v1555, %v1554
        %v1571 = vpack.c.b16 %v1557, %v1556
        %v1572 = vpack.c.b16 %v1559, %v1558
        %v1573 = vpack.c.b16 %v1561, %v1560
        %v1574 = vpack.c.b16 %v1563, %v1562
        %v1575 = vpack.c.b16 %v1565, %v1564
        %v1576 = vpack.c.b16 %v1567, %v1566
        %v1577 = vpack.c.b16 %v1569, %v1568
        %1586 = vmatprep.subr.bf16.mxu0 0
        %1587 = vmatpush1.bf16.msra.mxu0 %v1570
        %1588 = vmatprep.subr.bf16.mxu0 0
        %1589 = vmatpush1.bf16.msra.mxu0 %v1571
        %1590 = vmatprep.subr.bf16.mxu0 0
        %1591 = vmatpush1.bf16.msra.mxu0 %v1572
        %1592 = vmatprep.subr.bf16.mxu0 0
        %1593 = vmatpush1.bf16.msra.mxu0 %v1573
        %1594 = vmatprep.subr.bf16.mxu0 0
        %1595 = vmatpush1.bf16.msra.mxu0 %v1574
        %1596 = vmatprep.subr.bf16.mxu0 0
        %1597 = vmatpush1.bf16.msra.mxu0 %v1575
        %1598 = vmatprep.subr.bf16.mxu0 0
        %1599 = vmatpush1.bf16.msra.mxu0 %v1576
        %1600 = vmatprep.subr.bf16.mxu0 0
        %1601 = vmatpush1.bf16.msra.mxu0 %v1577
        %1602 = vmatprep.subr.bf16.mxu0 0
        %1603 = vmatpush1.bf16.msra.mxu0 0
        %1604 = vmatprep.subr.bf16.mxu0 0
        %1605 = vmatpush1.bf16.msra.mxu0 0
        %1606 = vmatprep.subr.bf16.mxu0 0
        %1607 = vmatpush1.bf16.msra.mxu0 0
        %1608 = vmatprep.subr.bf16.mxu0 0
        %1609 = vmatpush1.bf16.msra.mxu0 0
        %1610 = vmatprep.subr.bf16.mxu0 0
        %1611 = vmatpush1.bf16.msra.mxu0 0
        %1612 = vmatprep.subr.bf16.mxu0 0
        %1613 = vmatpush1.bf16.msra.mxu0 0
        %1614 = vmatprep.subr.bf16.mxu0 0
        %1615 = vmatpush1.bf16.msra.mxu0 0
        %1616 = vmatprep.subr.bf16.mxu0 0
        %1617 = vmatpush1.bf16.msra.mxu0 0
        %1618 = vmatprep.mubr.bf16.mxu0 0
        %1619 = vmatmul.mubr.bf16.gmra.mrb[0].mxu0 %v1517
        %v1620 = vpop.f32.mrb[0].mxu0
        %v1621 = vadd.f32 0.0, %v1620
        %v1622 = vpop.f32.mrb[0].mxu0
        %v1623 = vpop.f32.mrb[0].mxu0
        %v1624 = vadd.f32 0.0, %v1623
        %v1625 = vpop.f32.mrb[0].mxu0
        %1626 = vmatprep.mubr.bf16.mxu0 0
        %1627 = vmatmul.mubr.bf16.gmra.mrb[0].mxu0 %v1518
        %v1628 = vpop.f32.mrb[0].mxu0
        %v1629 = vadd.f32 0.0, %v1628
        %v1630 = vpop.f32.mrb[0].mxu0
        %v1631 = vpop.f32.mrb[0].mxu0
        %v1632 = vadd.f32 0.0, %v1631
        %v1633 = vpop.f32.mrb[0].mxu0
        %1634 = vmatprep.mubr.bf16.mxu0 0
        %1635 = vmatmul.mubr.bf16.gmra.mrb[0].mxu0 %v1519
        %v1636 = vpop.f32.mrb[0].mxu0
        %v1637 = vadd.f32 0.0, %v1636
        %v1638 = vpop.f32.mrb[0].mxu0
        %v1639 = vpop.f32.mrb[0].mxu0
        %v1640 = vadd.f32 0.0, %v1639
        %v1641 = vpop.f32.mrb[0].mxu0
        %1642 = vmatprep.mubr.bf16.mxu0 0
        %1643 = vmatmul.mubr.bf16.gmra.mrb[0].mxu0 %v1520
        %v1644 = vpop.f32.mrb[0].mxu0
        %v1645 = vadd.f32 0.0, %v1644
        %v1646 = vpop.f32.mrb[0].mxu0
        %v1647 = vpop.f32.mrb[0].mxu0
        %v1648 = vadd.f32 0.0, %v1647
        %v1649 = vpop.f32.mrb[0].mxu0
        %1650 = vdwg.mxu0
        %v1651 = vld [vmem:[#allocation3] sm:$0xff]
        %v1652 = vld [vmem:[#allocation3 + $0x8] sm:$0xff]
        %v1653 = vld [vmem:[#allocation3 + $0x10] sm:$0xff]
        %v1654 = vld [vmem:[#allocation3 + $0x18] sm:$0xff]
        %v1655 = vld [vmem:[#allocation3 + $0x20] sm:$0xff]
        %v1656 = vld [vmem:[#allocation3 + $0x28] sm:$0xff]
        %v1657 = vld [vmem:[#allocation3 + $0x30] sm:$0xff]
        %v1658 = vld [vmem:[#allocation3 + $0x38] sm:$0xff]
        %v1659 = vadd.f32 %v1651, %v1621
        %v1660 = vadd.f32 %v1652, %v1624
        %v1661 = vadd.f32 %v1653, %v1629
        %v1662 = vadd.f32 %v1654, %v1632
        %v1663 = vadd.f32 %v1655, %v1637
        %v1664 = vadd.f32 %v1656, %v1640
        %v1665 = vadd.f32 %v1657, %v1645
        %v1666 = vadd.f32 %v1658, %v1648
        %1667 = vst [vmem:[#allocation3] sm:$0xff] %v1659
        %1668 = vst [vmem:[#allocation3 + $0x8] sm:$0xff] %v1660
        %1669 = vst [vmem:[#allocation3 + $0x10] sm:$0xff] %v1661
        %1670 = vst [vmem:[#allocation3 + $0x18] sm:$0xff] %v1662
        %1671 = vst [vmem:[#allocation3 + $0x20] sm:$0xff] %v1663
        %1672 = vst [vmem:[#allocation3 + $0x28] sm:$0xff] %v1664
        %1673 = vst [vmem:[#allocation3 + $0x30] sm:$0xff] %v1665
        %1674 = vst [vmem:[#allocation3 + $0x38] sm:$0xff] %v1666
        %s1675 = scalar_lea.vmem %s5, 448
        %v1676 = vld [vmem:[%s1675] sm:$0xf]
        %v1677 = vld [vmem:[%s1675 + $0x4] sm:$0xf]
        %v1678 = vld [vmem:[%s1675 + $0x8] sm:$0xf]
        %v1679 = vld [vmem:[%s1675 + $0xc] sm:$0xf]
        %v1680 = vld [vmem:[%s1675 + $0x10] sm:$0xf]
        %v1681 = vld [vmem:[%s1675 + $0x14] sm:$0xf]
        %v1682 = vld [vmem:[%s1675 + $0x18] sm:$0xf]
        %v1683 = vld [vmem:[%s1675 + $0x1c] sm:$0xf]
        %v1684 = vld [vmem:[%s1675 + $0x20] sm:$0xf]
        %v1685 = vld [vmem:[%s1675 + $0x24] sm:$0xf]
        %v1686 = vld [vmem:[%s1675 + $0x28] sm:$0xf]
        %v1687 = vld [vmem:[%s1675 + $0x2c] sm:$0xf]
        %v1688 = vld [vmem:[%s1675 + $0x30] sm:$0xf]
        %v1689 = vld [vmem:[%s1675 + $0x34] sm:$0xf]
        %v1690 = vld [vmem:[%s1675 + $0x38] sm:$0xf]
        %v1691 = vld [vmem:[%s1675 + $0x3c] sm:$0xf]
        %v1708 = vunpack.c.l.b16 %v1676
        %v1709 = vunpack.c.l.b16 %v1677
        %v1710 = vunpack.c.l.b16 %v1678
        %v1711 = vunpack.c.l.b16 %v1679
        %v1712 = vunpack.c.l.b16 %v1680
        %v1713 = vunpack.c.l.b16 %v1681
        %v1714 = vunpack.c.l.b16 %v1682
        %v1715 = vunpack.c.l.b16 %v1683
        %v1716 = vunpack.c.l.b16 %v1684
        %v1717 = vunpack.c.l.b16 %v1685
        %v1718 = vunpack.c.l.b16 %v1686
        %v1719 = vunpack.c.l.b16 %v1687
        %v1720 = vunpack.c.l.b16 %v1688
        %v1721 = vunpack.c.l.b16 %v1689
        %v1722 = vunpack.c.l.b16 %v1690
        %v1723 = vunpack.c.l.b16 %v1691
        %v1724 = vpack.c.b16 %v1709, %v1708
        %v1725 = vpack.c.b16 %v1711, %v1710
        %v1726 = vpack.c.b16 %v1713, %v1712
        %v1727 = vpack.c.b16 %v1715, %v1714
        %v1728 = vpack.c.b16 %v1717, %v1716
        %v1729 = vpack.c.b16 %v1719, %v1718
        %v1730 = vpack.c.b16 %v1721, %v1720
        %v1731 = vpack.c.b16 %v1723, %v1722
        %1740 = vmatprep.subr.bf16.mxu0 0
        %1741 = vmatpush1.bf16.msra.mxu0 %v1724
        %1742 = vmatprep.subr.bf16.mxu0 0
        %1743 = vmatpush1.bf16.msra.mxu0 %v1725
        %1744 = vmatprep.subr.bf16.mxu0 0
        %1745 = vmatpush1.bf16.msra.mxu0 %v1726
        %1746 = vmatprep.subr.bf16.mxu0 0
        %1747 = vmatpush1.bf16.msra.mxu0 %v1727
        %1748 = vmatprep.subr.bf16.mxu0 0
        %1749 = vmatpush1.bf16.msra.mxu0 %v1728
        %1750 = vmatprep.subr.bf16.mxu0 0
        %1751 = vmatpush1.bf16.msra.mxu0 %v1729
        %1752 = vmatprep.subr.bf16.mxu0 0
        %1753 = vmatpush1.bf16.msra.mxu0 %v1730
        %1754 = vmatprep.subr.bf16.mxu0 0
        %1755 = vmatpush1.bf16.msra.mxu0 %v1731
        %1756 = vmatprep.subr.bf16.mxu0 0
        %1757 = vmatpush1.bf16.msra.mxu0 0
        %1758 = vmatprep.subr.bf16.mxu0 0
        %1759 = vmatpush1.bf16.msra.mxu0 0
        %1760 = vmatprep.subr.bf16.mxu0 0
        %1761 = vmatpush1.bf16.msra.mxu0 0
        %1762 = vmatprep.subr.bf16.mxu0 0
        %1763 = vmatpush1.bf16.msra.mxu0 0
        %1764 = vmatprep.subr.bf16.mxu0 0
        %1765 = vmatpush1.bf16.msra.mxu0 0
        %1766 = vmatprep.subr.bf16.mxu0 0
        %1767 = vmatpush1.bf16.msra.mxu0 0
        %1768 = vmatprep.subr.bf16.mxu0 0
        %1769 = vmatpush1.bf16.msra.mxu0 0
        %1770 = vmatprep.subr.bf16.mxu0 0
        %1771 = vmatpush1.bf16.msra.mxu0 0
        %1772 = vmatprep.mubr.bf16.mxu0 0
        %1773 = vmatmul.mubr.bf16.gmra.mrb[0].mxu0 %v1517
        %v1774 = vpop.f32.mrb[0].mxu0
        %v1775 = vadd.f32 0.0, %v1774
        %v1776 = vpop.f32.mrb[0].mxu0
        %v1777 = vpop.f32.mrb[0].mxu0
        %v1778 = vadd.f32 0.0, %v1777
        %v1779 = vpop.f32.mrb[0].mxu0
        %1780 = vmatprep.mubr.bf16.mxu0 0
        %1781 = vmatmul.mubr.bf16.gmra.mrb[0].mxu0 %v1518
        %v1782 = vpop.f32.mrb[0].mxu0
        %v1783 = vadd.f32 0.0, %v1782
        %v1784 = vpop.f32.mrb[0].mxu0
        %v1785 = vpop.f32.mrb[0].mxu0
        %v1786 = vadd.f32 0.0, %v1785
        %v1787 = vpop.f32.mrb[0].mxu0
        %1788 = vmatprep.mubr.bf16.mxu0 0
        %1789 = vmatmul.mubr.bf16.gmra.mrb[0].mxu0 %v1519
        %v1790 = vpop.f32.mrb[0].mxu0
        %v1791 = vadd.f32 0.0, %v1790
        %v1792 = vpop.f32.mrb[0].mxu0
        %v1793 = vpop.f32.mrb[0].mxu0
        %v1794 = vadd.f32 0.0, %v1793
        %v1795 = vpop.f32.mrb[0].mxu0
        %1796 = vmatprep.mubr.bf16.mxu0 0
        %1797 = vmatmul.mubr.bf16.gmra.mrb[0].mxu0 %v1520
        %v1798 = vpop.f32.mrb[0].mxu0
        %v1799 = vadd.f32 0.0, %v1798
        %v1800 = vpop.f32.mrb[0].mxu0
        %v1801 = vpop.f32.mrb[0].mxu0
        %v1802 = vadd.f32 0.0, %v1801
        %v1803 = vpop.f32.mrb[0].mxu0
        %1804 = vdwg.mxu0
        %v1805 = vld [vmem:[%s886] sm:$0xff]
        %v1806 = vld [vmem:[%s886 + $0x8] sm:$0xff]
        %v1807 = vld [vmem:[%s886 + $0x10] sm:$0xff]
        %v1808 = vld [vmem:[%s886 + $0x18] sm:$0xff]
        %v1809 = vld [vmem:[%s886 + $0x20] sm:$0xff]
        %v1810 = vld [vmem:[%s886 + $0x28] sm:$0xff]
        %v1811 = vld [vmem:[%s886 + $0x30] sm:$0xff]
        %v1812 = vld [vmem:[%s886 + $0x38] sm:$0xff]
        %v1813 = vadd.f32 %v1805, %v1775
        %v1814 = vadd.f32 %v1806, %v1778
        %v1815 = vadd.f32 %v1807, %v1783
        %v1816 = vadd.f32 %v1808, %v1786
        %v1817 = vadd.f32 %v1809, %v1791
        %v1818 = vadd.f32 %v1810, %v1794
        %v1819 = vadd.f32 %v1811, %v1799
        %v1820 = vadd.f32 %v1812, %v1802
        %1821 = vst [vmem:[%s886] sm:$0xff] %v1813
        %1822 = vst [vmem:[%s886 + $0x8] sm:$0xff] %v1814
        %1823 = vst [vmem:[%s886 + $0x10] sm:$0xff] %v1815
        %1824 = vst [vmem:[%s886 + $0x18] sm:$0xff] %v1816
        %1825 = vst [vmem:[%s886 + $0x20] sm:$0xff] %v1817
        %1826 = vst [vmem:[%s886 + $0x28] sm:$0xff] %v1818
        %1827 = vst [vmem:[%s886 + $0x30] sm:$0xff] %v1819
        %1828 = vst [vmem:[%s886 + $0x38] sm:$0xff] %v1820
        %s1829 = scalar_lea.vmem %s5, 512
        %v1830 = vld [vmem:[%s1829] sm:$0xf]
        %v1831 = vld [vmem:[%s1829 + $0x4] sm:$0xf]
        %v1832 = vld [vmem:[%s1829 + $0x8] sm:$0xf]
        %v1833 = vld [vmem:[%s1829 + $0xc] sm:$0xf]
        %v1834 = vld [vmem:[%s1829 + $0x10] sm:$0xf]
        %v1835 = vld [vmem:[%s1829 + $0x14] sm:$0xf]
        %v1836 = vld [vmem:[%s1829 + $0x18] sm:$0xf]
        %v1837 = vld [vmem:[%s1829 + $0x1c] sm:$0xf]
        %v1838 = vld [vmem:[%s1829 + $0x20] sm:$0xf]
        %v1839 = vld [vmem:[%s1829 + $0x24] sm:$0xf]
        %v1840 = vld [vmem:[%s1829 + $0x28] sm:$0xf]
        %v1841 = vld [vmem:[%s1829 + $0x2c] sm:$0xf]
        %v1842 = vld [vmem:[%s1829 + $0x30] sm:$0xf]
        %v1843 = vld [vmem:[%s1829 + $0x34] sm:$0xf]
        %v1844 = vld [vmem:[%s1829 + $0x38] sm:$0xf]
        %v1845 = vld [vmem:[%s1829 + $0x3c] sm:$0xf]
        %v1862 = vunpack.c.l.b16 %v1830
        %v1863 = vunpack.c.l.b16 %v1831
        %v1864 = vunpack.c.l.b16 %v1832
        %v1865 = vunpack.c.l.b16 %v1833
        %v1866 = vunpack.c.l.b16 %v1834
        %v1867 = vunpack.c.l.b16 %v1835
        %v1868 = vunpack.c.l.b16 %v1836
        %v1869 = vunpack.c.l.b16 %v1837
        %v1870 = vunpack.c.l.b16 %v1838
        %v1871 = vunpack.c.l.b16 %v1839
        %v1872 = vunpack.c.l.b16 %v1840
        %v1873 = vunpack.c.l.b16 %v1841
        %v1874 = vunpack.c.l.b16 %v1842
        %v1875 = vunpack.c.l.b16 %v1843
        %v1876 = vunpack.c.l.b16 %v1844
        %v1877 = vunpack.c.l.b16 %v1845
        %v1878 = vpack.c.b16 %v1863, %v1862
        %v1879 = vpack.c.b16 %v1865, %v1864
        %v1880 = vpack.c.b16 %v1867, %v1866
        %v1881 = vpack.c.b16 %v1869, %v1868
        %v1882 = vpack.c.b16 %v1871, %v1870
        %v1883 = vpack.c.b16 %v1873, %v1872
        %v1884 = vpack.c.b16 %v1875, %v1874
        %v1885 = vpack.c.b16 %v1877, %v1876
        %1894 = vmatprep.subr.bf16.mxu0 0
        %1895 = vmatpush1.bf16.msra.mxu0 %v1878
        %1896 = vmatprep.subr.bf16.mxu0 0
        %1897 = vmatpush1.bf16.msra.mxu0 %v1879
        %1898 = vmatprep.subr.bf16.mxu0 0
        %1899 = vmatpush1.bf16.msra.mxu0 %v1880
        %1900 = vmatprep.subr.bf16.mxu0 0
        %1901 = vmatpush1.bf16.msra.mxu0 %v1881
        %1902 = vmatprep.subr.bf16.mxu0 0
        %1903 = vmatpush1.bf16.msra.mxu0 %v1882
        %1904 = vmatprep.subr.bf16.mxu0 0
        %1905 = vmatpush1.bf16.msra.mxu0 %v1883
        %1906 = vmatprep.subr.bf16.mxu0 0
        %1907 = vmatpush1.bf16.msra.mxu0 %v1884
        %1908 = vmatprep.subr.bf16.mxu0 0
        %1909 = vmatpush1.bf16.msra.mxu0 %v1885
        %1910 = vmatprep.subr.bf16.mxu0 0
        %1911 = vmatpush1.bf16.msra.mxu0 0
        %1912 = vmatprep.subr.bf16.mxu0 0
        %1913 = vmatpush1.bf16.msra.mxu0 0
        %1914 = vmatprep.subr.bf16.mxu0 0
        %1915 = vmatpush1.bf16.msra.mxu0 0
        %1916 = vmatprep.subr.bf16.mxu0 0
        %1917 = vmatpush1.bf16.msra.mxu0 0
        %1918 = vmatprep.subr.bf16.mxu0 0
        %1919 = vmatpush1.bf16.msra.mxu0 0
        %1920 = vmatprep.subr.bf16.mxu0 0
        %1921 = vmatpush1.bf16.msra.mxu0 0
        %1922 = vmatprep.subr.bf16.mxu0 0
        %1923 = vmatpush1.bf16.msra.mxu0 0
        %1924 = vmatprep.subr.bf16.mxu0 0
        %1925 = vmatpush1.bf16.msra.mxu0 0
        %1926 = vmatprep.mubr.bf16.mxu0 0
        %1927 = vmatmul.mubr.bf16.gmra.mrb[0].mxu0 %v1517
        %v1928 = vpop.f32.mrb[0].mxu0
        %v1929 = vadd.f32 0.0, %v1928
        %v1930 = vpop.f32.mrb[0].mxu0
        %v1931 = vpop.f32.mrb[0].mxu0
        %v1932 = vadd.f32 0.0, %v1931
        %v1933 = vpop.f32.mrb[0].mxu0
        %1934 = vmatprep.mubr.bf16.mxu0 0
        %1935 = vmatmul.mubr.bf16.gmra.mrb[0].mxu0 %v1518
        %v1936 = vpop.f32.mrb[0].mxu0
        %v1937 = vadd.f32 0.0, %v1936
        %v1938 = vpop.f32.mrb[0].mxu0
        %v1939 = vpop.f32.mrb[0].mxu0
        %v1940 = vadd.f32 0.0, %v1939
        %v1941 = vpop.f32.mrb[0].mxu0
        %1942 = vmatprep.mubr.bf16.mxu0 0
        %1943 = vmatmul.mubr.bf16.gmra.mrb[0].mxu0 %v1519
        %v1944 = vpop.f32.mrb[0].mxu0
        %v1945 = vadd.f32 0.0, %v1944
        %v1946 = vpop.f32.mrb[0].mxu0
        %v1947 = vpop.f32.mrb[0].mxu0
        %v1948 = vadd.f32 0.0, %v1947
        %v1949 = vpop.f32.mrb[0].mxu0
        %1950 = vmatprep.mubr.bf16.mxu0 0
        %1951 = vmatmul.mubr.bf16.gmra.mrb[0].mxu0 %v1520
        %v1952 = vpop.f32.mrb[0].mxu0
        %v1953 = vadd.f32 0.0, %v1952
        %v1954 = vpop.f32.mrb[0].mxu0
        %v1955 = vpop.f32.mrb[0].mxu0
        %v1956 = vadd.f32 0.0, %v1955
        %v1957 = vpop.f32.mrb[0].mxu0
        %1958 = vdwg.mxu0
        %v1959 = vld [vmem:[%s1025] sm:$0xff]
        %v1960 = vld [vmem:[%s1025 + $0x8] sm:$0xff]
        %v1961 = vld [vmem:[%s1025 + $0x10] sm:$0xff]
        %v1962 = vld [vmem:[%s1025 + $0x18] sm:$0xff]
        %v1963 = vld [vmem:[%s1025 + $0x20] sm:$0xff]
        %v1964 = vld [vmem:[%s1025 + $0x28] sm:$0xff]
        %v1965 = vld [vmem:[%s1025 + $0x30] sm:$0xff]
        %v1966 = vld [vmem:[%s1025 + $0x38] sm:$0xff]
        %v1967 = vadd.f32 %v1959, %v1929
        %v1968 = vadd.f32 %v1960, %v1932
        %v1969 = vadd.f32 %v1961, %v1937
        %v1970 = vadd.f32 %v1962, %v1940
        %v1971 = vadd.f32 %v1963, %v1945
        %v1972 = vadd.f32 %v1964, %v1948
        %v1973 = vadd.f32 %v1965, %v1953
        %v1974 = vadd.f32 %v1966, %v1956
        %1975 = vst [vmem:[%s1025] sm:$0xff] %v1967
        %1976 = vst [vmem:[%s1025 + $0x8] sm:$0xff] %v1968
        %1977 = vst [vmem:[%s1025 + $0x10] sm:$0xff] %v1969
        %1978 = vst [vmem:[%s1025 + $0x18] sm:$0xff] %v1970
        %1979 = vst [vmem:[%s1025 + $0x20] sm:$0xff] %v1971
        %1980 = vst [vmem:[%s1025 + $0x28] sm:$0xff] %v1972
        %1981 = vst [vmem:[%s1025 + $0x30] sm:$0xff] %v1973
        %1982 = vst [vmem:[%s1025 + $0x38] sm:$0xff] %v1974
        %v1983 = vlaneseq
        %v1984 = vshrl.u32 %v1983, 7
        %v1985 = vadd.s32 %v1984, 8
        %v1986 = vadd.s32 %v1984, 16
        %v1987 = vadd.s32 %v1984, 24
        %v1988 = vadd.s32 %v1984, 32
        %v1989 = vadd.s32 %v1984, 40
        %v1990 = vadd.s32 %v1984, 48
        %v1991 = vadd.s32 %v1984, 56
        %vm1992 = vcmp.lt.s32.totalorder %v1984, 0
        %v1993 = vsub.s32 0, %v1984
        %v1994 = vsel %vm1992, %v1993, %v1984
        %v1995 = vshrl.u32 %v1994, 3
        %v1996 = vand.u32 %v1994, 7
        %v1997 = vsub.s32 0, %v1996
        %v1998 = vsel %vm1992, %v1997, %v1996
        %vm1999 = vcmp.lt.s32.totalorder %v1985, 0
        %v2000 = vsub.s32 0, %v1985
        %v2001 = vsel %vm1999, %v2000, %v1985
        %v2002 = vshrl.u32 %v2001, 3
        %v2003 = vand.u32 %v2001, 7
        %v2004 = vsub.s32 0, %v2003
        %v2005 = vsel %vm1999, %v2004, %v2003
        %vm2006 = vcmp.lt.s32.totalorder %v1986, 0
        %v2007 = vsub.s32 0, %v1986
        %v2008 = vsel %vm2006, %v2007, %v1986
        %v2009 = vshrl.u32 %v2008, 3
        %v2010 = vand.u32 %v2008, 7
        %v2011 = vsub.s32 0, %v2010
        %v2012 = vsel %vm2006, %v2011, %v2010
        %vm2013 = vcmp.lt.s32.totalorder %v1987, 0
        %v2014 = vsub.s32 0, %v1987
        %v2015 = vsel %vm2013, %v2014, %v1987
        %v2016 = vshrl.u32 %v2015, 3
        %v2017 = vand.u32 %v2015, 7
        %v2018 = vsub.s32 0, %v2017
        %v2019 = vsel %vm2013, %v2018, %v2017
        %vm2020 = vcmp.lt.s32.totalorder %v1988, 0
        %v2021 = vsub.s32 0, %v1988
        %v2022 = vsel %vm2020, %v2021, %v1988
        %v2023 = vshrl.u32 %v2022, 3
        %v2024 = vand.u32 %v2022, 7
        %v2025 = vsub.s32 0, %v2024
        %v2026 = vsel %vm2020, %v2025, %v2024
        %vm2027 = vcmp.lt.s32.totalorder %v1989, 0
        %v2028 = vsub.s32 0, %v1989
        %v2029 = vsel %vm2027, %v2028, %v1989
        %v2030 = vshrl.u32 %v2029, 3
        %v2031 = vand.u32 %v2029, 7
        %v2032 = vsub.s32 0, %v2031
        %v2033 = vsel %vm2027, %v2032, %v2031
        %vm2034 = vcmp.lt.s32.totalorder %v1990, 0
        %v2035 = vsub.s32 0, %v1990
        %v2036 = vsel %vm2034, %v2035, %v1990
        %v2037 = vshrl.u32 %v2036, 3
        %v2038 = vand.u32 %v2036, 7
        %v2039 = vsub.s32 0, %v2038
        %v2040 = vsel %vm2034, %v2039, %v2038
        %vm2041 = vcmp.lt.s32.totalorder %v1991, 0
        %v2042 = vsub.s32 0, %v1991
        %v2043 = vsel %vm2041, %v2042, %v1991
        %v2044 = vshrl.u32 %v2043, 3
        %v2045 = vand.u32 %v2043, 7
        %v2046 = vsub.s32 0, %v2045
        %v2047 = vsel %vm2041, %v2046, %v2045
        %vm2048 = vcmp.ne.s32.totalorder %v1998, 0
        %vm2049 = vcmp.ne.s32.totalorder %v2005, 0
        %vm2050 = vcmp.ne.s32.totalorder %v2012, 0
        %vm2051 = vcmp.ne.s32.totalorder %v2019, 0
        %vm2052 = vcmp.ne.s32.totalorder %v2026, 0
        %vm2053 = vcmp.ne.s32.totalorder %v2033, 0
        %vm2054 = vcmp.ne.s32.totalorder %v2040, 0
        %vm2055 = vcmp.ne.s32.totalorder %v2047, 0
        %vm2056 = vcmp.lt.s32.totalorder %v1998, 0
        %vm2057 = vcmp.lt.s32.totalorder %v2005, 0
        %vm2058 = vcmp.lt.s32.totalorder %v2012, 0
        %vm2059 = vcmp.lt.s32.totalorder %v2019, 0
        %vm2060 = vcmp.lt.s32.totalorder %v2026, 0
        %vm2061 = vcmp.lt.s32.totalorder %v2033, 0
        %vm2062 = vcmp.lt.s32.totalorder %v2040, 0
        %vm2063 = vcmp.lt.s32.totalorder %v2047, 0
        %vm2064 = vmand %vm2056, %vm2048
        %vm2065 = vmand %vm2057, %vm2049
        %vm2066 = vmand %vm2058, %vm2050
        %vm2067 = vmand %vm2059, %vm2051
        %vm2068 = vmand %vm2060, %vm2052
        %vm2069 = vmand %vm2061, %vm2053
        %vm2070 = vmand %vm2062, %vm2054
        %vm2071 = vmand %vm2063, %vm2055
        %v2072 = vadd.s32 %v1998, 8
        %v2073 = vadd.s32 %v2005, 8
        %v2074 = vadd.s32 %v2012, 8
        %v2075 = vadd.s32 %v2019, 8
        %v2076 = vadd.s32 %v2026, 8
        %v2077 = vadd.s32 %v2033, 8
        %v2078 = vadd.s32 %v2040, 8
        %v2079 = vadd.s32 %v2047, 8
        %v2080 = vsel %vm2064, %v2072, %v1998
        %v2081 = vsel %vm2065, %v2073, %v2005
        %v2082 = vsel %vm2066, %v2074, %v2012
        %v2083 = vsel %vm2067, %v2075, %v2019
        %v2084 = vsel %vm2068, %v2076, %v2026
        %v2085 = vsel %vm2069, %v2077, %v2033
        %v2086 = vsel %vm2070, %v2078, %v2040
        %v2087 = vsel %vm2071, %v2079, %v2047
        %vm2088 = vcmp.ne.s32.totalorder %v2080, 0
        %vm2089 = vcmp.ne.s32.totalorder %v2081, 0
        %vm2090 = vcmp.ne.s32.totalorder %v2082, 0
        %vm2091 = vcmp.ne.s32.totalorder %v2083, 0
        %vm2092 = vcmp.ne.s32.totalorder %v2084, 0
        %vm2093 = vcmp.ne.s32.totalorder %v2085, 0
        %vm2094 = vcmp.ne.s32.totalorder %v2086, 0
        %vm2095 = vcmp.ne.s32.totalorder %v2087, 0
        %v2096 = vsel %vm2088, 1, 0
        %v2097 = vsel %vm2089, 1, 0
        %v2098 = vsel %vm2090, 1, 0
        %v2099 = vsel %vm2091, 1, 0
        %v2100 = vsel %vm2092, 1, 0
        %v2101 = vsel %vm2093, 1, 0
        %v2102 = vsel %vm2094, 1, 0
        %v2103 = vsel %vm2095, 1, 0
        %v2104 = vcvt.s32.f32 %v2096
        %v2105 = vcvt.s32.f32 %v2097
        %v2106 = vcvt.s32.f32 %v2098
        %v2107 = vcvt.s32.f32 %v2099
        %v2108 = vcvt.s32.f32 %v2100
        %v2109 = vcvt.s32.f32 %v2101
        %v2110 = vcvt.s32.f32 %v2102
        %v2111 = vcvt.s32.f32 %v2103
        %vm2112 = vcmp.ne.s32.totalorder %v2080, 7
        %vm2113 = vcmp.ne.s32.totalorder %v2081, 7
        %vm2114 = vcmp.ne.s32.totalorder %v2082, 7
        %vm2115 = vcmp.ne.s32.totalorder %v2083, 7
        %vm2116 = vcmp.ne.s32.totalorder %v2084, 7
        %vm2117 = vcmp.ne.s32.totalorder %v2085, 7
        %vm2118 = vcmp.ne.s32.totalorder %v2086, 7
        %vm2119 = vcmp.ne.s32.totalorder %v2087, 7
        %v2120 = vsel %vm2112, 1, 0
        %v2121 = vsel %vm2113, 1, 0
        %v2122 = vsel %vm2114, 1, 0
        %v2123 = vsel %vm2115, 1, 0
        %v2124 = vsel %vm2116, 1, 0
        %v2125 = vsel %vm2117, 1, 0
        %v2126 = vsel %vm2118, 1, 0
        %v2127 = vsel %vm2119, 1, 0
        %v2128 = vcvt.s32.f32 %v2120
        %v2129 = vcvt.s32.f32 %v2121
        %v2130 = vcvt.s32.f32 %v2122
        %v2131 = vcvt.s32.f32 %v2123
        %v2132 = vcvt.s32.f32 %v2124
        %v2133 = vcvt.s32.f32 %v2125
        %v2134 = vcvt.s32.f32 %v2126
        %v2135 = vcvt.s32.f32 %v2127
        %v2136 = vld [vmem:[%s886] sm:$0xff]
        %v2137 = vld [vmem:[%s886 + $0x8] sm:$0xff]
        %v2138 = vld [vmem:[%s886 + $0x10] sm:$0xff]
        %v2139 = vld [vmem:[%s886 + $0x18] sm:$0xff]
        %v2140 = vld [vmem:[%s886 + $0x20] sm:$0xff]
        %v2141 = vld [vmem:[%s886 + $0x28] sm:$0xff]
        %v2142 = vld [vmem:[%s886 + $0x30] sm:$0xff]
        %v2143 = vld [vmem:[%s886 + $0x38] sm:$0xff]
        %v2144 = vld [vmem:[#allocation3] sm:$0xff]
        %v2145 = vld [vmem:[#allocation3 + $0x8] sm:$0xff]
        %v2146 = vld [vmem:[#allocation3 + $0x10] sm:$0xff]
        %v2147 = vld [vmem:[#allocation3 + $0x18] sm:$0xff]
        %v2148 = vld [vmem:[#allocation3 + $0x20] sm:$0xff]
        %v2149 = vld [vmem:[#allocation3 + $0x28] sm:$0xff]
        %v2150 = vld [vmem:[#allocation3 + $0x30] sm:$0xff]
        %v2151 = vld [vmem:[#allocation3 + $0x38] sm:$0xff]
        %v2152 = vrot.slane %v2144, 7
        %v2153 = vrot.slane %v2145, 7
        %v2154 = vrot.slane %v2146, 7
        %v2155 = vrot.slane %v2147, 7
        %v2156 = vrot.slane %v2148, 7
        %v2157 = vrot.slane %v2149, 7
        %v2158 = vrot.slane %v2150, 7
        %v2159 = vrot.slane %v2151, 7
        %vm2160 = vcmp.lt.s32.totalorder %v1984, 1
        %v2161 = vsel %vm2160, %v2158, %v2159
        %v2162 = vsel %vm2160, %v2157, %v2158
        %v2163 = vsel %vm2160, %v2156, %v2157
        %v2164 = vsel %vm2160, %v2155, %v2156
        %v2165 = vsel %vm2160, %v2154, %v2155
        %v2166 = vsel %vm2160, %v2153, %v2154
        %v2167 = vsel %vm2160, %v2152, %v2153
        %v2168 = vsel %vm2160, %v2159, %v2152
        %v2169 = vmul.f32 %v2104, %v2168
        %v2170 = vmul.f32 %v2105, %v2167
        %v2171 = vmul.f32 %v2106, %v2166
        %v2172 = vmul.f32 %v2107, %v2165
        %v2173 = vmul.f32 %v2108, %v2164
        %v2174 = vmul.f32 %v2109, %v2163
        %v2175 = vmul.f32 %v2110, %v2162
        %v2176 = vmul.f32 %v2111, %v2161
        %v2177 = vadd.f32 %v2136, %v2169
        %v2178 = vadd.f32 %v2137, %v2170
        %v2179 = vadd.f32 %v2138, %v2171
        %v2180 = vadd.f32 %v2139, %v2172
        %v2181 = vadd.f32 %v2140, %v2173
        %v2182 = vadd.f32 %v2141, %v2174
        %v2183 = vadd.f32 %v2142, %v2175
        %v2184 = vadd.f32 %v2143, %v2176
        %v2185 = vld [vmem:[%s1025] sm:$0xff]
        %v2186 = vld [vmem:[%s1025 + $0x8] sm:$0xff]
        %v2187 = vld [vmem:[%s1025 + $0x10] sm:$0xff]
        %v2188 = vld [vmem:[%s1025 + $0x18] sm:$0xff]
        %v2189 = vld [vmem:[%s1025 + $0x20] sm:$0xff]
        %v2190 = vld [vmem:[%s1025 + $0x28] sm:$0xff]
        %v2191 = vld [vmem:[%s1025 + $0x30] sm:$0xff]
        %v2192 = vld [vmem:[%s1025 + $0x38] sm:$0xff]
        %v2193 = vrot.slane %v2185, 1
        %v2194 = vrot.slane %v2186, 1
        %v2195 = vrot.slane %v2187, 1
        %v2196 = vrot.slane %v2188, 1
        %v2197 = vrot.slane %v2189, 1
        %v2198 = vrot.slane %v2190, 1
        %v2199 = vrot.slane %v2191, 1
        %v2200 = vrot.slane %v2192, 1
        %vm2201 = vcmp.lt.s32.totalorder %v1984, 7
        %v2202 = vsel %vm2201, %v2199, %v2200
        %v2203 = vsel %vm2201, %v2198, %v2199
        %v2204 = vsel %vm2201, %v2197, %v2198
        %v2205 = vsel %vm2201, %v2196, %v2197
        %v2206 = vsel %vm2201, %v2195, %v2196
        %v2207 = vsel %vm2201, %v2194, %v2195
        %v2208 = vsel %vm2201, %v2193, %v2194
        %v2209 = vsel %vm2201, %v2200, %v2193
        %v2210 = vmul.f32 %v2128, %v2208
        %v2211 = vmul.f32 %v2129, %v2207
        %v2212 = vmul.f32 %v2130, %v2206
        %v2213 = vmul.f32 %v2131, %v2205
        %v2214 = vmul.f32 %v2132, %v2204
        %v2215 = vmul.f32 %v2133, %v2203
        %v2216 = vmul.f32 %v2134, %v2202
        %v2217 = vmul.f32 %v2135, %v2209
        %v2218 = vadd.f32 %v2177, %v2210
        %v2219 = vadd.f32 %v2178, %v2211
        %v2220 = vadd.f32 %v2179, %v2212
        %v2221 = vadd.f32 %v2180, %v2213
        %v2222 = vadd.f32 %v2181, %v2214
        %v2223 = vadd.f32 %v2182, %v2215
        %v2224 = vadd.f32 %v2183, %v2216
        %v2225 = vadd.f32 %v2184, %v2217
        %v2226 = vld [vmem:[%s6] sm:$0x1]
        %v2228 = vlaneseq
        %v2229 = vshrl.u32 %v2228, 7
        %v2230 = vsub.s32 0, %v2229
        %v2231 = vrot.slane %v2226, %v2230
        %v2233 = vadd.f32 %v2218, %v2231
        %v2234 = vadd.f32 %v2219, %v2231
        %v2235 = vadd.f32 %v2220, %v2231
        %v2236 = vadd.f32 %v2221, %v2231
        %v2237 = vadd.f32 %v2222, %v2231
        %v2238 = vadd.f32 %v2223, %v2231
        %v2239 = vadd.f32 %v2224, %v2231
        %v2240 = vadd.f32 %v2225, %v2231
        %v2241 = vpack.c.bf16 %v2233, %v2233
        %v2242 = vpack.c.bf16 %v2234, %v2234
        %v2243 = vpack.c.bf16 %v2235, %v2235
        %v2244 = vpack.c.bf16 %v2236, %v2236
        %v2245 = vpack.c.bf16 %v2237, %v2237
        %v2246 = vpack.c.bf16 %v2238, %v2238
        %v2247 = vpack.c.bf16 %v2239, %v2239
        %v2248 = vpack.c.bf16 %v2240, %v2240
        %2249 = vst [vmem:[%s412] sm:$0xf] %v2241
        %2250 = vst [vmem:[%s412 + $0x4] sm:$0xf] %v2242
        %2251 = vst [vmem:[%s412 + $0x8] sm:$0xf] %v2243
        %2252 = vst [vmem:[%s412 + $0xc] sm:$0xf] %v2244
        %2253 = vst [vmem:[%s412 + $0x10] sm:$0xf] %v2245
        %2254 = vst [vmem:[%s412 + $0x14] sm:$0xf] %v2246
        %2255 = vst [vmem:[%s412 + $0x18] sm:$0xf] %v2247
        %2256 = vst [vmem:[%s412 + $0x1c] sm:$0xf] %v2248
        %v2257 = vadd.f32 %v2233, %v2234
        %v2258 = vadd.f32 %v2257, %v2235
        %v2259 = vadd.f32 %v2258, %v2236
        %v2260 = vadd.f32 %v2259, %v2237
        %v2261 = vadd.f32 %v2260, %v2238
        %v2262 = vadd.f32 %v2261, %v2239
        %v2263 = vadd.f32 %v2262, %v2240
        %v2264 = vrot.slane %v2263, 4
        %v2265 = vadd.f32 %v2263, %v2264
        %v2266 = vrot.slane %v2265, 2
        %v2267 = vadd.f32 %v2265, %v2266
        %v2268 = vrot.slane %v2267, 1
        %v2269 = vadd.f32 %v2267, %v2268
        %2270 = vst [vmem:[%s471] sm:$0x1] %v2269
        %v2271 = vmul.f32 %v2233, %v2233
        %v2272 = vmul.f32 %v2234, %v2234
        %v2273 = vmul.f32 %v2235, %v2235
        %v2274 = vmul.f32 %v2236, %v2236
        %v2275 = vmul.f32 %v2237, %v2237
        %v2276 = vmul.f32 %v2238, %v2238
        %v2277 = vmul.f32 %v2239, %v2239
        %v2278 = vmul.f32 %v2240, %v2240
        %v2279 = vadd.f32 %v2271, %v2272
        %v2280 = vadd.f32 %v2279, %v2273
        %v2281 = vadd.f32 %v2280, %v2274
        %v2282 = vadd.f32 %v2281, %v2275
        %v2283 = vadd.f32 %v2282, %v2276
        %v2284 = vadd.f32 %v2283, %v2277
        %v2285 = vadd.f32 %v2284, %v2278
        %v2286 = vrot.slane %v2285, 4
        %v2287 = vadd.f32 %v2285, %v2286
        %v2288 = vrot.slane %v2287, 2
        %v2289 = vadd.f32 %v2287, %v2288
        %v2290 = vrot.slane %v2289, 1
        %v2291 = vadd.f32 %v2289, %v2290
        %2292 = vst [vmem:[%s471 + $0x1] sm:$0x1] %v2291
        %s2293 = sand.u32 %s229, 1
        %s2294 = scalar_lea.sflag [#allocation5], %s2293
        %s2295 = sand.u32 %s229, 1
        %s2296 = smul.addr %s2295, 32
        %s2297 = scalar_lea.vmem [#allocation4], %s2296
        %p2298 = scmp.lt.s32.totalorder %s27, 1
        %s2299 = scalar_select %p2298, %s27, 1
        %p2300 = scmp.lt.s32.totalorder %s28, 0
        %s2301 = scalar_select %p2300, %s28, 0
        %s2302 = sadd.s32 %s2301, %s2299
        %s2303 = smul.addr %s2302, 2
        %s2304 = scalar_lea.vmem %s8, %s2303
        // Predicated region
        $region49: #{residual_block_3d_packed.4} parent=47 // pred_check
          %p2305 = pneg %p239
        $region50: #{residual_block_3d_packed.4} parent=47 // pred_check_branch
          %2307 = sbr.rel (%p2305) target = $region52
        $region51: #{residual_block_3d_packed.4} parent=47 // pred_region
          %s2308 = smul.u32 8, %s28
          %s2310 = ssub.s32 512, 512
          %2311 = vsyncadd %s2294, %s2310
          %s2312 = smul.addr %s27, 8
          %s2313 = sadd.s32 %s2308, %s2312
          %s2314 = smul.addr %s2313, 64
          %s2315 = scalar_lea.hbm %s7, %s2314
          %s2316 = sshll.u32 %s2297, 4
          %s2317 = int_to_ptr.vmem [resolvable:$true] %s2316
          %2322 = dma.vmem_to_hbm [thread:$0]  %s2317, 512, %s2315, %s2294, 64, 64, 4
        $region52: #{residual_block_3d_packed.4} parent=47 // pred_fallthru
          _
        // Predicated region
        $region53: #{residual_block_3d_packed.4} parent=47 // pred_check
          %p2323 = pneg %p267
        $region54: #{residual_block_3d_packed.4} parent=47 // pred_check_branch
          %2325 = sbr.rel (%p2323) target = $region56
        $region55: #{residual_block_3d_packed.4} parent=47 // pred_region
          _
        $region56: #{residual_block_3d_packed.4} parent=47 // pred_fallthru
          _
      $region48: #{residual_block_3d_packed.4} parent=5 // pred_fallthru
        _
      %p2326 = scmp.le.s32.totalorder 2, %s18
      // Predicated region
      $region57: #{residual_block_3d_packed.4} parent=5 // pred_check
        %p2327 = pneg %p2326
      $region58: #{residual_block_3d_packed.4} parent=5 // pred_check_branch
        %2329 = sbr.rel (%p2327) target = $region60
      $region59: #{residual_block_3d_packed.4} parent=5 // pred_region
        %s2330 = ssub.s32 %s18, 2
        // Predicated region
        $region61: #{residual_block_3d_packed.4} parent=59 // pred_check
          %p2331 = pneg %p245
        $region62: #{residual_block_3d_packed.4} parent=59 // pred_check_branch
          %2333 = sbr.rel (%p2331) target = $region64
        $region63: #{residual_block_3d_packed.4} parent=59 // pred_region
          %s2334 = sand.u32 %s230, 1
          %s2335 = scalar_lea.sflag [#allocation5], %s2334
          %s2336 = sand.u32 %s230, 1
          %s2337 = smul.addr %s2336, 32
          %s2338 = scalar_lea.vmem [#allocation4], %s2337
          %2339 = dma.done %s2335, 512
        $region64: #{residual_block_3d_packed.4} parent=59 // pred_fallthru
          _
        // Predicated region
        $region65: #{residual_block_3d_packed.4} parent=59 // pred_check
          %p2340 = pneg %p273
        $region66: #{residual_block_3d_packed.4} parent=59 // pred_check_branch
          %2342 = sbr.rel (%p2340) target = $region68
        $region67: #{residual_block_3d_packed.4} parent=59 // pred_region
          %p2343 = scmp.lt.s32.totalorder %s29, 1
          %s2344 = scalar_select %p2343, %s29, 1
          %p2345 = scmp.lt.s32.totalorder %s30, 0
          %s2346 = scalar_select %p2345, %s30, 0
          %s2347 = sadd.s32 %s2346, %s2344
          %s2348 = smul.addr %s2347, 2
          %s2349 = scalar_lea.vmem %s8, %s2348
        $region68: #{residual_block_3d_packed.4} parent=59 // pred_fallthru
          _
      $region60: #{residual_block_3d_packed.4} parent=5 // pred_fallthru
        _
    $region6: #{residual_block_3d_packed.4} parent=1 // loop_footer
      %s22 = sadd.s32 1, %s18
    $region7: #{residual_block_3d_packed.4} parent=1 // loop_footer_branch
      %17 = sbr.rel target = $region3
    $region8: #{residual_block_3d_packed.4} parent=1 // loop_exit
      _
    %2350 = vsyncpa [#allocation5], 1
    %s2351 = scalar_lea.sflag [#allocation5], 1
    %2352 = vsyncpa %s2351, 1

// kernel: residual_block_3d_packed.3
$region0: #{residual_block_3d_packed.3}
  #allocation0 [shape = 'u32[]', space=smem, size = 0x4, offset = 0x4, fixed_abs, tag = 'smem constant byte address 0x4 - core index']
  #allocation1 [shape = 'u32[144,128]{1,0:T(1,128)}', space=vmem, size = 0x12000, scoped, tag = 'internal scratch']
  #allocation2 [shape = 'f32[10,8,128]{2,1,0:T(8,128)}', space=vmem, size = 0xa000, scoped, tag = 'scratch operand']
  #allocation3 [shape = 'f32[3,64,128]{2,1,0:T(8,128)}', space=vmem, size = 0x18000, scoped, tag = 'scratch operand']
  %s0 = inlined_call_operand.vmem [shape: f32[1,128], index: 0, kind: input, shape index: {}]
  %s1 = inlined_call_operand.vmem [shape: f32[1,128], index: 1, kind: input, shape index: {}]
  %s2 = inlined_call_operand.hbm [shape: f32[2,8,8,128], index: 2, kind: input, shape index: {}, may-alias: {2,3,4}]
  %s3 = inlined_call_operand.hbm [shape: f32[2,8,8,128], index: 3, kind: input, shape index: {}, may-alias: {2,3,4}]
  %s4 = inlined_call_operand.hbm [shape: f32[2,8,8,128], index: 4, kind: input, shape index: {}, may-alias: {2,3,4}]
  %s5 = inlined_call_operand.hbm [shape: bf16[3,3,128,128], index: 5, kind: input, shape index: {}]
  %s6 = inlined_call_operand.hbm [shape: f32[1,128], index: 6, kind: input, shape index: {}]
  %s7 = inlined_call_operand.vmem [shape: bf16[2,8,8,128], index: 7, kind: output, shape index: {0}]
  %s8 = inlined_call_operand.vmem [shape: f32[2,1,2,128], index: 8, kind: output, shape index: {1}]
  %9 = xla_tuple %s7, %s8
  %s10 = sld [smem:[#allocation0]]
  $region89: #{residual_block_3d_packed.3} parent=0
    _
  %s12 = ssub.s32 1, %s10
  %s13 = scalar_select 0, %s12, %s10
  $region1: #{residual_block_3d_packed.3} parent=0
    #allocation4 [shape = 'u8[65536]{0}', space=vmem, size = 0x10000, scoped, tag = 'input window, operand 2']
    #allocation5 [shape = 's32[2]{0}', space=sflag, size = 0x8, scoped, tag = 'scoped memory for residual_block_3d_packed.3']
    #allocation6 [shape = 'u8[8192]{0}', space=vmem, size = 0x2000, scoped, tag = 'input window, operand 3']
    #allocation7 [shape = 's32[2]{0}', space=sflag, size = 0x8, scoped, tag = 'scoped memory for residual_block_3d_packed.3']
    #allocation8 [shape = 'u8[8192]{0}', space=vmem, size = 0x2000, scoped, tag = 'input window, operand 4']
    #allocation9 [shape = 'u8[294912]{0}', space=vmem, size = 0x48000, scoped, tag = 'input window, operand 5, single buffered']
    #allocation10 [shape = 's32[1]{0}', space=sflag, size = 0x4, scoped, tag = 'scoped memory for residual_block_3d_packed.3']
    #allocation11 [shape = 'u8[512]{0}', space=vmem, size = 0x400, scoped, tag = 'input window, operand 6, single buffered']
    %14 = vsyncpa [#allocation5], 0
    %s15 = scalar_lea.sflag [#allocation5], 1
    %16 = vsyncpa %s15, 0
    %17 = vsyncpa [#allocation7], 0
    %s18 = scalar_lea.sflag [#allocation7], 1
    %19 = vsyncpa %s18, 0
    %20 = vsyncpa [#allocation10], 0
    loop: start=0, step=1, limit=4
    $region2: #{residual_block_3d_packed.3} parent=1 // loop_pre_header
      _
    $region3: #{residual_block_3d_packed.3} parent=1 // loop_header
      %s22 = sphi 0, %s26
      %p23 = scmp.ge.s32.totalorder %s22, 4
      %s29 = sphi 0, %s41
      %s30 = sphi 0, %s37
      %s31 = sphi 0, %s29
      %s32 = sphi 0, %s30
      %s33 = sphi 0, %s31
      %s34 = sphi 0, %s32
      %s42 = sphi 0, %s42
      %s44 = sphi 0, %s42
      %s45 = sphi 0, %s44
      %s59 = sphi 0, %s45
      %s63 = sphi 0, %s63
      %s65 = sphi 0, %s63
      %s66 = sphi 0, %s65
      %s80 = sphi 0, %s66
      %s88 = sphi 0, %s90
      %s91 = sphi 0, %s88
      %s92 = sphi 0, %s91
      %s108 = sphi 0, %s92
      %s124 = sphi 0, %s126
      %s127 = sphi 0, %s124
      %s128 = sphi 0, %s127
      %s144 = sphi 0, %s128
      %s160 = sphi 0, %s162
      %s163 = sphi 0, %s160
      %s164 = sphi 0, %s163
      %s180 = sphi 0, %s164
      %s184 = sphi 0, %s184
      %s186 = sphi 0, %s184
      %s187 = sphi 0, %s186
      %s201 = sphi 0, %s187
      %s205 = sphi 0, %s205
      %s207 = sphi 0, %s205
      %s208 = sphi 0, %s207
      %s222 = sphi 0, %s208
      %s230 = sphi 0, %s232
      %s233 = sphi 0, %s230
      %s234 = sphi 0, %s233
      %s250 = sphi 0, %s234
      %s258 = sphi 0, %s260
      %s261 = sphi 0, %s258
      %s262 = sphi 0, %s261
      %s278 = sphi 0, %s262
    $region4: #{residual_block_3d_packed.3} parent=1 // loop_header_branch
      %25 = sbr.rel (%p23) target = $region8
    $region5: #{residual_block_3d_packed.3} parent=1 // loop_body
      %s27 = ssub.s32 %s22, 1
      %s28 = ssub.s32 %s22, 2
      %s35 = sadd.s32 1, %s30
      %p36 = scmp.ge.s32.totalorder %s35, 1
      %s37 = scalar_select %p36, 0, %s35
      %s38 = sadd.s32 1, %s29
      %s39 = scalar_select %p36, %s38, %s29
      %p40 = scmp.ge.s32.totalorder %s39, 2
      %s41 = scalar_select %p40, 0, %s39
      %s43 = sadd.s32 %s42, 1
      %p46 = scmp.eq.s32.totalorder %s22, 1
      %p47 = scmp.ne.s32.totalorder %s42, %s44
      %p48 = scmp.eq.s32.totalorder %s22, 0
      %p49 = por %p47, %p48
      %p50 = scmp.ne.s32.totalorder %s42, %s44
      %p51 = scmp.eq.s32.totalorder %s27, 1
      %p52 = por %p50, %p51
      %p53 = scmp.ne.s32.totalorder %s44, %s45
      %p54 = scmp.eq.s32.totalorder %s27, 0
      %p55 = por %p53, %p54
      %p56 = scmp.ne.s32.totalorder %s44, %s45
      %p57 = scmp.eq.s32.totalorder %s28, 1
      %p58 = por %p56, %p57
      %p60 = scmp.ne.s32.totalorder %s45, %s59
      %p61 = scmp.eq.s32.totalorder %s28, 0
      %p62 = por %p60, %p61
      %s64 = sadd.s32 %s63, 1
      %p67 = scmp.eq.s32.totalorder %s22, 1
      %p68 = scmp.ne.s32.totalorder %s63, %s65
      %p69 = scmp.eq.s32.totalorder %s22, 0
      %p70 = por %p68, %p69
      %p71 = scmp.ne.s32.totalorder %s63, %s65
      %p72 = scmp.eq.s32.totalorder %s27, 1
      %p73 = por %p71, %p72
      %p74 = scmp.ne.s32.totalorder %s65, %s66
      %p75 = scmp.eq.s32.totalorder %s27, 0
      %p76 = por %p74, %p75
      %p77 = scmp.ne.s32.totalorder %s65, %s66
      %p78 = scmp.eq.s32.totalorder %s28, 1
      %p79 = por %p77, %p78
      %p81 = scmp.ne.s32.totalorder %s66, %s80
      %p82 = scmp.eq.s32.totalorder %s28, 0
      %p83 = por %p81, %p82
      %s84 = ssub.s32 %s29, %s41
      %s85 = ssub.s32 %s30, %s37
      %s86 = sor.u32 %s84, %s85
      %p87 = scmp.eq.s32.totalorder %s86, 0
      %s89 = sadd.s32 %s88, 1
      %s90 = scalar_select %p87, %s88, %s89
      %p93 = pneg %p87
      %p94 = scmp.eq.s32.totalorder %s22, 1
      %p95 = por %p93, %p94
      %p96 = scmp.ne.s32.totalorder %s88, %s91
      %p97 = scmp.eq.s32.totalorder %s22, 0
      %p98 = por %p96, %p97
      %p99 = scmp.ne.s32.totalorder %s88, %s91
      %p100 = scmp.eq.s32.totalorder %s27, 1
      %p101 = por %p99, %p100
      %p102 = scmp.ne.s32.totalorder %s91, %s92
      %p103 = scmp.eq.s32.totalorder %s27, 0
      %p104 = por %p102, %p103
      %p105 = scmp.ne.s32.totalorder %s91, %s92
      %p106 = scmp.eq.s32.totalorder %s28, 1
      %p107 = por %p105, %p106
      %p109 = scmp.ne.s32.totalorder %s92, %s108
      %p110 = scmp.eq.s32.totalorder %s28, 0
      %p111 = por %p109, %p110
      %s112 = smul.u32 %s30, 8
      %s113 = ssub.s32 %s112, 1
      %p114 = scmp.gt.s32.totalorder %s113, 0
      %s115 = scalar_select %p114, %s113, 0
      %s116 = smul.u32 %s37, 8
      %s117 = ssub.s32 %s116, 1
      %p118 = scmp.gt.s32.totalorder %s117, 0
      %s119 = scalar_select %p118, %s117, 0
      %s120 = ssub.s32 %s29, %s41
      %s121 = ssub.s32 %s115, %s119
      %s122 = sor.u32 %s120, %s121
      %p123 = scmp.eq.s32.totalorder %s122, 0
      %s125 = sadd.s32 %s124, 1
      %s126 = scalar_select %p123, %s124, %s125
      %p129 = pneg %p123
      %p130 = scmp.eq.s32.totalorder %s22, 1
      %p131 = por %p129, %p130
      %p132 = scmp.ne.s32.totalorder %s124, %s127
      %p133 = scmp.eq.s32.totalorder %s22, 0
      %p134 = por %p132, %p133
      %p135 = scmp.ne.s32.totalorder %s124, %s127
      %p136 = scmp.eq.s32.totalorder %s27, 1
      %p137 = por %p135, %p136
      %p138 = scmp.ne.s32.totalorder %s127, %s128
      %p139 = scmp.eq.s32.totalorder %s27, 0
      %p140 = por %p138, %p139
      %p141 = scmp.ne.s32.totalorder %s127, %s128
      %p142 = scmp.eq.s32.totalorder %s28, 1
      %p143 = por %p141, %p142
      %p145 = scmp.ne.s32.totalorder %s128, %s144
      %p146 = scmp.eq.s32.totalorder %s28, 0
      %p147 = por %p145, %p146
      %s148 = smul.u32 %s30, 8
      %s149 = sadd.s32 %s148, 8
      %p150 = scmp.lt.s32.totalorder %s149, 7
      %s151 = scalar_select %p150, %s149, 7
      %s152 = smul.u32 %s37, 8
      %s153 = sadd.s32 %s152, 8
      %p154 = scmp.lt.s32.totalorder %s153, 7
      %s155 = scalar_select %p154, %s153, 7
      %s156 = ssub.s32 %s29, %s41
      %s157 = ssub.s32 %s151, %s155
      %s158 = sor.u32 %s156, %s157
      %p159 = scmp.eq.s32.totalorder %s158, 0
      %s161 = sadd.s32 %s160, 1
      %s162 = scalar_select %p159, %s160, %s161
      %p165 = pneg %p159
      %p166 = scmp.eq.s32.totalorder %s22, 1
      %p167 = por %p165, %p166
      %p168 = scmp.ne.s32.totalorder %s160, %s163
      %p169 = scmp.eq.s32.totalorder %s22, 0
      %p170 = por %p168, %p169
      %p171 = scmp.ne.s32.totalorder %s160, %s163
      %p172 = scmp.eq.s32.totalorder %s27, 1
      %p173 = por %p171, %p172
      %p174 = scmp.ne.s32.totalorder %s163, %s164
      %p175 = scmp.eq.s32.totalorder %s27, 0
      %p176 = por %p174, %p175
      %p177 = scmp.ne.s32.totalorder %s163, %s164
      %p178 = scmp.eq.s32.totalorder %s28, 1
      %p179 = por %p177, %p178
      %p181 = scmp.ne.s32.totalorder %s164, %s180
      %p182 = scmp.eq.s32.totalorder %s28, 0
      %p183 = por %p181, %p182
      %s185 = sadd.s32 %s184, 1
      %p188 = scmp.eq.s32.totalorder %s22, 1
      %p189 = scmp.ne.s32.totalorder %s184, %s186
      %p190 = scmp.eq.s32.totalorder %s22, 0
      %p191 = por %p189, %p190
      %p192 = scmp.ne.s32.totalorder %s184, %s186
      %p193 = scmp.eq.s32.totalorder %s27, 1
      %p194 = por %p192, %p193
      %p195 = scmp.ne.s32.totalorder %s186, %s187
      %p196 = scmp.eq.s32.totalorder %s27, 0
      %p197 = por %p195, %p196
      %p198 = scmp.ne.s32.totalorder %s186, %s187
      %p199 = scmp.eq.s32.totalorder %s28, 1
      %p200 = por %p198, %p199
      %p202 = scmp.ne.s32.totalorder %s187, %s201
      %p203 = scmp.eq.s32.totalorder %s28, 0
      %p204 = por %p202, %p203
      %s206 = sadd.s32 %s205, 1
      %p209 = scmp.eq.s32.totalorder %s22, 1
      %p210 = scmp.ne.s32.totalorder %s205, %s207
      %p211 = scmp.eq.s32.totalorder %s22, 0
      %p212 = por %p210, %p211
      %p213 = scmp.ne.s32.totalorder %s205, %s207
      %p214 = scmp.eq.s32.totalorder %s27, 1
      %p215 = por %p213, %p214
      %p216 = scmp.ne.s32.totalorder %s207, %s208
      %p217 = scmp.eq.s32.totalorder %s27, 0
      %p218 = por %p216, %p217
      %p219 = scmp.ne.s32.totalorder %s207, %s208
      %p220 = scmp.eq.s32.totalorder %s28, 1
      %p221 = por %p219, %p220
      %p223 = scmp.ne.s32.totalorder %s208, %s222
      %p224 = scmp.eq.s32.totalorder %s28, 0
      %p225 = por %p223, %p224
      %s226 = ssub.s32 %s29, %s41
      %s227 = ssub.s32 %s30, %s37
      %s228 = sor.u32 %s226, %s227
      %p229 = scmp.eq.s32.totalorder %s228, 0
      %s231 = sadd.s32 %s230, 1
      %s232 = scalar_select %p229, %s230, %s231
      %p235 = pneg %p229
      %p236 = scmp.eq.s32.totalorder %s22, 1
      %p237 = por %p235, %p236
      %p238 = scmp.ne.s32.totalorder %s230, %s233
      %p239 = scmp.eq.s32.totalorder %s22, 0
      %p240 = por %p238, %p239
      %p241 = scmp.ne.s32.totalorder %s230, %s233
      %p242 = scmp.eq.s32.totalorder %s27, 1
      %p243 = por %p241, %p242
      %p244 = scmp.ne.s32.totalorder %s233, %s234
      %p245 = scmp.eq.s32.totalorder %s27, 0
      %p246 = por %p244, %p245
      %p247 = scmp.ne.s32.totalorder %s233, %s234
      %p248 = scmp.eq.s32.totalorder %s28, 1
      %p249 = por %p247, %p248
      %p251 = scmp.ne.s32.totalorder %s234, %s250
      %p252 = scmp.eq.s32.totalorder %s28, 0
      %p253 = por %p251, %p252
      %s254 = ssub.s32 %s29, %s41
      %s255 = ssub.s32 %s30, %s37
      %s256 = sor.u32 %s254, %s255
      %p257 = scmp.eq.s32.totalorder %s256, 0
      %s259 = sadd.s32 %s258, 1
      %s260 = scalar_select %p257, %s258, %s259
      %p263 = pneg %p257
      %p264 = scmp.eq.s32.totalorder %s22, 1
      %p265 = por %p263, %p264
      %p266 = scmp.ne.s32.totalorder %s258, %s261
      %p267 = scmp.eq.s32.totalorder %s22, 0
      %p268 = por %p266, %p267
      %p269 = scmp.ne.s32.totalorder %s258, %s261
      %p270 = scmp.eq.s32.totalorder %s27, 1
      %p271 = por %p269, %p270
      %p272 = scmp.ne.s32.totalorder %s261, %s262
      %p273 = scmp.eq.s32.totalorder %s27, 0
      %p274 = por %p272, %p273
      %p275 = scmp.ne.s32.totalorder %s261, %s262
      %p276 = scmp.eq.s32.totalorder %s28, 1
      %p277 = por %p275, %p276
      %p279 = scmp.ne.s32.totalorder %s262, %s278
      %p280 = scmp.eq.s32.totalorder %s28, 0
      %p281 = por %p279, %p280
      %p282 = scmp.le.s32.totalorder 1, %s22
      %p283 = scmp.lt.s32.totalorder %s22, 3
      %p284 = pnand %p282, %p283
      %p285 = pneg %p284
      // Predicated region
      $region9: #{residual_block_3d_packed.3} parent=5 // pred_check
        _
      $region10: #{residual_block_3d_packed.3} parent=5 // pred_check_branch
        %287 = sbr.rel (%p284) target = $region12
      $region11: #{residual_block_3d_packed.3} parent=5 // pred_region
        %s288 = ssub.s32 %s22, 1
        // Predicated region
        $region13: #{residual_block_3d_packed.3} parent=11 // pred_check
          %p289 = pneg %p55
        $region14: #{residual_block_3d_packed.3} parent=11 // pred_check_branch
          %291 = sbr.rel (%p289) target = $region16
        $region15: #{residual_block_3d_packed.3} parent=11 // pred_region
          _
        $region16: #{residual_block_3d_packed.3} parent=11 // pred_fallthru
          _
        // Predicated region
        $region17: #{residual_block_3d_packed.3} parent=11 // pred_check
          %p292 = pneg %p76
        $region18: #{residual_block_3d_packed.3} parent=11 // pred_check_branch
          %294 = sbr.rel (%p292) target = $region20
        $region19: #{residual_block_3d_packed.3} parent=11 // pred_region
          _
        $region20: #{residual_block_3d_packed.3} parent=11 // pred_fallthru
          _
        // Predicated region
        $region21: #{residual_block_3d_packed.3} parent=11 // pred_check
          %p295 = pneg %p197
        $region22: #{residual_block_3d_packed.3} parent=11 // pred_check_branch
          %297 = sbr.rel (%p295) target = $region24
        $region23: #{residual_block_3d_packed.3} parent=11 // pred_region
          %s299 = ssub.s32 9216, 9216
          %300 = vsyncadd [#allocation10], %s299
          %s301 = sshll.u32 [#allocation9], 4
          %s302 = int_to_ptr.vmem [resolvable:$true] %s301
          %307 = dma.hbm_to_vmem [thread:$0]  %s5, 9216, %s302, [#allocation10], 64, 64, 4
        $region24: #{residual_block_3d_packed.3} parent=11 // pred_fallthru
          _
        // Predicated region
        $region25: #{residual_block_3d_packed.3} parent=11 // pred_check
          %p308 = pneg %p218
        $region26: #{residual_block_3d_packed.3} parent=11 // pred_check_branch
          %310 = sbr.rel (%p308) target = $region28
        $region27: #{residual_block_3d_packed.3} parent=11 // pred_region
          %s312 = ssub.s32 16, 16
          %313 = vsyncadd [#allocation10], %s312
          %s315 = sshll.u32 [#allocation11], 4
          %s316 = int_to_ptr.vmem [resolvable:$true] %s315
          %318 = dma.hbm_to_vmem [thread:$0]  %s6, 16, %s316, [#allocation10]
        $region28: #{residual_block_3d_packed.3} parent=11 // pred_fallthru
          _
      $region12: #{residual_block_3d_packed.3} parent=5 // pred_fallthru
        _
      %p319 = scmp.lt.s32.totalorder %s22, 2
      // Predicated region
      $region29: #{residual_block_3d_packed.3} parent=5 // pred_check
        %p320 = pneg %p319
      $region30: #{residual_block_3d_packed.3} parent=5 // pred_check_branch
        %322 = sbr.rel (%p320) target = $region32
      $region31: #{residual_block_3d_packed.3} parent=5 // pred_region
        // Predicated region
        $region33: #{residual_block_3d_packed.3} parent=31 // pred_check
          %p323 = pneg %p98
        $region34: #{residual_block_3d_packed.3} parent=31 // pred_check_branch
          %325 = sbr.rel (%p323) target = $region36
        $region35: #{residual_block_3d_packed.3} parent=31 // pred_region
          %s326 = sand.u32 %s88, 1
          %s327 = scalar_lea.sflag [#allocation5], %s326
          %s328 = sand.u32 %s88, 1
          %s329 = smul.addr %s328, 64
          %s330 = scalar_lea.vmem [#allocation4], %s329
          %s331 = smul.u32 8, %s30
          %s333 = ssub.s32 1024, 1024
          %334 = vsyncadd %s327, %s333
          %s335 = smul.addr %s29, 8
          %s336 = sadd.s32 %s331, %s335
          %s337 = smul.addr %s336, 128
          %s338 = scalar_lea.hbm %s2, %s337
          %s339 = sshll.u32 %s330, 4
          %s340 = int_to_ptr.vmem [resolvable:$true] %s339
          %345 = dma.hbm_to_vmem [thread:$0]  %s338, 1024, %s340, %s327, 128, 128, 8
        $region36: #{residual_block_3d_packed.3} parent=31 // pred_fallthru
          _
        // Predicated region
        $region37: #{residual_block_3d_packed.3} parent=31 // pred_check
          %p346 = pneg %p134
        $region38: #{residual_block_3d_packed.3} parent=31 // pred_check_branch
          %348 = sbr.rel (%p346) target = $region40
        $region39: #{residual_block_3d_packed.3} parent=31 // pred_region
          %s349 = sand.u32 %s22, 1
          %s350 = scalar_lea.sflag [#allocation7], %s349
          %s351 = sand.u32 %s124, 1
          %s352 = smul.addr %s351, 8
          %s353 = scalar_lea.vmem [#allocation6], %s352
          %s354 = smul.u32 %s30, 8
          %s355 = ssub.s32 %s354, 1
          %p356 = scmp.gt.s32.totalorder %s355, 0
          %s357 = scalar_select %p356, %s355, 0
          %s359 = ssub.s32 128, 128
          %360 = vsyncadd %s350, %s359
          %s361 = smul.addr %s29, 8
          %s362 = sadd.s32 %s357, %s361
          %s363 = smul.addr %s362, 128
          %s364 = scalar_lea.hbm %s3, %s363
          %s366 = sshll.u32 %s353, 4
          %s367 = int_to_ptr.vmem [resolvable:$true] %s366
          %369 = dma.hbm_to_vmem [thread:$0]  %s364, 128, %s367, %s350
        $region40: #{residual_block_3d_packed.3} parent=31 // pred_fallthru
          _
        // Predicated region
        $region41: #{residual_block_3d_packed.3} parent=31 // pred_check
          %p370 = pneg %p170
        $region42: #{residual_block_3d_packed.3} parent=31 // pred_check_branch
          %372 = sbr.rel (%p370) target = $region44
        $region43: #{residual_block_3d_packed.3} parent=31 // pred_region
          %s373 = sand.u32 %s22, 1
          %s374 = scalar_lea.sflag [#allocation7], %s373
          %s375 = sand.u32 %s160, 1
          %s376 = smul.addr %s375, 8
          %s377 = scalar_lea.vmem [#allocation8], %s376
          %s378 = smul.u32 %s30, 8
          %s379 = sadd.s32 %s378, 8
          %p380 = scmp.lt.s32.totalorder %s379, 7
          %s381 = scalar_select %p380, %s379, 7
          %s383 = ssub.s32 128, 128
          %384 = vsyncadd %s374, %s383
          %s385 = smul.addr %s29, 8
          %s386 = sadd.s32 %s381, %s385
          %s387 = smul.addr %s386, 128
          %s388 = scalar_lea.hbm %s4, %s387
          %s390 = sshll.u32 %s377, 4
          %s391 = int_to_ptr.vmem [resolvable:$true] %s390
          %393 = dma.hbm_to_vmem [thread:$0]  %s388, 128, %s391, %s374
        $region44: #{residual_block_3d_packed.3} parent=31 // pred_fallthru
          _
      $region32: #{residual_block_3d_packed.3} parent=5 // pred_fallthru
        _
      %p394 = scmp.le.s32.totalorder 1, %s22
      %p395 = scmp.lt.s32.totalorder %s22, 3
      %p396 = pnand %p394, %p395
      %p397 = pneg %p396
      // Predicated region
      $region45: #{residual_block_3d_packed.3} parent=5 // pred_check
        _
      $region46: #{residual_block_3d_packed.3} parent=5 // pred_check_branch
        %399 = sbr.rel (%p396) target = $region48
      $region47: #{residual_block_3d_packed.3} parent=5 // pred_region
        %s400 = ssub.s32 %s22, 1
        %s401 = sand.u32 %s91, 1
        %s402 = scalar_lea.sflag [#allocation5], %s401
        %s403 = sand.u32 %s91, 1
        %s404 = smul.addr %s403, 64
        %s405 = scalar_lea.vmem [#allocation4], %s404
        // Predicated region
        $region49: #{residual_block_3d_packed.3} parent=47 // pred_check
          %p406 = pneg %p104
        $region50: #{residual_block_3d_packed.3} parent=47 // pred_check_branch
          %408 = sbr.rel (%p406) target = $region52
        $region51: #{residual_block_3d_packed.3} parent=47 // pred_region
          %409 = dma.done %s402, 1024
        $region52: #{residual_block_3d_packed.3} parent=47 // pred_fallthru
          _
        %s410 = sand.u32 %s27, 1
        %s411 = scalar_lea.sflag [#allocation7], %s410
        %s412 = sand.u32 %s127, 1
        %s413 = smul.addr %s412, 8
        %s414 = scalar_lea.vmem [#allocation6], %s413
        // Predicated region
        $region53: #{residual_block_3d_packed.3} parent=47 // pred_check
          %p415 = pneg %p140
        $region54: #{residual_block_3d_packed.3} parent=47 // pred_check_branch
          %417 = sbr.rel (%p415) target = $region56
        $region55: #{residual_block_3d_packed.3} parent=47 // pred_region
          %418 = dma.done %s411, 128
        $region56: #{residual_block_3d_packed.3} parent=47 // pred_fallthru
          _
        %s419 = sand.u32 %s27, 1
        %s420 = scalar_lea.sflag [#allocation7], %s419
        %s421 = sand.u32 %s163, 1
        %s422 = smul.addr %s421, 8
        %s423 = scalar_lea.vmem [#allocation8], %s422
        // Predicated region
        $region57: #{residual_block_3d_packed.3} parent=47 // pred_check
          %p424 = pneg %p176
        $region58: #{residual_block_3d_packed.3} parent=47 // pred_check_branch
          %426 = sbr.rel (%p424) target = $region60
        $region59: #{residual_block_3d_packed.3} parent=47 // pred_region
          %427 = dma.done %s420, 128
        $region60: #{residual_block_3d_packed.3} parent=47 // pred_fallthru
          _
        // Predicated region
        $region61: #{residual_block_3d_packed.3} parent=47 // pred_check
          %p428 = pneg %p197
        $region62: #{residual_block_3d_packed.3} parent=47 // pred_check_branch
          %430 = sbr.rel (%p428) target = $region64
        $region63: #{residual_block_3d_packed.3} parent=47 // pred_region
          %431 = dma.done [#allocation10], 9216
        $region64: #{residual_block_3d_packed.3} parent=47 // pred_fallthru
          _
        // Predicated region
        $region65: #{residual_block_3d_packed.3} parent=47 // pred_check
          %p432 = pneg %p218
        $region66: #{residual_block_3d_packed.3} parent=47 // pred_check_branch
          %434 = sbr.rel (%p432) target = $region68
        $region67: #{residual_block_3d_packed.3} parent=47 // pred_region
          %435 = dma.done [#allocation10], 16
        $region68: #{residual_block_3d_packed.3} parent=47 // pred_fallthru
          _
        %p436 = pneg %p55
        %p437 = pneg %p52
        %p438 = pneg %p76
        %p439 = pneg %p73
        %s440 = sand.u32 %s91, 1
        %s441 = scalar_lea.sflag [#allocation5], %s440
        %s442 = sand.u32 %s91, 1
        %s443 = smul.addr %s442, 64
        %s444 = scalar_lea.vmem [#allocation4], %s443
        %p445 = pneg %p104
        %p446 = pneg %p101
        %s447 = sand.u32 %s27, 1
        %s448 = scalar_lea.sflag [#allocation7], %s447
        %s449 = sand.u32 %s127, 1
        %s450 = smul.addr %s449, 8
        %s451 = scalar_lea.vmem [#allocation6], %s450
        %p452 = pneg %p140
        %p453 = pneg %p137
        %s454 = sand.u32 %s27, 1
        %s455 = scalar_lea.sflag [#allocation7], %s454
        %s456 = sand.u32 %s163, 1
        %s457 = smul.addr %s456, 8
        %s458 = scalar_lea.vmem [#allocation8], %s457
        %p459 = pneg %p176
        %p460 = pneg %p173
        %p461 = pneg %p197
        %p462 = pneg %p194
        %p463 = pneg %p218
        %p464 = pneg %p215
        %p465 = pneg %p246
        %p466 = pneg %p243
        %s467 = smul.u32 8, %s32
        %p468 = scmp.lt.s32.totalorder %s31, 1
        %s469 = scalar_select %p468, %s31, 1
        %p470 = scmp.lt.s32.totalorder %s467, 7
        %s471 = scalar_select %p470, %s467, 7
        %s472 = smul.addr %s469, 8
        %s473 = sadd.s32 %s471, %s472
        %s474 = smul.addr %s473, 4
        %s475 = scalar_lea.vmem %s7, %s474
        %p476 = pneg %p274
        %p477 = pneg %p271
        %p478 = scmp.lt.s32.totalorder %s31, 1
        %s479 = scalar_select %p478, %s31, 1
        %p480 = scmp.lt.s32.totalorder %s32, 0
        %s481 = scalar_select %p480, %s32, 0
        %s482 = sadd.s32 %s481, %s479
        %s483 = smul.addr %s482, 2
        %s484 = scalar_lea.vmem %s8, %s483
        %s485 = smul.u32 8, %s32
        %s486 = smul.u32 %s32, 8
        %s487 = ssub.s32 %s486, 1
        %p488 = scmp.gt.s32.totalorder %s487, 0
        %s489 = scalar_select %p488, %s487, 0
        %s490 = smul.u32 %s32, 8
        %s491 = sadd.s32 %s490, 8
        %p492 = scmp.lt.s32.totalorder %s491, 7
        %s493 = scalar_select %p492, %s491, 7
        %s494 = smul.u32 8, %s32
        %p495 = scmp.lt.s32.totalorder %s31, 1
        %s496 = scalar_select %p495, %s31, 1
        %p497 = scmp.lt.s32.totalorder %s494, 7
        %s498 = scalar_select %p497, %s494, 7
        %s499 = smul.addr %s496, 8
        %s500 = sadd.s32 %s498, %s499
        %s501 = smul.addr %s500, 4
        %s502 = scalar_lea.vmem %s7, %s501
        %s503 = smul.u32 8, %s32
        %p504 = scmp.lt.s32.totalorder %s31, 1
        %s505 = scalar_select %p504, %s31, 1
        %p506 = scmp.lt.s32.totalorder %s32, 0
        %s507 = scalar_select %p506, %s32, 0
        %s508 = sadd.s32 %s507, %s505
        %s509 = smul.addr %s508, 2
        %s510 = scalar_lea.vmem %s8, %s509
        %v512 = vld [vmem:[%s405] sm:$0xff]
        %v513 = vld [vmem:[%s405 + $0x8] sm:$0xff]
        %v514 = vld [vmem:[%s405 + $0x10] sm:$0xff]
        %v515 = vld [vmem:[%s405 + $0x18] sm:$0xff]
        %v516 = vld [vmem:[%s405 + $0x20] sm:$0xff]
        %v517 = vld [vmem:[%s405 + $0x28] sm:$0xff]
        %v518 = vld [vmem:[%s405 + $0x30] sm:$0xff]
        %v519 = vld [vmem:[%s405 + $0x38] sm:$0xff]
        %s520 = scalar_lea.vmem [#allocation2], 8
        %521 = vst [vmem:[%s520] sm:$0xff] %v512
        %522 = vst [vmem:[%s520 + $0x8] sm:$0xff] %v513
        %523 = vst [vmem:[%s520 + $0x10] sm:$0xff] %v514
        %524 = vst [vmem:[%s520 + $0x18] sm:$0xff] %v515
        %525 = vst [vmem:[%s520 + $0x20] sm:$0xff] %v516
        %526 = vst [vmem:[%s520 + $0x28] sm:$0xff] %v517
        %527 = vst [vmem:[%s520 + $0x30] sm:$0xff] %v518
        %528 = vst [vmem:[%s520 + $0x38] sm:$0xff] %v519
        %p529 = scmp.gt.s32.totalorder %s32, 0
        %s530 = scalar_select %p529, 1, 0
        %s531 = scvt.s32.f32 %s530
        %p532 = scmp.lt.s32.totalorder %s32, 0
        %s533 = scalar_select %p532, 1, 0
        %s534 = scvt.s32.f32 %s533
        %v535 = vld [vmem:[%s414] sm:$0xff]
        %v536 = vstv %s531
        %v537 = vmul.f32 %v535, %v536
        %538 = vst [vmem:[#allocation2] sm:$0xff] %v537
        %v539 = vld [vmem:[%s423] sm:$0xff]
        %v540 = vstv %s534
        %v541 = vmul.f32 %v539, %v540
        %s542 = scalar_lea.vmem [#allocation2], 72
        %543 = vst [vmem:[%s542] sm:$0xff] %v541
        %v544 = vld [vmem:[#allocation2] sm:$0xff]
        %v545 = vld [vmem:[#allocation2 + $0x8] sm:$0xff]
        %v546 = vld [vmem:[#allocation2 + $0x10] sm:$0xff]
        %v547 = vld [vmem:[#allocation2 + $0x18] sm:$0xff]
        %v548 = vld [vmem:[#allocation2 + $0x20] sm:$0xff]
        %v549 = vld [vmem:[#allocation2 + $0x28] sm:$0xff]
        %v550 = vld [vmem:[#allocation2 + $0x30] sm:$0xff]
        %v551 = vld [vmem:[#allocation2 + $0x38] sm:$0xff]
        %v552 = vpack.c.bf16 %v545, %v544
        %v553 = vpack.c.bf16 %v547, %v546
        %v554 = vpack.c.bf16 %v549, %v548
        %v555 = vpack.c.bf16 %v551, %v550
        %v556 = vld [vmem:[#allocation9] sm:$0xf]
        %v557 = vld [vmem:[#allocation9 + $0x4] sm:$0xf]
        %v558 = vld [vmem:[#allocation9 + $0x8] sm:$0xf]
        %v559 = vld [vmem:[#allocation9 + $0xc] sm:$0xf]
        %v560 = vld [vmem:[#allocation9 + $0x10] sm:$0xf]
        %v561 = vld [vmem:[#allocation9 + $0x14] sm:$0xf]
        %v562 = vld [vmem:[#allocation9 + $0x18] sm:$0xf]
        %v563 = vld [vmem:[#allocation9 + $0x1c] sm:$0xf]
        %v564 = vld [vmem:[#allocation9 + $0x20] sm:$0xf]
        %v565 = vld [vmem:[#allocation9 + $0x24] sm:$0xf]
        %v566 = vld [vmem:[#allocation9 + $0x28] sm:$0xf]
        %v567 = vld [vmem:[#allocation9 + $0x2c] sm:$0xf]
        %v568 = vld [vmem:[#allocation9 + $0x30] sm:$0xf]
        %v569 = vld [vmem:[#allocation9 + $0x34] sm:$0xf]
        %v570 = vld [vmem:[#allocation9 + $0x38] sm:$0xf]
        %v571 = vld [vmem:[#allocation9 + $0x3c] sm:$0xf]
        %v588 = vunpack.c.l.b16 %v556
        %v589 = vunpack.c.l.b16 %v557
        %v590 = vunpack.c.l.b16 %v558
        %v591 = vunpack.c.l.b16 %v559
        %v592 = vunpack.c.l.b16 %v560
        %v593 = vunpack.c.l.b16 %v561
        %v594 = vunpack.c.l.b16 %v562
        %v595 = vunpack.c.l.b16 %v563
        %v596 = vunpack.c.l.b16 %v564
        %v597 = vunpack.c.l.b16 %v565
        %v598 = vunpack.c.l.b16 %v566
        %v599 = vunpack.c.l.b16 %v567
        %v600 = vunpack.c.l.b16 %v568
        %v601 = vunpack.c.l.b16 %v569
        %v602 = vunpack.c.l.b16 %v570
        %v603 = vunpack.c.l.b16 %v571
        %v604 = vpack.c.b16 %v589, %v588
        %v605 = vpack.c.b16 %v591, %v590
        %v606 = vpack.c.b16 %v593, %v592
        %v607 = vpack.c.b16 %v595, %v594
        %v608 = vpack.c.b16 %v597, %v596
        %v609 = vpack.c.b16 %v599, %v598
        %v610 = vpack.c.b16 %v601, %v600
        %v611 = vpack.c.b16 %v603, %v602
        %620 = vmatprep.subr.bf16.mxu0 0
        %621 = vmatpush1.bf16.msra.mxu0 %v604
        %622 = vmatprep.subr.bf16.mxu0 0
        %623 = vmatpush1.bf16.msra.mxu0 %v605
        %624 = vmatprep.subr.bf16.mxu0 0
        %625 = vmatpush1.bf16.msra.mxu0 %v606
        %626 = vmatprep.subr.bf16.mxu0 0
        %627 = vmatpush1.bf16.msra.mxu0 %v607
        %628 = vmatprep.subr.bf16.mxu0 0
        %629 = vmatpush1.bf16.msra.mxu0 %v608
        %630 = vmatprep.subr.bf16.mxu0 0
        %631 = vmatpush1.bf16.msra.mxu0 %v609
        %632 = vmatprep.subr.bf16.mxu0 0
        %633 = vmatpush1.bf16.msra.mxu0 %v610
        %634 = vmatprep.subr.bf16.mxu0 0
        %635 = vmatpush1.bf16.msra.mxu0 %v611
        %636 = vmatprep.subr.bf16.mxu0 0
        %637 = vmatpush1.bf16.msra.mxu0 0
        %638 = vmatprep.subr.bf16.mxu0 0
        %639 = vmatpush1.bf16.msra.mxu0 0
        %640 = vmatprep.subr.bf16.mxu0 0
        %641 = vmatpush1.bf16.msra.mxu0 0
        %642 = vmatprep.subr.bf16.mxu0 0
        %643 = vmatpush1.bf16.msra.mxu0 0
        %644 = vmatprep.subr.bf16.mxu0 0
        %645 = vmatpush1.bf16.msra.mxu0 0
        %646 = vmatprep.subr.bf16.mxu0 0
        %647 = vmatpush1.bf16.msra.mxu0 0
        %648 = vmatprep.subr.bf16.mxu0 0
        %649 = vmatpush1.bf16.msra.mxu0 0
        %650 = vmatprep.subr.bf16.mxu0 0
        %651 = vmatpush1.bf16.msra.mxu0 0
        %652 = vmatprep.mubr.bf16.mxu0 0
        %653 = vmatmul.mubr.bf16.gmra.mrb[0].mxu0 %v552
        %v654 = vpop.f32.mrb[0].mxu0
        %v655 = vadd.f32 0.0, %v654
        %v656 = vpop.f32.mrb[0].mxu0
        %v657 = vpop.f32.mrb[0].mxu0
        %v658 = vadd.f32 0.0, %v657
        %v659 = vpop.f32.mrb[0].mxu0
        %660 = vmatprep.mubr.bf16.mxu0 0
        %661 = vmatmul.mubr.bf16.gmra.mrb[0].mxu0 %v553
        %v662 = vpop.f32.mrb[0].mxu0
        %v663 = vadd.f32 0.0, %v662
        %v664 = vpop.f32.mrb[0].mxu0
        %v665 = vpop.f32.mrb[0].mxu0
        %v666 = vadd.f32 0.0, %v665
        %v667 = vpop.f32.mrb[0].mxu0
        %668 = vmatprep.mubr.bf16.mxu0 0
        %669 = vmatmul.mubr.bf16.gmra.mrb[0].mxu0 %v554
        %v670 = vpop.f32.mrb[0].mxu0
        %v671 = vadd.f32 0.0, %v670
        %v672 = vpop.f32.mrb[0].mxu0
        %v673 = vpop.f32.mrb[0].mxu0
        %v674 = vadd.f32 0.0, %v673
        %v675 = vpop.f32.mrb[0].mxu0
        %676 = vmatprep.mubr.bf16.mxu0 0
        %677 = vmatmul.mubr.bf16.gmra.mrb[0].mxu0 %v555
        %v678 = vpop.f32.mrb[0].mxu0
        %v679 = vadd.f32 0.0, %v678
        %v680 = vpop.f32.mrb[0].mxu0
        %v681 = vpop.f32.mrb[0].mxu0
        %v682 = vadd.f32 0.0, %v681
        %v683 = vpop.f32.mrb[0].mxu0
        %684 = vdwg.mxu0
        %685 = vst [vmem:[#allocation3] sm:$0xff] %v655
        %686 = vst [vmem:[#allocation3 + $0x8] sm:$0xff] %v658
        %687 = vst [vmem:[#allocation3 + $0x10] sm:$0xff] %v663
        %688 = vst [vmem:[#allocation3 + $0x18] sm:$0xff] %v666
        %689 = vst [vmem:[#allocation3 + $0x20] sm:$0xff] %v671
        %690 = vst [vmem:[#allocation3 + $0x28] sm:$0xff] %v674
        %691 = vst [vmem:[#allocation3 + $0x30] sm:$0xff] %v679
        %692 = vst [vmem:[#allocation3 + $0x38] sm:$0xff] %v682
        %s693 = scalar_lea.vmem [#allocation9], 64
        %v694 = vld [vmem:[%s693] sm:$0xf]
        %v695 = vld [vmem:[%s693 + $0x4] sm:$0xf]
        %v696 = vld [vmem:[%s693 + $0x8] sm:$0xf]
        %v697 = vld [vmem:[%s693 + $0xc] sm:$0xf]
        %v698 = vld [vmem:[%s693 + $0x10] sm:$0xf]
        %v699 = vld [vmem:[%s693 + $0x14] sm:$0xf]
        %v700 = vld [vmem:[%s693 + $0x18] sm:$0xf]
        %v701 = vld [vmem:[%s693 + $0x1c] sm:$0xf]
        %v702 = vld [vmem:[%s693 + $0x20] sm:$0xf]
        %v703 = vld [vmem:[%s693 + $0x24] sm:$0xf]
        %v704 = vld [vmem:[%s693 + $0x28] sm:$0xf]
        %v705 = vld [vmem:[%s693 + $0x2c] sm:$0xf]
        %v706 = vld [vmem:[%s693 + $0x30] sm:$0xf]
        %v707 = vld [vmem:[%s693 + $0x34] sm:$0xf]
        %v708 = vld [vmem:[%s693 + $0x38] sm:$0xf]
        %v709 = vld [vmem:[%s693 + $0x3c] sm:$0xf]
        %v726 = vunpack.c.l.b16 %v694
        %v727 = vunpack.c.l.b16 %v695
        %v728 = vunpack.c.l.b16 %v696
        %v729 = vunpack.c.l.b16 %v697
        %v730 = vunpack.c.l.b16 %v698
        %v731 = vunpack.c.l.b16 %v699
        %v732 = vunpack.c.l.b16 %v700
        %v733 = vunpack.c.l.b16 %v701
        %v734 = vunpack.c.l.b16 %v702
        %v735 = vunpack.c.l.b16 %v703
        %v736 = vunpack.c.l.b16 %v704
        %v737 = vunpack.c.l.b16 %v705
        %v738 = vunpack.c.l.b16 %v706
        %v739 = vunpack.c.l.b16 %v707
        %v740 = vunpack.c.l.b16 %v708
        %v741 = vunpack.c.l.b16 %v709
        %v742 = vpack.c.b16 %v727, %v726
        %v743 = vpack.c.b16 %v729, %v728
        %v744 = vpack.c.b16 %v731, %v730
        %v745 = vpack.c.b16 %v733, %v732
        %v746 = vpack.c.b16 %v735, %v734
        %v747 = vpack.c.b16 %v737, %v736
        %v748 = vpack.c.b16 %v739, %v738
        %v749 = vpack.c.b16 %v741, %v740
        %758 = vmatprep.subr.bf16.mxu0 0
        %759 = vmatpush1.bf16.msra.mxu0 %v742
        %760 = vmatprep.subr.bf16.mxu0 0
        %761 = vmatpush1.bf16.msra.mxu0 %v743
        %762 = vmatprep.subr.bf16.mxu0 0
        %763 = vmatpush1.bf16.msra.mxu0 %v744
        %764 = vmatprep.subr.bf16.mxu0 0
        %765 = vmatpush1.bf16.msra.mxu0 %v745
        %766 = vmatprep.subr.bf16.mxu0 0
        %767 = vmatpush1.bf16.msra.mxu0 %v746
        %768 = vmatprep.subr.bf16.mxu0 0
        %769 = vmatpush1.bf16.msra.mxu0 %v747
        %770 = vmatprep.subr.bf16.mxu0 0
        %771 = vmatpush1.bf16.msra.mxu0 %v748
        %772 = vmatprep.subr.bf16.mxu0 0
        %773 = vmatpush1.bf16.msra.mxu0 %v749
        %774 = vmatprep.subr.bf16.mxu0 0
        %775 = vmatpush1.bf16.msra.mxu0 0
        %776 = vmatprep.subr.bf16.mxu0 0
        %777 = vmatpush1.bf16.msra.mxu0 0
        %778 = vmatprep.subr.bf16.mxu0 0
        %779 = vmatpush1.bf16.msra.mxu0 0
        %780 = vmatprep.subr.bf16.mxu0 0
        %781 = vmatpush1.bf16.msra.mxu0 0
        %782 = vmatprep.subr.bf16.mxu0 0
        %783 = vmatpush1.bf16.msra.mxu0 0
        %784 = vmatprep.subr.bf16.mxu0 0
        %785 = vmatpush1.bf16.msra.mxu0 0
        %786 = vmatprep.subr.bf16.mxu0 0
        %787 = vmatpush1.bf16.msra.mxu0 0
        %788 = vmatprep.subr.bf16.mxu0 0
        %789 = vmatpush1.bf16.msra.mxu0 0
        %790 = vmatprep.mubr.bf16.mxu0 0
        %791 = vmatmul.mubr.bf16.gmra.mrb[0].mxu0 %v552
        %v792 = vpop.f32.mrb[0].mxu0
        %v793 = vadd.f32 0.0, %v792
        %v794 = vpop.f32.mrb[0].mxu0
        %v795 = vpop.f32.mrb[0].mxu0
        %v796 = vadd.f32 0.0, %v795
        %v797 = vpop.f32.mrb[0].mxu0
        %798 = vmatprep.mubr.bf16.mxu0 0
        %799 = vmatmul.mubr.bf16.gmra.mrb[0].mxu0 %v553
        %v800 = vpop.f32.mrb[0].mxu0
        %v801 = vadd.f32 0.0, %v800
        %v802 = vpop.f32.mrb[0].mxu0
        %v803 = vpop.f32.mrb[0].mxu0
        %v804 = vadd.f32 0.0, %v803
        %v805 = vpop.f32.mrb[0].mxu0
        %806 = vmatprep.mubr.bf16.mxu0 0
        %807 = vmatmul.mubr.bf16.gmra.mrb[0].mxu0 %v554
        %v808 = vpop.f32.mrb[0].mxu0
        %v809 = vadd.f32 0.0, %v808
        %v810 = vpop.f32.mrb[0].mxu0
        %v811 = vpop.f32.mrb[0].mxu0
        %v812 = vadd.f32 0.0, %v811
        %v813 = vpop.f32.mrb[0].mxu0
        %814 = vmatprep.mubr.bf16.mxu0 0
        %815 = vmatmul.mubr.bf16.gmra.mrb[0].mxu0 %v555
        %v816 = vpop.f32.mrb[0].mxu0
        %v817 = vadd.f32 0.0, %v816
        %v818 = vpop.f32.mrb[0].mxu0
        %v819 = vpop.f32.mrb[0].mxu0
        %v820 = vadd.f32 0.0, %v819
        %v821 = vpop.f32.mrb[0].mxu0
        %822 = vdwg.mxu0
        %s823 = scalar_lea.vmem [#allocation3], 64
        %824 = vst [vmem:[%s823] sm:$0xff] %v793
        %825 = vst [vmem:[%s823 + $0x8] sm:$0xff] %v796
        %826 = vst [vmem:[%s823 + $0x10] sm:$0xff] %v801
        %827 = vst [vmem:[%s823 + $0x18] sm:$0xff] %v804
        %828 = vst [vmem:[%s823 + $0x20] sm:$0xff] %v809
        %829 = vst [vmem:[%s823 + $0x28] sm:$0xff] %v812
        %830 = vst [vmem:[%s823 + $0x30] sm:$0xff] %v817
        %831 = vst [vmem:[%s823 + $0x38] sm:$0xff] %v820
        %s832 = scalar_lea.vmem [#allocation9], 128
        %v833 = vld [vmem:[%s832] sm:$0xf]
        %v834 = vld [vmem:[%s832 + $0x4] sm:$0xf]
        %v835 = vld [vmem:[%s832 + $0x8] sm:$0xf]
        %v836 = vld [vmem:[%s832 + $0xc] sm:$0xf]
        %v837 = vld [vmem:[%s832 + $0x10] sm:$0xf]
        %v838 = vld [vmem:[%s832 + $0x14] sm:$0xf]
        %v839 = vld [vmem:[%s832 + $0x18] sm:$0xf]
        %v840 = vld [vmem:[%s832 + $0x1c] sm:$0xf]
        %v841 = vld [vmem:[%s832 + $0x20] sm:$0xf]
        %v842 = vld [vmem:[%s832 + $0x24] sm:$0xf]
        %v843 = vld [vmem:[%s832 + $0x28] sm:$0xf]
        %v844 = vld [vmem:[%s832 + $0x2c] sm:$0xf]
        %v845 = vld [vmem:[%s832 + $0x30] sm:$0xf]
        %v846 = vld [vmem:[%s832 + $0x34] sm:$0xf]
        %v847 = vld [vmem:[%s832 + $0x38] sm:$0xf]
        %v848 = vld [vmem:[%s832 + $0x3c] sm:$0xf]
        %v865 = vunpack.c.l.b16 %v833
        %v866 = vunpack.c.l.b16 %v834
        %v867 = vunpack.c.l.b16 %v835
        %v868 = vunpack.c.l.b16 %v836
        %v869 = vunpack.c.l.b16 %v837
        %v870 = vunpack.c.l.b16 %v838
        %v871 = vunpack.c.l.b16 %v839
        %v872 = vunpack.c.l.b16 %v840
        %v873 = vunpack.c.l.b16 %v841
        %v874 = vunpack.c.l.b16 %v842
        %v875 = vunpack.c.l.b16 %v843
        %v876 = vunpack.c.l.b16 %v844
        %v877 = vunpack.c.l.b16 %v845
        %v878 = vunpack.c.l.b16 %v846
        %v879 = vunpack.c.l.b16 %v847
        %v880 = vunpack.c.l.b16 %v848
        %v881 = vpack.c.b16 %v866, %v865
        %v882 = vpack.c.b16 %v868, %v867
        %v883 = vpack.c.b16 %v870, %v869
        %v884 = vpack.c.b16 %v872, %v871
        %v885 = vpack.c.b16 %v874, %v873
        %v886 = vpack.c.b16 %v876, %v875
        %v887 = vpack.c.b16 %v878, %v877
        %v888 = vpack.c.b16 %v880, %v879
        %897 = vmatprep.subr.bf16.mxu0 0
        %898 = vmatpush1.bf16.msra.mxu0 %v881
        %899 = vmatprep.subr.bf16.mxu0 0
        %900 = vmatpush1.bf16.msra.mxu0 %v882
        %901 = vmatprep.subr.bf16.mxu0 0
        %902 = vmatpush1.bf16.msra.mxu0 %v883
        %903 = vmatprep.subr.bf16.mxu0 0
        %904 = vmatpush1.bf16.msra.mxu0 %v884
        %905 = vmatprep.subr.bf16.mxu0 0
        %906 = vmatpush1.bf16.msra.mxu0 %v885
        %907 = vmatprep.subr.bf16.mxu0 0
        %908 = vmatpush1.bf16.msra.mxu0 %v886
        %909 = vmatprep.subr.bf16.mxu0 0
        %910 = vmatpush1.bf16.msra.mxu0 %v887
        %911 = vmatprep.subr.bf16.mxu0 0
        %912 = vmatpush1.bf16.msra.mxu0 %v888
        %913 = vmatprep.subr.bf16.mxu0 0
        %914 = vmatpush1.bf16.msra.mxu0 0
        %915 = vmatprep.subr.bf16.mxu0 0
        %916 = vmatpush1.bf16.msra.mxu0 0
        %917 = vmatprep.subr.bf16.mxu0 0
        %918 = vmatpush1.bf16.msra.mxu0 0
        %919 = vmatprep.subr.bf16.mxu0 0
        %920 = vmatpush1.bf16.msra.mxu0 0
        %921 = vmatprep.subr.bf16.mxu0 0
        %922 = vmatpush1.bf16.msra.mxu0 0
        %923 = vmatprep.subr.bf16.mxu0 0
        %924 = vmatpush1.bf16.msra.mxu0 0
        %925 = vmatprep.subr.bf16.mxu0 0
        %926 = vmatpush1.bf16.msra.mxu0 0
        %927 = vmatprep.subr.bf16.mxu0 0
        %928 = vmatpush1.bf16.msra.mxu0 0
        %929 = vmatprep.mubr.bf16.mxu0 0
        %930 = vmatmul.mubr.bf16.gmra.mrb[0].mxu0 %v552
        %v931 = vpop.f32.mrb[0].mxu0
        %v932 = vadd.f32 0.0, %v931
        %v933 = vpop.f32.mrb[0].mxu0
        %v934 = vpop.f32.mrb[0].mxu0
        %v935 = vadd.f32 0.0, %v934
        %v936 = vpop.f32.mrb[0].mxu0
        %937 = vmatprep.mubr.bf16.mxu0 0
        %938 = vmatmul.mubr.bf16.gmra.mrb[0].mxu0 %v553
        %v939 = vpop.f32.mrb[0].mxu0
        %v940 = vadd.f32 0.0, %v939
        %v941 = vpop.f32.mrb[0].mxu0
        %v942 = vpop.f32.mrb[0].mxu0
        %v943 = vadd.f32 0.0, %v942
        %v944 = vpop.f32.mrb[0].mxu0
        %945 = vmatprep.mubr.bf16.mxu0 0
        %946 = vmatmul.mubr.bf16.gmra.mrb[0].mxu0 %v554
        %v947 = vpop.f32.mrb[0].mxu0
        %v948 = vadd.f32 0.0, %v947
        %v949 = vpop.f32.mrb[0].mxu0
        %v950 = vpop.f32.mrb[0].mxu0
        %v951 = vadd.f32 0.0, %v950
        %v952 = vpop.f32.mrb[0].mxu0
        %953 = vmatprep.mubr.bf16.mxu0 0
        %954 = vmatmul.mubr.bf16.gmra.mrb[0].mxu0 %v555
        %v955 = vpop.f32.mrb[0].mxu0
        %v956 = vadd.f32 0.0, %v955
        %v957 = vpop.f32.mrb[0].mxu0
        %v958 = vpop.f32.mrb[0].mxu0
        %v959 = vadd.f32 0.0, %v958
        %v960 = vpop.f32.mrb[0].mxu0
        %961 = vdwg.mxu0
        %s962 = scalar_lea.vmem [#allocation3], 128
        %963 = vst [vmem:[%s962] sm:$0xff] %v932
        %964 = vst [vmem:[%s962 + $0x8] sm:$0xff] %v935
        %965 = vst [vmem:[%s962 + $0x10] sm:$0xff] %v940
        %966 = vst [vmem:[%s962 + $0x18] sm:$0xff] %v943
        %967 = vst [vmem:[%s962 + $0x20] sm:$0xff] %v948
        %968 = vst [vmem:[%s962 + $0x28] sm:$0xff] %v951
        %969 = vst [vmem:[%s962 + $0x30] sm:$0xff] %v956
        %970 = vst [vmem:[%s962 + $0x38] sm:$0xff] %v959
        %v971 = vld [vmem:[%s520] sm:$0xff]
        %v972 = vld [vmem:[%s520 + $0x8] sm:$0xff]
        %v973 = vld [vmem:[%s520 + $0x10] sm:$0xff]
        %v974 = vld [vmem:[%s520 + $0x18] sm:$0xff]
        %v975 = vld [vmem:[%s520 + $0x20] sm:$0xff]
        %v976 = vld [vmem:[%s520 + $0x28] sm:$0xff]
        %v977 = vld [vmem:[%s520 + $0x30] sm:$0xff]
        %v978 = vld [vmem:[%s520 + $0x38] sm:$0xff]
        %v979 = vpack.c.bf16 %v972, %v971
        %v980 = vpack.c.bf16 %v974, %v973
        %v981 = vpack.c.bf16 %v976, %v975
        %v982 = vpack.c.bf16 %v978, %v977
        %s983 = scalar_lea.vmem [#allocation9], 192
        %v984 = vld [vmem:[%s983] sm:$0xf]
        %v985 = vld [vmem:[%s983 + $0x4] sm:$0xf]
        %v986 = vld [vmem:[%s983 + $0x8] sm:$0xf]
        %v987 = vld [vmem:[%s983 + $0xc] sm:$0xf]
        %v988 = vld [vmem:[%s983 + $0x10] sm:$0xf]
        %v989 = vld [vmem:[%s983 + $0x14] sm:$0xf]
        %v990 = vld [vmem:[%s983 + $0x18] sm:$0xf]
        %v991 = vld [vmem:[%s983 + $0x1c] sm:$0xf]
        %v992 = vld [vmem:[%s983 + $0x20] sm:$0xf]
        %v993 = vld [vmem:[%s983 + $0x24] sm:$0xf]
        %v994 = vld [vmem:[%s983 + $0x28] sm:$0xf]
        %v995 = vld [vmem:[%s983 + $0x2c] sm:$0xf]
        %v996 = vld [vmem:[%s983 + $0x30] sm:$0xf]
        %v997 = vld [vmem:[%s983 + $0x34] sm:$0xf]
        %v998 = vld [vmem:[%s983 + $0x38] sm:$0xf]
        %v999 = vld [vmem:[%s983 + $0x3c] sm:$0xf]
        %v1016 = vunpack.c.l.b16 %v984
        %v1017 = vunpack.c.l.b16 %v985
        %v1018 = vunpack.c.l.b16 %v986
        %v1019 = vunpack.c.l.b16 %v987
        %v1020 = vunpack.c.l.b16 %v988
        %v1021 = vunpack.c.l.b16 %v989
        %v1022 = vunpack.c.l.b16 %v990
        %v1023 = vunpack.c.l.b16 %v991
        %v1024 = vunpack.c.l.b16 %v992
        %v1025 = vunpack.c.l.b16 %v993
        %v1026 = vunpack.c.l.b16 %v994
        %v1027 = vunpack.c.l.b16 %v995
        %v1028 = vunpack.c.l.b16 %v996
        %v1029 = vunpack.c.l.b16 %v997
        %v1030 = vunpack.c.l.b16 %v998
        %v1031 = vunpack.c.l.b16 %v999
        %v1032 = vpack.c.b16 %v1017, %v1016
        %v1033 = vpack.c.b16 %v1019, %v1018
        %v1034 = vpack.c.b16 %v1021, %v1020
        %v1035 = vpack.c.b16 %v1023, %v1022
        %v1036 = vpack.c.b16 %v1025, %v1024
        %v1037 = vpack.c.b16 %v1027, %v1026
        %v1038 = vpack.c.b16 %v1029, %v1028
        %v1039 = vpack.c.b16 %v1031, %v1030
        %1048 = vmatprep.subr.bf16.mxu0 0
        %1049 = vmatpush1.bf16.msra.mxu0 %v1032
        %1050 = vmatprep.subr.bf16.mxu0 0
        %1051 = vmatpush1.bf16.msra.mxu0 %v1033
        %1052 = vmatprep.subr.bf16.mxu0 0
        %1053 = vmatpush1.bf16.msra.mxu0 %v1034
        %1054 = vmatprep.subr.bf16.mxu0 0
        %1055 = vmatpush1.bf16.msra.mxu0 %v1035
        %1056 = vmatprep.subr.bf16.mxu0 0
        %1057 = vmatpush1.bf16.msra.mxu0 %v1036
        %1058 = vmatprep.subr.bf16.mxu0 0
        %1059 = vmatpush1.bf16.msra.mxu0 %v1037
        %1060 = vmatprep.subr.bf16.mxu0 0
        %1061 = vmatpush1.bf16.msra.mxu0 %v1038
        %1062 = vmatprep.subr.bf16.mxu0 0
        %1063 = vmatpush1.bf16.msra.mxu0 %v1039
        %1064 = vmatprep.subr.bf16.mxu0 0
        %1065 = vmatpush1.bf16.msra.mxu0 0
        %1066 = vmatprep.subr.bf16.mxu0 0
        %1067 = vmatpush1.bf16.msra.mxu0 0
        %1068 = vmatprep.subr.bf16.mxu0 0
        %1069 = vmatpush1.bf16.msra.mxu0 0
        %1070 = vmatprep.subr.bf16.mxu0 0
        %1071 = vmatpush1.bf16.msra.mxu0 0
        %1072 = vmatprep.subr.bf16.mxu0 0
        %1073 = vmatpush1.bf16.msra.mxu0 0
        %1074 = vmatprep.subr.bf16.mxu0 0
        %1075 = vmatpush1.bf16.msra.mxu0 0
        %1076 = vmatprep.subr.bf16.mxu0 0
        %1077 = vmatpush1.bf16.msra.mxu0 0
        %1078 = vmatprep.subr.bf16.mxu0 0
        %1079 = vmatpush1.bf16.msra.mxu0 0
        %1080 = vmatprep.mubr.bf16.mxu0 0
        %1081 = vmatmul.mubr.bf16.gmra.mrb[0].mxu0 %v979
        %v1082 = vpop.f32.mrb[0].mxu0
        %v1083 = vadd.f32 0.0, %v1082
        %v1084 = vpop.f32.mrb[0].mxu0
        %v1085 = vpop.f32.mrb[0].mxu0
        %v1086 = vadd.f32 0.0, %v1085
        %v1087 = vpop.f32.mrb[0].mxu0
        %1088 = vmatprep.mubr.bf16.mxu0 0
        %1089 = vmatmul.mubr.bf16.gmra.mrb[0].mxu0 %v980
        %v1090 = vpop.f32.mrb[0].mxu0
        %v1091 = vadd.f32 0.0, %v1090
        %v1092 = vpop.f32.mrb[0].mxu0
        %v1093 = vpop.f32.mrb[0].mxu0
        %v1094 = vadd.f32 0.0, %v1093
        %v1095 = vpop.f32.mrb[0].mxu0
        %1096 = vmatprep.mubr.bf16.mxu0 0
        %1097 = vmatmul.mubr.bf16.gmra.mrb[0].mxu0 %v981
        %v1098 = vpop.f32.mrb[0].mxu0
        %v1099 = vadd.f32 0.0, %v1098
        %v1100 = vpop.f32.mrb[0].mxu0
        %v1101 = vpop.f32.mrb[0].mxu0
        %v1102 = vadd.f32 0.0, %v1101
        %v1103 = vpop.f32.mrb[0].mxu0
        %1104 = vmatprep.mubr.bf16.mxu0 0
        %1105 = vmatmul.mubr.bf16.gmra.mrb[0].mxu0 %v982
        %v1106 = vpop.f32.mrb[0].mxu0
        %v1107 = vadd.f32 0.0, %v1106
        %v1108 = vpop.f32.mrb[0].mxu0
        %v1109 = vpop.f32.mrb[0].mxu0
        %v1110 = vadd.f32 0.0, %v1109
        %v1111 = vpop.f32.mrb[0].mxu0
        %1112 = vdwg.mxu0
        %v1113 = vld [vmem:[#allocation3] sm:$0xff]
        %v1114 = vld [vmem:[#allocation3 + $0x8] sm:$0xff]
        %v1115 = vld [vmem:[#allocation3 + $0x10] sm:$0xff]
        %v1116 = vld [vmem:[#allocation3 + $0x18] sm:$0xff]
        %v1117 = vld [vmem:[#allocation3 + $0x20] sm:$0xff]
        %v1118 = vld [vmem:[#allocation3 + $0x28] sm:$0xff]
        %v1119 = vld [vmem:[#allocation3 + $0x30] sm:$0xff]
        %v1120 = vld [vmem:[#allocation3 + $0x38] sm:$0xff]
        %v1121 = vadd.f32 %v1113, %v1083
        %v1122 = vadd.f32 %v1114, %v1086
        %v1123 = vadd.f32 %v1115, %v1091
        %v1124 = vadd.f32 %v1116, %v1094
        %v1125 = vadd.f32 %v1117, %v1099
        %v1126 = vadd.f32 %v1118, %v1102
        %v1127 = vadd.f32 %v1119, %v1107
        %v1128 = vadd.f32 %v1120, %v1110
        %1129 = vst [vmem:[#allocation3] sm:$0xff] %v1121
        %1130 = vst [vmem:[#allocation3 + $0x8] sm:$0xff] %v1122
        %1131 = vst [vmem:[#allocation3 + $0x10] sm:$0xff] %v1123
        %1132 = vst [vmem:[#allocation3 + $0x18] sm:$0xff] %v1124
        %1133 = vst [vmem:[#allocation3 + $0x20] sm:$0xff] %v1125
        %1134 = vst [vmem:[#allocation3 + $0x28] sm:$0xff] %v1126
        %1135 = vst [vmem:[#allocation3 + $0x30] sm:$0xff] %v1127
        %1136 = vst [vmem:[#allocation3 + $0x38] sm:$0xff] %v1128
        %s1137 = scalar_lea.vmem [#allocation9], 256
        %v1138 = vld [vmem:[%s1137] sm:$0xf]
        %v1139 = vld [vmem:[%s1137 + $0x4] sm:$0xf]
        %v1140 = vld [vmem:[%s1137 + $0x8] sm:$0xf]
        %v1141 = vld [vmem:[%s1137 + $0xc] sm:$0xf]
        %v1142 = vld [vmem:[%s1137 + $0x10] sm:$0xf]
        %v1143 = vld [vmem:[%s1137 + $0x14] sm:$0xf]
        %v1144 = vld [vmem:[%s1137 + $0x18] sm:$0xf]
        %v1145 = vld [vmem:[%s1137 + $0x1c] sm:$0xf]
        %v1146 = vld [vmem:[%s1137 + $0x20] sm:$0xf]
        %v1147 = vld [vmem:[%s1137 + $0x24] sm:$0xf]
        %v1148 = vld [vmem:[%s1137 + $0x28] sm:$0xf]
        %v1149 = vld [vmem:[%s1137 + $0x2c] sm:$0xf]
        %v1150 = vld [vmem:[%s1137 + $0x30] sm:$0xf]
        %v1151 = vld [vmem:[%s1137 + $0x34] sm:$0xf]
        %v1152 = vld [vmem:[%s1137 + $0x38] sm:$0xf]
        %v1153 = vld [vmem:[%s1137 + $0x3c] sm:$0xf]
        %v1170 = vunpack.c.l.b16 %v1138
        %v1171 = vunpack.c.l.b16 %v1139
        %v1172 = vunpack.c.l.b16 %v1140
        %v1173 = vunpack.c.l.b16 %v1141
        %v1174 = vunpack.c.l.b16 %v1142
        %v1175 = vunpack.c.l.b16 %v1143
        %v1176 = vunpack.c.l.b16 %v1144
        %v1177 = vunpack.c.l.b16 %v1145
        %v1178 = vunpack.c.l.b16 %v1146
        %v1179 = vunpack.c.l.b16 %v1147
        %v1180 = vunpack.c.l.b16 %v1148
        %v1181 = vunpack.c.l.b16 %v1149
        %v1182 = vunpack.c.l.b16 %v1150
        %v1183 = vunpack.c.l.b16 %v1151
        %v1184 = vunpack.c.l.b16 %v1152
        %v1185 = vunpack.c.l.b16 %v1153
        %v1186 = vpack.c.b16 %v1171, %v1170
        %v1187 = vpack.c.b16 %v1173, %v1172
        %v1188 = vpack.c.b16 %v1175, %v1174
        %v1189 = vpack.c.b16 %v1177, %v1176
        %v1190 = vpack.c.b16 %v1179, %v1178
        %v1191 = vpack.c.b16 %v1181, %v1180
        %v1192 = vpack.c.b16 %v1183, %v1182
        %v1193 = vpack.c.b16 %v1185, %v1184
        %1202 = vmatprep.subr.bf16.mxu0 0
        %1203 = vmatpush1.bf16.msra.mxu0 %v1186
        %1204 = vmatprep.subr.bf16.mxu0 0
        %1205 = vmatpush1.bf16.msra.mxu0 %v1187
        %1206 = vmatprep.subr.bf16.mxu0 0
        %1207 = vmatpush1.bf16.msra.mxu0 %v1188
        %1208 = vmatprep.subr.bf16.mxu0 0
        %1209 = vmatpush1.bf16.msra.mxu0 %v1189
        %1210 = vmatprep.subr.bf16.mxu0 0
        %1211 = vmatpush1.bf16.msra.mxu0 %v1190
        %1212 = vmatprep.subr.bf16.mxu0 0
        %1213 = vmatpush1.bf16.msra.mxu0 %v1191
        %1214 = vmatprep.subr.bf16.mxu0 0
        %1215 = vmatpush1.bf16.msra.mxu0 %v1192
        %1216 = vmatprep.subr.bf16.mxu0 0
        %1217 = vmatpush1.bf16.msra.mxu0 %v1193
        %1218 = vmatprep.subr.bf16.mxu0 0
        %1219 = vmatpush1.bf16.msra.mxu0 0
        %1220 = vmatprep.subr.bf16.mxu0 0
        %1221 = vmatpush1.bf16.msra.mxu0 0
        %1222 = vmatprep.subr.bf16.mxu0 0
        %1223 = vmatpush1.bf16.msra.mxu0 0
        %1224 = vmatprep.subr.bf16.mxu0 0
        %1225 = vmatpush1.bf16.msra.mxu0 0
        %1226 = vmatprep.subr.bf16.mxu0 0
        %1227 = vmatpush1.bf16.msra.mxu0 0
        %1228 = vmatprep.subr.bf16.mxu0 0
        %1229 = vmatpush1.bf16.msra.mxu0 0
        %1230 = vmatprep.subr.bf16.mxu0 0
        %1231 = vmatpush1.bf16.msra.mxu0 0
        %1232 = vmatprep.subr.bf16.mxu0 0
        %1233 = vmatpush1.bf16.msra.mxu0 0
        %1234 = vmatprep.mubr.bf16.mxu0 0
        %1235 = vmatmul.mubr.bf16.gmra.mrb[0].mxu0 %v979
        %v1236 = vpop.f32.mrb[0].mxu0
        %v1237 = vadd.f32 0.0, %v1236
        %v1238 = vpop.f32.mrb[0].mxu0
        %v1239 = vpop.f32.mrb[0].mxu0
        %v1240 = vadd.f32 0.0, %v1239
        %v1241 = vpop.f32.mrb[0].mxu0
        %1242 = vmatprep.mubr.bf16.mxu0 0
        %1243 = vmatmul.mubr.bf16.gmra.mrb[0].mxu0 %v980
        %v1244 = vpop.f32.mrb[0].mxu0
        %v1245 = vadd.f32 0.0, %v1244
        %v1246 = vpop.f32.mrb[0].mxu0
        %v1247 = vpop.f32.mrb[0].mxu0
        %v1248 = vadd.f32 0.0, %v1247
        %v1249 = vpop.f32.mrb[0].mxu0
        %1250 = vmatprep.mubr.bf16.mxu0 0
        %1251 = vmatmul.mubr.bf16.gmra.mrb[0].mxu0 %v981
        %v1252 = vpop.f32.mrb[0].mxu0
        %v1253 = vadd.f32 0.0, %v1252
        %v1254 = vpop.f32.mrb[0].mxu0
        %v1255 = vpop.f32.mrb[0].mxu0
        %v1256 = vadd.f32 0.0, %v1255
        %v1257 = vpop.f32.mrb[0].mxu0
        %1258 = vmatprep.mubr.bf16.mxu0 0
        %1259 = vmatmul.mubr.bf16.gmra.mrb[0].mxu0 %v982
        %v1260 = vpop.f32.mrb[0].mxu0
        %v1261 = vadd.f32 0.0, %v1260
        %v1262 = vpop.f32.mrb[0].mxu0
        %v1263 = vpop.f32.mrb[0].mxu0
        %v1264 = vadd.f32 0.0, %v1263
        %v1265 = vpop.f32.mrb[0].mxu0
        %1266 = vdwg.mxu0
        %v1267 = vld [vmem:[%s823] sm:$0xff]
        %v1268 = vld [vmem:[%s823 + $0x8] sm:$0xff]
        %v1269 = vld [vmem:[%s823 + $0x10] sm:$0xff]
        %v1270 = vld [vmem:[%s823 + $0x18] sm:$0xff]
        %v1271 = vld [vmem:[%s823 + $0x20] sm:$0xff]
        %v1272 = vld [vmem:[%s823 + $0x28] sm:$0xff]
        %v1273 = vld [vmem:[%s823 + $0x30] sm:$0xff]
        %v1274 = vld [vmem:[%s823 + $0x38] sm:$0xff]
        %v1275 = vadd.f32 %v1267, %v1237
        %v1276 = vadd.f32 %v1268, %v1240
        %v1277 = vadd.f32 %v1269, %v1245
        %v1278 = vadd.f32 %v1270, %v1248
        %v1279 = vadd.f32 %v1271, %v1253
        %v1280 = vadd.f32 %v1272, %v1256
        %v1281 = vadd.f32 %v1273, %v1261
        %v1282 = vadd.f32 %v1274, %v1264
        %1283 = vst [vmem:[%s823] sm:$0xff] %v1275
        %1284 = vst [vmem:[%s823 + $0x8] sm:$0xff] %v1276
        %1285 = vst [vmem:[%s823 + $0x10] sm:$0xff] %v1277
        %1286 = vst [vmem:[%s823 + $0x18] sm:$0xff] %v1278
        %1287 = vst [vmem:[%s823 + $0x20] sm:$0xff] %v1279
        %1288 = vst [vmem:[%s823 + $0x28] sm:$0xff] %v1280
        %1289 = vst [vmem:[%s823 + $0x30] sm:$0xff] %v1281
        %1290 = vst [vmem:[%s823 + $0x38] sm:$0xff] %v1282
        %s1291 = scalar_lea.vmem [#allocation9], 320
        %v1292 = vld [vmem:[%s1291] sm:$0xf]
        %v1293 = vld [vmem:[%s1291 + $0x4] sm:$0xf]
        %v1294 = vld [vmem:[%s1291 + $0x8] sm:$0xf]
        %v1295 = vld [vmem:[%s1291 + $0xc] sm:$0xf]
        %v1296 = vld [vmem:[%s1291 + $0x10] sm:$0xf]
        %v1297 = vld [vmem:[%s1291 + $0x14] sm:$0xf]
        %v1298 = vld [vmem:[%s1291 + $0x18] sm:$0xf]
        %v1299 = vld [vmem:[%s1291 + $0x1c] sm:$0xf]
        %v1300 = vld [vmem:[%s1291 + $0x20] sm:$0xf]
        %v1301 = vld [vmem:[%s1291 + $0x24] sm:$0xf]
        %v1302 = vld [vmem:[%s1291 + $0x28] sm:$0xf]
        %v1303 = vld [vmem:[%s1291 + $0x2c] sm:$0xf]
        %v1304 = vld [vmem:[%s1291 + $0x30] sm:$0xf]
        %v1305 = vld [vmem:[%s1291 + $0x34] sm:$0xf]
        %v1306 = vld [vmem:[%s1291 + $0x38] sm:$0xf]
        %v1307 = vld [vmem:[%s1291 + $0x3c] sm:$0xf]
        %v1324 = vunpack.c.l.b16 %v1292
        %v1325 = vunpack.c.l.b16 %v1293
        %v1326 = vunpack.c.l.b16 %v1294
        %v1327 = vunpack.c.l.b16 %v1295
        %v1328 = vunpack.c.l.b16 %v1296
        %v1329 = vunpack.c.l.b16 %v1297
        %v1330 = vunpack.c.l.b16 %v1298
        %v1331 = vunpack.c.l.b16 %v1299
        %v1332 = vunpack.c.l.b16 %v1300
        %v1333 = vunpack.c.l.b16 %v1301
        %v1334 = vunpack.c.l.b16 %v1302
        %v1335 = vunpack.c.l.b16 %v1303
        %v1336 = vunpack.c.l.b16 %v1304
        %v1337 = vunpack.c.l.b16 %v1305
        %v1338 = vunpack.c.l.b16 %v1306
        %v1339 = vunpack.c.l.b16 %v1307
        %v1340 = vpack.c.b16 %v1325, %v1324
        %v1341 = vpack.c.b16 %v1327, %v1326
        %v1342 = vpack.c.b16 %v1329, %v1328
        %v1343 = vpack.c.b16 %v1331, %v1330
        %v1344 = vpack.c.b16 %v1333, %v1332
        %v1345 = vpack.c.b16 %v1335, %v1334
        %v1346 = vpack.c.b16 %v1337, %v1336
        %v1347 = vpack.c.b16 %v1339, %v1338
        %1356 = vmatprep.subr.bf16.mxu0 0
        %1357 = vmatpush1.bf16.msra.mxu0 %v1340
        %1358 = vmatprep.subr.bf16.mxu0 0
        %1359 = vmatpush1.bf16.msra.mxu0 %v1341
        %1360 = vmatprep.subr.bf16.mxu0 0
        %1361 = vmatpush1.bf16.msra.mxu0 %v1342
        %1362 = vmatprep.subr.bf16.mxu0 0
        %1363 = vmatpush1.bf16.msra.mxu0 %v1343
        %1364 = vmatprep.subr.bf16.mxu0 0
        %1365 = vmatpush1.bf16.msra.mxu0 %v1344
        %1366 = vmatprep.subr.bf16.mxu0 0
        %1367 = vmatpush1.bf16.msra.mxu0 %v1345
        %1368 = vmatprep.subr.bf16.mxu0 0
        %1369 = vmatpush1.bf16.msra.mxu0 %v1346
        %1370 = vmatprep.subr.bf16.mxu0 0
        %1371 = vmatpush1.bf16.msra.mxu0 %v1347
        %1372 = vmatprep.subr.bf16.mxu0 0
        %1373 = vmatpush1.bf16.msra.mxu0 0
        %1374 = vmatprep.subr.bf16.mxu0 0
        %1375 = vmatpush1.bf16.msra.mxu0 0
        %1376 = vmatprep.subr.bf16.mxu0 0
        %1377 = vmatpush1.bf16.msra.mxu0 0
        %1378 = vmatprep.subr.bf16.mxu0 0
        %1379 = vmatpush1.bf16.msra.mxu0 0
        %1380 = vmatprep.subr.bf16.mxu0 0
        %1381 = vmatpush1.bf16.msra.mxu0 0
        %1382 = vmatprep.subr.bf16.mxu0 0
        %1383 = vmatpush1.bf16.msra.mxu0 0
        %1384 = vmatprep.subr.bf16.mxu0 0
        %1385 = vmatpush1.bf16.msra.mxu0 0
        %1386 = vmatprep.subr.bf16.mxu0 0
        %1387 = vmatpush1.bf16.msra.mxu0 0
        %1388 = vmatprep.mubr.bf16.mxu0 0
        %1389 = vmatmul.mubr.bf16.gmra.mrb[0].mxu0 %v979
        %v1390 = vpop.f32.mrb[0].mxu0
        %v1391 = vadd.f32 0.0, %v1390
        %v1392 = vpop.f32.mrb[0].mxu0
        %v1393 = vpop.f32.mrb[0].mxu0
        %v1394 = vadd.f32 0.0, %v1393
        %v1395 = vpop.f32.mrb[0].mxu0
        %1396 = vmatprep.mubr.bf16.mxu0 0
        %1397 = vmatmul.mubr.bf16.gmra.mrb[0].mxu0 %v980
        %v1398 = vpop.f32.mrb[0].mxu0
        %v1399 = vadd.f32 0.0, %v1398
        %v1400 = vpop.f32.mrb[0].mxu0
        %v1401 = vpop.f32.mrb[0].mxu0
        %v1402 = vadd.f32 0.0, %v1401
        %v1403 = vpop.f32.mrb[0].mxu0
        %1404 = vmatprep.mubr.bf16.mxu0 0
        %1405 = vmatmul.mubr.bf16.gmra.mrb[0].mxu0 %v981
        %v1406 = vpop.f32.mrb[0].mxu0
        %v1407 = vadd.f32 0.0, %v1406
        %v1408 = vpop.f32.mrb[0].mxu0
        %v1409 = vpop.f32.mrb[0].mxu0
        %v1410 = vadd.f32 0.0, %v1409
        %v1411 = vpop.f32.mrb[0].mxu0
        %1412 = vmatprep.mubr.bf16.mxu0 0
        %1413 = vmatmul.mubr.bf16.gmra.mrb[0].mxu0 %v982
        %v1414 = vpop.f32.mrb[0].mxu0
        %v1415 = vadd.f32 0.0, %v1414
        %v1416 = vpop.f32.mrb[0].mxu0
        %v1417 = vpop.f32.mrb[0].mxu0
        %v1418 = vadd.f32 0.0, %v1417
        %v1419 = vpop.f32.mrb[0].mxu0
        %1420 = vdwg.mxu0
        %v1421 = vld [vmem:[%s962] sm:$0xff]
        %v1422 = vld [vmem:[%s962 + $0x8] sm:$0xff]
        %v1423 = vld [vmem:[%s962 + $0x10] sm:$0xff]
        %v1424 = vld [vmem:[%s962 + $0x18] sm:$0xff]
        %v1425 = vld [vmem:[%s962 + $0x20] sm:$0xff]
        %v1426 = vld [vmem:[%s962 + $0x28] sm:$0xff]
        %v1427 = vld [vmem:[%s962 + $0x30] sm:$0xff]
        %v1428 = vld [vmem:[%s962 + $0x38] sm:$0xff]
        %v1429 = vadd.f32 %v1421, %v1391
        %v1430 = vadd.f32 %v1422, %v1394
        %v1431 = vadd.f32 %v1423, %v1399
        %v1432 = vadd.f32 %v1424, %v1402
        %v1433 = vadd.f32 %v1425, %v1407
        %v1434 = vadd.f32 %v1426, %v1410
        %v1435 = vadd.f32 %v1427, %v1415
        %v1436 = vadd.f32 %v1428, %v1418
        %1437 = vst [vmem:[%s962] sm:$0xff] %v1429
        %1438 = vst [vmem:[%s962 + $0x8] sm:$0xff] %v1430
        %1439 = vst [vmem:[%s962 + $0x10] sm:$0xff] %v1431
        %1440 = vst [vmem:[%s962 + $0x18] sm:$0xff] %v1432
        %1441 = vst [vmem:[%s962 + $0x20] sm:$0xff] %v1433
        %1442 = vst [vmem:[%s962 + $0x28] sm:$0xff] %v1434
        %1443 = vst [vmem:[%s962 + $0x30] sm:$0xff] %v1435
        %1444 = vst [vmem:[%s962 + $0x38] sm:$0xff] %v1436
        %s1445 = scalar_lea.vmem [#allocation2], 16
        %v1446 = vld [vmem:[%s1445] sm:$0xff]
        %v1447 = vld [vmem:[%s1445 + $0x8] sm:$0xff]
        %v1448 = vld [vmem:[%s1445 + $0x10] sm:$0xff]
        %v1449 = vld [vmem:[%s1445 + $0x18] sm:$0xff]
        %v1450 = vld [vmem:[%s1445 + $0x20] sm:$0xff]
        %v1451 = vld [vmem:[%s1445 + $0x28] sm:$0xff]
        %v1452 = vld [vmem:[%s1445 + $0x30] sm:$0xff]
        %v1453 = vld [vmem:[%s1445 + $0x38] sm:$0xff]
        %v1454 = vpack.c.bf16 %v1447, %v1446
        %v1455 = vpack.c.bf16 %v1449, %v1448
        %v1456 = vpack.c.bf16 %v1451, %v1450
        %v1457 = vpack.c.bf16 %v1453, %v1452
        %s1458 = scalar_lea.vmem [#allocation9], 384
        %v1459 = vld [vmem:[%s1458] sm:$0xf]
        %v1460 = vld [vmem:[%s1458 + $0x4] sm:$0xf]
        %v1461 = vld [vmem:[%s1458 + $0x8] sm:$0xf]
        %v1462 = vld [vmem:[%s1458 + $0xc] sm:$0xf]
        %v1463 = vld [vmem:[%s1458 + $0x10] sm:$0xf]
        %v1464 = vld [vmem:[%s1458 + $0x14] sm:$0xf]
        %v1465 = vld [vmem:[%s1458 + $0x18] sm:$0xf]
        %v1466 = vld [vmem:[%s1458 + $0x1c] sm:$0xf]
        %v1467 = vld [vmem:[%s1458 + $0x20] sm:$0xf]
        %v1468 = vld [vmem:[%s1458 + $0x24] sm:$0xf]
        %v1469 = vld [vmem:[%s1458 + $0x28] sm:$0xf]
        %v1470 = vld [vmem:[%s1458 + $0x2c] sm:$0xf]
        %v1471 = vld [vmem:[%s1458 + $0x30] sm:$0xf]
        %v1472 = vld [vmem:[%s1458 + $0x34] sm:$0xf]
        %v1473 = vld [vmem:[%s1458 + $0x38] sm:$0xf]
        %v1474 = vld [vmem:[%s1458 + $0x3c] sm:$0xf]
        %v1491 = vunpack.c.l.b16 %v1459
        %v1492 = vunpack.c.l.b16 %v1460
        %v1493 = vunpack.c.l.b16 %v1461
        %v1494 = vunpack.c.l.b16 %v1462
        %v1495 = vunpack.c.l.b16 %v1463
        %v1496 = vunpack.c.l.b16 %v1464
        %v1497 = vunpack.c.l.b16 %v1465
        %v1498 = vunpack.c.l.b16 %v1466
        %v1499 = vunpack.c.l.b16 %v1467
        %v1500 = vunpack.c.l.b16 %v1468
        %v1501 = vunpack.c.l.b16 %v1469
        %v1502 = vunpack.c.l.b16 %v1470
        %v1503 = vunpack.c.l.b16 %v1471
        %v1504 = vunpack.c.l.b16 %v1472
        %v1505 = vunpack.c.l.b16 %v1473
        %v1506 = vunpack.c.l.b16 %v1474
        %v1507 = vpack.c.b16 %v1492, %v1491
        %v1508 = vpack.c.b16 %v1494, %v1493
        %v1509 = vpack.c.b16 %v1496, %v1495
        %v1510 = vpack.c.b16 %v1498, %v1497
        %v1511 = vpack.c.b16 %v1500, %v1499
        %v1512 = vpack.c.b16 %v1502, %v1501
        %v1513 = vpack.c.b16 %v1504, %v1503
        %v1514 = vpack.c.b16 %v1506, %v1505
        %1523 = vmatprep.subr.bf16.mxu0 0
        %1524 = vmatpush1.bf16.msra.mxu0 %v1507
        %1525 = vmatprep.subr.bf16.mxu0 0
        %1526 = vmatpush1.bf16.msra.mxu0 %v1508
        %1527 = vmatprep.subr.bf16.mxu0 0
        %1528 = vmatpush1.bf16.msra.mxu0 %v1509
        %1529 = vmatprep.subr.bf16.mxu0 0
        %1530 = vmatpush1.bf16.msra.mxu0 %v1510
        %1531 = vmatprep.subr.bf16.mxu0 0
        %1532 = vmatpush1.bf16.msra.mxu0 %v1511
        %1533 = vmatprep.subr.bf16.mxu0 0
        %1534 = vmatpush1.bf16.msra.mxu0 %v1512
        %1535 = vmatprep.subr.bf16.mxu0 0
        %1536 = vmatpush1.bf16.msra.mxu0 %v1513
        %1537 = vmatprep.subr.bf16.mxu0 0
        %1538 = vmatpush1.bf16.msra.mxu0 %v1514
        %1539 = vmatprep.subr.bf16.mxu0 0
        %1540 = vmatpush1.bf16.msra.mxu0 0
        %1541 = vmatprep.subr.bf16.mxu0 0
        %1542 = vmatpush1.bf16.msra.mxu0 0
        %1543 = vmatprep.subr.bf16.mxu0 0
        %1544 = vmatpush1.bf16.msra.mxu0 0
        %1545 = vmatprep.subr.bf16.mxu0 0
        %1546 = vmatpush1.bf16.msra.mxu0 0
        %1547 = vmatprep.subr.bf16.mxu0 0
        %1548 = vmatpush1.bf16.msra.mxu0 0
        %1549 = vmatprep.subr.bf16.mxu0 0
        %1550 = vmatpush1.bf16.msra.mxu0 0
        %1551 = vmatprep.subr.bf16.mxu0 0
        %1552 = vmatpush1.bf16.msra.mxu0 0
        %1553 = vmatprep.subr.bf16.mxu0 0
        %1554 = vmatpush1.bf16.msra.mxu0 0
        %1555 = vmatprep.mubr.bf16.mxu0 0
        %1556 = vmatmul.mubr.bf16.gmra.mrb[0].mxu0 %v1454
        %v1557 = vpop.f32.mrb[0].mxu0
        %v1558 = vadd.f32 0.0, %v1557
        %v1559 = vpop.f32.mrb[0].mxu0
        %v1560 = vpop.f32.mrb[0].mxu0
        %v1561 = vadd.f32 0.0, %v1560
        %v1562 = vpop.f32.mrb[0].mxu0
        %1563 = vmatprep.mubr.bf16.mxu0 0
        %1564 = vmatmul.mubr.bf16.gmra.mrb[0].mxu0 %v1455
        %v1565 = vpop.f32.mrb[0].mxu0
        %v1566 = vadd.f32 0.0, %v1565
        %v1567 = vpop.f32.mrb[0].mxu0
        %v1568 = vpop.f32.mrb[0].mxu0
        %v1569 = vadd.f32 0.0, %v1568
        %v1570 = vpop.f32.mrb[0].mxu0
        %1571 = vmatprep.mubr.bf16.mxu0 0
        %1572 = vmatmul.mubr.bf16.gmra.mrb[0].mxu0 %v1456
        %v1573 = vpop.f32.mrb[0].mxu0
        %v1574 = vadd.f32 0.0, %v1573
        %v1575 = vpop.f32.mrb[0].mxu0
        %v1576 = vpop.f32.mrb[0].mxu0
        %v1577 = vadd.f32 0.0, %v1576
        %v1578 = vpop.f32.mrb[0].mxu0
        %1579 = vmatprep.mubr.bf16.mxu0 0
        %1580 = vmatmul.mubr.bf16.gmra.mrb[0].mxu0 %v1457
        %v1581 = vpop.f32.mrb[0].mxu0
        %v1582 = vadd.f32 0.0, %v1581
        %v1583 = vpop.f32.mrb[0].mxu0
        %v1584 = vpop.f32.mrb[0].mxu0
        %v1585 = vadd.f32 0.0, %v1584
        %v1586 = vpop.f32.mrb[0].mxu0
        %1587 = vdwg.mxu0
        %v1588 = vld [vmem:[#allocation3] sm:$0xff]
        %v1589 = vld [vmem:[#allocation3 + $0x8] sm:$0xff]
        %v1590 = vld [vmem:[#allocation3 + $0x10] sm:$0xff]
        %v1591 = vld [vmem:[#allocation3 + $0x18] sm:$0xff]
        %v1592 = vld [vmem:[#allocation3 + $0x20] sm:$0xff]
        %v1593 = vld [vmem:[#allocation3 + $0x28] sm:$0xff]
        %v1594 = vld [vmem:[#allocation3 + $0x30] sm:$0xff]
        %v1595 = vld [vmem:[#allocation3 + $0x38] sm:$0xff]
        %v1596 = vadd.f32 %v1588, %v1558
        %v1597 = vadd.f32 %v1589, %v1561
        %v1598 = vadd.f32 %v1590, %v1566
        %v1599 = vadd.f32 %v1591, %v1569
        %v1600 = vadd.f32 %v1592, %v1574
        %v1601 = vadd.f32 %v1593, %v1577
        %v1602 = vadd.f32 %v1594, %v1582
        %v1603 = vadd.f32 %v1595, %v1585
        %1604 = vst [vmem:[#allocation3] sm:$0xff] %v1596
        %1605 = vst [vmem:[#allocation3 + $0x8] sm:$0xff] %v1597
        %1606 = vst [vmem:[#allocation3 + $0x10] sm:$0xff] %v1598
        %1607 = vst [vmem:[#allocation3 + $0x18] sm:$0xff] %v1599
        %1608 = vst [vmem:[#allocation3 + $0x20] sm:$0xff] %v1600
        %1609 = vst [vmem:[#allocation3 + $0x28] sm:$0xff] %v1601
        %1610 = vst [vmem:[#allocation3 + $0x30] sm:$0xff] %v1602
        %1611 = vst [vmem:[#allocation3 + $0x38] sm:$0xff] %v1603
        %s1612 = scalar_lea.vmem [#allocation9], 448
        %v1613 = vld [vmem:[%s1612] sm:$0xf]
        %v1614 = vld [vmem:[%s1612 + $0x4] sm:$0xf]
        %v1615 = vld [vmem:[%s1612 + $0x8] sm:$0xf]
        %v1616 = vld [vmem:[%s1612 + $0xc] sm:$0xf]
        %v1617 = vld [vmem:[%s1612 + $0x10] sm:$0xf]
        %v1618 = vld [vmem:[%s1612 + $0x14] sm:$0xf]
        %v1619 = vld [vmem:[%s1612 + $0x18] sm:$0xf]
        %v1620 = vld [vmem:[%s1612 + $0x1c] sm:$0xf]
        %v1621 = vld [vmem:[%s1612 + $0x20] sm:$0xf]
        %v1622 = vld [vmem:[%s1612 + $0x24] sm:$0xf]
        %v1623 = vld [vmem:[%s1612 + $0x28] sm:$0xf]
        %v1624 = vld [vmem:[%s1612 + $0x2c] sm:$0xf]
        %v1625 = vld [vmem:[%s1612 + $0x30] sm:$0xf]
        %v1626 = vld [vmem:[%s1612 + $0x34] sm:$0xf]
        %v1627 = vld [vmem:[%s1612 + $0x38] sm:$0xf]
        %v1628 = vld [vmem:[%s1612 + $0x3c] sm:$0xf]
        %v1645 = vunpack.c.l.b16 %v1613
        %v1646 = vunpack.c.l.b16 %v1614
        %v1647 = vunpack.c.l.b16 %v1615
        %v1648 = vunpack.c.l.b16 %v1616
        %v1649 = vunpack.c.l.b16 %v1617
        %v1650 = vunpack.c.l.b16 %v1618
        %v1651 = vunpack.c.l.b16 %v1619
        %v1652 = vunpack.c.l.b16 %v1620
        %v1653 = vunpack.c.l.b16 %v1621
        %v1654 = vunpack.c.l.b16 %v1622
        %v1655 = vunpack.c.l.b16 %v1623
        %v1656 = vunpack.c.l.b16 %v1624
        %v1657 = vunpack.c.l.b16 %v1625
        %v1658 = vunpack.c.l.b16 %v1626
        %v1659 = vunpack.c.l.b16 %v1627
        %v1660 = vunpack.c.l.b16 %v1628
        %v1661 = vpack.c.b16 %v1646, %v1645
        %v1662 = vpack.c.b16 %v1648, %v1647
        %v1663 = vpack.c.b16 %v1650, %v1649
        %v1664 = vpack.c.b16 %v1652, %v1651
        %v1665 = vpack.c.b16 %v1654, %v1653
        %v1666 = vpack.c.b16 %v1656, %v1655
        %v1667 = vpack.c.b16 %v1658, %v1657
        %v1668 = vpack.c.b16 %v1660, %v1659
        %1677 = vmatprep.subr.bf16.mxu0 0
        %1678 = vmatpush1.bf16.msra.mxu0 %v1661
        %1679 = vmatprep.subr.bf16.mxu0 0
        %1680 = vmatpush1.bf16.msra.mxu0 %v1662
        %1681 = vmatprep.subr.bf16.mxu0 0
        %1682 = vmatpush1.bf16.msra.mxu0 %v1663
        %1683 = vmatprep.subr.bf16.mxu0 0
        %1684 = vmatpush1.bf16.msra.mxu0 %v1664
        %1685 = vmatprep.subr.bf16.mxu0 0
        %1686 = vmatpush1.bf16.msra.mxu0 %v1665
        %1687 = vmatprep.subr.bf16.mxu0 0
        %1688 = vmatpush1.bf16.msra.mxu0 %v1666
        %1689 = vmatprep.subr.bf16.mxu0 0
        %1690 = vmatpush1.bf16.msra.mxu0 %v1667
        %1691 = vmatprep.subr.bf16.mxu0 0
        %1692 = vmatpush1.bf16.msra.mxu0 %v1668
        %1693 = vmatprep.subr.bf16.mxu0 0
        %1694 = vmatpush1.bf16.msra.mxu0 0
        %1695 = vmatprep.subr.bf16.mxu0 0
        %1696 = vmatpush1.bf16.msra.mxu0 0
        %1697 = vmatprep.subr.bf16.mxu0 0
        %1698 = vmatpush1.bf16.msra.mxu0 0
        %1699 = vmatprep.subr.bf16.mxu0 0
        %1700 = vmatpush1.bf16.msra.mxu0 0
        %1701 = vmatprep.subr.bf16.mxu0 0
        %1702 = vmatpush1.bf16.msra.mxu0 0
        %1703 = vmatprep.subr.bf16.mxu0 0
        %1704 = vmatpush1.bf16.msra.mxu0 0
        %1705 = vmatprep.subr.bf16.mxu0 0
        %1706 = vmatpush1.bf16.msra.mxu0 0
        %1707 = vmatprep.subr.bf16.mxu0 0
        %1708 = vmatpush1.bf16.msra.mxu0 0
        %1709 = vmatprep.mubr.bf16.mxu0 0
        %1710 = vmatmul.mubr.bf16.gmra.mrb[0].mxu0 %v1454
        %v1711 = vpop.f32.mrb[0].mxu0
        %v1712 = vadd.f32 0.0, %v1711
        %v1713 = vpop.f32.mrb[0].mxu0
        %v1714 = vpop.f32.mrb[0].mxu0
        %v1715 = vadd.f32 0.0, %v1714
        %v1716 = vpop.f32.mrb[0].mxu0
        %1717 = vmatprep.mubr.bf16.mxu0 0
        %1718 = vmatmul.mubr.bf16.gmra.mrb[0].mxu0 %v1455
        %v1719 = vpop.f32.mrb[0].mxu0
        %v1720 = vadd.f32 0.0, %v1719
        %v1721 = vpop.f32.mrb[0].mxu0
        %v1722 = vpop.f32.mrb[0].mxu0
        %v1723 = vadd.f32 0.0, %v1722
        %v1724 = vpop.f32.mrb[0].mxu0
        %1725 = vmatprep.mubr.bf16.mxu0 0
        %1726 = vmatmul.mubr.bf16.gmra.mrb[0].mxu0 %v1456
        %v1727 = vpop.f32.mrb[0].mxu0
        %v1728 = vadd.f32 0.0, %v1727
        %v1729 = vpop.f32.mrb[0].mxu0
        %v1730 = vpop.f32.mrb[0].mxu0
        %v1731 = vadd.f32 0.0, %v1730
        %v1732 = vpop.f32.mrb[0].mxu0
        %1733 = vmatprep.mubr.bf16.mxu0 0
        %1734 = vmatmul.mubr.bf16.gmra.mrb[0].mxu0 %v1457
        %v1735 = vpop.f32.mrb[0].mxu0
        %v1736 = vadd.f32 0.0, %v1735
        %v1737 = vpop.f32.mrb[0].mxu0
        %v1738 = vpop.f32.mrb[0].mxu0
        %v1739 = vadd.f32 0.0, %v1738
        %v1740 = vpop.f32.mrb[0].mxu0
        %1741 = vdwg.mxu0
        %v1742 = vld [vmem:[%s823] sm:$0xff]
        %v1743 = vld [vmem:[%s823 + $0x8] sm:$0xff]
        %v1744 = vld [vmem:[%s823 + $0x10] sm:$0xff]
        %v1745 = vld [vmem:[%s823 + $0x18] sm:$0xff]
        %v1746 = vld [vmem:[%s823 + $0x20] sm:$0xff]
        %v1747 = vld [vmem:[%s823 + $0x28] sm:$0xff]
        %v1748 = vld [vmem:[%s823 + $0x30] sm:$0xff]
        %v1749 = vld [vmem:[%s823 + $0x38] sm:$0xff]
        %v1750 = vadd.f32 %v1742, %v1712
        %v1751 = vadd.f32 %v1743, %v1715
        %v1752 = vadd.f32 %v1744, %v1720
        %v1753 = vadd.f32 %v1745, %v1723
        %v1754 = vadd.f32 %v1746, %v1728
        %v1755 = vadd.f32 %v1747, %v1731
        %v1756 = vadd.f32 %v1748, %v1736
        %v1757 = vadd.f32 %v1749, %v1739
        %1758 = vst [vmem:[%s823] sm:$0xff] %v1750
        %1759 = vst [vmem:[%s823 + $0x8] sm:$0xff] %v1751
        %1760 = vst [vmem:[%s823 + $0x10] sm:$0xff] %v1752
        %1761 = vst [vmem:[%s823 + $0x18] sm:$0xff] %v1753
        %1762 = vst [vmem:[%s823 + $0x20] sm:$0xff] %v1754
        %1763 = vst [vmem:[%s823 + $0x28] sm:$0xff] %v1755
        %1764 = vst [vmem:[%s823 + $0x30] sm:$0xff] %v1756
        %1765 = vst [vmem:[%s823 + $0x38] sm:$0xff] %v1757
        %s1766 = scalar_lea.vmem [#allocation9], 512
        %v1767 = vld [vmem:[%s1766] sm:$0xf]
        %v1768 = vld [vmem:[%s1766 + $0x4] sm:$0xf]
        %v1769 = vld [vmem:[%s1766 + $0x8] sm:$0xf]
        %v1770 = vld [vmem:[%s1766 + $0xc] sm:$0xf]
        %v1771 = vld [vmem:[%s1766 + $0x10] sm:$0xf]
        %v1772 = vld [vmem:[%s1766 + $0x14] sm:$0xf]
        %v1773 = vld [vmem:[%s1766 + $0x18] sm:$0xf]
        %v1774 = vld [vmem:[%s1766 + $0x1c] sm:$0xf]
        %v1775 = vld [vmem:[%s1766 + $0x20] sm:$0xf]
        %v1776 = vld [vmem:[%s1766 + $0x24] sm:$0xf]
        %v1777 = vld [vmem:[%s1766 + $0x28] sm:$0xf]
        %v1778 = vld [vmem:[%s1766 + $0x2c] sm:$0xf]
        %v1779 = vld [vmem:[%s1766 + $0x30] sm:$0xf]
        %v1780 = vld [vmem:[%s1766 + $0x34] sm:$0xf]
        %v1781 = vld [vmem:[%s1766 + $0x38] sm:$0xf]
        %v1782 = vld [vmem:[%s1766 + $0x3c] sm:$0xf]
        %v1799 = vunpack.c.l.b16 %v1767
        %v1800 = vunpack.c.l.b16 %v1768
        %v1801 = vunpack.c.l.b16 %v1769
        %v1802 = vunpack.c.l.b16 %v1770
        %v1803 = vunpack.c.l.b16 %v1771
        %v1804 = vunpack.c.l.b16 %v1772
        %v1805 = vunpack.c.l.b16 %v1773
        %v1806 = vunpack.c.l.b16 %v1774
        %v1807 = vunpack.c.l.b16 %v1775
        %v1808 = vunpack.c.l.b16 %v1776
        %v1809 = vunpack.c.l.b16 %v1777
        %v1810 = vunpack.c.l.b16 %v1778
        %v1811 = vunpack.c.l.b16 %v1779
        %v1812 = vunpack.c.l.b16 %v1780
        %v1813 = vunpack.c.l.b16 %v1781
        %v1814 = vunpack.c.l.b16 %v1782
        %v1815 = vpack.c.b16 %v1800, %v1799
        %v1816 = vpack.c.b16 %v1802, %v1801
        %v1817 = vpack.c.b16 %v1804, %v1803
        %v1818 = vpack.c.b16 %v1806, %v1805
        %v1819 = vpack.c.b16 %v1808, %v1807
        %v1820 = vpack.c.b16 %v1810, %v1809
        %v1821 = vpack.c.b16 %v1812, %v1811
        %v1822 = vpack.c.b16 %v1814, %v1813
        %1831 = vmatprep.subr.bf16.mxu0 0
        %1832 = vmatpush1.bf16.msra.mxu0 %v1815
        %1833 = vmatprep.subr.bf16.mxu0 0
        %1834 = vmatpush1.bf16.msra.mxu0 %v1816
        %1835 = vmatprep.subr.bf16.mxu0 0
        %1836 = vmatpush1.bf16.msra.mxu0 %v1817
        %1837 = vmatprep.subr.bf16.mxu0 0
        %1838 = vmatpush1.bf16.msra.mxu0 %v1818
        %1839 = vmatprep.subr.bf16.mxu0 0
        %1840 = vmatpush1.bf16.msra.mxu0 %v1819
        %1841 = vmatprep.subr.bf16.mxu0 0
        %1842 = vmatpush1.bf16.msra.mxu0 %v1820
        %1843 = vmatprep.subr.bf16.mxu0 0
        %1844 = vmatpush1.bf16.msra.mxu0 %v1821
        %1845 = vmatprep.subr.bf16.mxu0 0
        %1846 = vmatpush1.bf16.msra.mxu0 %v1822
        %1847 = vmatprep.subr.bf16.mxu0 0
        %1848 = vmatpush1.bf16.msra.mxu0 0
        %1849 = vmatprep.subr.bf16.mxu0 0
        %1850 = vmatpush1.bf16.msra.mxu0 0
        %1851 = vmatprep.subr.bf16.mxu0 0
        %1852 = vmatpush1.bf16.msra.mxu0 0
        %1853 = vmatprep.subr.bf16.mxu0 0
        %1854 = vmatpush1.bf16.msra.mxu0 0
        %1855 = vmatprep.subr.bf16.mxu0 0
        %1856 = vmatpush1.bf16.msra.mxu0 0
        %1857 = vmatprep.subr.bf16.mxu0 0
        %1858 = vmatpush1.bf16.msra.mxu0 0
        %1859 = vmatprep.subr.bf16.mxu0 0
        %1860 = vmatpush1.bf16.msra.mxu0 0
        %1861 = vmatprep.subr.bf16.mxu0 0
        %1862 = vmatpush1.bf16.msra.mxu0 0
        %1863 = vmatprep.mubr.bf16.mxu0 0
        %1864 = vmatmul.mubr.bf16.gmra.mrb[0].mxu0 %v1454
        %v1865 = vpop.f32.mrb[0].mxu0
        %v1866 = vadd.f32 0.0, %v1865
        %v1867 = vpop.f32.mrb[0].mxu0
        %v1868 = vpop.f32.mrb[0].mxu0
        %v1869 = vadd.f32 0.0, %v1868
        %v1870 = vpop.f32.mrb[0].mxu0
        %1871 = vmatprep.mubr.bf16.mxu0 0
        %1872 = vmatmul.mubr.bf16.gmra.mrb[0].mxu0 %v1455
        %v1873 = vpop.f32.mrb[0].mxu0
        %v1874 = vadd.f32 0.0, %v1873
        %v1875 = vpop.f32.mrb[0].mxu0
        %v1876 = vpop.f32.mrb[0].mxu0
        %v1877 = vadd.f32 0.0, %v1876
        %v1878 = vpop.f32.mrb[0].mxu0
        %1879 = vmatprep.mubr.bf16.mxu0 0
        %1880 = vmatmul.mubr.bf16.gmra.mrb[0].mxu0 %v1456
        %v1881 = vpop.f32.mrb[0].mxu0
        %v1882 = vadd.f32 0.0, %v1881
        %v1883 = vpop.f32.mrb[0].mxu0
        %v1884 = vpop.f32.mrb[0].mxu0
        %v1885 = vadd.f32 0.0, %v1884
        %v1886 = vpop.f32.mrb[0].mxu0
        %1887 = vmatprep.mubr.bf16.mxu0 0
        %1888 = vmatmul.mubr.bf16.gmra.mrb[0].mxu0 %v1457
        %v1889 = vpop.f32.mrb[0].mxu0
        %v1890 = vadd.f32 0.0, %v1889
        %v1891 = vpop.f32.mrb[0].mxu0
        %v1892 = vpop.f32.mrb[0].mxu0
        %v1893 = vadd.f32 0.0, %v1892
        %v1894 = vpop.f32.mrb[0].mxu0
        %1895 = vdwg.mxu0
        %v1896 = vld [vmem:[%s962] sm:$0xff]
        %v1897 = vld [vmem:[%s962 + $0x8] sm:$0xff]
        %v1898 = vld [vmem:[%s962 + $0x10] sm:$0xff]
        %v1899 = vld [vmem:[%s962 + $0x18] sm:$0xff]
        %v1900 = vld [vmem:[%s962 + $0x20] sm:$0xff]
        %v1901 = vld [vmem:[%s962 + $0x28] sm:$0xff]
        %v1902 = vld [vmem:[%s962 + $0x30] sm:$0xff]
        %v1903 = vld [vmem:[%s962 + $0x38] sm:$0xff]
        %v1904 = vadd.f32 %v1896, %v1866
        %v1905 = vadd.f32 %v1897, %v1869
        %v1906 = vadd.f32 %v1898, %v1874
        %v1907 = vadd.f32 %v1899, %v1877
        %v1908 = vadd.f32 %v1900, %v1882
        %v1909 = vadd.f32 %v1901, %v1885
        %v1910 = vadd.f32 %v1902, %v1890
        %v1911 = vadd.f32 %v1903, %v1893
        %1912 = vst [vmem:[%s962] sm:$0xff] %v1904
        %1913 = vst [vmem:[%s962 + $0x8] sm:$0xff] %v1905
        %1914 = vst [vmem:[%s962 + $0x10] sm:$0xff] %v1906
        %1915 = vst [vmem:[%s962 + $0x18] sm:$0xff] %v1907
        %1916 = vst [vmem:[%s962 + $0x20] sm:$0xff] %v1908
        %1917 = vst [vmem:[%s962 + $0x28] sm:$0xff] %v1909
        %1918 = vst [vmem:[%s962 + $0x30] sm:$0xff] %v1910
        %1919 = vst [vmem:[%s962 + $0x38] sm:$0xff] %v1911
        %v1920 = vlaneseq
        %v1921 = vshrl.u32 %v1920, 7
        %v1922 = vadd.s32 %v1921, 8
        %v1923 = vadd.s32 %v1921, 16
        %v1924 = vadd.s32 %v1921, 24
        %v1925 = vadd.s32 %v1921, 32
        %v1926 = vadd.s32 %v1921, 40
        %v1927 = vadd.s32 %v1921, 48
        %v1928 = vadd.s32 %v1921, 56
        %vm1929 = vcmp.lt.s32.totalorder %v1921, 0
        %v1930 = vsub.s32 0, %v1921
        %v1931 = vsel %vm1929, %v1930, %v1921
        %v1932 = vshrl.u32 %v1931, 3
        %v1933 = vand.u32 %v1931, 7
        %v1934 = vsub.s32 0, %v1933
        %v1935 = vsel %vm1929, %v1934, %v1933
        %vm1936 = vcmp.lt.s32.totalorder %v1922, 0
        %v1937 = vsub.s32 0, %v1922
        %v1938 = vsel %vm1936, %v1937, %v1922
        %v1939 = vshrl.u32 %v1938, 3
        %v1940 = vand.u32 %v1938, 7
        %v1941 = vsub.s32 0, %v1940
        %v1942 = vsel %vm1936, %v1941, %v1940
        %vm1943 = vcmp.lt.s32.totalorder %v1923, 0
        %v1944 = vsub.s32 0, %v1923
        %v1945 = vsel %vm1943, %v1944, %v1923
        %v1946 = vshrl.u32 %v1945, 3
        %v1947 = vand.u32 %v1945, 7
        %v1948 = vsub.s32 0, %v1947
        %v1949 = vsel %vm1943, %v1948, %v1947
        %vm1950 = vcmp.lt.s32.totalorder %v1924, 0
        %v1951 = vsub.s32 0, %v1924
        %v1952 = vsel %vm1950, %v1951, %v1924
        %v1953 = vshrl.u32 %v1952, 3
        %v1954 = vand.u32 %v1952, 7
        %v1955 = vsub.s32 0, %v1954
        %v1956 = vsel %vm1950, %v1955, %v1954
        %vm1957 = vcmp.lt.s32.totalorder %v1925, 0
        %v1958 = vsub.s32 0, %v1925
        %v1959 = vsel %vm1957, %v1958, %v1925
        %v1960 = vshrl.u32 %v1959, 3
        %v1961 = vand.u32 %v1959, 7
        %v1962 = vsub.s32 0, %v1961
        %v1963 = vsel %vm1957, %v1962, %v1961
        %vm1964 = vcmp.lt.s32.totalorder %v1926, 0
        %v1965 = vsub.s32 0, %v1926
        %v1966 = vsel %vm1964, %v1965, %v1926
        %v1967 = vshrl.u32 %v1966, 3
        %v1968 = vand.u32 %v1966, 7
        %v1969 = vsub.s32 0, %v1968
        %v1970 = vsel %vm1964, %v1969, %v1968
        %vm1971 = vcmp.lt.s32.totalorder %v1927, 0
        %v1972 = vsub.s32 0, %v1927
        %v1973 = vsel %vm1971, %v1972, %v1927
        %v1974 = vshrl.u32 %v1973, 3
        %v1975 = vand.u32 %v1973, 7
        %v1976 = vsub.s32 0, %v1975
        %v1977 = vsel %vm1971, %v1976, %v1975
        %vm1978 = vcmp.lt.s32.totalorder %v1928, 0
        %v1979 = vsub.s32 0, %v1928
        %v1980 = vsel %vm1978, %v1979, %v1928
        %v1981 = vshrl.u32 %v1980, 3
        %v1982 = vand.u32 %v1980, 7
        %v1983 = vsub.s32 0, %v1982
        %v1984 = vsel %vm1978, %v1983, %v1982
        %vm1985 = vcmp.ne.s32.totalorder %v1935, 0
        %vm1986 = vcmp.ne.s32.totalorder %v1942, 0
        %vm1987 = vcmp.ne.s32.totalorder %v1949, 0
        %vm1988 = vcmp.ne.s32.totalorder %v1956, 0
        %vm1989 = vcmp.ne.s32.totalorder %v1963, 0
        %vm1990 = vcmp.ne.s32.totalorder %v1970, 0
        %vm1991 = vcmp.ne.s32.totalorder %v1977, 0
        %vm1992 = vcmp.ne.s32.totalorder %v1984, 0
        %vm1993 = vcmp.lt.s32.totalorder %v1935, 0
        %vm1994 = vcmp.lt.s32.totalorder %v1942, 0
        %vm1995 = vcmp.lt.s32.totalorder %v1949, 0
        %vm1996 = vcmp.lt.s32.totalorder %v1956, 0
        %vm1997 = vcmp.lt.s32.totalorder %v1963, 0
        %vm1998 = vcmp.lt.s32.totalorder %v1970, 0
        %vm1999 = vcmp.lt.s32.totalorder %v1977, 0
        %vm2000 = vcmp.lt.s32.totalorder %v1984, 0
        %vm2001 = vmand %vm1993, %vm1985
        %vm2002 = vmand %vm1994, %vm1986
        %vm2003 = vmand %vm1995, %vm1987
        %vm2004 = vmand %vm1996, %vm1988
        %vm2005 = vmand %vm1997, %vm1989
        %vm2006 = vmand %vm1998, %vm1990
        %vm2007 = vmand %vm1999, %vm1991
        %vm2008 = vmand %vm2000, %vm1992
        %v2009 = vadd.s32 %v1935, 8
        %v2010 = vadd.s32 %v1942, 8
        %v2011 = vadd.s32 %v1949, 8
        %v2012 = vadd.s32 %v1956, 8
        %v2013 = vadd.s32 %v1963, 8
        %v2014 = vadd.s32 %v1970, 8
        %v2015 = vadd.s32 %v1977, 8
        %v2016 = vadd.s32 %v1984, 8
        %v2017 = vsel %vm2001, %v2009, %v1935
        %v2018 = vsel %vm2002, %v2010, %v1942
        %v2019 = vsel %vm2003, %v2011, %v1949
        %v2020 = vsel %vm2004, %v2012, %v1956
        %v2021 = vsel %vm2005, %v2013, %v1963
        %v2022 = vsel %vm2006, %v2014, %v1970
        %v2023 = vsel %vm2007, %v2015, %v1977
        %v2024 = vsel %vm2008, %v2016, %v1984
        %vm2025 = vcmp.ne.s32.totalorder %v2017, 0
        %vm2026 = vcmp.ne.s32.totalorder %v2018, 0
        %vm2027 = vcmp.ne.s32.totalorder %v2019, 0
        %vm2028 = vcmp.ne.s32.totalorder %v2020, 0
        %vm2029 = vcmp.ne.s32.totalorder %v2021, 0
        %vm2030 = vcmp.ne.s32.totalorder %v2022, 0
        %vm2031 = vcmp.ne.s32.totalorder %v2023, 0
        %vm2032 = vcmp.ne.s32.totalorder %v2024, 0
        %v2033 = vsel %vm2025, 1, 0
        %v2034 = vsel %vm2026, 1, 0
        %v2035 = vsel %vm2027, 1, 0
        %v2036 = vsel %vm2028, 1, 0
        %v2037 = vsel %vm2029, 1, 0
        %v2038 = vsel %vm2030, 1, 0
        %v2039 = vsel %vm2031, 1, 0
        %v2040 = vsel %vm2032, 1, 0
        %v2041 = vcvt.s32.f32 %v2033
        %v2042 = vcvt.s32.f32 %v2034
        %v2043 = vcvt.s32.f32 %v2035
        %v2044 = vcvt.s32.f32 %v2036
        %v2045 = vcvt.s32.f32 %v2037
        %v2046 = vcvt.s32.f32 %v2038
        %v2047 = vcvt.s32.f32 %v2039
        %v2048 = vcvt.s32.f32 %v2040
        %vm2049 = vcmp.ne.s32.totalorder %v2017, 7
        %vm2050 = vcmp.ne.s32.totalorder %v2018, 7
        %vm2051 = vcmp.ne.s32.totalorder %v2019, 7
        %vm2052 = vcmp.ne.s32.totalorder %v2020, 7
        %vm2053 = vcmp.ne.s32.totalorder %v2021, 7
        %vm2054 = vcmp.ne.s32.totalorder %v2022, 7
        %vm2055 = vcmp.ne.s32.totalorder %v2023, 7
        %vm2056 = vcmp.ne.s32.totalorder %v2024, 7
        %v2057 = vsel %vm2049, 1, 0
        %v2058 = vsel %vm2050, 1, 0
        %v2059 = vsel %vm2051, 1, 0
        %v2060 = vsel %vm2052, 1, 0
        %v2061 = vsel %vm2053, 1, 0
        %v2062 = vsel %vm2054, 1, 0
        %v2063 = vsel %vm2055, 1, 0
        %v2064 = vsel %vm2056, 1, 0
        %v2065 = vcvt.s32.f32 %v2057
        %v2066 = vcvt.s32.f32 %v2058
        %v2067 = vcvt.s32.f32 %v2059
        %v2068 = vcvt.s32.f32 %v2060
        %v2069 = vcvt.s32.f32 %v2061
        %v2070 = vcvt.s32.f32 %v2062
        %v2071 = vcvt.s32.f32 %v2063
        %v2072 = vcvt.s32.f32 %v2064
        %v2073 = vld [vmem:[%s823] sm:$0xff]
        %v2074 = vld [vmem:[%s823 + $0x8] sm:$0xff]
        %v2075 = vld [vmem:[%s823 + $0x10] sm:$0xff]
        %v2076 = vld [vmem:[%s823 + $0x18] sm:$0xff]
        %v2077 = vld [vmem:[%s823 + $0x20] sm:$0xff]
        %v2078 = vld [vmem:[%s823 + $0x28] sm:$0xff]
        %v2079 = vld [vmem:[%s823 + $0x30] sm:$0xff]
        %v2080 = vld [vmem:[%s823 + $0x38] sm:$0xff]
        %v2081 = vld [vmem:[#allocation3] sm:$0xff]
        %v2082 = vld [vmem:[#allocation3 + $0x8] sm:$0xff]
        %v2083 = vld [vmem:[#allocation3 + $0x10] sm:$0xff]
        %v2084 = vld [vmem:[#allocation3 + $0x18] sm:$0xff]
        %v2085 = vld [vmem:[#allocation3 + $0x20] sm:$0xff]
        %v2086 = vld [vmem:[#allocation3 + $0x28] sm:$0xff]
        %v2087 = vld [vmem:[#allocation3 + $0x30] sm:$0xff]
        %v2088 = vld [vmem:[#allocation3 + $0x38] sm:$0xff]
        %v2089 = vrot.slane %v2081, 7
        %v2090 = vrot.slane %v2082, 7
        %v2091 = vrot.slane %v2083, 7
        %v2092 = vrot.slane %v2084, 7
        %v2093 = vrot.slane %v2085, 7
        %v2094 = vrot.slane %v2086, 7
        %v2095 = vrot.slane %v2087, 7
        %v2096 = vrot.slane %v2088, 7
        %vm2097 = vcmp.lt.s32.totalorder %v1921, 1
        %v2098 = vsel %vm2097, %v2095, %v2096
        %v2099 = vsel %vm2097, %v2094, %v2095
        %v2100 = vsel %vm2097, %v2093, %v2094
        %v2101 = vsel %vm2097, %v2092, %v2093
        %v2102 = vsel %vm2097, %v2091, %v2092
        %v2103 = vsel %vm2097, %v2090, %v2091
        %v2104 = vsel %vm2097, %v2089, %v2090
        %v2105 = vsel %vm2097, %v2096, %v2089
        %v2106 = vmul.f32 %v2041, %v2105
        %v2107 = vmul.f32 %v2042, %v2104
        %v2108 = vmul.f32 %v2043, %v2103
        %v2109 = vmul.f32 %v2044, %v2102
        %v2110 = vmul.f32 %v2045, %v2101
        %v2111 = vmul.f32 %v2046, %v2100
        %v2112 = vmul.f32 %v2047, %v2099
        %v2113 = vmul.f32 %v2048, %v2098
        %v2114 = vadd.f32 %v2073, %v2106
        %v2115 = vadd.f32 %v2074, %v2107
        %v2116 = vadd.f32 %v2075, %v2108
        %v2117 = vadd.f32 %v2076, %v2109
        %v2118 = vadd.f32 %v2077, %v2110
        %v2119 = vadd.f32 %v2078, %v2111
        %v2120 = vadd.f32 %v2079, %v2112
        %v2121 = vadd.f32 %v2080, %v2113
        %v2122 = vld [vmem:[%s962] sm:$0xff]
        %v2123 = vld [vmem:[%s962 + $0x8] sm:$0xff]
        %v2124 = vld [vmem:[%s962 + $0x10] sm:$0xff]
        %v2125 = vld [vmem:[%s962 + $0x18] sm:$0xff]
        %v2126 = vld [vmem:[%s962 + $0x20] sm:$0xff]
        %v2127 = vld [vmem:[%s962 + $0x28] sm:$0xff]
        %v2128 = vld [vmem:[%s962 + $0x30] sm:$0xff]
        %v2129 = vld [vmem:[%s962 + $0x38] sm:$0xff]
        %v2130 = vrot.slane %v2122, 1
        %v2131 = vrot.slane %v2123, 1
        %v2132 = vrot.slane %v2124, 1
        %v2133 = vrot.slane %v2125, 1
        %v2134 = vrot.slane %v2126, 1
        %v2135 = vrot.slane %v2127, 1
        %v2136 = vrot.slane %v2128, 1
        %v2137 = vrot.slane %v2129, 1
        %vm2138 = vcmp.lt.s32.totalorder %v1921, 7
        %v2139 = vsel %vm2138, %v2136, %v2137
        %v2140 = vsel %vm2138, %v2135, %v2136
        %v2141 = vsel %vm2138, %v2134, %v2135
        %v2142 = vsel %vm2138, %v2133, %v2134
        %v2143 = vsel %vm2138, %v2132, %v2133
        %v2144 = vsel %vm2138, %v2131, %v2132
        %v2145 = vsel %vm2138, %v2130, %v2131
        %v2146 = vsel %vm2138, %v2137, %v2130
        %v2147 = vmul.f32 %v2065, %v2145
        %v2148 = vmul.f32 %v2066, %v2144
        %v2149 = vmul.f32 %v2067, %v2143
        %v2150 = vmul.f32 %v2068, %v2142
        %v2151 = vmul.f32 %v2069, %v2141
        %v2152 = vmul.f32 %v2070, %v2140
        %v2153 = vmul.f32 %v2071, %v2139
        %v2154 = vmul.f32 %v2072, %v2146
        %v2155 = vadd.f32 %v2114, %v2147
        %v2156 = vadd.f32 %v2115, %v2148
        %v2157 = vadd.f32 %v2116, %v2149
        %v2158 = vadd.f32 %v2117, %v2150
        %v2159 = vadd.f32 %v2118, %v2151
        %v2160 = vadd.f32 %v2119, %v2152
        %v2161 = vadd.f32 %v2120, %v2153
        %v2162 = vadd.f32 %v2121, %v2154
        %v2163 = vld [vmem:[#allocation11] sm:$0x1]
        %v2165 = vlaneseq
        %v2166 = vshrl.u32 %v2165, 7
        %v2167 = vsub.s32 0, %v2166
        %v2168 = vrot.slane %v2163, %v2167
        %v2170 = vadd.f32 %v2155, %v2168
        %v2171 = vadd.f32 %v2156, %v2168
        %v2172 = vadd.f32 %v2157, %v2168
        %v2173 = vadd.f32 %v2158, %v2168
        %v2174 = vadd.f32 %v2159, %v2168
        %v2175 = vadd.f32 %v2160, %v2168
        %v2176 = vadd.f32 %v2161, %v2168
        %v2177 = vadd.f32 %v2162, %v2168
        %v2178 = vpack.c.bf16 %v2170, %v2170
        %v2179 = vpack.c.bf16 %v2171, %v2171
        %v2180 = vpack.c.bf16 %v2172, %v2172
        %v2181 = vpack.c.bf16 %v2173, %v2173
        %v2182 = vpack.c.bf16 %v2174, %v2174
        %v2183 = vpack.c.bf16 %v2175, %v2175
        %v2184 = vpack.c.bf16 %v2176, %v2176
        %v2185 = vpack.c.bf16 %v2177, %v2177
        %2186 = vst [vmem:[%s502] sm:$0xf] %v2178
        %2187 = vst [vmem:[%s502 + $0x4] sm:$0xf] %v2179
        %2188 = vst [vmem:[%s502 + $0x8] sm:$0xf] %v2180
        %2189 = vst [vmem:[%s502 + $0xc] sm:$0xf] %v2181
        %2190 = vst [vmem:[%s502 + $0x10] sm:$0xf] %v2182
        %2191 = vst [vmem:[%s502 + $0x14] sm:$0xf] %v2183
        %2192 = vst [vmem:[%s502 + $0x18] sm:$0xf] %v2184
        %2193 = vst [vmem:[%s502 + $0x1c] sm:$0xf] %v2185
        %v2194 = vadd.f32 %v2170, %v2171
        %v2195 = vadd.f32 %v2194, %v2172
        %v2196 = vadd.f32 %v2195, %v2173
        %v2197 = vadd.f32 %v2196, %v2174
        %v2198 = vadd.f32 %v2197, %v2175
        %v2199 = vadd.f32 %v2198, %v2176
        %v2200 = vadd.f32 %v2199, %v2177
        %v2201 = vrot.slane %v2200, 4
        %v2202 = vadd.f32 %v2200, %v2201
        %v2203 = vrot.slane %v2202, 2
        %v2204 = vadd.f32 %v2202, %v2203
        %v2205 = vrot.slane %v2204, 1
        %v2206 = vadd.f32 %v2204, %v2205
        %2207 = vst [vmem:[%s510] sm:$0x1] %v2206
        %v2208 = vmul.f32 %v2170, %v2170
        %v2209 = vmul.f32 %v2171, %v2171
        %v2210 = vmul.f32 %v2172, %v2172
        %v2211 = vmul.f32 %v2173, %v2173
        %v2212 = vmul.f32 %v2174, %v2174
        %v2213 = vmul.f32 %v2175, %v2175
        %v2214 = vmul.f32 %v2176, %v2176
        %v2215 = vmul.f32 %v2177, %v2177
        %v2216 = vadd.f32 %v2208, %v2209
        %v2217 = vadd.f32 %v2216, %v2210
        %v2218 = vadd.f32 %v2217, %v2211
        %v2219 = vadd.f32 %v2218, %v2212
        %v2220 = vadd.f32 %v2219, %v2213
        %v2221 = vadd.f32 %v2220, %v2214
        %v2222 = vadd.f32 %v2221, %v2215
        %v2223 = vrot.slane %v2222, 4
        %v2224 = vadd.f32 %v2222, %v2223
        %v2225 = vrot.slane %v2224, 2
        %v2226 = vadd.f32 %v2224, %v2225
        %v2227 = vrot.slane %v2226, 1
        %v2228 = vadd.f32 %v2226, %v2227
        %2229 = vst [vmem:[%s510 + $0x1] sm:$0x1] %v2228
        %s2230 = smul.u32 8, %s32
        %p2231 = scmp.lt.s32.totalorder %s31, 1
        %s2232 = scalar_select %p2231, %s31, 1
        %p2233 = scmp.lt.s32.totalorder %s2230, 7
        %s2234 = scalar_select %p2233, %s2230, 7
        %s2235 = smul.addr %s2232, 8
        %s2236 = sadd.s32 %s2234, %s2235
        %s2237 = smul.addr %s2236, 4
        %s2238 = scalar_lea.vmem %s7, %s2237
        %p2239 = scmp.lt.s32.totalorder %s31, 1
        %s2240 = scalar_select %p2239, %s31, 1
        %p2241 = scmp.lt.s32.totalorder %s32, 0
        %s2242 = scalar_select %p2241, %s32, 0
        %s2243 = sadd.s32 %s2242, %s2240
        %s2244 = smul.addr %s2243, 2
        %s2245 = scalar_lea.vmem %s8, %s2244
        // Predicated region
        $region69: #{residual_block_3d_packed.3} parent=47 // pred_check
          %p2246 = pneg %p243
        $region70: #{residual_block_3d_packed.3} parent=47 // pred_check_branch
          %2248 = sbr.rel (%p2246) target = $region72
        $region71: #{residual_block_3d_packed.3} parent=47 // pred_region
          %s2249 = smul.u32 8, %s32
        $region72: #{residual_block_3d_packed.3} parent=47 // pred_fallthru
          _
        // Predicated region
        $region73: #{residual_block_3d_packed.3} parent=47 // pred_check
          %p2250 = pneg %p271
        $region74: #{residual_block_3d_packed.3} parent=47 // pred_check_branch
          %2252 = sbr.rel (%p2250) target = $region76
        $region75: #{residual_block_3d_packed.3} parent=47 // pred_region
          _
        $region76: #{residual_block_3d_packed.3} parent=47 // pred_fallthru
          _
      $region48: #{residual_block_3d_packed.3} parent=5 // pred_fallthru
        _
      %p2253 = scmp.le.s32.totalorder 2, %s22
      // Predicated region
      $region77: #{residual_block_3d_packed.3} parent=5 // pred_check
        %p2254 = pneg %p2253
      $region78: #{residual_block_3d_packed.3} parent=5 // pred_check_branch
        %2256 = sbr.rel (%p2254) target = $region80
      $region79: #{residual_block_3d_packed.3} parent=5 // pred_region
        %s2257 = ssub.s32 %s22, 2
        // Predicated region
        $region81: #{residual_block_3d_packed.3} parent=79 // pred_check
          %p2258 = pneg %p249
        $region82: #{residual_block_3d_packed.3} parent=79 // pred_check_branch
          %2260 = sbr.rel (%p2258) target = $region84
        $region83: #{residual_block_3d_packed.3} parent=79 // pred_region
          %s2261 = smul.u32 8, %s34
          %p2262 = scmp.lt.s32.totalorder %s33, 1
          %s2263 = scalar_select %p2262, %s33, 1
          %p2264 = scmp.lt.s32.totalorder %s2261, 7
          %s2265 = scalar_select %p2264, %s2261, 7
          %s2266 = smul.addr %s2263, 8
          %s2267 = sadd.s32 %s2265, %s2266
          %s2268 = smul.addr %s2267, 4
          %s2269 = scalar_lea.vmem %s7, %s2268
        $region84: #{residual_block_3d_packed.3} parent=79 // pred_fallthru
          _
        // Predicated region
        $region85: #{residual_block_3d_packed.3} parent=79 // pred_check
          %p2270 = pneg %p277
        $region86: #{residual_block_3d_packed.3} parent=79 // pred_check_branch
          %2272 = sbr.rel (%p2270) target = $region88
        $region87: #{residual_block_3d_packed.3} parent=79 // pred_region
          %p2273 = scmp.lt.s32.totalorder %s33, 1
          %s2274 = scalar_select %p2273, %s33, 1
          %p2275 = scmp.lt.s32.totalorder %s34, 0
          %s2276 = scalar_select %p2275, %s34, 0
          %s2277 = sadd.s32 %s2276, %s2274
          %s2278 = smul.addr %s2277, 2
          %s2279 = scalar_lea.vmem %s8, %s2278
        $region88: #{residual_block_3d_packed.3} parent=79 // pred_fallthru
          _
      $region80: #{residual_block_3d_packed.3} parent=5 // pred_fallthru
        _
    $region6: #{residual_block_3d_packed.3} parent=1 // loop_footer
      %s26 = sadd.s32 1, %s22
    $region7: #{residual_block_3d_packed.3} parent=1 // loop_footer_branch
      %21 = sbr.rel target = $region3
    $region8: #{residual_block_3d_packed.3} parent=1 // loop_exit
      _
    %2280 = vsyncpa [#allocation5], 1
    %s2281 = scalar_lea.sflag [#allocation5], 1
    %2282 = vsyncpa %s2281, 1
    %2283 = vsyncpa [#allocation7], 1
    %s2284 = scalar_lea.sflag [#allocation7], 1
    %2285 = vsyncpa %s2284, 1
    %2286 = vsyncpa [#allocation10], 1

</llo_original>
